<compile_context>
chip_gen: v6e
topology: v6e:2x2x1
jax: 0.10.0
libtpu: 0.0.40
codegen_flags: <defaults>
</compile_context>

<pallas_src>
import functools

import jax
import jax.numpy as jnp
import numpy as np
from jax import lax
from jax.experimental import pallas as pl
from jax.experimental.pallas import tpu as pltpu


def rotate_edge_kernel(ones_ref, re_h_ref, im_h_ref, rel_ref, re_t_ref, im_t_ref,
                       o_ref, *, gamma, phase_scale):
    re_h = re_h_ref[...].astype(jnp.float32)
    im_h = im_h_ref[...].astype(jnp.float32)
    re_t = re_t_ref[...].astype(jnp.float32)
    im_t = im_t_ref[...].astype(jnp.float32)

    phase = rel_ref[...].astype(jnp.float32) * phase_scale
    re_r = jnp.cos(phase)
    im_r = jnp.sin(phase)

    re_s = re_h * re_r - im_h * im_r - re_t
    im_s = re_h * im_r + im_h * re_r - im_t
    dist = jnp.sqrt(re_s * re_s + im_s * im_s)          # (tile_n, hd), f32

    # Lane-axis row-sum as an MXU mat-vec; contracting dims ((1,),(1,)) feed the
    # (tile_n, hd) operand through the MXU transposed-RHS path (no XLU transpose),
    # and give the result directly in lane-major (1, tile_n) orientation so the
    # output store is a dense full-lane write, not a masked width-1 column store.
    rows = lax.dot_general(ones_ref[...], dist,
                           dimension_numbers=(((1,), (1,)), ((), ())),
                           preferred_element_type=jnp.float32)   # (8, tile_n), rows identical
    o_ref[...] = (gamma - rows[0:1, :]).astype(o_ref.dtype)


def _vmem_capacity_bytes():
    try:
        return int(pltpu.get_tpu_info().vmem_capacity_bytes)
    except Exception:
        return 64 * 1024 * 1024   # conservative fallback (v7x per-TC VMEM)


def _bytes_per_row(d, hd, in_itemsize):
    # Double-buffered streaming inputs (head D + tail D + rel hd) plus ~14 live f32
    # (tile_n, hd) intermediates inside the body (casts, cos/sin, scores, dist, ...).
    return 2 * (2 * d + hd) * in_itemsize + 14 * hd * 4


def _choose_tile_n(n_edges, d, hd, in_itemsize, vmem_budget_bytes, max_tile=4096):
    """Largest 128-multiple row tile fitting the VMEM budget, capped so there are at
    least 2 grid steps whenever N >= 256 (keeps both v7x TensorCores busy)."""
    tile = int(vmem_budget_bytes // max(_bytes_per_row(d, hd, in_itemsize), 1))
    tile = max(128, min(max_tile, (tile // 128) * 128))
    n_pad = ((n_edges + 127) // 128) * 128
    tile = min(tile, max(128, n_pad))
    if n_pad >= 256:
        half = ((((n_edges + 1) // 2) + 127) // 128) * 128
        tile = min(tile, max(128, half))
    return tile


def rotate_score(heads, relations, tails, *, gamma, emb_init, tile_n=None):
    """Per-edge RotatE scores. heads/tails: (N, D); relations: (N, D//2). Returns (N,) f32."""
    N, D = heads.shape
    assert D % 2 == 0, "hidden_dim must be even (complex split)"
    hd = D // 2
    assert relations.shape == (N, hd)
    assert tails.shape == (N, D)

    itemsize = jnp.dtype(heads.dtype).itemsize
    vmem_cap = _vmem_capacity_bytes()
    if tile_n is None:
        tile_n = _choose_tile_n(N, D, hd, itemsize, int(0.45 * vmem_cap))
    # (1, tile_n) output blocks and bf16 sublane packing both require 128-multiples.
    assert tile_n % 128 == 0, "tile_n must be a multiple of 128"

    # Generation-aware VMEM limit derived from the real block footprint (+headroom),
    # never exceeding ~85% of physical VMEM so Mosaic scratch keeps room and oversized
    # user tiles fail loudly here rather than silently on the 64 MiB v7x part.
    usage = tile_n * _bytes_per_row(D, hd, itemsize) + 2 * tile_n * 4 + 8 * hd * 4
    vmem_limit = int(min(max(2 * usage, 32 * 1024 * 1024), 0.85 * vmem_cap))

    grid = (pl.cdiv(N, tile_n),)
    phase_scale = float(np.pi / emb_init)
    kernel = functools.partial(rotate_edge_kernel, gamma=float(gamma),
                               phase_scale=phase_scale)

    ones = jnp.ones((8, hd), jnp.float32)   # grid-invariant reduction operand

    if hd % 128 == 0:
        # Lane-aligned complex halves: pass the same (N, D) array twice with column
        # block 0 (real) / 1 (imag) — every DMA is a 128-aligned tile and there is no
        # in-kernel slice that could cross a (8,128) vreg boundary.
        in_specs = [
            pl.BlockSpec((8, hd), lambda i: (0, 0)),          # ones (constant block)
            pl.BlockSpec((tile_n, hd), lambda i: (i, 0)),     # re_head
            pl.BlockSpec((tile_n, hd), lambda i: (i, 1)),     # im_head
            pl.BlockSpec((tile_n, hd), lambda i: (i, 0)),     # relation phases
            pl.BlockSpec((tile_n, hd), lambda i: (i, 0)),     # re_tail
            pl.BlockSpec((tile_n, hd), lambda i: (i, 1)),     # im_tail
        ]
        args = (ones, heads, heads, relations, tails, tails)
    else:
        # Fallback for hd not a multiple of 128: pre-split into contiguous re/im halves
        # (one extra HBM copy) so each block's minor dim equals the full array dim.
        re_h, im_h = heads[:, :hd], heads[:, hd:]
        re_t, im_t = tails[:, :hd], tails[:, hd:]
        in_specs = [pl.BlockSpec((8, hd), lambda i: (0, 0))] + \
                   [pl.BlockSpec((tile_n, hd), lambda i: (i, 0)) for _ in range(5)]
        args = (ones, re_h, im_h, relations, re_t, im_t)

    out = pl.pallas_call(
        kernel,
        out_shape=jax.ShapeDtypeStruct((1, N), jnp.float32),
        grid=grid,
        in_specs=in_specs,
        out_specs=pl.BlockSpec((1, tile_n), lambda i: (0, i)),
        compiler_params=pltpu.CompilerParams(
            dimension_semantics=(pltpu.PARALLEL,),
            vmem_limit_bytes=vmem_limit,
        ),
    )(*args)
    return out[0]


def _reference_score(heads, relations, tails, *, gamma, emb_init):
    """Pure-numpy (f64) reference mirroring RotatEScore.edge_func."""
    h = np.asarray(heads, dtype=np.float64)
    r = np.asarray(relations, dtype=np.float64)
    t = np.asarray(tails, dtype=np.float64)
    hd = h.shape[-1] // 2
    re_h, im_h = h[:, :hd], h[:, hd:]
    re_t, im_t = t[:, :hd], t[:, hd:]
    phase = r / (emb_init / np.pi)
    re_r, im_r = np.cos(phase), np.sin(phase)
    re_s = re_h * re_r - im_h * im_r - re_t
    im_s = re_h * im_r + im_h * re_r - im_t
    dist = np.sqrt(re_s * re_s + im_s * im_s)
    return gamma - dist.sum(-1)


if __name__ == "__main__":
    gamma = 12.0

    def run_case(N, D, dtype, tile_n=None):
        hd = D // 2
        emb_init = (gamma + 2.0) / D   # standard DGL-KE embedding init range
        key = jax.random.PRNGKey(0)
        kh, kr, kt = jax.random.split(key, 3)
        heads = (jax.random.normal(kh, (N, D), jnp.float32) * emb_init).astype(dtype)
        relations = (jax.random.normal(kr, (N, hd), jnp.float32) * emb_init).astype(dtype)
        tails = (jax.random.normal(kt, (N, D), jnp.float32) * emb_init).astype(dtype)

        score = rotate_score(heads, relations, tails, gamma=gamma,
                             emb_init=emb_init, tile_n=tile_n)
        jax.block_until_ready(score)

        # Reference computed from the same (possibly bf16-quantised) input values.
        ref = _reference_score(np.asarray(heads.astype(jnp.float32)),
                               np.asarray(relations.astype(jnp.float32)),
                               np.asarray(tails.astype(jnp.float32)),
                               gamma=gamma, emb_init=emb_init)
        np.testing.assert_allclose(np.asarray(score), ref, rtol=2e-3, atol=2e-3)

    # Aligned halves (hd=128): auto tile (>= 2 grid steps) and a small 128-row tile
    # that exercises a multi-step grid plus the masked ragged edge block.
    run_case(500, 256, jnp.float32)
    run_case(500, 256, jnp.float32, tile_n=128)
    # bf16 embeddings: halves HBM traffic, kernel still accumulates in f32.
    run_case(500, 256, jnp.bfloat16)
    # hd not a multiple of 128 -> wrapper-side contiguous re/im split fallback path.
    run_case(300, 160, jnp.float32)

    print("KERNEL_OK")
</pallas_src>

<mosaic_0001>
module attributes {stable_mosaic.version = 11 : i64} {
  func.func @rotate_edge_kernel(%arg0: i32, %arg1: memref<8x128xf32, #tpu.memory_space<vmem>>, %arg2: memref<256x128xf32, #tpu.memory_space<vmem>>, %arg3: memref<256x128xf32, #tpu.memory_space<vmem>>, %arg4: memref<256x128xf32, #tpu.memory_space<vmem>>, %arg5: memref<256x128xf32, #tpu.memory_space<vmem>>, %arg6: memref<256x128xf32, #tpu.memory_space<vmem>>, %arg7: memref<1x256xf32, #tpu.memory_space<vmem>>) attributes {dimension_semantics = [#tpu.dimension_semantics<parallel>], iteration_bounds = array<i64: 2>, scalar_prefetch = 0 : i64, scratch_operands = 0 : i64, tpu.core_type = #tpu.core_type<tc>, window_params = [{pipeline_mode = #tpu.pipeline_mode<synchronous>, transform_indices = @transform_0, window_bounds = array<i64: 8, 128>}, {transform_indices = @transform_1, window_bounds = array<i64: 256, 128>}, {transform_indices = @transform_2, window_bounds = array<i64: 256, 128>}, {transform_indices = @transform_3, window_bounds = array<i64: 256, 128>}, {transform_indices = @transform_4, window_bounds = array<i64: 256, 128>}, {transform_indices = @transform_5, window_bounds = array<i64: 256, 128>}, {transform_indices = @transform_6, window_bounds = array<i64: 1, 256>}]} {
    %c0 = arith.constant 0 : index
    %c0_0 = arith.constant 0 : index
    %0 = vector.load %arg2[%c0, %c0_0] : memref<256x128xf32, #tpu.memory_space<vmem>>, vector<256x128xf32>
    %c0_1 = arith.constant 0 : index
    %c0_2 = arith.constant 0 : index
    %1 = vector.load %arg3[%c0_1, %c0_2] : memref<256x128xf32, #tpu.memory_space<vmem>>, vector<256x128xf32>
    %c0_3 = arith.constant 0 : index
    %c0_4 = arith.constant 0 : index
    %2 = vector.load %arg5[%c0_3, %c0_4] : memref<256x128xf32, #tpu.memory_space<vmem>>, vector<256x128xf32>
    %c0_5 = arith.constant 0 : index
    %c0_6 = arith.constant 0 : index
    %3 = vector.load %arg6[%c0_5, %c0_6] : memref<256x128xf32, #tpu.memory_space<vmem>>, vector<256x128xf32>
    %c0_7 = arith.constant 0 : index
    %c0_8 = arith.constant 0 : index
    %4 = vector.load %arg4[%c0_7, %c0_8] : memref<256x128xf32, #tpu.memory_space<vmem>>, vector<256x128xf32>
    %cst = arith.constant 57.4462662 : f32
    %5 = vector.broadcast %cst : f32 to vector<256x128xf32>
    %6 = arith.mulf %4, %5 : vector<256x128xf32>
    %7 = math.cos %6 : vector<256x128xf32>
    %8 = math.sin %6 : vector<256x128xf32>
    %9 = arith.mulf %0, %7 : vector<256x128xf32>
    %10 = arith.mulf %1, %8 : vector<256x128xf32>
    %11 = arith.subf %9, %10 : vector<256x128xf32>
    %12 = arith.subf %11, %2 : vector<256x128xf32>
    %13 = arith.mulf %0, %8 : vector<256x128xf32>
    %14 = arith.mulf %1, %7 : vector<256x128xf32>
    %15 = arith.addf %13, %14 : vector<256x128xf32>
    %16 = arith.subf %15, %3 : vector<256x128xf32>
    %17 = arith.mulf %12, %12 : vector<256x128xf32>
    %18 = arith.mulf %16, %16 : vector<256x128xf32>
    %19 = arith.addf %17, %18 : vector<256x128xf32>
    %20 = math.sqrt %19 : vector<256x128xf32>
    %c0_9 = arith.constant 0 : index
    %c0_10 = arith.constant 0 : index
    %21 = vector.load %arg1[%c0_9, %c0_10] : memref<8x128xf32, #tpu.memory_space<vmem>>, vector<8x128xf32>
    %cst_11 = arith.constant dense<0.000000e+00> : vector<8x256xf32>
    %22 = tpu.matmul %21, %20, %cst_11 {dimension_numbers = #tpu.dot_dimension_numbers<[1], [1], [0], [0], [0, 0, 1, 0], [], []>} : vector<8x128xf32>, vector<256x128xf32>, vector<8x256xf32> -> vector<8x256xf32>
    %23 = vector.extract_strided_slice %22 {offsets = [0, 0], sizes = [1, 256], strides = [1, 1]} : vector<8x256xf32> to vector<1x256xf32>
    %cst_12 = arith.constant 1.200000e+01 : f32
    %24 = vector.broadcast %cst_12 : f32 to vector<1x256xf32>
    %25 = arith.subf %24, %23 : vector<1x256xf32>
    %c0_13 = arith.constant 0 : index
    %c0_14 = arith.constant 0 : index
    %26 = vector.load %arg7[%c0_13, %c0_14] : memref<1x256xf32, #tpu.memory_space<vmem>>, vector<1x256xf32>
    tpu.vector_store %arg7[%c0_13, %c0_14], %25 {strides = array<i32>} : memref<1x256xf32, #tpu.memory_space<vmem>>, vector<1x256xf32>,
    return
  }
  func.func @transform_0(%arg0: i32) -> (i32, i32) {
    %c0_i32 = arith.constant 0 : i32
    %c0_i32_0 = arith.constant 0 : i32
    %c0_i32_1 = arith.constant 0 : i32
    return %c0_i32, %c0_i32_0 : i32, i32
  }
  func.func @transform_1(%arg0: i32) -> (i32, i32) {
    %c0_i32 = arith.constant 0 : i32
    %c0_i32_0 = arith.constant 0 : i32
    return %arg0, %c0_i32 : i32, i32
  }
  func.func @transform_2(%arg0: i32) -> (i32, i32) {
    %c1_i32 = arith.constant 1 : i32
    %c0_i32 = arith.constant 0 : i32
    return %arg0, %c1_i32 : i32, i32
  }
  func.func @transform_3(%arg0: i32) -> (i32, i32) {
    %c0_i32 = arith.constant 0 : i32
    %c0_i32_0 = arith.constant 0 : i32
    return %arg0, %c0_i32 : i32, i32
  }
  func.func @transform_4(%arg0: i32) -> (i32, i32) {
    %c0_i32 = arith.constant 0 : i32
    %c0_i32_0 = arith.constant 0 : i32
    return %arg0, %c0_i32 : i32, i32
  }
  func.func @transform_5(%arg0: i32) -> (i32, i32) {
    %c1_i32 = arith.constant 1 : i32
    %c0_i32 = arith.constant 0 : i32
    return %arg0, %c1_i32 : i32, i32
  }
  func.func @transform_6(%arg0: i32) -> (i32, i32) {
    %c0_i32 = arith.constant 0 : i32
    %c0_i32_0 = arith.constant 0 : i32
    return %c0_i32, %arg0 : i32, i32
  }
}

</mosaic_0001>

<llo_original>
// kernel: tpu_custom_call.1
$region0: #{tpu_custom_call.1}
  #allocation0 [shape = 'u32[]', space=smem, size = 0x4, offset = 0x4, fixed_abs, tag = 'smem constant byte address 0x4 - core index']
  #allocation1 [shape = 'u32[144,128]{1,0:T(1,128)}', space=vmem, size = 0x12000, scoped, tag = 'internal scratch']
  %s0 = inlined_call_operand.hbm [shape: f32[8,128], index: 0, kind: input, shape index: {}]
  %s1 = inlined_call_operand.hbm [shape: f32[500,256], index: 1, kind: input, shape index: {}]
  %s2 = inlined_call_operand.hbm [shape: f32[500,256], index: 2, kind: input, shape index: {}]
  %s3 = inlined_call_operand.hbm [shape: f32[500,128], index: 3, kind: input, shape index: {}]
  %s4 = inlined_call_operand.hbm [shape: f32[500,256], index: 4, kind: input, shape index: {}]
  %s5 = inlined_call_operand.hbm [shape: f32[500,256], index: 5, kind: input, shape index: {}]
  %s6 = inlined_call_operand.hbm [shape: f32[1,500], index: 6, kind: output, shape index: {}]
  %s7 = sld [smem:[#allocation0]]
  $region81: #{tpu_custom_call.1} parent=0
    _
  %s9 = ssub.s32 1, %s7
  %s10 = scalar_select 0, %s9, %s7
  $region1: #{tpu_custom_call.1} parent=0
    #allocation2 [shape = 'u8[4096]{0}', space=vmem, size = 0x1000, scoped, tag = 'input window, operand 0, single buffered']
    #allocation3 [shape = 's32[2]{0}', space=sflag, size = 0x8, scoped, tag = 'scoped memory for tpu_custom_call.1']
    #allocation4 [shape = 's32[2]{0}', space=sflag, size = 0x8, scoped, tag = 'scoped memory for tpu_custom_call.1']
    #allocation5 [shape = 'u8[262144]{0}', space=vmem, size = 0x40000, scoped, tag = 'input window, operand 1']
    #allocation6 [shape = 's32[2]{0}', space=sflag, size = 0x8, scoped, tag = 'scoped memory for tpu_custom_call.1']
    #allocation7 [shape = 'u8[262144]{0}', space=vmem, size = 0x40000, scoped, tag = 'input window, operand 2']
    #allocation8 [shape = 'u8[262144]{0}', space=vmem, size = 0x40000, scoped, tag = 'input window, operand 3']
    #allocation9 [shape = 's32[2]{0}', space=sflag, size = 0x8, scoped, tag = 'scoped memory for tpu_custom_call.1']
    #allocation10 [shape = 'u8[262144]{0}', space=vmem, size = 0x40000, scoped, tag = 'input window, operand 4']
    #allocation11 [shape = 'u8[262144]{0}', space=vmem, size = 0x40000, scoped, tag = 'input window, operand 5']
    #allocation12 [shape = 's32[2]{0}', space=sflag, size = 0x8, scoped, tag = 'scoped memory for tpu_custom_call.1']
    #allocation13 [shape = 'u8[2048]{0}', space=vmem, size = 0x800, scoped, tag = 'output window, operand 0']
    %11 = vsyncpa [#allocation3], 0
    %12 = vsyncpa [#allocation6], 0
    %s13 = scalar_lea.sflag [#allocation6], 1
    %14 = vsyncpa %s13, 0
    %15 = vsyncpa [#allocation9], 0
    %s16 = scalar_lea.sflag [#allocation9], 1
    %17 = vsyncpa %s16, 0
    %18 = vsyncpa [#allocation12], 0
    %s19 = scalar_lea.sflag [#allocation12], 1
    %20 = vsyncpa %s19, 0
    %21 = vsyncpa [#allocation4], 0
    %s22 = scalar_lea.sflag [#allocation4], 1
    %23 = vsyncpa %s22, 0
    loop: start=0, step=1, limit=4
    $region2: #{tpu_custom_call.1} parent=1 // loop_pre_header
      _
    $region3: #{tpu_custom_call.1} parent=1 // loop_header
      %s25 = sphi 0, %s29
      %p26 = scmp.ge.s32.totalorder %s25, 4
      %s33 = sphi 0, %s33
      %s35 = sphi 0, %s33
      %s36 = sphi 0, %s35
      %s50 = sphi 0, %s36
      %s56 = sphi 0, %s58
      %s59 = sphi 0, %s56
      %s60 = sphi 0, %s59
      %s76 = sphi 0, %s60
      %s82 = sphi 0, %s84
      %s85 = sphi 0, %s82
      %s86 = sphi 0, %s85
      %s102 = sphi 0, %s86
      %s108 = sphi 0, %s110
      %s111 = sphi 0, %s108
      %s112 = sphi 0, %s111
      %s128 = sphi 0, %s112
      %s134 = sphi 0, %s136
      %s137 = sphi 0, %s134
      %s138 = sphi 0, %s137
      %s154 = sphi 0, %s138
      %s160 = sphi 0, %s162
      %s163 = sphi 0, %s160
      %s164 = sphi 0, %s163
      %s180 = sphi 0, %s164
      %s186 = sphi 0, %s188
      %s189 = sphi 0, %s186
      %s190 = sphi 0, %s189
      %s206 = sphi 0, %s190
    $region4: #{tpu_custom_call.1} parent=1 // loop_header_branch
      %28 = sbr.rel (%p26) target = $region8
    $region5: #{tpu_custom_call.1} parent=1 // loop_body
      %s30 = ssub.s32 %s25, 1
      %s31 = ssub.s32 %s25, 2
      %s32 = sadd.s32 %s25, 1
      %s34 = sadd.s32 %s33, 1
      %p37 = scmp.eq.s32.totalorder %s25, 1
      %p38 = scmp.ne.s32.totalorder %s33, %s35
      %p39 = scmp.eq.s32.totalorder %s25, 0
      %p40 = por %p38, %p39
      %p41 = scmp.ne.s32.totalorder %s33, %s35
      %p42 = scmp.eq.s32.totalorder %s30, 1
      %p43 = por %p41, %p42
      %p44 = scmp.ne.s32.totalorder %s35, %s36
      %p45 = scmp.eq.s32.totalorder %s30, 0
      %p46 = por %p44, %p45
      %p47 = scmp.ne.s32.totalorder %s35, %s36
      %p48 = scmp.eq.s32.totalorder %s31, 1
      %p49 = por %p47, %p48
      %p51 = scmp.ne.s32.totalorder %s36, %s50
      %p52 = scmp.eq.s32.totalorder %s31, 0
      %p53 = por %p51, %p52
      %s54 = ssub.s32 %s25, %s32
      %p55 = scmp.eq.s32.totalorder %s54, 0
      %s57 = sadd.s32 %s56, 1
      %s58 = scalar_select %p55, %s56, %s57
      %p61 = pneg %p55
      %p62 = scmp.eq.s32.totalorder %s25, 1
      %p63 = por %p61, %p62
      %p64 = scmp.ne.s32.totalorder %s56, %s59
      %p65 = scmp.eq.s32.totalorder %s25, 0
      %p66 = por %p64, %p65
      %p67 = scmp.ne.s32.totalorder %s56, %s59
      %p68 = scmp.eq.s32.totalorder %s30, 1
      %p69 = por %p67, %p68
      %p70 = scmp.ne.s32.totalorder %s59, %s60
      %p71 = scmp.eq.s32.totalorder %s30, 0
      %p72 = por %p70, %p71
      %p73 = scmp.ne.s32.totalorder %s59, %s60
      %p74 = scmp.eq.s32.totalorder %s31, 1
      %p75 = por %p73, %p74
      %p77 = scmp.ne.s32.totalorder %s60, %s76
      %p78 = scmp.eq.s32.totalorder %s31, 0
      %p79 = por %p77, %p78
      %s80 = ssub.s32 %s25, %s32
      %p81 = scmp.eq.s32.totalorder %s80, 0
      %s83 = sadd.s32 %s82, 1
      %s84 = scalar_select %p81, %s82, %s83
      %p87 = pneg %p81
      %p88 = scmp.eq.s32.totalorder %s25, 1
      %p89 = por %p87, %p88
      %p90 = scmp.ne.s32.totalorder %s82, %s85
      %p91 = scmp.eq.s32.totalorder %s25, 0
      %p92 = por %p90, %p91
      %p93 = scmp.ne.s32.totalorder %s82, %s85
      %p94 = scmp.eq.s32.totalorder %s30, 1
      %p95 = por %p93, %p94
      %p96 = scmp.ne.s32.totalorder %s85, %s86
      %p97 = scmp.eq.s32.totalorder %s30, 0
      %p98 = por %p96, %p97
      %p99 = scmp.ne.s32.totalorder %s85, %s86
      %p100 = scmp.eq.s32.totalorder %s31, 1
      %p101 = por %p99, %p100
      %p103 = scmp.ne.s32.totalorder %s86, %s102
      %p104 = scmp.eq.s32.totalorder %s31, 0
      %p105 = por %p103, %p104
      %s106 = ssub.s32 %s25, %s32
      %p107 = scmp.eq.s32.totalorder %s106, 0
      %s109 = sadd.s32 %s108, 1
      %s110 = scalar_select %p107, %s108, %s109
      %p113 = pneg %p107
      %p114 = scmp.eq.s32.totalorder %s25, 1
      %p115 = por %p113, %p114
      %p116 = scmp.ne.s32.totalorder %s108, %s111
      %p117 = scmp.eq.s32.totalorder %s25, 0
      %p118 = por %p116, %p117
      %p119 = scmp.ne.s32.totalorder %s108, %s111
      %p120 = scmp.eq.s32.totalorder %s30, 1
      %p121 = por %p119, %p120
      %p122 = scmp.ne.s32.totalorder %s111, %s112
      %p123 = scmp.eq.s32.totalorder %s30, 0
      %p124 = por %p122, %p123
      %p125 = scmp.ne.s32.totalorder %s111, %s112
      %p126 = scmp.eq.s32.totalorder %s31, 1
      %p127 = por %p125, %p126
      %p129 = scmp.ne.s32.totalorder %s112, %s128
      %p130 = scmp.eq.s32.totalorder %s31, 0
      %p131 = por %p129, %p130
      %s132 = ssub.s32 %s25, %s32
      %p133 = scmp.eq.s32.totalorder %s132, 0
      %s135 = sadd.s32 %s134, 1
      %s136 = scalar_select %p133, %s134, %s135
      %p139 = pneg %p133
      %p140 = scmp.eq.s32.totalorder %s25, 1
      %p141 = por %p139, %p140
      %p142 = scmp.ne.s32.totalorder %s134, %s137
      %p143 = scmp.eq.s32.totalorder %s25, 0
      %p144 = por %p142, %p143
      %p145 = scmp.ne.s32.totalorder %s134, %s137
      %p146 = scmp.eq.s32.totalorder %s30, 1
      %p147 = por %p145, %p146
      %p148 = scmp.ne.s32.totalorder %s137, %s138
      %p149 = scmp.eq.s32.totalorder %s30, 0
      %p150 = por %p148, %p149
      %p151 = scmp.ne.s32.totalorder %s137, %s138
      %p152 = scmp.eq.s32.totalorder %s31, 1
      %p153 = por %p151, %p152
      %p155 = scmp.ne.s32.totalorder %s138, %s154
      %p156 = scmp.eq.s32.totalorder %s31, 0
      %p157 = por %p155, %p156
      %s158 = ssub.s32 %s25, %s32
      %p159 = scmp.eq.s32.totalorder %s158, 0
      %s161 = sadd.s32 %s160, 1
      %s162 = scalar_select %p159, %s160, %s161
      %p165 = pneg %p159
      %p166 = scmp.eq.s32.totalorder %s25, 1
      %p167 = por %p165, %p166
      %p168 = scmp.ne.s32.totalorder %s160, %s163
      %p169 = scmp.eq.s32.totalorder %s25, 0
      %p170 = por %p168, %p169
      %p171 = scmp.ne.s32.totalorder %s160, %s163
      %p172 = scmp.eq.s32.totalorder %s30, 1
      %p173 = por %p171, %p172
      %p174 = scmp.ne.s32.totalorder %s163, %s164
      %p175 = scmp.eq.s32.totalorder %s30, 0
      %p176 = por %p174, %p175
      %p177 = scmp.ne.s32.totalorder %s163, %s164
      %p178 = scmp.eq.s32.totalorder %s31, 1
      %p179 = por %p177, %p178
      %p181 = scmp.ne.s32.totalorder %s164, %s180
      %p182 = scmp.eq.s32.totalorder %s31, 0
      %p183 = por %p181, %p182
      %s184 = ssub.s32 %s25, %s32
      %p185 = scmp.eq.s32.totalorder %s184, 0
      %s187 = sadd.s32 %s186, 1
      %s188 = scalar_select %p185, %s186, %s187
      %p191 = pneg %p185
      %p192 = scmp.eq.s32.totalorder %s25, 1
      %p193 = por %p191, %p192
      %p194 = scmp.ne.s32.totalorder %s186, %s189
      %p195 = scmp.eq.s32.totalorder %s25, 0
      %p196 = por %p194, %p195
      %p197 = scmp.ne.s32.totalorder %s186, %s189
      %p198 = scmp.eq.s32.totalorder %s30, 1
      %p199 = por %p197, %p198
      %p200 = scmp.ne.s32.totalorder %s189, %s190
      %p201 = scmp.eq.s32.totalorder %s30, 0
      %p202 = por %p200, %p201
      %p203 = scmp.ne.s32.totalorder %s189, %s190
      %p204 = scmp.eq.s32.totalorder %s31, 1
      %p205 = por %p203, %p204
      %p207 = scmp.ne.s32.totalorder %s190, %s206
      %p208 = scmp.eq.s32.totalorder %s31, 0
      %p209 = por %p207, %p208
      %p210 = scmp.le.s32.totalorder 1, %s25
      %p211 = scmp.lt.s32.totalorder %s25, 3
      %p212 = pnand %p210, %p211
      %p213 = pneg %p212
      // Predicated region
      $region9: #{tpu_custom_call.1} parent=5 // pred_check
        _
      $region10: #{tpu_custom_call.1} parent=5 // pred_check_branch
        %215 = sbr.rel (%p212) target = $region12
      $region11: #{tpu_custom_call.1} parent=5 // pred_region
        %s216 = ssub.s32 %s25, 1
        // Predicated region
        $region13: #{tpu_custom_call.1} parent=11 // pred_check
          %p217 = pneg %p46
        $region14: #{tpu_custom_call.1} parent=11 // pred_check_branch
          %219 = sbr.rel (%p217) target = $region16
        $region15: #{tpu_custom_call.1} parent=11 // pred_region
          %s221 = ssub.s32 128, 128
          %222 = vsyncadd [#allocation3], %s221
          %s224 = sshll.u32 [#allocation2], 4
          %s225 = int_to_ptr.vmem [resolvable:$true] %s224
          %227 = dma.hbm_to_vmem [thread:$0]  %s0, 128, %s225, [#allocation3]
        $region16: #{tpu_custom_call.1} parent=11 // pred_fallthru
          _
      $region12: #{tpu_custom_call.1} parent=5 // pred_fallthru
        _
      %p228 = scmp.lt.s32.totalorder %s25, 2
      // Predicated region
      $region17: #{tpu_custom_call.1} parent=5 // pred_check
        %p229 = pneg %p228
      $region18: #{tpu_custom_call.1} parent=5 // pred_check_branch
        %231 = sbr.rel (%p229) target = $region20
      $region19: #{tpu_custom_call.1} parent=5 // pred_region
        // Predicated region
        $region21: #{tpu_custom_call.1} parent=19 // pred_check
          %p232 = pneg %p66
        $region22: #{tpu_custom_call.1} parent=19 // pred_check_branch
          %234 = sbr.rel (%p232) target = $region24
        $region23: #{tpu_custom_call.1} parent=19 // pred_region
          %s235 = sand.u32 %s25, 1
          %s236 = scalar_lea.sflag [#allocation6], %s235
          %s237 = sand.u32 %s56, 1
          %s238 = smul.addr %s237, 256
          %s239 = scalar_lea.vmem [#allocation5], %s238
          %s240 = smul.u32 32, %s25
          %s241 = ssub.s32 63, %s240
          %p242 = scmp.lt.s32.totalorder %s241, 32
          %s243 = scalar_select %p242, %s241, 32
          %s244 = smul.u32 128, %s243
          %s246 = ssub.s32 4096, %s244
          %247 = vsyncadd %s236, %s246
          %p248 = scmp.ne.s32.totalorder 0, %s244
          %s249 = smul.addr %s240, 2
          %s250 = smul.addr %s249, 128
          %s251 = scalar_lea.hbm %s1, %s250
          %s252 = smul.u32 8, %s243
          %s253 = sshll.u32 %s239, 4
          %s254 = int_to_ptr.vmem [resolvable:$true] %s253
          %s255 = sshll.u32 %s252, 4
          %259 = dma.hbm_to_vmem [thread:$0]  (%p248), %s251, %s255, %s254, %s236, 256, 128, 8
        $region24: #{tpu_custom_call.1} parent=19 // pred_fallthru
          _
        // Predicated region
        $region25: #{tpu_custom_call.1} parent=19 // pred_check
          %p260 = pneg %p92
        $region26: #{tpu_custom_call.1} parent=19 // pred_check_branch
          %262 = sbr.rel (%p260) target = $region28
        $region27: #{tpu_custom_call.1} parent=19 // pred_region
          %s263 = sand.u32 %s25, 1
          %s264 = scalar_lea.sflag [#allocation6], %s263
          %s265 = sand.u32 %s82, 1
          %s266 = smul.addr %s265, 256
          %s267 = scalar_lea.vmem [#allocation7], %s266
          %s268 = smul.u32 32, %s25
          %s269 = ssub.s32 63, %s268
          %p270 = scmp.lt.s32.totalorder %s269, 32
          %s271 = scalar_select %p270, %s269, 32
          %s272 = smul.u32 128, %s271
          %s274 = ssub.s32 4096, %s272
          %275 = vsyncadd %s264, %s274
          %p276 = scmp.ne.s32.totalorder 0, %s272
          %s277 = smul.addr %s268, 2
          %s278 = sadd.s32 1, %s277
          %s279 = smul.addr %s278, 128
          %s280 = scalar_lea.hbm %s2, %s279
          %s281 = smul.u32 8, %s271
          %s282 = sshll.u32 %s267, 4
          %s283 = int_to_ptr.vmem [resolvable:$true] %s282
          %s284 = sshll.u32 %s281, 4
          %288 = dma.hbm_to_vmem [thread:$0]  (%p276), %s280, %s284, %s283, %s264, 256, 128, 8
        $region28: #{tpu_custom_call.1} parent=19 // pred_fallthru
          _
        // Predicated region
        $region29: #{tpu_custom_call.1} parent=19 // pred_check
          %p289 = pneg %p118
        $region30: #{tpu_custom_call.1} parent=19 // pred_check_branch
          %291 = sbr.rel (%p289) target = $region32
        $region31: #{tpu_custom_call.1} parent=19 // pred_region
          %s292 = sand.u32 %s25, 1
          %s293 = scalar_lea.sflag [#allocation9], %s292
          %s294 = sand.u32 %s108, 1
          %s295 = smul.addr %s294, 256
          %s296 = scalar_lea.vmem [#allocation8], %s295
          %s297 = smul.u32 32, %s25
          %s298 = ssub.s32 63, %s297
          %p299 = scmp.lt.s32.totalorder %s298, 32
          %s300 = scalar_select %p299, %s298, 32
          %s301 = smul.u32 128, %s300
          %s303 = ssub.s32 4096, %s301
          %304 = vsyncadd %s293, %s303
          %p305 = scmp.ne.s32.totalorder 0, %s301
          %s306 = smul.addr %s297, 128
          %s307 = scalar_lea.hbm %s3, %s306
          %s308 = smul.u32 8, %s300
          %s309 = sshll.u32 %s296, 4
          %s310 = int_to_ptr.vmem [resolvable:$true] %s309
          %s311 = sshll.u32 %s308, 4
          %315 = dma.hbm_to_vmem [thread:$0]  (%p305), %s307, %s311, %s310, %s293, 128, 128, 8
        $region32: #{tpu_custom_call.1} parent=19 // pred_fallthru
          _
        // Predicated region
        $region33: #{tpu_custom_call.1} parent=19 // pred_check
          %p316 = pneg %p144
        $region34: #{tpu_custom_call.1} parent=19 // pred_check_branch
          %318 = sbr.rel (%p316) target = $region36
        $region35: #{tpu_custom_call.1} parent=19 // pred_region
          %s319 = sand.u32 %s25, 1
          %s320 = scalar_lea.sflag [#allocation9], %s319
          %s321 = sand.u32 %s134, 1
          %s322 = smul.addr %s321, 256
          %s323 = scalar_lea.vmem [#allocation10], %s322
          %s324 = smul.u32 32, %s25
          %s325 = ssub.s32 63, %s324
          %p326 = scmp.lt.s32.totalorder %s325, 32
          %s327 = scalar_select %p326, %s325, 32
          %s328 = smul.u32 128, %s327
          %s330 = ssub.s32 4096, %s328
          %331 = vsyncadd %s320, %s330
          %p332 = scmp.ne.s32.totalorder 0, %s328
          %s333 = smul.addr %s324, 2
          %s334 = smul.addr %s333, 128
          %s335 = scalar_lea.hbm %s4, %s334
          %s336 = smul.u32 8, %s327
          %s337 = sshll.u32 %s323, 4
          %s338 = int_to_ptr.vmem [resolvable:$true] %s337
          %s339 = sshll.u32 %s336, 4
          %343 = dma.hbm_to_vmem [thread:$0]  (%p332), %s335, %s339, %s338, %s320, 256, 128, 8
        $region36: #{tpu_custom_call.1} parent=19 // pred_fallthru
          _
        // Predicated region
        $region37: #{tpu_custom_call.1} parent=19 // pred_check
          %p344 = pneg %p170
        $region38: #{tpu_custom_call.1} parent=19 // pred_check_branch
          %346 = sbr.rel (%p344) target = $region40
        $region39: #{tpu_custom_call.1} parent=19 // pred_region
          %s347 = sand.u32 %s160, 1
          %s348 = scalar_lea.sflag [#allocation12], %s347
          %s349 = sand.u32 %s160, 1
          %s350 = smul.addr %s349, 256
          %s351 = scalar_lea.vmem [#allocation11], %s350
          %s352 = smul.u32 32, %s25
          %s353 = ssub.s32 63, %s352
          %p354 = scmp.lt.s32.totalorder %s353, 32
          %s355 = scalar_select %p354, %s353, 32
          %s356 = smul.u32 128, %s355
          %s358 = ssub.s32 4096, %s356
          %359 = vsyncadd %s348, %s358
          %p360 = scmp.ne.s32.totalorder 0, %s356
          %s361 = smul.addr %s352, 2
          %s362 = sadd.s32 1, %s361
          %s363 = smul.addr %s362, 128
          %s364 = scalar_lea.hbm %s5, %s363
          %s365 = smul.u32 8, %s355
          %s366 = sshll.u32 %s351, 4
          %s367 = int_to_ptr.vmem [resolvable:$true] %s366
          %s368 = sshll.u32 %s365, 4
          %372 = dma.hbm_to_vmem [thread:$0]  (%p360), %s364, %s368, %s367, %s348, 256, 128, 8
        $region40: #{tpu_custom_call.1} parent=19 // pred_fallthru
          _
      $region20: #{tpu_custom_call.1} parent=5 // pred_fallthru
        _
      %p373 = scmp.le.s32.totalorder 1, %s25
      %p374 = scmp.lt.s32.totalorder %s25, 3
      %p375 = pnand %p373, %p374
      %p376 = pneg %p375
      // Predicated region
      $region41: #{tpu_custom_call.1} parent=5 // pred_check
        _
      $region42: #{tpu_custom_call.1} parent=5 // pred_check_branch
        %378 = sbr.rel (%p375) target = $region44
      $region43: #{tpu_custom_call.1} parent=5 // pred_region
        %s379 = ssub.s32 %s25, 1
        // Predicated region
        $region45: #{tpu_custom_call.1} parent=43 // pred_check
          %p380 = pneg %p46
        $region46: #{tpu_custom_call.1} parent=43 // pred_check_branch
          %382 = sbr.rel (%p380) target = $region48
        $region47: #{tpu_custom_call.1} parent=43 // pred_region
          %383 = dma.done [#allocation3], 128
        $region48: #{tpu_custom_call.1} parent=43 // pred_fallthru
          _
        %s384 = sand.u32 %s30, 1
        %s385 = scalar_lea.sflag [#allocation6], %s384
        %s386 = sand.u32 %s59, 1
        %s387 = smul.addr %s386, 256
        %s388 = scalar_lea.vmem [#allocation5], %s387
        // Predicated region
        $region49: #{tpu_custom_call.1} parent=43 // pred_check
          %p389 = pneg %p72
        $region50: #{tpu_custom_call.1} parent=43 // pred_check_branch
          %391 = sbr.rel (%p389) target = $region52
        $region51: #{tpu_custom_call.1} parent=43 // pred_region
          %392 = dma.done %s385, 4096
        $region52: #{tpu_custom_call.1} parent=43 // pred_fallthru
          _
        %s393 = sand.u32 %s30, 1
        %s394 = scalar_lea.sflag [#allocation6], %s393
        %s395 = sand.u32 %s85, 1
        %s396 = smul.addr %s395, 256
        %s397 = scalar_lea.vmem [#allocation7], %s396
        // Predicated region
        $region53: #{tpu_custom_call.1} parent=43 // pred_check
          %p398 = pneg %p98
        $region54: #{tpu_custom_call.1} parent=43 // pred_check_branch
          %400 = sbr.rel (%p398) target = $region56
        $region55: #{tpu_custom_call.1} parent=43 // pred_region
          %401 = dma.done %s394, 4096
        $region56: #{tpu_custom_call.1} parent=43 // pred_fallthru
          _
        %s402 = sand.u32 %s30, 1
        %s403 = scalar_lea.sflag [#allocation9], %s402
        %s404 = sand.u32 %s111, 1
        %s405 = smul.addr %s404, 256
        %s406 = scalar_lea.vmem [#allocation8], %s405
        // Predicated region
        $region57: #{tpu_custom_call.1} parent=43 // pred_check
          %p407 = pneg %p124
        $region58: #{tpu_custom_call.1} parent=43 // pred_check_branch
          %409 = sbr.rel (%p407) target = $region60
        $region59: #{tpu_custom_call.1} parent=43 // pred_region
          %410 = dma.done %s403, 4096
        $region60: #{tpu_custom_call.1} parent=43 // pred_fallthru
          _
        %s411 = sand.u32 %s30, 1
        %s412 = scalar_lea.sflag [#allocation9], %s411
        %s413 = sand.u32 %s137, 1
        %s414 = smul.addr %s413, 256
        %s415 = scalar_lea.vmem [#allocation10], %s414
        // Predicated region
        $region61: #{tpu_custom_call.1} parent=43 // pred_check
          %p416 = pneg %p150
        $region62: #{tpu_custom_call.1} parent=43 // pred_check_branch
          %418 = sbr.rel (%p416) target = $region64
        $region63: #{tpu_custom_call.1} parent=43 // pred_region
          %419 = dma.done %s412, 4096
        $region64: #{tpu_custom_call.1} parent=43 // pred_fallthru
          _
        %s420 = sand.u32 %s163, 1
        %s421 = scalar_lea.sflag [#allocation12], %s420
        %s422 = sand.u32 %s163, 1
        %s423 = smul.addr %s422, 256
        %s424 = scalar_lea.vmem [#allocation11], %s423
        // Predicated region
        $region65: #{tpu_custom_call.1} parent=43 // pred_check
          %p425 = pneg %p176
        $region66: #{tpu_custom_call.1} parent=43 // pred_check_branch
          %427 = sbr.rel (%p425) target = $region68
        $region67: #{tpu_custom_call.1} parent=43 // pred_region
          %428 = dma.done %s421, 4096
        $region68: #{tpu_custom_call.1} parent=43 // pred_fallthru
          _
        %p429 = pneg %p46
        %p430 = pneg %p43
        %s431 = sand.u32 %s30, 1
        %s432 = scalar_lea.sflag [#allocation6], %s431
        %s433 = sand.u32 %s59, 1
        %s434 = smul.addr %s433, 256
        %s435 = scalar_lea.vmem [#allocation5], %s434
        %p436 = pneg %p72
        %p437 = pneg %p69
        %s438 = sand.u32 %s30, 1
        %s439 = scalar_lea.sflag [#allocation6], %s438
        %s440 = sand.u32 %s85, 1
        %s441 = smul.addr %s440, 256
        %s442 = scalar_lea.vmem [#allocation7], %s441
        %p443 = pneg %p98
        %p444 = pneg %p95
        %s445 = sand.u32 %s30, 1
        %s446 = scalar_lea.sflag [#allocation9], %s445
        %s447 = sand.u32 %s111, 1
        %s448 = smul.addr %s447, 256
        %s449 = scalar_lea.vmem [#allocation8], %s448
        %p450 = pneg %p124
        %p451 = pneg %p121
        %s452 = sand.u32 %s30, 1
        %s453 = scalar_lea.sflag [#allocation9], %s452
        %s454 = sand.u32 %s137, 1
        %s455 = smul.addr %s454, 256
        %s456 = scalar_lea.vmem [#allocation10], %s455
        %p457 = pneg %p150
        %p458 = pneg %p147
        %s459 = sand.u32 %s163, 1
        %s460 = scalar_lea.sflag [#allocation12], %s459
        %s461 = sand.u32 %s163, 1
        %s462 = smul.addr %s461, 256
        %s463 = scalar_lea.vmem [#allocation11], %s462
        %p464 = pneg %p176
        %p465 = pneg %p173
        %p466 = pneg %p202
        %p467 = pneg %p199
        %s468 = sand.u32 %s189, 1
        %s469 = scalar_lea.sflag [#allocation4], %s468
        %s470 = sand.u32 %s189, 1
        %s471 = smul.addr %s470, 2
        %s472 = scalar_lea.vmem [#allocation13], %s471
        %s473 = smul.u32 32, %s30
        %s474 = ssub.s32 63, %s473
        %p475 = scmp.lt.s32.totalorder %s474, 32
        %s476 = scalar_select %p475, %s474, 32
        %s477 = smul.u32 128, %s476
        %s478 = smul.u32 32, %s30
        %s479 = ssub.s32 63, %s478
        %p480 = scmp.lt.s32.totalorder %s479, 32
        %s481 = scalar_select %p480, %s479, 32
        %s482 = smul.u32 128, %s481
        %s483 = smul.u32 32, %s30
        %s484 = ssub.s32 63, %s483
        %p485 = scmp.lt.s32.totalorder %s484, 32
        %s486 = scalar_select %p485, %s484, 32
        %s487 = smul.u32 128, %s486
        %s488 = smul.u32 32, %s30
        %s489 = ssub.s32 63, %s488
        %p490 = scmp.lt.s32.totalorder %s489, 32
        %s491 = scalar_select %p490, %s489, 32
        %s492 = smul.u32 128, %s491
        %s493 = smul.u32 32, %s30
        %s494 = ssub.s32 63, %s493
        %p495 = scmp.lt.s32.totalorder %s494, 32
        %s496 = scalar_select %p495, %s494, 32
        %s497 = smul.u32 128, %s496
        %s498 = smul.u32 2, %s30
        %v499 = vld [vmem:[%s388] sm:$0xff]
        %v500 = vld [vmem:[%s388 + $0x8] sm:$0xff]
        %v501 = vld [vmem:[%s388 + $0x10] sm:$0xff]
        %v502 = vld [vmem:[%s388 + $0x18] sm:$0xff]
        %v503 = vld [vmem:[%s388 + $0x20] sm:$0xff]
        %v504 = vld [vmem:[%s388 + $0x28] sm:$0xff]
        %v505 = vld [vmem:[%s388 + $0x30] sm:$0xff]
        %v506 = vld [vmem:[%s388 + $0x38] sm:$0xff]
        %v507 = vld [vmem:[%s388 + $0x40] sm:$0xff]
        %v508 = vld [vmem:[%s388 + $0x48] sm:$0xff]
        %v509 = vld [vmem:[%s388 + $0x50] sm:$0xff]
        %v510 = vld [vmem:[%s388 + $0x58] sm:$0xff]
        %v511 = vld [vmem:[%s388 + $0x60] sm:$0xff]
        %v512 = vld [vmem:[%s388 + $0x68] sm:$0xff]
        %v513 = vld [vmem:[%s388 + $0x70] sm:$0xff]
        %v514 = vld [vmem:[%s388 + $0x78] sm:$0xff]
        %v515 = vld [vmem:[%s388 + $0x80] sm:$0xff]
        %v516 = vld [vmem:[%s388 + $0x88] sm:$0xff]
        %v517 = vld [vmem:[%s388 + $0x90] sm:$0xff]
        %v518 = vld [vmem:[%s388 + $0x98] sm:$0xff]
        %v519 = vld [vmem:[%s388 + $0xa0] sm:$0xff]
        %v520 = vld [vmem:[%s388 + $0xa8] sm:$0xff]
        %v521 = vld [vmem:[%s388 + $0xb0] sm:$0xff]
        %v522 = vld [vmem:[%s388 + $0xb8] sm:$0xff]
        %v523 = vld [vmem:[%s388 + $0xc0] sm:$0xff]
        %v524 = vld [vmem:[%s388 + $0xc8] sm:$0xff]
        %v525 = vld [vmem:[%s388 + $0xd0] sm:$0xff]
        %v526 = vld [vmem:[%s388 + $0xd8] sm:$0xff]
        %v527 = vld [vmem:[%s388 + $0xe0] sm:$0xff]
        %v528 = vld [vmem:[%s388 + $0xe8] sm:$0xff]
        %v529 = vld [vmem:[%s388 + $0xf0] sm:$0xff]
        %v530 = vld [vmem:[%s388 + $0xf8] sm:$0xff]
        %v531 = vld [vmem:[%s397] sm:$0xff]
        %v532 = vld [vmem:[%s397 + $0x8] sm:$0xff]
        %v533 = vld [vmem:[%s397 + $0x10] sm:$0xff]
        %v534 = vld [vmem:[%s397 + $0x18] sm:$0xff]
        %v535 = vld [vmem:[%s397 + $0x20] sm:$0xff]
        %v536 = vld [vmem:[%s397 + $0x28] sm:$0xff]
        %v537 = vld [vmem:[%s397 + $0x30] sm:$0xff]
        %v538 = vld [vmem:[%s397 + $0x38] sm:$0xff]
        %v539 = vld [vmem:[%s397 + $0x40] sm:$0xff]
        %v540 = vld [vmem:[%s397 + $0x48] sm:$0xff]
        %v541 = vld [vmem:[%s397 + $0x50] sm:$0xff]
        %v542 = vld [vmem:[%s397 + $0x58] sm:$0xff]
        %v543 = vld [vmem:[%s397 + $0x60] sm:$0xff]
        %v544 = vld [vmem:[%s397 + $0x68] sm:$0xff]
        %v545 = vld [vmem:[%s397 + $0x70] sm:$0xff]
        %v546 = vld [vmem:[%s397 + $0x78] sm:$0xff]
        %v547 = vld [vmem:[%s397 + $0x80] sm:$0xff]
        %v548 = vld [vmem:[%s397 + $0x88] sm:$0xff]
        %v549 = vld [vmem:[%s397 + $0x90] sm:$0xff]
        %v550 = vld [vmem:[%s397 + $0x98] sm:$0xff]
        %v551 = vld [vmem:[%s397 + $0xa0] sm:$0xff]
        %v552 = vld [vmem:[%s397 + $0xa8] sm:$0xff]
        %v553 = vld [vmem:[%s397 + $0xb0] sm:$0xff]
        %v554 = vld [vmem:[%s397 + $0xb8] sm:$0xff]
        %v555 = vld [vmem:[%s397 + $0xc0] sm:$0xff]
        %v556 = vld [vmem:[%s397 + $0xc8] sm:$0xff]
        %v557 = vld [vmem:[%s397 + $0xd0] sm:$0xff]
        %v558 = vld [vmem:[%s397 + $0xd8] sm:$0xff]
        %v559 = vld [vmem:[%s397 + $0xe0] sm:$0xff]
        %v560 = vld [vmem:[%s397 + $0xe8] sm:$0xff]
        %v561 = vld [vmem:[%s397 + $0xf0] sm:$0xff]
        %v562 = vld [vmem:[%s397 + $0xf8] sm:$0xff]
        %v563 = vld [vmem:[%s415] sm:$0xff]
        %v564 = vld [vmem:[%s415 + $0x8] sm:$0xff]
        %v565 = vld [vmem:[%s415 + $0x10] sm:$0xff]
        %v566 = vld [vmem:[%s415 + $0x18] sm:$0xff]
        %v567 = vld [vmem:[%s415 + $0x20] sm:$0xff]
        %v568 = vld [vmem:[%s415 + $0x28] sm:$0xff]
        %v569 = vld [vmem:[%s415 + $0x30] sm:$0xff]
        %v570 = vld [vmem:[%s415 + $0x38] sm:$0xff]
        %v571 = vld [vmem:[%s415 + $0x40] sm:$0xff]
        %v572 = vld [vmem:[%s415 + $0x48] sm:$0xff]
        %v573 = vld [vmem:[%s415 + $0x50] sm:$0xff]
        %v574 = vld [vmem:[%s415 + $0x58] sm:$0xff]
        %v575 = vld [vmem:[%s415 + $0x60] sm:$0xff]
        %v576 = vld [vmem:[%s415 + $0x68] sm:$0xff]
        %v577 = vld [vmem:[%s415 + $0x70] sm:$0xff]
        %v578 = vld [vmem:[%s415 + $0x78] sm:$0xff]
        %v579 = vld [vmem:[%s415 + $0x80] sm:$0xff]
        %v580 = vld [vmem:[%s415 + $0x88] sm:$0xff]
        %v581 = vld [vmem:[%s415 + $0x90] sm:$0xff]
        %v582 = vld [vmem:[%s415 + $0x98] sm:$0xff]
        %v583 = vld [vmem:[%s415 + $0xa0] sm:$0xff]
        %v584 = vld [vmem:[%s415 + $0xa8] sm:$0xff]
        %v585 = vld [vmem:[%s415 + $0xb0] sm:$0xff]
        %v586 = vld [vmem:[%s415 + $0xb8] sm:$0xff]
        %v587 = vld [vmem:[%s415 + $0xc0] sm:$0xff]
        %v588 = vld [vmem:[%s415 + $0xc8] sm:$0xff]
        %v589 = vld [vmem:[%s415 + $0xd0] sm:$0xff]
        %v590 = vld [vmem:[%s415 + $0xd8] sm:$0xff]
        %v591 = vld [vmem:[%s415 + $0xe0] sm:$0xff]
        %v592 = vld [vmem:[%s415 + $0xe8] sm:$0xff]
        %v593 = vld [vmem:[%s415 + $0xf0] sm:$0xff]
        %v594 = vld [vmem:[%s415 + $0xf8] sm:$0xff]
        %v595 = vld [vmem:[%s424] sm:$0xff]
        %v596 = vld [vmem:[%s424 + $0x8] sm:$0xff]
        %v597 = vld [vmem:[%s424 + $0x10] sm:$0xff]
        %v598 = vld [vmem:[%s424 + $0x18] sm:$0xff]
        %v599 = vld [vmem:[%s424 + $0x20] sm:$0xff]
        %v600 = vld [vmem:[%s424 + $0x28] sm:$0xff]
        %v601 = vld [vmem:[%s424 + $0x30] sm:$0xff]
        %v602 = vld [vmem:[%s424 + $0x38] sm:$0xff]
        %v603 = vld [vmem:[%s424 + $0x40] sm:$0xff]
        %v604 = vld [vmem:[%s424 + $0x48] sm:$0xff]
        %v605 = vld [vmem:[%s424 + $0x50] sm:$0xff]
        %v606 = vld [vmem:[%s424 + $0x58] sm:$0xff]
        %v607 = vld [vmem:[%s424 + $0x60] sm:$0xff]
        %v608 = vld [vmem:[%s424 + $0x68] sm:$0xff]
        %v609 = vld [vmem:[%s424 + $0x70] sm:$0xff]
        %v610 = vld [vmem:[%s424 + $0x78] sm:$0xff]
        %v611 = vld [vmem:[%s424 + $0x80] sm:$0xff]
        %v612 = vld [vmem:[%s424 + $0x88] sm:$0xff]
        %v613 = vld [vmem:[%s424 + $0x90] sm:$0xff]
        %v614 = vld [vmem:[%s424 + $0x98] sm:$0xff]
        %v615 = vld [vmem:[%s424 + $0xa0] sm:$0xff]
        %v616 = vld [vmem:[%s424 + $0xa8] sm:$0xff]
        %v617 = vld [vmem:[%s424 + $0xb0] sm:$0xff]
        %v618 = vld [vmem:[%s424 + $0xb8] sm:$0xff]
        %v619 = vld [vmem:[%s424 + $0xc0] sm:$0xff]
        %v620 = vld [vmem:[%s424 + $0xc8] sm:$0xff]
        %v621 = vld [vmem:[%s424 + $0xd0] sm:$0xff]
        %v622 = vld [vmem:[%s424 + $0xd8] sm:$0xff]
        %v623 = vld [vmem:[%s424 + $0xe0] sm:$0xff]
        %v624 = vld [vmem:[%s424 + $0xe8] sm:$0xff]
        %v625 = vld [vmem:[%s424 + $0xf0] sm:$0xff]
        %v626 = vld [vmem:[%s424 + $0xf8] sm:$0xff]
        %v627 = vld [vmem:[%s406] sm:$0xff]
        %v628 = vld [vmem:[%s406 + $0x8] sm:$0xff]
        %v629 = vld [vmem:[%s406 + $0x10] sm:$0xff]
        %v630 = vld [vmem:[%s406 + $0x18] sm:$0xff]
        %v631 = vld [vmem:[%s406 + $0x20] sm:$0xff]
        %v632 = vld [vmem:[%s406 + $0x28] sm:$0xff]
        %v633 = vld [vmem:[%s406 + $0x30] sm:$0xff]
        %v634 = vld [vmem:[%s406 + $0x38] sm:$0xff]
        %v635 = vld [vmem:[%s406 + $0x40] sm:$0xff]
        %v636 = vld [vmem:[%s406 + $0x48] sm:$0xff]
        %v637 = vld [vmem:[%s406 + $0x50] sm:$0xff]
        %v638 = vld [vmem:[%s406 + $0x58] sm:$0xff]
        %v639 = vld [vmem:[%s406 + $0x60] sm:$0xff]
        %v640 = vld [vmem:[%s406 + $0x68] sm:$0xff]
        %v641 = vld [vmem:[%s406 + $0x70] sm:$0xff]
        %v642 = vld [vmem:[%s406 + $0x78] sm:$0xff]
        %v643 = vld [vmem:[%s406 + $0x80] sm:$0xff]
        %v644 = vld [vmem:[%s406 + $0x88] sm:$0xff]
        %v645 = vld [vmem:[%s406 + $0x90] sm:$0xff]
        %v646 = vld [vmem:[%s406 + $0x98] sm:$0xff]
        %v647 = vld [vmem:[%s406 + $0xa0] sm:$0xff]
        %v648 = vld [vmem:[%s406 + $0xa8] sm:$0xff]
        %v649 = vld [vmem:[%s406 + $0xb0] sm:$0xff]
        %v650 = vld [vmem:[%s406 + $0xb8] sm:$0xff]
        %v651 = vld [vmem:[%s406 + $0xc0] sm:$0xff]
        %v652 = vld [vmem:[%s406 + $0xc8] sm:$0xff]
        %v653 = vld [vmem:[%s406 + $0xd0] sm:$0xff]
        %v654 = vld [vmem:[%s406 + $0xd8] sm:$0xff]
        %v655 = vld [vmem:[%s406 + $0xe0] sm:$0xff]
        %v656 = vld [vmem:[%s406 + $0xe8] sm:$0xff]
        %v657 = vld [vmem:[%s406 + $0xf0] sm:$0xff]
        %v658 = vld [vmem:[%s406 + $0xf8] sm:$0xff]
        %v659 = vmul.f32 %v627, 57.446266
        %v660 = vmul.f32 %v628, 57.446266
        %v661 = vmul.f32 %v629, 57.446266
        %v662 = vmul.f32 %v630, 57.446266
        %v663 = vmul.f32 %v631, 57.446266
        %v664 = vmul.f32 %v632, 57.446266
        %v665 = vmul.f32 %v633, 57.446266
        %v666 = vmul.f32 %v634, 57.446266
        %v667 = vmul.f32 %v635, 57.446266
        %v668 = vmul.f32 %v636, 57.446266
        %v669 = vmul.f32 %v637, 57.446266
        %v670 = vmul.f32 %v638, 57.446266
        %v671 = vmul.f32 %v639, 57.446266
        %v672 = vmul.f32 %v640, 57.446266
        %v673 = vmul.f32 %v641, 57.446266
        %v674 = vmul.f32 %v642, 57.446266
        %v675 = vmul.f32 %v643, 57.446266
        %v676 = vmul.f32 %v644, 57.446266
        %v677 = vmul.f32 %v645, 57.446266
        %v678 = vmul.f32 %v646, 57.446266
        %v679 = vmul.f32 %v647, 57.446266
        %v680 = vmul.f32 %v648, 57.446266
        %v681 = vmul.f32 %v649, 57.446266
        %v682 = vmul.f32 %v650, 57.446266
        %v683 = vmul.f32 %v651, 57.446266
        %v684 = vmul.f32 %v652, 57.446266
        %v685 = vmul.f32 %v653, 57.446266
        %v686 = vmul.f32 %v654, 57.446266
        %v687 = vmul.f32 %v655, 57.446266
        %v688 = vmul.f32 %v656, 57.446266
        %v689 = vmul.f32 %v657, 57.446266
        %v690 = vmul.f32 %v658, 57.446266
        %v691 = vand.u32 2147483647, %v659
        %vm692 = vcmp.le.f32.partialorder %v691, 0.7853982
        %vm693 = vcmp.lt.s32.totalorder %v659, 0
        %v694 = vand.u32 %v659, 2139095040
        %v695 = vshrl.u32 %v694, 23
        %v696 = vsub.s32 %v695, 127
        %v697 = vand.u32 2147483647, %v659
        %v698 = vand.u32 %v697, 8388607
        %v699 = vor.u32 %v698, 8388608
        %v700 = vsub.s32 0, %v699
        %v701 = vadd.s32 %v696, 1
        %vm702 = vcmp.gt.s32.totalorder %v701, 0
        %v703 = vsel %vm702, %v701, 0
        %v704 = vshrl.u32 %v703, 5
        %v705 = vand.u32 %v703, 31
        %v706 = vsub.s32 32, %v705
        %v707 = vshrl.u32 683565275, %v706
        %v708 = vshll.u32 683565275, %v705
        %v709 = vshrl.u32 2475754826, %v706
        %v710 = vor.u32 %v708, %v709
        %v711 = vshll.u32 2475754826, %v705
        %v712 = vshrl.u32 2131351028, %v706
        %v713 = vor.u32 %v711, %v712
        %v714 = vshll.u32 2131351028, %v705
        %v715 = vshrl.u32 2102212464, %v706
        %v716 = vor.u32 %v714, %v715
        %v717 = vshll.u32 2102212464, %v705
        %v718 = vshrl.u32 920167782, %v706
        %v719 = vor.u32 %v717, %v718
        %v720 = vshll.u32 920167782, %v705
        %v721 = vshrl.u32 1326507024, %v706
        %v722 = vor.u32 %v720, %v721
        %vm723 = vcmp.lt.s32.totalorder %v704, 1
        %vm724 = vcmp.lt.s32.totalorder %v704, 2
        %vm725 = vcmp.lt.s32.totalorder %v704, 3
        %vm726 = vcmp.lt.s32.totalorder %v704, 4
        %v727 = vsel %vm723, %v707, %v710
        %v728 = vsel %vm726, %v716, 2102212464
        %v729 = vsel %vm725, %v713, %v728
        %v730 = vsel %vm724, %v727, %v729
        %v731 = vsel %vm723, %v710, %v713
        %v732 = vsel %vm726, %v719, 920167782
        %v733 = vsel %vm725, %v716, %v732
        %v734 = vsel %vm724, %v731, %v733
        %v735 = vsel %vm723, %v713, %v716
        %v736 = vsel %vm726, %v722, 1326507024
        %v737 = vsel %vm725, %v719, %v736
        %v738 = vsel %vm724, %v735, %v737
        %v739 = vshll.u32 %v699, 8
        %v740 = vmul.u32.u64.compose %v739, %v738
        %v741 = vextract.low.u32 %v740
        %v742 = vextract.high.u32 %v740
        %v743 = vmul.u32.u64.compose %v739, %v734
        %v744 = vextract.low.u32 %v743
        %v745 = vextract.high.u32 %v743
        %v746 = vmul.u32 %v739, %v730
        %v747 = vadd.s32 %v742, %v744
        %vm748 = vc.u32 %v742, %v744
        %v749 = vadd.s32 %v745, 1
        %v750 = vsel %vm748, %v749, %v745
        %v751 = vadd.s32 %v746, %v750
        %v752 = vadd.s32 %v751, 536870912
        %v753 = vshrl.u32 %v752, 30
        %v754 = vshll.u32 %v753, 30
        %v755 = vsub.s32 %v751, %v754
        %vm756 = vcmp.lt.s32.totalorder %v755, 0
        %v757 = vsub.s32 0, %v755
        %v758 = vsel %vm756, %v757, %v755
        %v759 = vclz %v758
        %v760 = vsub.s32 %v759, 2
        %vm761 = vcmp.gt.s32.totalorder 0, %v760
        %v762 = vsel %vm761, 0, %v760
        %v763 = vsub.s32 32, %v762
        %v764 = vshll.u32 %v755, %v762
        %v765 = vshrl.u32 %v747, %v763
        %v766 = vor.u32 %v764, %v765
        %v767 = vsub.s32 4294967266, %v762
        %v768 = vadd.s32 %v767, 127
        %v769 = vshll.u32 %v768, 23
        %v770 = vor.u32 4788187, %v769
        %v771 = vand.u32 2147483647, %v770
        %v773 = vcvt.s32.f32 %v766
        %v774 = vmul.f32 %v773, %v771
        %v775 = vxor.u32 %v774, 2147483648
        %v776 = vsel %vm693, %v775, %v774
        %v777 = vsub.s32 4, %v753
        %v778 = vsel %vm693, %v777, %v753
        %v779 = vsel %vm692, %v659, %v776
        %v780 = vsel %vm692, 0, %v778
        %v781 = vcosq.f32.pop %v779
        %v782 = vsinq.f32.pop %v779
        %vm783 = vweird.f32 %v659
        %v784 = vand.u32 %v780, 3
        %vm785 = vcmp.lt.s32.totalorder %v784, 2
        %vm786 = vcmp.eq.s32.totalorder %v784, 0
        %v787 = vxor.u32 %v782, 2147483648
        %v788 = vsel %vm786, %v781, %v787
        %vm789 = vcmp.eq.s32.totalorder %v784, 2
        %v790 = vxor.u32 %v781, 2147483648
        %v791 = vsel %vm789, %v790, %v782
        %v792 = vsel %vm785, %v788, %v791
        %v793 = vsel %vm783, nan, %v792
        %v794 = vand.u32 2147483647, %v660
        %vm795 = vcmp.le.f32.partialorder %v794, 0.7853982
        %vm796 = vcmp.lt.s32.totalorder %v660, 0
        %v797 = vand.u32 %v660, 2139095040
        %v798 = vshrl.u32 %v797, 23
        %v799 = vsub.s32 %v798, 127
        %v800 = vand.u32 2147483647, %v660
        %v801 = vand.u32 %v800, 8388607
        %v802 = vor.u32 %v801, 8388608
        %v803 = vsub.s32 0, %v802
        %v804 = vadd.s32 %v799, 1
        %vm805 = vcmp.gt.s32.totalorder %v804, 0
        %v806 = vsel %vm805, %v804, 0
        %v807 = vshrl.u32 %v806, 5
        %v808 = vand.u32 %v806, 31
        %v809 = vsub.s32 32, %v808
        %v810 = vshrl.u32 683565275, %v809
        %v811 = vshll.u32 683565275, %v808
        %v812 = vshrl.u32 2475754826, %v809
        %v813 = vor.u32 %v811, %v812
        %v814 = vshll.u32 2475754826, %v808
        %v815 = vshrl.u32 2131351028, %v809
        %v816 = vor.u32 %v814, %v815
        %v817 = vshll.u32 2131351028, %v808
        %v818 = vshrl.u32 2102212464, %v809
        %v819 = vor.u32 %v817, %v818
        %v820 = vshll.u32 2102212464, %v808
        %v821 = vshrl.u32 920167782, %v809
        %v822 = vor.u32 %v820, %v821
        %v823 = vshll.u32 920167782, %v808
        %v824 = vshrl.u32 1326507024, %v809
        %v825 = vor.u32 %v823, %v824
        %vm826 = vcmp.lt.s32.totalorder %v807, 1
        %vm827 = vcmp.lt.s32.totalorder %v807, 2
        %vm828 = vcmp.lt.s32.totalorder %v807, 3
        %vm829 = vcmp.lt.s32.totalorder %v807, 4
        %v830 = vsel %vm826, %v810, %v813
        %v831 = vsel %vm829, %v819, 2102212464
        %v832 = vsel %vm828, %v816, %v831
        %v833 = vsel %vm827, %v830, %v832
        %v834 = vsel %vm826, %v813, %v816
        %v835 = vsel %vm829, %v822, 920167782
        %v836 = vsel %vm828, %v819, %v835
        %v837 = vsel %vm827, %v834, %v836
        %v838 = vsel %vm826, %v816, %v819
        %v839 = vsel %vm829, %v825, 1326507024
        %v840 = vsel %vm828, %v822, %v839
        %v841 = vsel %vm827, %v838, %v840
        %v842 = vshll.u32 %v802, 8
        %v843 = vmul.u32.u64.compose %v842, %v841
        %v844 = vextract.low.u32 %v843
        %v845 = vextract.high.u32 %v843
        %v846 = vmul.u32.u64.compose %v842, %v837
        %v847 = vextract.low.u32 %v846
        %v848 = vextract.high.u32 %v846
        %v849 = vmul.u32 %v842, %v833
        %v850 = vadd.s32 %v845, %v847
        %vm851 = vc.u32 %v845, %v847
        %v852 = vadd.s32 %v848, 1
        %v853 = vsel %vm851, %v852, %v848
        %v854 = vadd.s32 %v849, %v853
        %v855 = vadd.s32 %v854, 536870912
        %v856 = vshrl.u32 %v855, 30
        %v857 = vshll.u32 %v856, 30
        %v858 = vsub.s32 %v854, %v857
        %vm859 = vcmp.lt.s32.totalorder %v858, 0
        %v860 = vsub.s32 0, %v858
        %v861 = vsel %vm859, %v860, %v858
        %v862 = vclz %v861
        %v863 = vsub.s32 %v862, 2
        %vm864 = vcmp.gt.s32.totalorder 0, %v863
        %v865 = vsel %vm864, 0, %v863
        %v866 = vsub.s32 32, %v865
        %v867 = vshll.u32 %v858, %v865
        %v868 = vshrl.u32 %v850, %v866
        %v869 = vor.u32 %v867, %v868
        %v870 = vsub.s32 4294967266, %v865
        %v871 = vadd.s32 %v870, 127
        %v872 = vshll.u32 %v871, 23
        %v873 = vor.u32 4788187, %v872
        %v874 = vand.u32 2147483647, %v873
        %v876 = vcvt.s32.f32 %v869
        %v877 = vmul.f32 %v876, %v874
        %v878 = vxor.u32 %v877, 2147483648
        %v879 = vsel %vm796, %v878, %v877
        %v880 = vsub.s32 4, %v856
        %v881 = vsel %vm796, %v880, %v856
        %v882 = vsel %vm795, %v660, %v879
        %v883 = vsel %vm795, 0, %v881
        %v884 = vcosq.f32.pop %v882
        %v885 = vsinq.f32.pop %v882
        %vm886 = vweird.f32 %v660
        %v887 = vand.u32 %v883, 3
        %vm888 = vcmp.lt.s32.totalorder %v887, 2
        %vm889 = vcmp.eq.s32.totalorder %v887, 0
        %v890 = vxor.u32 %v885, 2147483648
        %v891 = vsel %vm889, %v884, %v890
        %vm892 = vcmp.eq.s32.totalorder %v887, 2
        %v893 = vxor.u32 %v884, 2147483648
        %v894 = vsel %vm892, %v893, %v885
        %v895 = vsel %vm888, %v891, %v894
        %v896 = vsel %vm886, nan, %v895
        %v897 = vand.u32 2147483647, %v661
        %vm898 = vcmp.le.f32.partialorder %v897, 0.7853982
        %vm899 = vcmp.lt.s32.totalorder %v661, 0
        %v900 = vand.u32 %v661, 2139095040
        %v901 = vshrl.u32 %v900, 23
        %v902 = vsub.s32 %v901, 127
        %v903 = vand.u32 2147483647, %v661
        %v904 = vand.u32 %v903, 8388607
        %v905 = vor.u32 %v904, 8388608
        %v906 = vsub.s32 0, %v905
        %v907 = vadd.s32 %v902, 1
        %vm908 = vcmp.gt.s32.totalorder %v907, 0
        %v909 = vsel %vm908, %v907, 0
        %v910 = vshrl.u32 %v909, 5
        %v911 = vand.u32 %v909, 31
        %v912 = vsub.s32 32, %v911
        %v913 = vshrl.u32 683565275, %v912
        %v914 = vshll.u32 683565275, %v911
        %v915 = vshrl.u32 2475754826, %v912
        %v916 = vor.u32 %v914, %v915
        %v917 = vshll.u32 2475754826, %v911
        %v918 = vshrl.u32 2131351028, %v912
        %v919 = vor.u32 %v917, %v918
        %v920 = vshll.u32 2131351028, %v911
        %v921 = vshrl.u32 2102212464, %v912
        %v922 = vor.u32 %v920, %v921
        %v923 = vshll.u32 2102212464, %v911
        %v924 = vshrl.u32 920167782, %v912
        %v925 = vor.u32 %v923, %v924
        %v926 = vshll.u32 920167782, %v911
        %v927 = vshrl.u32 1326507024, %v912
        %v928 = vor.u32 %v926, %v927
        %vm929 = vcmp.lt.s32.totalorder %v910, 1
        %vm930 = vcmp.lt.s32.totalorder %v910, 2
        %vm931 = vcmp.lt.s32.totalorder %v910, 3
        %vm932 = vcmp.lt.s32.totalorder %v910, 4
        %v933 = vsel %vm929, %v913, %v916
        %v934 = vsel %vm932, %v922, 2102212464
        %v935 = vsel %vm931, %v919, %v934
        %v936 = vsel %vm930, %v933, %v935
        %v937 = vsel %vm929, %v916, %v919
        %v938 = vsel %vm932, %v925, 920167782
        %v939 = vsel %vm931, %v922, %v938
        %v940 = vsel %vm930, %v937, %v939
        %v941 = vsel %vm929, %v919, %v922
        %v942 = vsel %vm932, %v928, 1326507024
        %v943 = vsel %vm931, %v925, %v942
        %v944 = vsel %vm930, %v941, %v943
        %v945 = vshll.u32 %v905, 8
        %v946 = vmul.u32.u64.compose %v945, %v944
        %v947 = vextract.low.u32 %v946
        %v948 = vextract.high.u32 %v946
        %v949 = vmul.u32.u64.compose %v945, %v940
        %v950 = vextract.low.u32 %v949
        %v951 = vextract.high.u32 %v949
        %v952 = vmul.u32 %v945, %v936
        %v953 = vadd.s32 %v948, %v950
        %vm954 = vc.u32 %v948, %v950
        %v955 = vadd.s32 %v951, 1
        %v956 = vsel %vm954, %v955, %v951
        %v957 = vadd.s32 %v952, %v956
        %v958 = vadd.s32 %v957, 536870912
        %v959 = vshrl.u32 %v958, 30
        %v960 = vshll.u32 %v959, 30
        %v961 = vsub.s32 %v957, %v960
        %vm962 = vcmp.lt.s32.totalorder %v961, 0
        %v963 = vsub.s32 0, %v961
        %v964 = vsel %vm962, %v963, %v961
        %v965 = vclz %v964
        %v966 = vsub.s32 %v965, 2
        %vm967 = vcmp.gt.s32.totalorder 0, %v966
        %v968 = vsel %vm967, 0, %v966
        %v969 = vsub.s32 32, %v968
        %v970 = vshll.u32 %v961, %v968
        %v971 = vshrl.u32 %v953, %v969
        %v972 = vor.u32 %v970, %v971
        %v973 = vsub.s32 4294967266, %v968
        %v974 = vadd.s32 %v973, 127
        %v975 = vshll.u32 %v974, 23
        %v976 = vor.u32 4788187, %v975
        %v977 = vand.u32 2147483647, %v976
        %v979 = vcvt.s32.f32 %v972
        %v980 = vmul.f32 %v979, %v977
        %v981 = vxor.u32 %v980, 2147483648
        %v982 = vsel %vm899, %v981, %v980
        %v983 = vsub.s32 4, %v959
        %v984 = vsel %vm899, %v983, %v959
        %v985 = vsel %vm898, %v661, %v982
        %v986 = vsel %vm898, 0, %v984
        %v987 = vcosq.f32.pop %v985
        %v988 = vsinq.f32.pop %v985
        %vm989 = vweird.f32 %v661
        %v990 = vand.u32 %v986, 3
        %vm991 = vcmp.lt.s32.totalorder %v990, 2
        %vm992 = vcmp.eq.s32.totalorder %v990, 0
        %v993 = vxor.u32 %v988, 2147483648
        %v994 = vsel %vm992, %v987, %v993
        %vm995 = vcmp.eq.s32.totalorder %v990, 2
        %v996 = vxor.u32 %v987, 2147483648
        %v997 = vsel %vm995, %v996, %v988
        %v998 = vsel %vm991, %v994, %v997
        %v999 = vsel %vm989, nan, %v998
        %v1000 = vand.u32 2147483647, %v662
        %vm1001 = vcmp.le.f32.partialorder %v1000, 0.7853982
        %vm1002 = vcmp.lt.s32.totalorder %v662, 0
        %v1003 = vand.u32 %v662, 2139095040
        %v1004 = vshrl.u32 %v1003, 23
        %v1005 = vsub.s32 %v1004, 127
        %v1006 = vand.u32 2147483647, %v662
        %v1007 = vand.u32 %v1006, 8388607
        %v1008 = vor.u32 %v1007, 8388608
        %v1009 = vsub.s32 0, %v1008
        %v1010 = vadd.s32 %v1005, 1
        %vm1011 = vcmp.gt.s32.totalorder %v1010, 0
        %v1012 = vsel %vm1011, %v1010, 0
        %v1013 = vshrl.u32 %v1012, 5
        %v1014 = vand.u32 %v1012, 31
        %v1015 = vsub.s32 32, %v1014
        %v1016 = vshrl.u32 683565275, %v1015
        %v1017 = vshll.u32 683565275, %v1014
        %v1018 = vshrl.u32 2475754826, %v1015
        %v1019 = vor.u32 %v1017, %v1018
        %v1020 = vshll.u32 2475754826, %v1014
        %v1021 = vshrl.u32 2131351028, %v1015
        %v1022 = vor.u32 %v1020, %v1021
        %v1023 = vshll.u32 2131351028, %v1014
        %v1024 = vshrl.u32 2102212464, %v1015
        %v1025 = vor.u32 %v1023, %v1024
        %v1026 = vshll.u32 2102212464, %v1014
        %v1027 = vshrl.u32 920167782, %v1015
        %v1028 = vor.u32 %v1026, %v1027
        %v1029 = vshll.u32 920167782, %v1014
        %v1030 = vshrl.u32 1326507024, %v1015
        %v1031 = vor.u32 %v1029, %v1030
        %vm1032 = vcmp.lt.s32.totalorder %v1013, 1
        %vm1033 = vcmp.lt.s32.totalorder %v1013, 2
        %vm1034 = vcmp.lt.s32.totalorder %v1013, 3
        %vm1035 = vcmp.lt.s32.totalorder %v1013, 4
        %v1036 = vsel %vm1032, %v1016, %v1019
        %v1037 = vsel %vm1035, %v1025, 2102212464
        %v1038 = vsel %vm1034, %v1022, %v1037
        %v1039 = vsel %vm1033, %v1036, %v1038
        %v1040 = vsel %vm1032, %v1019, %v1022
        %v1041 = vsel %vm1035, %v1028, 920167782
        %v1042 = vsel %vm1034, %v1025, %v1041
        %v1043 = vsel %vm1033, %v1040, %v1042
        %v1044 = vsel %vm1032, %v1022, %v1025
        %v1045 = vsel %vm1035, %v1031, 1326507024
        %v1046 = vsel %vm1034, %v1028, %v1045
        %v1047 = vsel %vm1033, %v1044, %v1046
        %v1048 = vshll.u32 %v1008, 8
        %v1049 = vmul.u32.u64.compose %v1048, %v1047
        %v1050 = vextract.low.u32 %v1049
        %v1051 = vextract.high.u32 %v1049
        %v1052 = vmul.u32.u64.compose %v1048, %v1043
        %v1053 = vextract.low.u32 %v1052
        %v1054 = vextract.high.u32 %v1052
        %v1055 = vmul.u32 %v1048, %v1039
        %v1056 = vadd.s32 %v1051, %v1053
        %vm1057 = vc.u32 %v1051, %v1053
        %v1058 = vadd.s32 %v1054, 1
        %v1059 = vsel %vm1057, %v1058, %v1054
        %v1060 = vadd.s32 %v1055, %v1059
        %v1061 = vadd.s32 %v1060, 536870912
        %v1062 = vshrl.u32 %v1061, 30
        %v1063 = vshll.u32 %v1062, 30
        %v1064 = vsub.s32 %v1060, %v1063
        %vm1065 = vcmp.lt.s32.totalorder %v1064, 0
        %v1066 = vsub.s32 0, %v1064
        %v1067 = vsel %vm1065, %v1066, %v1064
        %v1068 = vclz %v1067
        %v1069 = vsub.s32 %v1068, 2
        %vm1070 = vcmp.gt.s32.totalorder 0, %v1069
        %v1071 = vsel %vm1070, 0, %v1069
        %v1072 = vsub.s32 32, %v1071
        %v1073 = vshll.u32 %v1064, %v1071
        %v1074 = vshrl.u32 %v1056, %v1072
        %v1075 = vor.u32 %v1073, %v1074
        %v1076 = vsub.s32 4294967266, %v1071
        %v1077 = vadd.s32 %v1076, 127
        %v1078 = vshll.u32 %v1077, 23
        %v1079 = vor.u32 4788187, %v1078
        %v1080 = vand.u32 2147483647, %v1079
        %v1082 = vcvt.s32.f32 %v1075
        %v1083 = vmul.f32 %v1082, %v1080
        %v1084 = vxor.u32 %v1083, 2147483648
        %v1085 = vsel %vm1002, %v1084, %v1083
        %v1086 = vsub.s32 4, %v1062
        %v1087 = vsel %vm1002, %v1086, %v1062
        %v1088 = vsel %vm1001, %v662, %v1085
        %v1089 = vsel %vm1001, 0, %v1087
        %v1090 = vcosq.f32.pop %v1088
        %v1091 = vsinq.f32.pop %v1088
        %vm1092 = vweird.f32 %v662
        %v1093 = vand.u32 %v1089, 3
        %vm1094 = vcmp.lt.s32.totalorder %v1093, 2
        %vm1095 = vcmp.eq.s32.totalorder %v1093, 0
        %v1096 = vxor.u32 %v1091, 2147483648
        %v1097 = vsel %vm1095, %v1090, %v1096
        %vm1098 = vcmp.eq.s32.totalorder %v1093, 2
        %v1099 = vxor.u32 %v1090, 2147483648
        %v1100 = vsel %vm1098, %v1099, %v1091
        %v1101 = vsel %vm1094, %v1097, %v1100
        %v1102 = vsel %vm1092, nan, %v1101
        %v1103 = vand.u32 2147483647, %v663
        %vm1104 = vcmp.le.f32.partialorder %v1103, 0.7853982
        %vm1105 = vcmp.lt.s32.totalorder %v663, 0
        %v1106 = vand.u32 %v663, 2139095040
        %v1107 = vshrl.u32 %v1106, 23
        %v1108 = vsub.s32 %v1107, 127
        %v1109 = vand.u32 2147483647, %v663
        %v1110 = vand.u32 %v1109, 8388607
        %v1111 = vor.u32 %v1110, 8388608
        %v1112 = vsub.s32 0, %v1111
        %v1113 = vadd.s32 %v1108, 1
        %vm1114 = vcmp.gt.s32.totalorder %v1113, 0
        %v1115 = vsel %vm1114, %v1113, 0
        %v1116 = vshrl.u32 %v1115, 5
        %v1117 = vand.u32 %v1115, 31
        %v1118 = vsub.s32 32, %v1117
        %v1119 = vshrl.u32 683565275, %v1118
        %v1120 = vshll.u32 683565275, %v1117
        %v1121 = vshrl.u32 2475754826, %v1118
        %v1122 = vor.u32 %v1120, %v1121
        %v1123 = vshll.u32 2475754826, %v1117
        %v1124 = vshrl.u32 2131351028, %v1118
        %v1125 = vor.u32 %v1123, %v1124
        %v1126 = vshll.u32 2131351028, %v1117
        %v1127 = vshrl.u32 2102212464, %v1118
        %v1128 = vor.u32 %v1126, %v1127
        %v1129 = vshll.u32 2102212464, %v1117
        %v1130 = vshrl.u32 920167782, %v1118
        %v1131 = vor.u32 %v1129, %v1130
        %v1132 = vshll.u32 920167782, %v1117
        %v1133 = vshrl.u32 1326507024, %v1118
        %v1134 = vor.u32 %v1132, %v1133
        %vm1135 = vcmp.lt.s32.totalorder %v1116, 1
        %vm1136 = vcmp.lt.s32.totalorder %v1116, 2
        %vm1137 = vcmp.lt.s32.totalorder %v1116, 3
        %vm1138 = vcmp.lt.s32.totalorder %v1116, 4
        %v1139 = vsel %vm1135, %v1119, %v1122
        %v1140 = vsel %vm1138, %v1128, 2102212464
        %v1141 = vsel %vm1137, %v1125, %v1140
        %v1142 = vsel %vm1136, %v1139, %v1141
        %v1143 = vsel %vm1135, %v1122, %v1125
        %v1144 = vsel %vm1138, %v1131, 920167782
        %v1145 = vsel %vm1137, %v1128, %v1144
        %v1146 = vsel %vm1136, %v1143, %v1145
        %v1147 = vsel %vm1135, %v1125, %v1128
        %v1148 = vsel %vm1138, %v1134, 1326507024
        %v1149 = vsel %vm1137, %v1131, %v1148
        %v1150 = vsel %vm1136, %v1147, %v1149
        %v1151 = vshll.u32 %v1111, 8
        %v1152 = vmul.u32.u64.compose %v1151, %v1150
        %v1153 = vextract.low.u32 %v1152
        %v1154 = vextract.high.u32 %v1152
        %v1155 = vmul.u32.u64.compose %v1151, %v1146
        %v1156 = vextract.low.u32 %v1155
        %v1157 = vextract.high.u32 %v1155
        %v1158 = vmul.u32 %v1151, %v1142
        %v1159 = vadd.s32 %v1154, %v1156
        %vm1160 = vc.u32 %v1154, %v1156
        %v1161 = vadd.s32 %v1157, 1
        %v1162 = vsel %vm1160, %v1161, %v1157
        %v1163 = vadd.s32 %v1158, %v1162
        %v1164 = vadd.s32 %v1163, 536870912
        %v1165 = vshrl.u32 %v1164, 30
        %v1166 = vshll.u32 %v1165, 30
        %v1167 = vsub.s32 %v1163, %v1166
        %vm1168 = vcmp.lt.s32.totalorder %v1167, 0
        %v1169 = vsub.s32 0, %v1167
        %v1170 = vsel %vm1168, %v1169, %v1167
        %v1171 = vclz %v1170
        %v1172 = vsub.s32 %v1171, 2
        %vm1173 = vcmp.gt.s32.totalorder 0, %v1172
        %v1174 = vsel %vm1173, 0, %v1172
        %v1175 = vsub.s32 32, %v1174
        %v1176 = vshll.u32 %v1167, %v1174
        %v1177 = vshrl.u32 %v1159, %v1175
        %v1178 = vor.u32 %v1176, %v1177
        %v1179 = vsub.s32 4294967266, %v1174
        %v1180 = vadd.s32 %v1179, 127
        %v1181 = vshll.u32 %v1180, 23
        %v1182 = vor.u32 4788187, %v1181
        %v1183 = vand.u32 2147483647, %v1182
        %v1185 = vcvt.s32.f32 %v1178
        %v1186 = vmul.f32 %v1185, %v1183
        %v1187 = vxor.u32 %v1186, 2147483648
        %v1188 = vsel %vm1105, %v1187, %v1186
        %v1189 = vsub.s32 4, %v1165
        %v1190 = vsel %vm1105, %v1189, %v1165
        %v1191 = vsel %vm1104, %v663, %v1188
        %v1192 = vsel %vm1104, 0, %v1190
        %v1193 = vcosq.f32.pop %v1191
        %v1194 = vsinq.f32.pop %v1191
        %vm1195 = vweird.f32 %v663
        %v1196 = vand.u32 %v1192, 3
        %vm1197 = vcmp.lt.s32.totalorder %v1196, 2
        %vm1198 = vcmp.eq.s32.totalorder %v1196, 0
        %v1199 = vxor.u32 %v1194, 2147483648
        %v1200 = vsel %vm1198, %v1193, %v1199
        %vm1201 = vcmp.eq.s32.totalorder %v1196, 2
        %v1202 = vxor.u32 %v1193, 2147483648
        %v1203 = vsel %vm1201, %v1202, %v1194
        %v1204 = vsel %vm1197, %v1200, %v1203
        %v1205 = vsel %vm1195, nan, %v1204
        %v1206 = vand.u32 2147483647, %v664
        %vm1207 = vcmp.le.f32.partialorder %v1206, 0.7853982
        %vm1208 = vcmp.lt.s32.totalorder %v664, 0
        %v1209 = vand.u32 %v664, 2139095040
        %v1210 = vshrl.u32 %v1209, 23
        %v1211 = vsub.s32 %v1210, 127
        %v1212 = vand.u32 2147483647, %v664
        %v1213 = vand.u32 %v1212, 8388607
        %v1214 = vor.u32 %v1213, 8388608
        %v1215 = vsub.s32 0, %v1214
        %v1216 = vadd.s32 %v1211, 1
        %vm1217 = vcmp.gt.s32.totalorder %v1216, 0
        %v1218 = vsel %vm1217, %v1216, 0
        %v1219 = vshrl.u32 %v1218, 5
        %v1220 = vand.u32 %v1218, 31
        %v1221 = vsub.s32 32, %v1220
        %v1222 = vshrl.u32 683565275, %v1221
        %v1223 = vshll.u32 683565275, %v1220
        %v1224 = vshrl.u32 2475754826, %v1221
        %v1225 = vor.u32 %v1223, %v1224
        %v1226 = vshll.u32 2475754826, %v1220
        %v1227 = vshrl.u32 2131351028, %v1221
        %v1228 = vor.u32 %v1226, %v1227
        %v1229 = vshll.u32 2131351028, %v1220
        %v1230 = vshrl.u32 2102212464, %v1221
        %v1231 = vor.u32 %v1229, %v1230
        %v1232 = vshll.u32 2102212464, %v1220
        %v1233 = vshrl.u32 920167782, %v1221
        %v1234 = vor.u32 %v1232, %v1233
        %v1235 = vshll.u32 920167782, %v1220
        %v1236 = vshrl.u32 1326507024, %v1221
        %v1237 = vor.u32 %v1235, %v1236
        %vm1238 = vcmp.lt.s32.totalorder %v1219, 1
        %vm1239 = vcmp.lt.s32.totalorder %v1219, 2
        %vm1240 = vcmp.lt.s32.totalorder %v1219, 3
        %vm1241 = vcmp.lt.s32.totalorder %v1219, 4
        %v1242 = vsel %vm1238, %v1222, %v1225
        %v1243 = vsel %vm1241, %v1231, 2102212464
        %v1244 = vsel %vm1240, %v1228, %v1243
        %v1245 = vsel %vm1239, %v1242, %v1244
        %v1246 = vsel %vm1238, %v1225, %v1228
        %v1247 = vsel %vm1241, %v1234, 920167782
        %v1248 = vsel %vm1240, %v1231, %v1247
        %v1249 = vsel %vm1239, %v1246, %v1248
        %v1250 = vsel %vm1238, %v1228, %v1231
        %v1251 = vsel %vm1241, %v1237, 1326507024
        %v1252 = vsel %vm1240, %v1234, %v1251
        %v1253 = vsel %vm1239, %v1250, %v1252
        %v1254 = vshll.u32 %v1214, 8
        %v1255 = vmul.u32.u64.compose %v1254, %v1253
        %v1256 = vextract.low.u32 %v1255
        %v1257 = vextract.high.u32 %v1255
        %v1258 = vmul.u32.u64.compose %v1254, %v1249
        %v1259 = vextract.low.u32 %v1258
        %v1260 = vextract.high.u32 %v1258
        %v1261 = vmul.u32 %v1254, %v1245
        %v1262 = vadd.s32 %v1257, %v1259
        %vm1263 = vc.u32 %v1257, %v1259
        %v1264 = vadd.s32 %v1260, 1
        %v1265 = vsel %vm1263, %v1264, %v1260
        %v1266 = vadd.s32 %v1261, %v1265
        %v1267 = vadd.s32 %v1266, 536870912
        %v1268 = vshrl.u32 %v1267, 30
        %v1269 = vshll.u32 %v1268, 30
        %v1270 = vsub.s32 %v1266, %v1269
        %vm1271 = vcmp.lt.s32.totalorder %v1270, 0
        %v1272 = vsub.s32 0, %v1270
        %v1273 = vsel %vm1271, %v1272, %v1270
        %v1274 = vclz %v1273
        %v1275 = vsub.s32 %v1274, 2
        %vm1276 = vcmp.gt.s32.totalorder 0, %v1275
        %v1277 = vsel %vm1276, 0, %v1275
        %v1278 = vsub.s32 32, %v1277
        %v1279 = vshll.u32 %v1270, %v1277
        %v1280 = vshrl.u32 %v1262, %v1278
        %v1281 = vor.u32 %v1279, %v1280
        %v1282 = vsub.s32 4294967266, %v1277
        %v1283 = vadd.s32 %v1282, 127
        %v1284 = vshll.u32 %v1283, 23
        %v1285 = vor.u32 4788187, %v1284
        %v1286 = vand.u32 2147483647, %v1285
        %v1288 = vcvt.s32.f32 %v1281
        %v1289 = vmul.f32 %v1288, %v1286
        %v1290 = vxor.u32 %v1289, 2147483648
        %v1291 = vsel %vm1208, %v1290, %v1289
        %v1292 = vsub.s32 4, %v1268
        %v1293 = vsel %vm1208, %v1292, %v1268
        %v1294 = vsel %vm1207, %v664, %v1291
        %v1295 = vsel %vm1207, 0, %v1293
        %v1296 = vcosq.f32.pop %v1294
        %v1297 = vsinq.f32.pop %v1294
        %vm1298 = vweird.f32 %v664
        %v1299 = vand.u32 %v1295, 3
        %vm1300 = vcmp.lt.s32.totalorder %v1299, 2
        %vm1301 = vcmp.eq.s32.totalorder %v1299, 0
        %v1302 = vxor.u32 %v1297, 2147483648
        %v1303 = vsel %vm1301, %v1296, %v1302
        %vm1304 = vcmp.eq.s32.totalorder %v1299, 2
        %v1305 = vxor.u32 %v1296, 2147483648
        %v1306 = vsel %vm1304, %v1305, %v1297
        %v1307 = vsel %vm1300, %v1303, %v1306
        %v1308 = vsel %vm1298, nan, %v1307
        %v1309 = vand.u32 2147483647, %v665
        %vm1310 = vcmp.le.f32.partialorder %v1309, 0.7853982
        %vm1311 = vcmp.lt.s32.totalorder %v665, 0
        %v1312 = vand.u32 %v665, 2139095040
        %v1313 = vshrl.u32 %v1312, 23
        %v1314 = vsub.s32 %v1313, 127
        %v1315 = vand.u32 2147483647, %v665
        %v1316 = vand.u32 %v1315, 8388607
        %v1317 = vor.u32 %v1316, 8388608
        %v1318 = vsub.s32 0, %v1317
        %v1319 = vadd.s32 %v1314, 1
        %vm1320 = vcmp.gt.s32.totalorder %v1319, 0
        %v1321 = vsel %vm1320, %v1319, 0
        %v1322 = vshrl.u32 %v1321, 5
        %v1323 = vand.u32 %v1321, 31
        %v1324 = vsub.s32 32, %v1323
        %v1325 = vshrl.u32 683565275, %v1324
        %v1326 = vshll.u32 683565275, %v1323
        %v1327 = vshrl.u32 2475754826, %v1324
        %v1328 = vor.u32 %v1326, %v1327
        %v1329 = vshll.u32 2475754826, %v1323
        %v1330 = vshrl.u32 2131351028, %v1324
        %v1331 = vor.u32 %v1329, %v1330
        %v1332 = vshll.u32 2131351028, %v1323
        %v1333 = vshrl.u32 2102212464, %v1324
        %v1334 = vor.u32 %v1332, %v1333
        %v1335 = vshll.u32 2102212464, %v1323
        %v1336 = vshrl.u32 920167782, %v1324
        %v1337 = vor.u32 %v1335, %v1336
        %v1338 = vshll.u32 920167782, %v1323
        %v1339 = vshrl.u32 1326507024, %v1324
        %v1340 = vor.u32 %v1338, %v1339
        %vm1341 = vcmp.lt.s32.totalorder %v1322, 1
        %vm1342 = vcmp.lt.s32.totalorder %v1322, 2
        %vm1343 = vcmp.lt.s32.totalorder %v1322, 3
        %vm1344 = vcmp.lt.s32.totalorder %v1322, 4
        %v1345 = vsel %vm1341, %v1325, %v1328
        %v1346 = vsel %vm1344, %v1334, 2102212464
        %v1347 = vsel %vm1343, %v1331, %v1346
        %v1348 = vsel %vm1342, %v1345, %v1347
        %v1349 = vsel %vm1341, %v1328, %v1331
        %v1350 = vsel %vm1344, %v1337, 920167782
        %v1351 = vsel %vm1343, %v1334, %v1350
        %v1352 = vsel %vm1342, %v1349, %v1351
        %v1353 = vsel %vm1341, %v1331, %v1334
        %v1354 = vsel %vm1344, %v1340, 1326507024
        %v1355 = vsel %vm1343, %v1337, %v1354
        %v1356 = vsel %vm1342, %v1353, %v1355
        %v1357 = vshll.u32 %v1317, 8
        %v1358 = vmul.u32.u64.compose %v1357, %v1356
        %v1359 = vextract.low.u32 %v1358
        %v1360 = vextract.high.u32 %v1358
        %v1361 = vmul.u32.u64.compose %v1357, %v1352
        %v1362 = vextract.low.u32 %v1361
        %v1363 = vextract.high.u32 %v1361
        %v1364 = vmul.u32 %v1357, %v1348
        %v1365 = vadd.s32 %v1360, %v1362
        %vm1366 = vc.u32 %v1360, %v1362
        %v1367 = vadd.s32 %v1363, 1
        %v1368 = vsel %vm1366, %v1367, %v1363
        %v1369 = vadd.s32 %v1364, %v1368
        %v1370 = vadd.s32 %v1369, 536870912
        %v1371 = vshrl.u32 %v1370, 30
        %v1372 = vshll.u32 %v1371, 30
        %v1373 = vsub.s32 %v1369, %v1372
        %vm1374 = vcmp.lt.s32.totalorder %v1373, 0
        %v1375 = vsub.s32 0, %v1373
        %v1376 = vsel %vm1374, %v1375, %v1373
        %v1377 = vclz %v1376
        %v1378 = vsub.s32 %v1377, 2
        %vm1379 = vcmp.gt.s32.totalorder 0, %v1378
        %v1380 = vsel %vm1379, 0, %v1378
        %v1381 = vsub.s32 32, %v1380
        %v1382 = vshll.u32 %v1373, %v1380
        %v1383 = vshrl.u32 %v1365, %v1381
        %v1384 = vor.u32 %v1382, %v1383
        %v1385 = vsub.s32 4294967266, %v1380
        %v1386 = vadd.s32 %v1385, 127
        %v1387 = vshll.u32 %v1386, 23
        %v1388 = vor.u32 4788187, %v1387
        %v1389 = vand.u32 2147483647, %v1388
        %v1391 = vcvt.s32.f32 %v1384
        %v1392 = vmul.f32 %v1391, %v1389
        %v1393 = vxor.u32 %v1392, 2147483648
        %v1394 = vsel %vm1311, %v1393, %v1392
        %v1395 = vsub.s32 4, %v1371
        %v1396 = vsel %vm1311, %v1395, %v1371
        %v1397 = vsel %vm1310, %v665, %v1394
        %v1398 = vsel %vm1310, 0, %v1396
        %v1399 = vcosq.f32.pop %v1397
        %v1400 = vsinq.f32.pop %v1397
        %vm1401 = vweird.f32 %v665
        %v1402 = vand.u32 %v1398, 3
        %vm1403 = vcmp.lt.s32.totalorder %v1402, 2
        %vm1404 = vcmp.eq.s32.totalorder %v1402, 0
        %v1405 = vxor.u32 %v1400, 2147483648
        %v1406 = vsel %vm1404, %v1399, %v1405
        %vm1407 = vcmp.eq.s32.totalorder %v1402, 2
        %v1408 = vxor.u32 %v1399, 2147483648
        %v1409 = vsel %vm1407, %v1408, %v1400
        %v1410 = vsel %vm1403, %v1406, %v1409
        %v1411 = vsel %vm1401, nan, %v1410
        %v1412 = vand.u32 2147483647, %v666
        %vm1413 = vcmp.le.f32.partialorder %v1412, 0.7853982
        %vm1414 = vcmp.lt.s32.totalorder %v666, 0
        %v1415 = vand.u32 %v666, 2139095040
        %v1416 = vshrl.u32 %v1415, 23
        %v1417 = vsub.s32 %v1416, 127
        %v1418 = vand.u32 2147483647, %v666
        %v1419 = vand.u32 %v1418, 8388607
        %v1420 = vor.u32 %v1419, 8388608
        %v1421 = vsub.s32 0, %v1420
        %v1422 = vadd.s32 %v1417, 1
        %vm1423 = vcmp.gt.s32.totalorder %v1422, 0
        %v1424 = vsel %vm1423, %v1422, 0
        %v1425 = vshrl.u32 %v1424, 5
        %v1426 = vand.u32 %v1424, 31
        %v1427 = vsub.s32 32, %v1426
        %v1428 = vshrl.u32 683565275, %v1427
        %v1429 = vshll.u32 683565275, %v1426
        %v1430 = vshrl.u32 2475754826, %v1427
        %v1431 = vor.u32 %v1429, %v1430
        %v1432 = vshll.u32 2475754826, %v1426
        %v1433 = vshrl.u32 2131351028, %v1427
        %v1434 = vor.u32 %v1432, %v1433
        %v1435 = vshll.u32 2131351028, %v1426
        %v1436 = vshrl.u32 2102212464, %v1427
        %v1437 = vor.u32 %v1435, %v1436
        %v1438 = vshll.u32 2102212464, %v1426
        %v1439 = vshrl.u32 920167782, %v1427
        %v1440 = vor.u32 %v1438, %v1439
        %v1441 = vshll.u32 920167782, %v1426
        %v1442 = vshrl.u32 1326507024, %v1427
        %v1443 = vor.u32 %v1441, %v1442
        %vm1444 = vcmp.lt.s32.totalorder %v1425, 1
        %vm1445 = vcmp.lt.s32.totalorder %v1425, 2
        %vm1446 = vcmp.lt.s32.totalorder %v1425, 3
        %vm1447 = vcmp.lt.s32.totalorder %v1425, 4
        %v1448 = vsel %vm1444, %v1428, %v1431
        %v1449 = vsel %vm1447, %v1437, 2102212464
        %v1450 = vsel %vm1446, %v1434, %v1449
        %v1451 = vsel %vm1445, %v1448, %v1450
        %v1452 = vsel %vm1444, %v1431, %v1434
        %v1453 = vsel %vm1447, %v1440, 920167782
        %v1454 = vsel %vm1446, %v1437, %v1453
        %v1455 = vsel %vm1445, %v1452, %v1454
        %v1456 = vsel %vm1444, %v1434, %v1437
        %v1457 = vsel %vm1447, %v1443, 1326507024
        %v1458 = vsel %vm1446, %v1440, %v1457
        %v1459 = vsel %vm1445, %v1456, %v1458
        %v1460 = vshll.u32 %v1420, 8
        %v1461 = vmul.u32.u64.compose %v1460, %v1459
        %v1462 = vextract.low.u32 %v1461
        %v1463 = vextract.high.u32 %v1461
        %v1464 = vmul.u32.u64.compose %v1460, %v1455
        %v1465 = vextract.low.u32 %v1464
        %v1466 = vextract.high.u32 %v1464
        %v1467 = vmul.u32 %v1460, %v1451
        %v1468 = vadd.s32 %v1463, %v1465
        %vm1469 = vc.u32 %v1463, %v1465
        %v1470 = vadd.s32 %v1466, 1
        %v1471 = vsel %vm1469, %v1470, %v1466
        %v1472 = vadd.s32 %v1467, %v1471
        %v1473 = vadd.s32 %v1472, 536870912
        %v1474 = vshrl.u32 %v1473, 30
        %v1475 = vshll.u32 %v1474, 30
        %v1476 = vsub.s32 %v1472, %v1475
        %vm1477 = vcmp.lt.s32.totalorder %v1476, 0
        %v1478 = vsub.s32 0, %v1476
        %v1479 = vsel %vm1477, %v1478, %v1476
        %v1480 = vclz %v1479
        %v1481 = vsub.s32 %v1480, 2
        %vm1482 = vcmp.gt.s32.totalorder 0, %v1481
        %v1483 = vsel %vm1482, 0, %v1481
        %v1484 = vsub.s32 32, %v1483
        %v1485 = vshll.u32 %v1476, %v1483
        %v1486 = vshrl.u32 %v1468, %v1484
        %v1487 = vor.u32 %v1485, %v1486
        %v1488 = vsub.s32 4294967266, %v1483
        %v1489 = vadd.s32 %v1488, 127
        %v1490 = vshll.u32 %v1489, 23
        %v1491 = vor.u32 4788187, %v1490
        %v1492 = vand.u32 2147483647, %v1491
        %v1494 = vcvt.s32.f32 %v1487
        %v1495 = vmul.f32 %v1494, %v1492
        %v1496 = vxor.u32 %v1495, 2147483648
        %v1497 = vsel %vm1414, %v1496, %v1495
        %v1498 = vsub.s32 4, %v1474
        %v1499 = vsel %vm1414, %v1498, %v1474
        %v1500 = vsel %vm1413, %v666, %v1497
        %v1501 = vsel %vm1413, 0, %v1499
        %v1502 = vcosq.f32.pop %v1500
        %v1503 = vsinq.f32.pop %v1500
        %vm1504 = vweird.f32 %v666
        %v1505 = vand.u32 %v1501, 3
        %vm1506 = vcmp.lt.s32.totalorder %v1505, 2
        %vm1507 = vcmp.eq.s32.totalorder %v1505, 0
        %v1508 = vxor.u32 %v1503, 2147483648
        %v1509 = vsel %vm1507, %v1502, %v1508
        %vm1510 = vcmp.eq.s32.totalorder %v1505, 2
        %v1511 = vxor.u32 %v1502, 2147483648
        %v1512 = vsel %vm1510, %v1511, %v1503
        %v1513 = vsel %vm1506, %v1509, %v1512
        %v1514 = vsel %vm1504, nan, %v1513
        %v1515 = vand.u32 2147483647, %v667
        %vm1516 = vcmp.le.f32.partialorder %v1515, 0.7853982
        %vm1517 = vcmp.lt.s32.totalorder %v667, 0
        %v1518 = vand.u32 %v667, 2139095040
        %v1519 = vshrl.u32 %v1518, 23
        %v1520 = vsub.s32 %v1519, 127
        %v1521 = vand.u32 2147483647, %v667
        %v1522 = vand.u32 %v1521, 8388607
        %v1523 = vor.u32 %v1522, 8388608
        %v1524 = vsub.s32 0, %v1523
        %v1525 = vadd.s32 %v1520, 1
        %vm1526 = vcmp.gt.s32.totalorder %v1525, 0
        %v1527 = vsel %vm1526, %v1525, 0
        %v1528 = vshrl.u32 %v1527, 5
        %v1529 = vand.u32 %v1527, 31
        %v1530 = vsub.s32 32, %v1529
        %v1531 = vshrl.u32 683565275, %v1530
        %v1532 = vshll.u32 683565275, %v1529
        %v1533 = vshrl.u32 2475754826, %v1530
        %v1534 = vor.u32 %v1532, %v1533
        %v1535 = vshll.u32 2475754826, %v1529
        %v1536 = vshrl.u32 2131351028, %v1530
        %v1537 = vor.u32 %v1535, %v1536
        %v1538 = vshll.u32 2131351028, %v1529
        %v1539 = vshrl.u32 2102212464, %v1530
        %v1540 = vor.u32 %v1538, %v1539
        %v1541 = vshll.u32 2102212464, %v1529
        %v1542 = vshrl.u32 920167782, %v1530
        %v1543 = vor.u32 %v1541, %v1542
        %v1544 = vshll.u32 920167782, %v1529
        %v1545 = vshrl.u32 1326507024, %v1530
        %v1546 = vor.u32 %v1544, %v1545
        %vm1547 = vcmp.lt.s32.totalorder %v1528, 1
        %vm1548 = vcmp.lt.s32.totalorder %v1528, 2
        %vm1549 = vcmp.lt.s32.totalorder %v1528, 3
        %vm1550 = vcmp.lt.s32.totalorder %v1528, 4
        %v1551 = vsel %vm1547, %v1531, %v1534
        %v1552 = vsel %vm1550, %v1540, 2102212464
        %v1553 = vsel %vm1549, %v1537, %v1552
        %v1554 = vsel %vm1548, %v1551, %v1553
        %v1555 = vsel %vm1547, %v1534, %v1537
        %v1556 = vsel %vm1550, %v1543, 920167782
        %v1557 = vsel %vm1549, %v1540, %v1556
        %v1558 = vsel %vm1548, %v1555, %v1557
        %v1559 = vsel %vm1547, %v1537, %v1540
        %v1560 = vsel %vm1550, %v1546, 1326507024
        %v1561 = vsel %vm1549, %v1543, %v1560
        %v1562 = vsel %vm1548, %v1559, %v1561
        %v1563 = vshll.u32 %v1523, 8
        %v1564 = vmul.u32.u64.compose %v1563, %v1562
        %v1565 = vextract.low.u32 %v1564
        %v1566 = vextract.high.u32 %v1564
        %v1567 = vmul.u32.u64.compose %v1563, %v1558
        %v1568 = vextract.low.u32 %v1567
        %v1569 = vextract.high.u32 %v1567
        %v1570 = vmul.u32 %v1563, %v1554
        %v1571 = vadd.s32 %v1566, %v1568
        %vm1572 = vc.u32 %v1566, %v1568
        %v1573 = vadd.s32 %v1569, 1
        %v1574 = vsel %vm1572, %v1573, %v1569
        %v1575 = vadd.s32 %v1570, %v1574
        %v1576 = vadd.s32 %v1575, 536870912
        %v1577 = vshrl.u32 %v1576, 30
        %v1578 = vshll.u32 %v1577, 30
        %v1579 = vsub.s32 %v1575, %v1578
        %vm1580 = vcmp.lt.s32.totalorder %v1579, 0
        %v1581 = vsub.s32 0, %v1579
        %v1582 = vsel %vm1580, %v1581, %v1579
        %v1583 = vclz %v1582
        %v1584 = vsub.s32 %v1583, 2
        %vm1585 = vcmp.gt.s32.totalorder 0, %v1584
        %v1586 = vsel %vm1585, 0, %v1584
        %v1587 = vsub.s32 32, %v1586
        %v1588 = vshll.u32 %v1579, %v1586
        %v1589 = vshrl.u32 %v1571, %v1587
        %v1590 = vor.u32 %v1588, %v1589
        %v1591 = vsub.s32 4294967266, %v1586
        %v1592 = vadd.s32 %v1591, 127
        %v1593 = vshll.u32 %v1592, 23
        %v1594 = vor.u32 4788187, %v1593
        %v1595 = vand.u32 2147483647, %v1594
        %v1597 = vcvt.s32.f32 %v1590
        %v1598 = vmul.f32 %v1597, %v1595
        %v1599 = vxor.u32 %v1598, 2147483648
        %v1600 = vsel %vm1517, %v1599, %v1598
        %v1601 = vsub.s32 4, %v1577
        %v1602 = vsel %vm1517, %v1601, %v1577
        %v1603 = vsel %vm1516, %v667, %v1600
        %v1604 = vsel %vm1516, 0, %v1602
        %v1605 = vcosq.f32.pop %v1603
        %v1606 = vsinq.f32.pop %v1603
        %vm1607 = vweird.f32 %v667
        %v1608 = vand.u32 %v1604, 3
        %vm1609 = vcmp.lt.s32.totalorder %v1608, 2
        %vm1610 = vcmp.eq.s32.totalorder %v1608, 0
        %v1611 = vxor.u32 %v1606, 2147483648
        %v1612 = vsel %vm1610, %v1605, %v1611
        %vm1613 = vcmp.eq.s32.totalorder %v1608, 2
        %v1614 = vxor.u32 %v1605, 2147483648
        %v1615 = vsel %vm1613, %v1614, %v1606
        %v1616 = vsel %vm1609, %v1612, %v1615
        %v1617 = vsel %vm1607, nan, %v1616
        %v1618 = vand.u32 2147483647, %v668
        %vm1619 = vcmp.le.f32.partialorder %v1618, 0.7853982
        %vm1620 = vcmp.lt.s32.totalorder %v668, 0
        %v1621 = vand.u32 %v668, 2139095040
        %v1622 = vshrl.u32 %v1621, 23
        %v1623 = vsub.s32 %v1622, 127
        %v1624 = vand.u32 2147483647, %v668
        %v1625 = vand.u32 %v1624, 8388607
        %v1626 = vor.u32 %v1625, 8388608
        %v1627 = vsub.s32 0, %v1626
        %v1628 = vadd.s32 %v1623, 1
        %vm1629 = vcmp.gt.s32.totalorder %v1628, 0
        %v1630 = vsel %vm1629, %v1628, 0
        %v1631 = vshrl.u32 %v1630, 5
        %v1632 = vand.u32 %v1630, 31
        %v1633 = vsub.s32 32, %v1632
        %v1634 = vshrl.u32 683565275, %v1633
        %v1635 = vshll.u32 683565275, %v1632
        %v1636 = vshrl.u32 2475754826, %v1633
        %v1637 = vor.u32 %v1635, %v1636
        %v1638 = vshll.u32 2475754826, %v1632
        %v1639 = vshrl.u32 2131351028, %v1633
        %v1640 = vor.u32 %v1638, %v1639
        %v1641 = vshll.u32 2131351028, %v1632
        %v1642 = vshrl.u32 2102212464, %v1633
        %v1643 = vor.u32 %v1641, %v1642
        %v1644 = vshll.u32 2102212464, %v1632
        %v1645 = vshrl.u32 920167782, %v1633
        %v1646 = vor.u32 %v1644, %v1645
        %v1647 = vshll.u32 920167782, %v1632
        %v1648 = vshrl.u32 1326507024, %v1633
        %v1649 = vor.u32 %v1647, %v1648
        %vm1650 = vcmp.lt.s32.totalorder %v1631, 1
        %vm1651 = vcmp.lt.s32.totalorder %v1631, 2
        %vm1652 = vcmp.lt.s32.totalorder %v1631, 3
        %vm1653 = vcmp.lt.s32.totalorder %v1631, 4
        %v1654 = vsel %vm1650, %v1634, %v1637
        %v1655 = vsel %vm1653, %v1643, 2102212464
        %v1656 = vsel %vm1652, %v1640, %v1655
        %v1657 = vsel %vm1651, %v1654, %v1656
        %v1658 = vsel %vm1650, %v1637, %v1640
        %v1659 = vsel %vm1653, %v1646, 920167782
        %v1660 = vsel %vm1652, %v1643, %v1659
        %v1661 = vsel %vm1651, %v1658, %v1660
        %v1662 = vsel %vm1650, %v1640, %v1643
        %v1663 = vsel %vm1653, %v1649, 1326507024
        %v1664 = vsel %vm1652, %v1646, %v1663
        %v1665 = vsel %vm1651, %v1662, %v1664
        %v1666 = vshll.u32 %v1626, 8
        %v1667 = vmul.u32.u64.compose %v1666, %v1665
        %v1668 = vextract.low.u32 %v1667
        %v1669 = vextract.high.u32 %v1667
        %v1670 = vmul.u32.u64.compose %v1666, %v1661
        %v1671 = vextract.low.u32 %v1670
        %v1672 = vextract.high.u32 %v1670
        %v1673 = vmul.u32 %v1666, %v1657
        %v1674 = vadd.s32 %v1669, %v1671
        %vm1675 = vc.u32 %v1669, %v1671
        %v1676 = vadd.s32 %v1672, 1
        %v1677 = vsel %vm1675, %v1676, %v1672
        %v1678 = vadd.s32 %v1673, %v1677
        %v1679 = vadd.s32 %v1678, 536870912
        %v1680 = vshrl.u32 %v1679, 30
        %v1681 = vshll.u32 %v1680, 30
        %v1682 = vsub.s32 %v1678, %v1681
        %vm1683 = vcmp.lt.s32.totalorder %v1682, 0
        %v1684 = vsub.s32 0, %v1682
        %v1685 = vsel %vm1683, %v1684, %v1682
        %v1686 = vclz %v1685
        %v1687 = vsub.s32 %v1686, 2
        %vm1688 = vcmp.gt.s32.totalorder 0, %v1687
        %v1689 = vsel %vm1688, 0, %v1687
        %v1690 = vsub.s32 32, %v1689
        %v1691 = vshll.u32 %v1682, %v1689
        %v1692 = vshrl.u32 %v1674, %v1690
        %v1693 = vor.u32 %v1691, %v1692
        %v1694 = vsub.s32 4294967266, %v1689
        %v1695 = vadd.s32 %v1694, 127
        %v1696 = vshll.u32 %v1695, 23
        %v1697 = vor.u32 4788187, %v1696
        %v1698 = vand.u32 2147483647, %v1697
        %v1700 = vcvt.s32.f32 %v1693
        %v1701 = vmul.f32 %v1700, %v1698
        %v1702 = vxor.u32 %v1701, 2147483648
        %v1703 = vsel %vm1620, %v1702, %v1701
        %v1704 = vsub.s32 4, %v1680
        %v1705 = vsel %vm1620, %v1704, %v1680
        %v1706 = vsel %vm1619, %v668, %v1703
        %v1707 = vsel %vm1619, 0, %v1705
        %v1708 = vcosq.f32.pop %v1706
        %v1709 = vsinq.f32.pop %v1706
        %vm1710 = vweird.f32 %v668
        %v1711 = vand.u32 %v1707, 3
        %vm1712 = vcmp.lt.s32.totalorder %v1711, 2
        %vm1713 = vcmp.eq.s32.totalorder %v1711, 0
        %v1714 = vxor.u32 %v1709, 2147483648
        %v1715 = vsel %vm1713, %v1708, %v1714
        %vm1716 = vcmp.eq.s32.totalorder %v1711, 2
        %v1717 = vxor.u32 %v1708, 2147483648
        %v1718 = vsel %vm1716, %v1717, %v1709
        %v1719 = vsel %vm1712, %v1715, %v1718
        %v1720 = vsel %vm1710, nan, %v1719
        %v1721 = vand.u32 2147483647, %v669
        %vm1722 = vcmp.le.f32.partialorder %v1721, 0.7853982
        %vm1723 = vcmp.lt.s32.totalorder %v669, 0
        %v1724 = vand.u32 %v669, 2139095040
        %v1725 = vshrl.u32 %v1724, 23
        %v1726 = vsub.s32 %v1725, 127
        %v1727 = vand.u32 2147483647, %v669
        %v1728 = vand.u32 %v1727, 8388607
        %v1729 = vor.u32 %v1728, 8388608
        %v1730 = vsub.s32 0, %v1729
        %v1731 = vadd.s32 %v1726, 1
        %vm1732 = vcmp.gt.s32.totalorder %v1731, 0
        %v1733 = vsel %vm1732, %v1731, 0
        %v1734 = vshrl.u32 %v1733, 5
        %v1735 = vand.u32 %v1733, 31
        %v1736 = vsub.s32 32, %v1735
        %v1737 = vshrl.u32 683565275, %v1736
        %v1738 = vshll.u32 683565275, %v1735
        %v1739 = vshrl.u32 2475754826, %v1736
        %v1740 = vor.u32 %v1738, %v1739
        %v1741 = vshll.u32 2475754826, %v1735
        %v1742 = vshrl.u32 2131351028, %v1736
        %v1743 = vor.u32 %v1741, %v1742
        %v1744 = vshll.u32 2131351028, %v1735
        %v1745 = vshrl.u32 2102212464, %v1736
        %v1746 = vor.u32 %v1744, %v1745
        %v1747 = vshll.u32 2102212464, %v1735
        %v1748 = vshrl.u32 920167782, %v1736
        %v1749 = vor.u32 %v1747, %v1748
        %v1750 = vshll.u32 920167782, %v1735
        %v1751 = vshrl.u32 1326507024, %v1736
        %v1752 = vor.u32 %v1750, %v1751
        %vm1753 = vcmp.lt.s32.totalorder %v1734, 1
        %vm1754 = vcmp.lt.s32.totalorder %v1734, 2
        %vm1755 = vcmp.lt.s32.totalorder %v1734, 3
        %vm1756 = vcmp.lt.s32.totalorder %v1734, 4
        %v1757 = vsel %vm1753, %v1737, %v1740
        %v1758 = vsel %vm1756, %v1746, 2102212464
        %v1759 = vsel %vm1755, %v1743, %v1758
        %v1760 = vsel %vm1754, %v1757, %v1759
        %v1761 = vsel %vm1753, %v1740, %v1743
        %v1762 = vsel %vm1756, %v1749, 920167782
        %v1763 = vsel %vm1755, %v1746, %v1762
        %v1764 = vsel %vm1754, %v1761, %v1763
        %v1765 = vsel %vm1753, %v1743, %v1746
        %v1766 = vsel %vm1756, %v1752, 1326507024
        %v1767 = vsel %vm1755, %v1749, %v1766
        %v1768 = vsel %vm1754, %v1765, %v1767
        %v1769 = vshll.u32 %v1729, 8
        %v1770 = vmul.u32.u64.compose %v1769, %v1768
        %v1771 = vextract.low.u32 %v1770
        %v1772 = vextract.high.u32 %v1770
        %v1773 = vmul.u32.u64.compose %v1769, %v1764
        %v1774 = vextract.low.u32 %v1773
        %v1775 = vextract.high.u32 %v1773
        %v1776 = vmul.u32 %v1769, %v1760
        %v1777 = vadd.s32 %v1772, %v1774
        %vm1778 = vc.u32 %v1772, %v1774
        %v1779 = vadd.s32 %v1775, 1
        %v1780 = vsel %vm1778, %v1779, %v1775
        %v1781 = vadd.s32 %v1776, %v1780
        %v1782 = vadd.s32 %v1781, 536870912
        %v1783 = vshrl.u32 %v1782, 30
        %v1784 = vshll.u32 %v1783, 30
        %v1785 = vsub.s32 %v1781, %v1784
        %vm1786 = vcmp.lt.s32.totalorder %v1785, 0
        %v1787 = vsub.s32 0, %v1785
        %v1788 = vsel %vm1786, %v1787, %v1785
        %v1789 = vclz %v1788
        %v1790 = vsub.s32 %v1789, 2
        %vm1791 = vcmp.gt.s32.totalorder 0, %v1790
        %v1792 = vsel %vm1791, 0, %v1790
        %v1793 = vsub.s32 32, %v1792
        %v1794 = vshll.u32 %v1785, %v1792
        %v1795 = vshrl.u32 %v1777, %v1793
        %v1796 = vor.u32 %v1794, %v1795
        %v1797 = vsub.s32 4294967266, %v1792
        %v1798 = vadd.s32 %v1797, 127
        %v1799 = vshll.u32 %v1798, 23
        %v1800 = vor.u32 4788187, %v1799
        %v1801 = vand.u32 2147483647, %v1800
        %v1803 = vcvt.s32.f32 %v1796
        %v1804 = vmul.f32 %v1803, %v1801
        %v1805 = vxor.u32 %v1804, 2147483648
        %v1806 = vsel %vm1723, %v1805, %v1804
        %v1807 = vsub.s32 4, %v1783
        %v1808 = vsel %vm1723, %v1807, %v1783
        %v1809 = vsel %vm1722, %v669, %v1806
        %v1810 = vsel %vm1722, 0, %v1808
        %v1811 = vcosq.f32.pop %v1809
        %v1812 = vsinq.f32.pop %v1809
        %vm1813 = vweird.f32 %v669
        %v1814 = vand.u32 %v1810, 3
        %vm1815 = vcmp.lt.s32.totalorder %v1814, 2
        %vm1816 = vcmp.eq.s32.totalorder %v1814, 0
        %v1817 = vxor.u32 %v1812, 2147483648
        %v1818 = vsel %vm1816, %v1811, %v1817
        %vm1819 = vcmp.eq.s32.totalorder %v1814, 2
        %v1820 = vxor.u32 %v1811, 2147483648
        %v1821 = vsel %vm1819, %v1820, %v1812
        %v1822 = vsel %vm1815, %v1818, %v1821
        %v1823 = vsel %vm1813, nan, %v1822
        %v1824 = vand.u32 2147483647, %v670
        %vm1825 = vcmp.le.f32.partialorder %v1824, 0.7853982
        %vm1826 = vcmp.lt.s32.totalorder %v670, 0
        %v1827 = vand.u32 %v670, 2139095040
        %v1828 = vshrl.u32 %v1827, 23
        %v1829 = vsub.s32 %v1828, 127
        %v1830 = vand.u32 2147483647, %v670
        %v1831 = vand.u32 %v1830, 8388607
        %v1832 = vor.u32 %v1831, 8388608
        %v1833 = vsub.s32 0, %v1832
        %v1834 = vadd.s32 %v1829, 1
        %vm1835 = vcmp.gt.s32.totalorder %v1834, 0
        %v1836 = vsel %vm1835, %v1834, 0
        %v1837 = vshrl.u32 %v1836, 5
        %v1838 = vand.u32 %v1836, 31
        %v1839 = vsub.s32 32, %v1838
        %v1840 = vshrl.u32 683565275, %v1839
        %v1841 = vshll.u32 683565275, %v1838
        %v1842 = vshrl.u32 2475754826, %v1839
        %v1843 = vor.u32 %v1841, %v1842
        %v1844 = vshll.u32 2475754826, %v1838
        %v1845 = vshrl.u32 2131351028, %v1839
        %v1846 = vor.u32 %v1844, %v1845
        %v1847 = vshll.u32 2131351028, %v1838
        %v1848 = vshrl.u32 2102212464, %v1839
        %v1849 = vor.u32 %v1847, %v1848
        %v1850 = vshll.u32 2102212464, %v1838
        %v1851 = vshrl.u32 920167782, %v1839
        %v1852 = vor.u32 %v1850, %v1851
        %v1853 = vshll.u32 920167782, %v1838
        %v1854 = vshrl.u32 1326507024, %v1839
        %v1855 = vor.u32 %v1853, %v1854
        %vm1856 = vcmp.lt.s32.totalorder %v1837, 1
        %vm1857 = vcmp.lt.s32.totalorder %v1837, 2
        %vm1858 = vcmp.lt.s32.totalorder %v1837, 3
        %vm1859 = vcmp.lt.s32.totalorder %v1837, 4
        %v1860 = vsel %vm1856, %v1840, %v1843
        %v1861 = vsel %vm1859, %v1849, 2102212464
        %v1862 = vsel %vm1858, %v1846, %v1861
        %v1863 = vsel %vm1857, %v1860, %v1862
        %v1864 = vsel %vm1856, %v1843, %v1846
        %v1865 = vsel %vm1859, %v1852, 920167782
        %v1866 = vsel %vm1858, %v1849, %v1865
        %v1867 = vsel %vm1857, %v1864, %v1866
        %v1868 = vsel %vm1856, %v1846, %v1849
        %v1869 = vsel %vm1859, %v1855, 1326507024
        %v1870 = vsel %vm1858, %v1852, %v1869
        %v1871 = vsel %vm1857, %v1868, %v1870
        %v1872 = vshll.u32 %v1832, 8
        %v1873 = vmul.u32.u64.compose %v1872, %v1871
        %v1874 = vextract.low.u32 %v1873
        %v1875 = vextract.high.u32 %v1873
        %v1876 = vmul.u32.u64.compose %v1872, %v1867
        %v1877 = vextract.low.u32 %v1876
        %v1878 = vextract.high.u32 %v1876
        %v1879 = vmul.u32 %v1872, %v1863
        %v1880 = vadd.s32 %v1875, %v1877
        %vm1881 = vc.u32 %v1875, %v1877
        %v1882 = vadd.s32 %v1878, 1
        %v1883 = vsel %vm1881, %v1882, %v1878
        %v1884 = vadd.s32 %v1879, %v1883
        %v1885 = vadd.s32 %v1884, 536870912
        %v1886 = vshrl.u32 %v1885, 30
        %v1887 = vshll.u32 %v1886, 30
        %v1888 = vsub.s32 %v1884, %v1887
        %vm1889 = vcmp.lt.s32.totalorder %v1888, 0
        %v1890 = vsub.s32 0, %v1888
        %v1891 = vsel %vm1889, %v1890, %v1888
        %v1892 = vclz %v1891
        %v1893 = vsub.s32 %v1892, 2
        %vm1894 = vcmp.gt.s32.totalorder 0, %v1893
        %v1895 = vsel %vm1894, 0, %v1893
        %v1896 = vsub.s32 32, %v1895
        %v1897 = vshll.u32 %v1888, %v1895
        %v1898 = vshrl.u32 %v1880, %v1896
        %v1899 = vor.u32 %v1897, %v1898
        %v1900 = vsub.s32 4294967266, %v1895
        %v1901 = vadd.s32 %v1900, 127
        %v1902 = vshll.u32 %v1901, 23
        %v1903 = vor.u32 4788187, %v1902
        %v1904 = vand.u32 2147483647, %v1903
        %v1906 = vcvt.s32.f32 %v1899
        %v1907 = vmul.f32 %v1906, %v1904
        %v1908 = vxor.u32 %v1907, 2147483648
        %v1909 = vsel %vm1826, %v1908, %v1907
        %v1910 = vsub.s32 4, %v1886
        %v1911 = vsel %vm1826, %v1910, %v1886
        %v1912 = vsel %vm1825, %v670, %v1909
        %v1913 = vsel %vm1825, 0, %v1911
        %v1914 = vcosq.f32.pop %v1912
        %v1915 = vsinq.f32.pop %v1912
        %vm1916 = vweird.f32 %v670
        %v1917 = vand.u32 %v1913, 3
        %vm1918 = vcmp.lt.s32.totalorder %v1917, 2
        %vm1919 = vcmp.eq.s32.totalorder %v1917, 0
        %v1920 = vxor.u32 %v1915, 2147483648
        %v1921 = vsel %vm1919, %v1914, %v1920
        %vm1922 = vcmp.eq.s32.totalorder %v1917, 2
        %v1923 = vxor.u32 %v1914, 2147483648
        %v1924 = vsel %vm1922, %v1923, %v1915
        %v1925 = vsel %vm1918, %v1921, %v1924
        %v1926 = vsel %vm1916, nan, %v1925
        %v1927 = vand.u32 2147483647, %v671
        %vm1928 = vcmp.le.f32.partialorder %v1927, 0.7853982
        %vm1929 = vcmp.lt.s32.totalorder %v671, 0
        %v1930 = vand.u32 %v671, 2139095040
        %v1931 = vshrl.u32 %v1930, 23
        %v1932 = vsub.s32 %v1931, 127
        %v1933 = vand.u32 2147483647, %v671
        %v1934 = vand.u32 %v1933, 8388607
        %v1935 = vor.u32 %v1934, 8388608
        %v1936 = vsub.s32 0, %v1935
        %v1937 = vadd.s32 %v1932, 1
        %vm1938 = vcmp.gt.s32.totalorder %v1937, 0
        %v1939 = vsel %vm1938, %v1937, 0
        %v1940 = vshrl.u32 %v1939, 5
        %v1941 = vand.u32 %v1939, 31
        %v1942 = vsub.s32 32, %v1941
        %v1943 = vshrl.u32 683565275, %v1942
        %v1944 = vshll.u32 683565275, %v1941
        %v1945 = vshrl.u32 2475754826, %v1942
        %v1946 = vor.u32 %v1944, %v1945
        %v1947 = vshll.u32 2475754826, %v1941
        %v1948 = vshrl.u32 2131351028, %v1942
        %v1949 = vor.u32 %v1947, %v1948
        %v1950 = vshll.u32 2131351028, %v1941
        %v1951 = vshrl.u32 2102212464, %v1942
        %v1952 = vor.u32 %v1950, %v1951
        %v1953 = vshll.u32 2102212464, %v1941
        %v1954 = vshrl.u32 920167782, %v1942
        %v1955 = vor.u32 %v1953, %v1954
        %v1956 = vshll.u32 920167782, %v1941
        %v1957 = vshrl.u32 1326507024, %v1942
        %v1958 = vor.u32 %v1956, %v1957
        %vm1959 = vcmp.lt.s32.totalorder %v1940, 1
        %vm1960 = vcmp.lt.s32.totalorder %v1940, 2
        %vm1961 = vcmp.lt.s32.totalorder %v1940, 3
        %vm1962 = vcmp.lt.s32.totalorder %v1940, 4
        %v1963 = vsel %vm1959, %v1943, %v1946
        %v1964 = vsel %vm1962, %v1952, 2102212464
        %v1965 = vsel %vm1961, %v1949, %v1964
        %v1966 = vsel %vm1960, %v1963, %v1965
        %v1967 = vsel %vm1959, %v1946, %v1949
        %v1968 = vsel %vm1962, %v1955, 920167782
        %v1969 = vsel %vm1961, %v1952, %v1968
        %v1970 = vsel %vm1960, %v1967, %v1969
        %v1971 = vsel %vm1959, %v1949, %v1952
        %v1972 = vsel %vm1962, %v1958, 1326507024
        %v1973 = vsel %vm1961, %v1955, %v1972
        %v1974 = vsel %vm1960, %v1971, %v1973
        %v1975 = vshll.u32 %v1935, 8
        %v1976 = vmul.u32.u64.compose %v1975, %v1974
        %v1977 = vextract.low.u32 %v1976
        %v1978 = vextract.high.u32 %v1976
        %v1979 = vmul.u32.u64.compose %v1975, %v1970
        %v1980 = vextract.low.u32 %v1979
        %v1981 = vextract.high.u32 %v1979
        %v1982 = vmul.u32 %v1975, %v1966
        %v1983 = vadd.s32 %v1978, %v1980
        %vm1984 = vc.u32 %v1978, %v1980
        %v1985 = vadd.s32 %v1981, 1
        %v1986 = vsel %vm1984, %v1985, %v1981
        %v1987 = vadd.s32 %v1982, %v1986
        %v1988 = vadd.s32 %v1987, 536870912
        %v1989 = vshrl.u32 %v1988, 30
        %v1990 = vshll.u32 %v1989, 30
        %v1991 = vsub.s32 %v1987, %v1990
        %vm1992 = vcmp.lt.s32.totalorder %v1991, 0
        %v1993 = vsub.s32 0, %v1991
        %v1994 = vsel %vm1992, %v1993, %v1991
        %v1995 = vclz %v1994
        %v1996 = vsub.s32 %v1995, 2
        %vm1997 = vcmp.gt.s32.totalorder 0, %v1996
        %v1998 = vsel %vm1997, 0, %v1996
        %v1999 = vsub.s32 32, %v1998
        %v2000 = vshll.u32 %v1991, %v1998
        %v2001 = vshrl.u32 %v1983, %v1999
        %v2002 = vor.u32 %v2000, %v2001
        %v2003 = vsub.s32 4294967266, %v1998
        %v2004 = vadd.s32 %v2003, 127
        %v2005 = vshll.u32 %v2004, 23
        %v2006 = vor.u32 4788187, %v2005
        %v2007 = vand.u32 2147483647, %v2006
        %v2009 = vcvt.s32.f32 %v2002
        %v2010 = vmul.f32 %v2009, %v2007
        %v2011 = vxor.u32 %v2010, 2147483648
        %v2012 = vsel %vm1929, %v2011, %v2010
        %v2013 = vsub.s32 4, %v1989
        %v2014 = vsel %vm1929, %v2013, %v1989
        %v2015 = vsel %vm1928, %v671, %v2012
        %v2016 = vsel %vm1928, 0, %v2014
        %v2017 = vcosq.f32.pop %v2015
        %v2018 = vsinq.f32.pop %v2015
        %vm2019 = vweird.f32 %v671
        %v2020 = vand.u32 %v2016, 3
        %vm2021 = vcmp.lt.s32.totalorder %v2020, 2
        %vm2022 = vcmp.eq.s32.totalorder %v2020, 0
        %v2023 = vxor.u32 %v2018, 2147483648
        %v2024 = vsel %vm2022, %v2017, %v2023
        %vm2025 = vcmp.eq.s32.totalorder %v2020, 2
        %v2026 = vxor.u32 %v2017, 2147483648
        %v2027 = vsel %vm2025, %v2026, %v2018
        %v2028 = vsel %vm2021, %v2024, %v2027
        %v2029 = vsel %vm2019, nan, %v2028
        %v2030 = vand.u32 2147483647, %v672
        %vm2031 = vcmp.le.f32.partialorder %v2030, 0.7853982
        %vm2032 = vcmp.lt.s32.totalorder %v672, 0
        %v2033 = vand.u32 %v672, 2139095040
        %v2034 = vshrl.u32 %v2033, 23
        %v2035 = vsub.s32 %v2034, 127
        %v2036 = vand.u32 2147483647, %v672
        %v2037 = vand.u32 %v2036, 8388607
        %v2038 = vor.u32 %v2037, 8388608
        %v2039 = vsub.s32 0, %v2038
        %v2040 = vadd.s32 %v2035, 1
        %vm2041 = vcmp.gt.s32.totalorder %v2040, 0
        %v2042 = vsel %vm2041, %v2040, 0
        %v2043 = vshrl.u32 %v2042, 5
        %v2044 = vand.u32 %v2042, 31
        %v2045 = vsub.s32 32, %v2044
        %v2046 = vshrl.u32 683565275, %v2045
        %v2047 = vshll.u32 683565275, %v2044
        %v2048 = vshrl.u32 2475754826, %v2045
        %v2049 = vor.u32 %v2047, %v2048
        %v2050 = vshll.u32 2475754826, %v2044
        %v2051 = vshrl.u32 2131351028, %v2045
        %v2052 = vor.u32 %v2050, %v2051
        %v2053 = vshll.u32 2131351028, %v2044
        %v2054 = vshrl.u32 2102212464, %v2045
        %v2055 = vor.u32 %v2053, %v2054
        %v2056 = vshll.u32 2102212464, %v2044
        %v2057 = vshrl.u32 920167782, %v2045
        %v2058 = vor.u32 %v2056, %v2057
        %v2059 = vshll.u32 920167782, %v2044
        %v2060 = vshrl.u32 1326507024, %v2045
        %v2061 = vor.u32 %v2059, %v2060
        %vm2062 = vcmp.lt.s32.totalorder %v2043, 1
        %vm2063 = vcmp.lt.s32.totalorder %v2043, 2
        %vm2064 = vcmp.lt.s32.totalorder %v2043, 3
        %vm2065 = vcmp.lt.s32.totalorder %v2043, 4
        %v2066 = vsel %vm2062, %v2046, %v2049
        %v2067 = vsel %vm2065, %v2055, 2102212464
        %v2068 = vsel %vm2064, %v2052, %v2067
        %v2069 = vsel %vm2063, %v2066, %v2068
        %v2070 = vsel %vm2062, %v2049, %v2052
        %v2071 = vsel %vm2065, %v2058, 920167782
        %v2072 = vsel %vm2064, %v2055, %v2071
        %v2073 = vsel %vm2063, %v2070, %v2072
        %v2074 = vsel %vm2062, %v2052, %v2055
        %v2075 = vsel %vm2065, %v2061, 1326507024
        %v2076 = vsel %vm2064, %v2058, %v2075
        %v2077 = vsel %vm2063, %v2074, %v2076
        %v2078 = vshll.u32 %v2038, 8
        %v2079 = vmul.u32.u64.compose %v2078, %v2077
        %v2080 = vextract.low.u32 %v2079
        %v2081 = vextract.high.u32 %v2079
        %v2082 = vmul.u32.u64.compose %v2078, %v2073
        %v2083 = vextract.low.u32 %v2082
        %v2084 = vextract.high.u32 %v2082
        %v2085 = vmul.u32 %v2078, %v2069
        %v2086 = vadd.s32 %v2081, %v2083
        %vm2087 = vc.u32 %v2081, %v2083
        %v2088 = vadd.s32 %v2084, 1
        %v2089 = vsel %vm2087, %v2088, %v2084
        %v2090 = vadd.s32 %v2085, %v2089
        %v2091 = vadd.s32 %v2090, 536870912
        %v2092 = vshrl.u32 %v2091, 30
        %v2093 = vshll.u32 %v2092, 30
        %v2094 = vsub.s32 %v2090, %v2093
        %vm2095 = vcmp.lt.s32.totalorder %v2094, 0
        %v2096 = vsub.s32 0, %v2094
        %v2097 = vsel %vm2095, %v2096, %v2094
        %v2098 = vclz %v2097
        %v2099 = vsub.s32 %v2098, 2
        %vm2100 = vcmp.gt.s32.totalorder 0, %v2099
        %v2101 = vsel %vm2100, 0, %v2099
        %v2102 = vsub.s32 32, %v2101
        %v2103 = vshll.u32 %v2094, %v2101
        %v2104 = vshrl.u32 %v2086, %v2102
        %v2105 = vor.u32 %v2103, %v2104
        %v2106 = vsub.s32 4294967266, %v2101
        %v2107 = vadd.s32 %v2106, 127
        %v2108 = vshll.u32 %v2107, 23
        %v2109 = vor.u32 4788187, %v2108
        %v2110 = vand.u32 2147483647, %v2109
        %v2112 = vcvt.s32.f32 %v2105
        %v2113 = vmul.f32 %v2112, %v2110
        %v2114 = vxor.u32 %v2113, 2147483648
        %v2115 = vsel %vm2032, %v2114, %v2113
        %v2116 = vsub.s32 4, %v2092
        %v2117 = vsel %vm2032, %v2116, %v2092
        %v2118 = vsel %vm2031, %v672, %v2115
        %v2119 = vsel %vm2031, 0, %v2117
        %v2120 = vcosq.f32.pop %v2118
        %v2121 = vsinq.f32.pop %v2118
        %vm2122 = vweird.f32 %v672
        %v2123 = vand.u32 %v2119, 3
        %vm2124 = vcmp.lt.s32.totalorder %v2123, 2
        %vm2125 = vcmp.eq.s32.totalorder %v2123, 0
        %v2126 = vxor.u32 %v2121, 2147483648
        %v2127 = vsel %vm2125, %v2120, %v2126
        %vm2128 = vcmp.eq.s32.totalorder %v2123, 2
        %v2129 = vxor.u32 %v2120, 2147483648
        %v2130 = vsel %vm2128, %v2129, %v2121
        %v2131 = vsel %vm2124, %v2127, %v2130
        %v2132 = vsel %vm2122, nan, %v2131
        %v2133 = vand.u32 2147483647, %v673
        %vm2134 = vcmp.le.f32.partialorder %v2133, 0.7853982
        %vm2135 = vcmp.lt.s32.totalorder %v673, 0
        %v2136 = vand.u32 %v673, 2139095040
        %v2137 = vshrl.u32 %v2136, 23
        %v2138 = vsub.s32 %v2137, 127
        %v2139 = vand.u32 2147483647, %v673
        %v2140 = vand.u32 %v2139, 8388607
        %v2141 = vor.u32 %v2140, 8388608
        %v2142 = vsub.s32 0, %v2141
        %v2143 = vadd.s32 %v2138, 1
        %vm2144 = vcmp.gt.s32.totalorder %v2143, 0
        %v2145 = vsel %vm2144, %v2143, 0
        %v2146 = vshrl.u32 %v2145, 5
        %v2147 = vand.u32 %v2145, 31
        %v2148 = vsub.s32 32, %v2147
        %v2149 = vshrl.u32 683565275, %v2148
        %v2150 = vshll.u32 683565275, %v2147
        %v2151 = vshrl.u32 2475754826, %v2148
        %v2152 = vor.u32 %v2150, %v2151
        %v2153 = vshll.u32 2475754826, %v2147
        %v2154 = vshrl.u32 2131351028, %v2148
        %v2155 = vor.u32 %v2153, %v2154
        %v2156 = vshll.u32 2131351028, %v2147
        %v2157 = vshrl.u32 2102212464, %v2148
        %v2158 = vor.u32 %v2156, %v2157
        %v2159 = vshll.u32 2102212464, %v2147
        %v2160 = vshrl.u32 920167782, %v2148
        %v2161 = vor.u32 %v2159, %v2160
        %v2162 = vshll.u32 920167782, %v2147
        %v2163 = vshrl.u32 1326507024, %v2148
        %v2164 = vor.u32 %v2162, %v2163
        %vm2165 = vcmp.lt.s32.totalorder %v2146, 1
        %vm2166 = vcmp.lt.s32.totalorder %v2146, 2
        %vm2167 = vcmp.lt.s32.totalorder %v2146, 3
        %vm2168 = vcmp.lt.s32.totalorder %v2146, 4
        %v2169 = vsel %vm2165, %v2149, %v2152
        %v2170 = vsel %vm2168, %v2158, 2102212464
        %v2171 = vsel %vm2167, %v2155, %v2170
        %v2172 = vsel %vm2166, %v2169, %v2171
        %v2173 = vsel %vm2165, %v2152, %v2155
        %v2174 = vsel %vm2168, %v2161, 920167782
        %v2175 = vsel %vm2167, %v2158, %v2174
        %v2176 = vsel %vm2166, %v2173, %v2175
        %v2177 = vsel %vm2165, %v2155, %v2158
        %v2178 = vsel %vm2168, %v2164, 1326507024
        %v2179 = vsel %vm2167, %v2161, %v2178
        %v2180 = vsel %vm2166, %v2177, %v2179
        %v2181 = vshll.u32 %v2141, 8
        %v2182 = vmul.u32.u64.compose %v2181, %v2180
        %v2183 = vextract.low.u32 %v2182
        %v2184 = vextract.high.u32 %v2182
        %v2185 = vmul.u32.u64.compose %v2181, %v2176
        %v2186 = vextract.low.u32 %v2185
        %v2187 = vextract.high.u32 %v2185
        %v2188 = vmul.u32 %v2181, %v2172
        %v2189 = vadd.s32 %v2184, %v2186
        %vm2190 = vc.u32 %v2184, %v2186
        %v2191 = vadd.s32 %v2187, 1
        %v2192 = vsel %vm2190, %v2191, %v2187
        %v2193 = vadd.s32 %v2188, %v2192
        %v2194 = vadd.s32 %v2193, 536870912
        %v2195 = vshrl.u32 %v2194, 30
        %v2196 = vshll.u32 %v2195, 30
        %v2197 = vsub.s32 %v2193, %v2196
        %vm2198 = vcmp.lt.s32.totalorder %v2197, 0
        %v2199 = vsub.s32 0, %v2197
        %v2200 = vsel %vm2198, %v2199, %v2197
        %v2201 = vclz %v2200
        %v2202 = vsub.s32 %v2201, 2
        %vm2203 = vcmp.gt.s32.totalorder 0, %v2202
        %v2204 = vsel %vm2203, 0, %v2202
        %v2205 = vsub.s32 32, %v2204
        %v2206 = vshll.u32 %v2197, %v2204
        %v2207 = vshrl.u32 %v2189, %v2205
        %v2208 = vor.u32 %v2206, %v2207
        %v2209 = vsub.s32 4294967266, %v2204
        %v2210 = vadd.s32 %v2209, 127
        %v2211 = vshll.u32 %v2210, 23
        %v2212 = vor.u32 4788187, %v2211
        %v2213 = vand.u32 2147483647, %v2212
        %v2215 = vcvt.s32.f32 %v2208
        %v2216 = vmul.f32 %v2215, %v2213
        %v2217 = vxor.u32 %v2216, 2147483648
        %v2218 = vsel %vm2135, %v2217, %v2216
        %v2219 = vsub.s32 4, %v2195
        %v2220 = vsel %vm2135, %v2219, %v2195
        %v2221 = vsel %vm2134, %v673, %v2218
        %v2222 = vsel %vm2134, 0, %v2220
        %v2223 = vcosq.f32.pop %v2221
        %v2224 = vsinq.f32.pop %v2221
        %vm2225 = vweird.f32 %v673
        %v2226 = vand.u32 %v2222, 3
        %vm2227 = vcmp.lt.s32.totalorder %v2226, 2
        %vm2228 = vcmp.eq.s32.totalorder %v2226, 0
        %v2229 = vxor.u32 %v2224, 2147483648
        %v2230 = vsel %vm2228, %v2223, %v2229
        %vm2231 = vcmp.eq.s32.totalorder %v2226, 2
        %v2232 = vxor.u32 %v2223, 2147483648
        %v2233 = vsel %vm2231, %v2232, %v2224
        %v2234 = vsel %vm2227, %v2230, %v2233
        %v2235 = vsel %vm2225, nan, %v2234
        %v2236 = vand.u32 2147483647, %v674
        %vm2237 = vcmp.le.f32.partialorder %v2236, 0.7853982
        %vm2238 = vcmp.lt.s32.totalorder %v674, 0
        %v2239 = vand.u32 %v674, 2139095040
        %v2240 = vshrl.u32 %v2239, 23
        %v2241 = vsub.s32 %v2240, 127
        %v2242 = vand.u32 2147483647, %v674
        %v2243 = vand.u32 %v2242, 8388607
        %v2244 = vor.u32 %v2243, 8388608
        %v2245 = vsub.s32 0, %v2244
        %v2246 = vadd.s32 %v2241, 1
        %vm2247 = vcmp.gt.s32.totalorder %v2246, 0
        %v2248 = vsel %vm2247, %v2246, 0
        %v2249 = vshrl.u32 %v2248, 5
        %v2250 = vand.u32 %v2248, 31
        %v2251 = vsub.s32 32, %v2250
        %v2252 = vshrl.u32 683565275, %v2251
        %v2253 = vshll.u32 683565275, %v2250
        %v2254 = vshrl.u32 2475754826, %v2251
        %v2255 = vor.u32 %v2253, %v2254
        %v2256 = vshll.u32 2475754826, %v2250
        %v2257 = vshrl.u32 2131351028, %v2251
        %v2258 = vor.u32 %v2256, %v2257
        %v2259 = vshll.u32 2131351028, %v2250
        %v2260 = vshrl.u32 2102212464, %v2251
        %v2261 = vor.u32 %v2259, %v2260
        %v2262 = vshll.u32 2102212464, %v2250
        %v2263 = vshrl.u32 920167782, %v2251
        %v2264 = vor.u32 %v2262, %v2263
        %v2265 = vshll.u32 920167782, %v2250
        %v2266 = vshrl.u32 1326507024, %v2251
        %v2267 = vor.u32 %v2265, %v2266
        %vm2268 = vcmp.lt.s32.totalorder %v2249, 1
        %vm2269 = vcmp.lt.s32.totalorder %v2249, 2
        %vm2270 = vcmp.lt.s32.totalorder %v2249, 3
        %vm2271 = vcmp.lt.s32.totalorder %v2249, 4
        %v2272 = vsel %vm2268, %v2252, %v2255
        %v2273 = vsel %vm2271, %v2261, 2102212464
        %v2274 = vsel %vm2270, %v2258, %v2273
        %v2275 = vsel %vm2269, %v2272, %v2274
        %v2276 = vsel %vm2268, %v2255, %v2258
        %v2277 = vsel %vm2271, %v2264, 920167782
        %v2278 = vsel %vm2270, %v2261, %v2277
        %v2279 = vsel %vm2269, %v2276, %v2278
        %v2280 = vsel %vm2268, %v2258, %v2261
        %v2281 = vsel %vm2271, %v2267, 1326507024
        %v2282 = vsel %vm2270, %v2264, %v2281
        %v2283 = vsel %vm2269, %v2280, %v2282
        %v2284 = vshll.u32 %v2244, 8
        %v2285 = vmul.u32.u64.compose %v2284, %v2283
        %v2286 = vextract.low.u32 %v2285
        %v2287 = vextract.high.u32 %v2285
        %v2288 = vmul.u32.u64.compose %v2284, %v2279
        %v2289 = vextract.low.u32 %v2288
        %v2290 = vextract.high.u32 %v2288
        %v2291 = vmul.u32 %v2284, %v2275
        %v2292 = vadd.s32 %v2287, %v2289
        %vm2293 = vc.u32 %v2287, %v2289
        %v2294 = vadd.s32 %v2290, 1
        %v2295 = vsel %vm2293, %v2294, %v2290
        %v2296 = vadd.s32 %v2291, %v2295
        %v2297 = vadd.s32 %v2296, 536870912
        %v2298 = vshrl.u32 %v2297, 30
        %v2299 = vshll.u32 %v2298, 30
        %v2300 = vsub.s32 %v2296, %v2299
        %vm2301 = vcmp.lt.s32.totalorder %v2300, 0
        %v2302 = vsub.s32 0, %v2300
        %v2303 = vsel %vm2301, %v2302, %v2300
        %v2304 = vclz %v2303
        %v2305 = vsub.s32 %v2304, 2
        %vm2306 = vcmp.gt.s32.totalorder 0, %v2305
        %v2307 = vsel %vm2306, 0, %v2305
        %v2308 = vsub.s32 32, %v2307
        %v2309 = vshll.u32 %v2300, %v2307
        %v2310 = vshrl.u32 %v2292, %v2308
        %v2311 = vor.u32 %v2309, %v2310
        %v2312 = vsub.s32 4294967266, %v2307
        %v2313 = vadd.s32 %v2312, 127
        %v2314 = vshll.u32 %v2313, 23
        %v2315 = vor.u32 4788187, %v2314
        %v2316 = vand.u32 2147483647, %v2315
        %v2318 = vcvt.s32.f32 %v2311
        %v2319 = vmul.f32 %v2318, %v2316
        %v2320 = vxor.u32 %v2319, 2147483648
        %v2321 = vsel %vm2238, %v2320, %v2319
        %v2322 = vsub.s32 4, %v2298
        %v2323 = vsel %vm2238, %v2322, %v2298
        %v2324 = vsel %vm2237, %v674, %v2321
        %v2325 = vsel %vm2237, 0, %v2323
        %v2326 = vcosq.f32.pop %v2324
        %v2327 = vsinq.f32.pop %v2324
        %vm2328 = vweird.f32 %v674
        %v2329 = vand.u32 %v2325, 3
        %vm2330 = vcmp.lt.s32.totalorder %v2329, 2
        %vm2331 = vcmp.eq.s32.totalorder %v2329, 0
        %v2332 = vxor.u32 %v2327, 2147483648
        %v2333 = vsel %vm2331, %v2326, %v2332
        %vm2334 = vcmp.eq.s32.totalorder %v2329, 2
        %v2335 = vxor.u32 %v2326, 2147483648
        %v2336 = vsel %vm2334, %v2335, %v2327
        %v2337 = vsel %vm2330, %v2333, %v2336
        %v2338 = vsel %vm2328, nan, %v2337
        %v2339 = vand.u32 2147483647, %v675
        %vm2340 = vcmp.le.f32.partialorder %v2339, 0.7853982
        %vm2341 = vcmp.lt.s32.totalorder %v675, 0
        %v2342 = vand.u32 %v675, 2139095040
        %v2343 = vshrl.u32 %v2342, 23
        %v2344 = vsub.s32 %v2343, 127
        %v2345 = vand.u32 2147483647, %v675
        %v2346 = vand.u32 %v2345, 8388607
        %v2347 = vor.u32 %v2346, 8388608
        %v2348 = vsub.s32 0, %v2347
        %v2349 = vadd.s32 %v2344, 1
        %vm2350 = vcmp.gt.s32.totalorder %v2349, 0
        %v2351 = vsel %vm2350, %v2349, 0
        %v2352 = vshrl.u32 %v2351, 5
        %v2353 = vand.u32 %v2351, 31
        %v2354 = vsub.s32 32, %v2353
        %v2355 = vshrl.u32 683565275, %v2354
        %v2356 = vshll.u32 683565275, %v2353
        %v2357 = vshrl.u32 2475754826, %v2354
        %v2358 = vor.u32 %v2356, %v2357
        %v2359 = vshll.u32 2475754826, %v2353
        %v2360 = vshrl.u32 2131351028, %v2354
        %v2361 = vor.u32 %v2359, %v2360
        %v2362 = vshll.u32 2131351028, %v2353
        %v2363 = vshrl.u32 2102212464, %v2354
        %v2364 = vor.u32 %v2362, %v2363
        %v2365 = vshll.u32 2102212464, %v2353
        %v2366 = vshrl.u32 920167782, %v2354
        %v2367 = vor.u32 %v2365, %v2366
        %v2368 = vshll.u32 920167782, %v2353
        %v2369 = vshrl.u32 1326507024, %v2354
        %v2370 = vor.u32 %v2368, %v2369
        %vm2371 = vcmp.lt.s32.totalorder %v2352, 1
        %vm2372 = vcmp.lt.s32.totalorder %v2352, 2
        %vm2373 = vcmp.lt.s32.totalorder %v2352, 3
        %vm2374 = vcmp.lt.s32.totalorder %v2352, 4
        %v2375 = vsel %vm2371, %v2355, %v2358
        %v2376 = vsel %vm2374, %v2364, 2102212464
        %v2377 = vsel %vm2373, %v2361, %v2376
        %v2378 = vsel %vm2372, %v2375, %v2377
        %v2379 = vsel %vm2371, %v2358, %v2361
        %v2380 = vsel %vm2374, %v2367, 920167782
        %v2381 = vsel %vm2373, %v2364, %v2380
        %v2382 = vsel %vm2372, %v2379, %v2381
        %v2383 = vsel %vm2371, %v2361, %v2364
        %v2384 = vsel %vm2374, %v2370, 1326507024
        %v2385 = vsel %vm2373, %v2367, %v2384
        %v2386 = vsel %vm2372, %v2383, %v2385
        %v2387 = vshll.u32 %v2347, 8
        %v2388 = vmul.u32.u64.compose %v2387, %v2386
        %v2389 = vextract.low.u32 %v2388
        %v2390 = vextract.high.u32 %v2388
        %v2391 = vmul.u32.u64.compose %v2387, %v2382
        %v2392 = vextract.low.u32 %v2391
        %v2393 = vextract.high.u32 %v2391
        %v2394 = vmul.u32 %v2387, %v2378
        %v2395 = vadd.s32 %v2390, %v2392
        %vm2396 = vc.u32 %v2390, %v2392
        %v2397 = vadd.s32 %v2393, 1
        %v2398 = vsel %vm2396, %v2397, %v2393
        %v2399 = vadd.s32 %v2394, %v2398
        %v2400 = vadd.s32 %v2399, 536870912
        %v2401 = vshrl.u32 %v2400, 30
        %v2402 = vshll.u32 %v2401, 30
        %v2403 = vsub.s32 %v2399, %v2402
        %vm2404 = vcmp.lt.s32.totalorder %v2403, 0
        %v2405 = vsub.s32 0, %v2403
        %v2406 = vsel %vm2404, %v2405, %v2403
        %v2407 = vclz %v2406
        %v2408 = vsub.s32 %v2407, 2
        %vm2409 = vcmp.gt.s32.totalorder 0, %v2408
        %v2410 = vsel %vm2409, 0, %v2408
        %v2411 = vsub.s32 32, %v2410
        %v2412 = vshll.u32 %v2403, %v2410
        %v2413 = vshrl.u32 %v2395, %v2411
        %v2414 = vor.u32 %v2412, %v2413
        %v2415 = vsub.s32 4294967266, %v2410
        %v2416 = vadd.s32 %v2415, 127
        %v2417 = vshll.u32 %v2416, 23
        %v2418 = vor.u32 4788187, %v2417
        %v2419 = vand.u32 2147483647, %v2418
        %v2421 = vcvt.s32.f32 %v2414
        %v2422 = vmul.f32 %v2421, %v2419
        %v2423 = vxor.u32 %v2422, 2147483648
        %v2424 = vsel %vm2341, %v2423, %v2422
        %v2425 = vsub.s32 4, %v2401
        %v2426 = vsel %vm2341, %v2425, %v2401
        %v2427 = vsel %vm2340, %v675, %v2424
        %v2428 = vsel %vm2340, 0, %v2426
        %v2429 = vcosq.f32.pop %v2427
        %v2430 = vsinq.f32.pop %v2427
        %vm2431 = vweird.f32 %v675
        %v2432 = vand.u32 %v2428, 3
        %vm2433 = vcmp.lt.s32.totalorder %v2432, 2
        %vm2434 = vcmp.eq.s32.totalorder %v2432, 0
        %v2435 = vxor.u32 %v2430, 2147483648
        %v2436 = vsel %vm2434, %v2429, %v2435
        %vm2437 = vcmp.eq.s32.totalorder %v2432, 2
        %v2438 = vxor.u32 %v2429, 2147483648
        %v2439 = vsel %vm2437, %v2438, %v2430
        %v2440 = vsel %vm2433, %v2436, %v2439
        %v2441 = vsel %vm2431, nan, %v2440
        %v2442 = vand.u32 2147483647, %v676
        %vm2443 = vcmp.le.f32.partialorder %v2442, 0.7853982
        %vm2444 = vcmp.lt.s32.totalorder %v676, 0
        %v2445 = vand.u32 %v676, 2139095040
        %v2446 = vshrl.u32 %v2445, 23
        %v2447 = vsub.s32 %v2446, 127
        %v2448 = vand.u32 2147483647, %v676
        %v2449 = vand.u32 %v2448, 8388607
        %v2450 = vor.u32 %v2449, 8388608
        %v2451 = vsub.s32 0, %v2450
        %v2452 = vadd.s32 %v2447, 1
        %vm2453 = vcmp.gt.s32.totalorder %v2452, 0
        %v2454 = vsel %vm2453, %v2452, 0
        %v2455 = vshrl.u32 %v2454, 5
        %v2456 = vand.u32 %v2454, 31
        %v2457 = vsub.s32 32, %v2456
        %v2458 = vshrl.u32 683565275, %v2457
        %v2459 = vshll.u32 683565275, %v2456
        %v2460 = vshrl.u32 2475754826, %v2457
        %v2461 = vor.u32 %v2459, %v2460
        %v2462 = vshll.u32 2475754826, %v2456
        %v2463 = vshrl.u32 2131351028, %v2457
        %v2464 = vor.u32 %v2462, %v2463
        %v2465 = vshll.u32 2131351028, %v2456
        %v2466 = vshrl.u32 2102212464, %v2457
        %v2467 = vor.u32 %v2465, %v2466
        %v2468 = vshll.u32 2102212464, %v2456
        %v2469 = vshrl.u32 920167782, %v2457
        %v2470 = vor.u32 %v2468, %v2469
        %v2471 = vshll.u32 920167782, %v2456
        %v2472 = vshrl.u32 1326507024, %v2457
        %v2473 = vor.u32 %v2471, %v2472
        %vm2474 = vcmp.lt.s32.totalorder %v2455, 1
        %vm2475 = vcmp.lt.s32.totalorder %v2455, 2
        %vm2476 = vcmp.lt.s32.totalorder %v2455, 3
        %vm2477 = vcmp.lt.s32.totalorder %v2455, 4
        %v2478 = vsel %vm2474, %v2458, %v2461
        %v2479 = vsel %vm2477, %v2467, 2102212464
        %v2480 = vsel %vm2476, %v2464, %v2479
        %v2481 = vsel %vm2475, %v2478, %v2480
        %v2482 = vsel %vm2474, %v2461, %v2464
        %v2483 = vsel %vm2477, %v2470, 920167782
        %v2484 = vsel %vm2476, %v2467, %v2483
        %v2485 = vsel %vm2475, %v2482, %v2484
        %v2486 = vsel %vm2474, %v2464, %v2467
        %v2487 = vsel %vm2477, %v2473, 1326507024
        %v2488 = vsel %vm2476, %v2470, %v2487
        %v2489 = vsel %vm2475, %v2486, %v2488
        %v2490 = vshll.u32 %v2450, 8
        %v2491 = vmul.u32.u64.compose %v2490, %v2489
        %v2492 = vextract.low.u32 %v2491
        %v2493 = vextract.high.u32 %v2491
        %v2494 = vmul.u32.u64.compose %v2490, %v2485
        %v2495 = vextract.low.u32 %v2494
        %v2496 = vextract.high.u32 %v2494
        %v2497 = vmul.u32 %v2490, %v2481
        %v2498 = vadd.s32 %v2493, %v2495
        %vm2499 = vc.u32 %v2493, %v2495
        %v2500 = vadd.s32 %v2496, 1
        %v2501 = vsel %vm2499, %v2500, %v2496
        %v2502 = vadd.s32 %v2497, %v2501
        %v2503 = vadd.s32 %v2502, 536870912
        %v2504 = vshrl.u32 %v2503, 30
        %v2505 = vshll.u32 %v2504, 30
        %v2506 = vsub.s32 %v2502, %v2505
        %vm2507 = vcmp.lt.s32.totalorder %v2506, 0
        %v2508 = vsub.s32 0, %v2506
        %v2509 = vsel %vm2507, %v2508, %v2506
        %v2510 = vclz %v2509
        %v2511 = vsub.s32 %v2510, 2
        %vm2512 = vcmp.gt.s32.totalorder 0, %v2511
        %v2513 = vsel %vm2512, 0, %v2511
        %v2514 = vsub.s32 32, %v2513
        %v2515 = vshll.u32 %v2506, %v2513
        %v2516 = vshrl.u32 %v2498, %v2514
        %v2517 = vor.u32 %v2515, %v2516
        %v2518 = vsub.s32 4294967266, %v2513
        %v2519 = vadd.s32 %v2518, 127
        %v2520 = vshll.u32 %v2519, 23
        %v2521 = vor.u32 4788187, %v2520
        %v2522 = vand.u32 2147483647, %v2521
        %v2524 = vcvt.s32.f32 %v2517
        %v2525 = vmul.f32 %v2524, %v2522
        %v2526 = vxor.u32 %v2525, 2147483648
        %v2527 = vsel %vm2444, %v2526, %v2525
        %v2528 = vsub.s32 4, %v2504
        %v2529 = vsel %vm2444, %v2528, %v2504
        %v2530 = vsel %vm2443, %v676, %v2527
        %v2531 = vsel %vm2443, 0, %v2529
        %v2532 = vcosq.f32.pop %v2530
        %v2533 = vsinq.f32.pop %v2530
        %vm2534 = vweird.f32 %v676
        %v2535 = vand.u32 %v2531, 3
        %vm2536 = vcmp.lt.s32.totalorder %v2535, 2
        %vm2537 = vcmp.eq.s32.totalorder %v2535, 0
        %v2538 = vxor.u32 %v2533, 2147483648
        %v2539 = vsel %vm2537, %v2532, %v2538
        %vm2540 = vcmp.eq.s32.totalorder %v2535, 2
        %v2541 = vxor.u32 %v2532, 2147483648
        %v2542 = vsel %vm2540, %v2541, %v2533
        %v2543 = vsel %vm2536, %v2539, %v2542
        %v2544 = vsel %vm2534, nan, %v2543
        %v2545 = vand.u32 2147483647, %v677
        %vm2546 = vcmp.le.f32.partialorder %v2545, 0.7853982
        %vm2547 = vcmp.lt.s32.totalorder %v677, 0
        %v2548 = vand.u32 %v677, 2139095040
        %v2549 = vshrl.u32 %v2548, 23
        %v2550 = vsub.s32 %v2549, 127
        %v2551 = vand.u32 2147483647, %v677
        %v2552 = vand.u32 %v2551, 8388607
        %v2553 = vor.u32 %v2552, 8388608
        %v2554 = vsub.s32 0, %v2553
        %v2555 = vadd.s32 %v2550, 1
        %vm2556 = vcmp.gt.s32.totalorder %v2555, 0
        %v2557 = vsel %vm2556, %v2555, 0
        %v2558 = vshrl.u32 %v2557, 5
        %v2559 = vand.u32 %v2557, 31
        %v2560 = vsub.s32 32, %v2559
        %v2561 = vshrl.u32 683565275, %v2560
        %v2562 = vshll.u32 683565275, %v2559
        %v2563 = vshrl.u32 2475754826, %v2560
        %v2564 = vor.u32 %v2562, %v2563
        %v2565 = vshll.u32 2475754826, %v2559
        %v2566 = vshrl.u32 2131351028, %v2560
        %v2567 = vor.u32 %v2565, %v2566
        %v2568 = vshll.u32 2131351028, %v2559
        %v2569 = vshrl.u32 2102212464, %v2560
        %v2570 = vor.u32 %v2568, %v2569
        %v2571 = vshll.u32 2102212464, %v2559
        %v2572 = vshrl.u32 920167782, %v2560
        %v2573 = vor.u32 %v2571, %v2572
        %v2574 = vshll.u32 920167782, %v2559
        %v2575 = vshrl.u32 1326507024, %v2560
        %v2576 = vor.u32 %v2574, %v2575
        %vm2577 = vcmp.lt.s32.totalorder %v2558, 1
        %vm2578 = vcmp.lt.s32.totalorder %v2558, 2
        %vm2579 = vcmp.lt.s32.totalorder %v2558, 3
        %vm2580 = vcmp.lt.s32.totalorder %v2558, 4
        %v2581 = vsel %vm2577, %v2561, %v2564
        %v2582 = vsel %vm2580, %v2570, 2102212464
        %v2583 = vsel %vm2579, %v2567, %v2582
        %v2584 = vsel %vm2578, %v2581, %v2583
        %v2585 = vsel %vm2577, %v2564, %v2567
        %v2586 = vsel %vm2580, %v2573, 920167782
        %v2587 = vsel %vm2579, %v2570, %v2586
        %v2588 = vsel %vm2578, %v2585, %v2587
        %v2589 = vsel %vm2577, %v2567, %v2570
        %v2590 = vsel %vm2580, %v2576, 1326507024
        %v2591 = vsel %vm2579, %v2573, %v2590
        %v2592 = vsel %vm2578, %v2589, %v2591
        %v2593 = vshll.u32 %v2553, 8
        %v2594 = vmul.u32.u64.compose %v2593, %v2592
        %v2595 = vextract.low.u32 %v2594
        %v2596 = vextract.high.u32 %v2594
        %v2597 = vmul.u32.u64.compose %v2593, %v2588
        %v2598 = vextract.low.u32 %v2597
        %v2599 = vextract.high.u32 %v2597
        %v2600 = vmul.u32 %v2593, %v2584
        %v2601 = vadd.s32 %v2596, %v2598
        %vm2602 = vc.u32 %v2596, %v2598
        %v2603 = vadd.s32 %v2599, 1
        %v2604 = vsel %vm2602, %v2603, %v2599
        %v2605 = vadd.s32 %v2600, %v2604
        %v2606 = vadd.s32 %v2605, 536870912
        %v2607 = vshrl.u32 %v2606, 30
        %v2608 = vshll.u32 %v2607, 30
        %v2609 = vsub.s32 %v2605, %v2608
        %vm2610 = vcmp.lt.s32.totalorder %v2609, 0
        %v2611 = vsub.s32 0, %v2609
        %v2612 = vsel %vm2610, %v2611, %v2609
        %v2613 = vclz %v2612
        %v2614 = vsub.s32 %v2613, 2
        %vm2615 = vcmp.gt.s32.totalorder 0, %v2614
        %v2616 = vsel %vm2615, 0, %v2614
        %v2617 = vsub.s32 32, %v2616
        %v2618 = vshll.u32 %v2609, %v2616
        %v2619 = vshrl.u32 %v2601, %v2617
        %v2620 = vor.u32 %v2618, %v2619
        %v2621 = vsub.s32 4294967266, %v2616
        %v2622 = vadd.s32 %v2621, 127
        %v2623 = vshll.u32 %v2622, 23
        %v2624 = vor.u32 4788187, %v2623
        %v2625 = vand.u32 2147483647, %v2624
        %v2627 = vcvt.s32.f32 %v2620
        %v2628 = vmul.f32 %v2627, %v2625
        %v2629 = vxor.u32 %v2628, 2147483648
        %v2630 = vsel %vm2547, %v2629, %v2628
        %v2631 = vsub.s32 4, %v2607
        %v2632 = vsel %vm2547, %v2631, %v2607
        %v2633 = vsel %vm2546, %v677, %v2630
        %v2634 = vsel %vm2546, 0, %v2632
        %v2635 = vcosq.f32.pop %v2633
        %v2636 = vsinq.f32.pop %v2633
        %vm2637 = vweird.f32 %v677
        %v2638 = vand.u32 %v2634, 3
        %vm2639 = vcmp.lt.s32.totalorder %v2638, 2
        %vm2640 = vcmp.eq.s32.totalorder %v2638, 0
        %v2641 = vxor.u32 %v2636, 2147483648
        %v2642 = vsel %vm2640, %v2635, %v2641
        %vm2643 = vcmp.eq.s32.totalorder %v2638, 2
        %v2644 = vxor.u32 %v2635, 2147483648
        %v2645 = vsel %vm2643, %v2644, %v2636
        %v2646 = vsel %vm2639, %v2642, %v2645
        %v2647 = vsel %vm2637, nan, %v2646
        %v2648 = vand.u32 2147483647, %v678
        %vm2649 = vcmp.le.f32.partialorder %v2648, 0.7853982
        %vm2650 = vcmp.lt.s32.totalorder %v678, 0
        %v2651 = vand.u32 %v678, 2139095040
        %v2652 = vshrl.u32 %v2651, 23
        %v2653 = vsub.s32 %v2652, 127
        %v2654 = vand.u32 2147483647, %v678
        %v2655 = vand.u32 %v2654, 8388607
        %v2656 = vor.u32 %v2655, 8388608
        %v2657 = vsub.s32 0, %v2656
        %v2658 = vadd.s32 %v2653, 1
        %vm2659 = vcmp.gt.s32.totalorder %v2658, 0
        %v2660 = vsel %vm2659, %v2658, 0
        %v2661 = vshrl.u32 %v2660, 5
        %v2662 = vand.u32 %v2660, 31
        %v2663 = vsub.s32 32, %v2662
        %v2664 = vshrl.u32 683565275, %v2663
        %v2665 = vshll.u32 683565275, %v2662
        %v2666 = vshrl.u32 2475754826, %v2663
        %v2667 = vor.u32 %v2665, %v2666
        %v2668 = vshll.u32 2475754826, %v2662
        %v2669 = vshrl.u32 2131351028, %v2663
        %v2670 = vor.u32 %v2668, %v2669
        %v2671 = vshll.u32 2131351028, %v2662
        %v2672 = vshrl.u32 2102212464, %v2663
        %v2673 = vor.u32 %v2671, %v2672
        %v2674 = vshll.u32 2102212464, %v2662
        %v2675 = vshrl.u32 920167782, %v2663
        %v2676 = vor.u32 %v2674, %v2675
        %v2677 = vshll.u32 920167782, %v2662
        %v2678 = vshrl.u32 1326507024, %v2663
        %v2679 = vor.u32 %v2677, %v2678
        %vm2680 = vcmp.lt.s32.totalorder %v2661, 1
        %vm2681 = vcmp.lt.s32.totalorder %v2661, 2
        %vm2682 = vcmp.lt.s32.totalorder %v2661, 3
        %vm2683 = vcmp.lt.s32.totalorder %v2661, 4
        %v2684 = vsel %vm2680, %v2664, %v2667
        %v2685 = vsel %vm2683, %v2673, 2102212464
        %v2686 = vsel %vm2682, %v2670, %v2685
        %v2687 = vsel %vm2681, %v2684, %v2686
        %v2688 = vsel %vm2680, %v2667, %v2670
        %v2689 = vsel %vm2683, %v2676, 920167782
        %v2690 = vsel %vm2682, %v2673, %v2689
        %v2691 = vsel %vm2681, %v2688, %v2690
        %v2692 = vsel %vm2680, %v2670, %v2673
        %v2693 = vsel %vm2683, %v2679, 1326507024
        %v2694 = vsel %vm2682, %v2676, %v2693
        %v2695 = vsel %vm2681, %v2692, %v2694
        %v2696 = vshll.u32 %v2656, 8
        %v2697 = vmul.u32.u64.compose %v2696, %v2695
        %v2698 = vextract.low.u32 %v2697
        %v2699 = vextract.high.u32 %v2697
        %v2700 = vmul.u32.u64.compose %v2696, %v2691
        %v2701 = vextract.low.u32 %v2700
        %v2702 = vextract.high.u32 %v2700
        %v2703 = vmul.u32 %v2696, %v2687
        %v2704 = vadd.s32 %v2699, %v2701
        %vm2705 = vc.u32 %v2699, %v2701
        %v2706 = vadd.s32 %v2702, 1
        %v2707 = vsel %vm2705, %v2706, %v2702
        %v2708 = vadd.s32 %v2703, %v2707
        %v2709 = vadd.s32 %v2708, 536870912
        %v2710 = vshrl.u32 %v2709, 30
        %v2711 = vshll.u32 %v2710, 30
        %v2712 = vsub.s32 %v2708, %v2711
        %vm2713 = vcmp.lt.s32.totalorder %v2712, 0
        %v2714 = vsub.s32 0, %v2712
        %v2715 = vsel %vm2713, %v2714, %v2712
        %v2716 = vclz %v2715
        %v2717 = vsub.s32 %v2716, 2
        %vm2718 = vcmp.gt.s32.totalorder 0, %v2717
        %v2719 = vsel %vm2718, 0, %v2717
        %v2720 = vsub.s32 32, %v2719
        %v2721 = vshll.u32 %v2712, %v2719
        %v2722 = vshrl.u32 %v2704, %v2720
        %v2723 = vor.u32 %v2721, %v2722
        %v2724 = vsub.s32 4294967266, %v2719
        %v2725 = vadd.s32 %v2724, 127
        %v2726 = vshll.u32 %v2725, 23
        %v2727 = vor.u32 4788187, %v2726
        %v2728 = vand.u32 2147483647, %v2727
        %v2730 = vcvt.s32.f32 %v2723
        %v2731 = vmul.f32 %v2730, %v2728
        %v2732 = vxor.u32 %v2731, 2147483648
        %v2733 = vsel %vm2650, %v2732, %v2731
        %v2734 = vsub.s32 4, %v2710
        %v2735 = vsel %vm2650, %v2734, %v2710
        %v2736 = vsel %vm2649, %v678, %v2733
        %v2737 = vsel %vm2649, 0, %v2735
        %v2738 = vcosq.f32.pop %v2736
        %v2739 = vsinq.f32.pop %v2736
        %vm2740 = vweird.f32 %v678
        %v2741 = vand.u32 %v2737, 3
        %vm2742 = vcmp.lt.s32.totalorder %v2741, 2
        %vm2743 = vcmp.eq.s32.totalorder %v2741, 0
        %v2744 = vxor.u32 %v2739, 2147483648
        %v2745 = vsel %vm2743, %v2738, %v2744
        %vm2746 = vcmp.eq.s32.totalorder %v2741, 2
        %v2747 = vxor.u32 %v2738, 2147483648
        %v2748 = vsel %vm2746, %v2747, %v2739
        %v2749 = vsel %vm2742, %v2745, %v2748
        %v2750 = vsel %vm2740, nan, %v2749
        %v2751 = vand.u32 2147483647, %v679
        %vm2752 = vcmp.le.f32.partialorder %v2751, 0.7853982
        %vm2753 = vcmp.lt.s32.totalorder %v679, 0
        %v2754 = vand.u32 %v679, 2139095040
        %v2755 = vshrl.u32 %v2754, 23
        %v2756 = vsub.s32 %v2755, 127
        %v2757 = vand.u32 2147483647, %v679
        %v2758 = vand.u32 %v2757, 8388607
        %v2759 = vor.u32 %v2758, 8388608
        %v2760 = vsub.s32 0, %v2759
        %v2761 = vadd.s32 %v2756, 1
        %vm2762 = vcmp.gt.s32.totalorder %v2761, 0
        %v2763 = vsel %vm2762, %v2761, 0
        %v2764 = vshrl.u32 %v2763, 5
        %v2765 = vand.u32 %v2763, 31
        %v2766 = vsub.s32 32, %v2765
        %v2767 = vshrl.u32 683565275, %v2766
        %v2768 = vshll.u32 683565275, %v2765
        %v2769 = vshrl.u32 2475754826, %v2766
        %v2770 = vor.u32 %v2768, %v2769
        %v2771 = vshll.u32 2475754826, %v2765
        %v2772 = vshrl.u32 2131351028, %v2766
        %v2773 = vor.u32 %v2771, %v2772
        %v2774 = vshll.u32 2131351028, %v2765
        %v2775 = vshrl.u32 2102212464, %v2766
        %v2776 = vor.u32 %v2774, %v2775
        %v2777 = vshll.u32 2102212464, %v2765
        %v2778 = vshrl.u32 920167782, %v2766
        %v2779 = vor.u32 %v2777, %v2778
        %v2780 = vshll.u32 920167782, %v2765
        %v2781 = vshrl.u32 1326507024, %v2766
        %v2782 = vor.u32 %v2780, %v2781
        %vm2783 = vcmp.lt.s32.totalorder %v2764, 1
        %vm2784 = vcmp.lt.s32.totalorder %v2764, 2
        %vm2785 = vcmp.lt.s32.totalorder %v2764, 3
        %vm2786 = vcmp.lt.s32.totalorder %v2764, 4
        %v2787 = vsel %vm2783, %v2767, %v2770
        %v2788 = vsel %vm2786, %v2776, 2102212464
        %v2789 = vsel %vm2785, %v2773, %v2788
        %v2790 = vsel %vm2784, %v2787, %v2789
        %v2791 = vsel %vm2783, %v2770, %v2773
        %v2792 = vsel %vm2786, %v2779, 920167782
        %v2793 = vsel %vm2785, %v2776, %v2792
        %v2794 = vsel %vm2784, %v2791, %v2793
        %v2795 = vsel %vm2783, %v2773, %v2776
        %v2796 = vsel %vm2786, %v2782, 1326507024
        %v2797 = vsel %vm2785, %v2779, %v2796
        %v2798 = vsel %vm2784, %v2795, %v2797
        %v2799 = vshll.u32 %v2759, 8
        %v2800 = vmul.u32.u64.compose %v2799, %v2798
        %v2801 = vextract.low.u32 %v2800
        %v2802 = vextract.high.u32 %v2800
        %v2803 = vmul.u32.u64.compose %v2799, %v2794
        %v2804 = vextract.low.u32 %v2803
        %v2805 = vextract.high.u32 %v2803
        %v2806 = vmul.u32 %v2799, %v2790
        %v2807 = vadd.s32 %v2802, %v2804
        %vm2808 = vc.u32 %v2802, %v2804
        %v2809 = vadd.s32 %v2805, 1
        %v2810 = vsel %vm2808, %v2809, %v2805
        %v2811 = vadd.s32 %v2806, %v2810
        %v2812 = vadd.s32 %v2811, 536870912
        %v2813 = vshrl.u32 %v2812, 30
        %v2814 = vshll.u32 %v2813, 30
        %v2815 = vsub.s32 %v2811, %v2814
        %vm2816 = vcmp.lt.s32.totalorder %v2815, 0
        %v2817 = vsub.s32 0, %v2815
        %v2818 = vsel %vm2816, %v2817, %v2815
        %v2819 = vclz %v2818
        %v2820 = vsub.s32 %v2819, 2
        %vm2821 = vcmp.gt.s32.totalorder 0, %v2820
        %v2822 = vsel %vm2821, 0, %v2820
        %v2823 = vsub.s32 32, %v2822
        %v2824 = vshll.u32 %v2815, %v2822
        %v2825 = vshrl.u32 %v2807, %v2823
        %v2826 = vor.u32 %v2824, %v2825
        %v2827 = vsub.s32 4294967266, %v2822
        %v2828 = vadd.s32 %v2827, 127
        %v2829 = vshll.u32 %v2828, 23
        %v2830 = vor.u32 4788187, %v2829
        %v2831 = vand.u32 2147483647, %v2830
        %v2833 = vcvt.s32.f32 %v2826
        %v2834 = vmul.f32 %v2833, %v2831
        %v2835 = vxor.u32 %v2834, 2147483648
        %v2836 = vsel %vm2753, %v2835, %v2834
        %v2837 = vsub.s32 4, %v2813
        %v2838 = vsel %vm2753, %v2837, %v2813
        %v2839 = vsel %vm2752, %v679, %v2836
        %v2840 = vsel %vm2752, 0, %v2838
        %v2841 = vcosq.f32.pop %v2839
        %v2842 = vsinq.f32.pop %v2839
        %vm2843 = vweird.f32 %v679
        %v2844 = vand.u32 %v2840, 3
        %vm2845 = vcmp.lt.s32.totalorder %v2844, 2
        %vm2846 = vcmp.eq.s32.totalorder %v2844, 0
        %v2847 = vxor.u32 %v2842, 2147483648
        %v2848 = vsel %vm2846, %v2841, %v2847
        %vm2849 = vcmp.eq.s32.totalorder %v2844, 2
        %v2850 = vxor.u32 %v2841, 2147483648
        %v2851 = vsel %vm2849, %v2850, %v2842
        %v2852 = vsel %vm2845, %v2848, %v2851
        %v2853 = vsel %vm2843, nan, %v2852
        %v2854 = vand.u32 2147483647, %v680
        %vm2855 = vcmp.le.f32.partialorder %v2854, 0.7853982
        %vm2856 = vcmp.lt.s32.totalorder %v680, 0
        %v2857 = vand.u32 %v680, 2139095040
        %v2858 = vshrl.u32 %v2857, 23
        %v2859 = vsub.s32 %v2858, 127
        %v2860 = vand.u32 2147483647, %v680
        %v2861 = vand.u32 %v2860, 8388607
        %v2862 = vor.u32 %v2861, 8388608
        %v2863 = vsub.s32 0, %v2862
        %v2864 = vadd.s32 %v2859, 1
        %vm2865 = vcmp.gt.s32.totalorder %v2864, 0
        %v2866 = vsel %vm2865, %v2864, 0
        %v2867 = vshrl.u32 %v2866, 5
        %v2868 = vand.u32 %v2866, 31
        %v2869 = vsub.s32 32, %v2868
        %v2870 = vshrl.u32 683565275, %v2869
        %v2871 = vshll.u32 683565275, %v2868
        %v2872 = vshrl.u32 2475754826, %v2869
        %v2873 = vor.u32 %v2871, %v2872
        %v2874 = vshll.u32 2475754826, %v2868
        %v2875 = vshrl.u32 2131351028, %v2869
        %v2876 = vor.u32 %v2874, %v2875
        %v2877 = vshll.u32 2131351028, %v2868
        %v2878 = vshrl.u32 2102212464, %v2869
        %v2879 = vor.u32 %v2877, %v2878
        %v2880 = vshll.u32 2102212464, %v2868
        %v2881 = vshrl.u32 920167782, %v2869
        %v2882 = vor.u32 %v2880, %v2881
        %v2883 = vshll.u32 920167782, %v2868
        %v2884 = vshrl.u32 1326507024, %v2869
        %v2885 = vor.u32 %v2883, %v2884
        %vm2886 = vcmp.lt.s32.totalorder %v2867, 1
        %vm2887 = vcmp.lt.s32.totalorder %v2867, 2
        %vm2888 = vcmp.lt.s32.totalorder %v2867, 3
        %vm2889 = vcmp.lt.s32.totalorder %v2867, 4
        %v2890 = vsel %vm2886, %v2870, %v2873
        %v2891 = vsel %vm2889, %v2879, 2102212464
        %v2892 = vsel %vm2888, %v2876, %v2891
        %v2893 = vsel %vm2887, %v2890, %v2892
        %v2894 = vsel %vm2886, %v2873, %v2876
        %v2895 = vsel %vm2889, %v2882, 920167782
        %v2896 = vsel %vm2888, %v2879, %v2895
        %v2897 = vsel %vm2887, %v2894, %v2896
        %v2898 = vsel %vm2886, %v2876, %v2879
        %v2899 = vsel %vm2889, %v2885, 1326507024
        %v2900 = vsel %vm2888, %v2882, %v2899
        %v2901 = vsel %vm2887, %v2898, %v2900
        %v2902 = vshll.u32 %v2862, 8
        %v2903 = vmul.u32.u64.compose %v2902, %v2901
        %v2904 = vextract.low.u32 %v2903
        %v2905 = vextract.high.u32 %v2903
        %v2906 = vmul.u32.u64.compose %v2902, %v2897
        %v2907 = vextract.low.u32 %v2906
        %v2908 = vextract.high.u32 %v2906
        %v2909 = vmul.u32 %v2902, %v2893
        %v2910 = vadd.s32 %v2905, %v2907
        %vm2911 = vc.u32 %v2905, %v2907
        %v2912 = vadd.s32 %v2908, 1
        %v2913 = vsel %vm2911, %v2912, %v2908
        %v2914 = vadd.s32 %v2909, %v2913
        %v2915 = vadd.s32 %v2914, 536870912
        %v2916 = vshrl.u32 %v2915, 30
        %v2917 = vshll.u32 %v2916, 30
        %v2918 = vsub.s32 %v2914, %v2917
        %vm2919 = vcmp.lt.s32.totalorder %v2918, 0
        %v2920 = vsub.s32 0, %v2918
        %v2921 = vsel %vm2919, %v2920, %v2918
        %v2922 = vclz %v2921
        %v2923 = vsub.s32 %v2922, 2
        %vm2924 = vcmp.gt.s32.totalorder 0, %v2923
        %v2925 = vsel %vm2924, 0, %v2923
        %v2926 = vsub.s32 32, %v2925
        %v2927 = vshll.u32 %v2918, %v2925
        %v2928 = vshrl.u32 %v2910, %v2926
        %v2929 = vor.u32 %v2927, %v2928
        %v2930 = vsub.s32 4294967266, %v2925
        %v2931 = vadd.s32 %v2930, 127
        %v2932 = vshll.u32 %v2931, 23
        %v2933 = vor.u32 4788187, %v2932
        %v2934 = vand.u32 2147483647, %v2933
        %v2936 = vcvt.s32.f32 %v2929
        %v2937 = vmul.f32 %v2936, %v2934
        %v2938 = vxor.u32 %v2937, 2147483648
        %v2939 = vsel %vm2856, %v2938, %v2937
        %v2940 = vsub.s32 4, %v2916
        %v2941 = vsel %vm2856, %v2940, %v2916
        %v2942 = vsel %vm2855, %v680, %v2939
        %v2943 = vsel %vm2855, 0, %v2941
        %v2944 = vcosq.f32.pop %v2942
        %v2945 = vsinq.f32.pop %v2942
        %vm2946 = vweird.f32 %v680
        %v2947 = vand.u32 %v2943, 3
        %vm2948 = vcmp.lt.s32.totalorder %v2947, 2
        %vm2949 = vcmp.eq.s32.totalorder %v2947, 0
        %v2950 = vxor.u32 %v2945, 2147483648
        %v2951 = vsel %vm2949, %v2944, %v2950
        %vm2952 = vcmp.eq.s32.totalorder %v2947, 2
        %v2953 = vxor.u32 %v2944, 2147483648
        %v2954 = vsel %vm2952, %v2953, %v2945
        %v2955 = vsel %vm2948, %v2951, %v2954
        %v2956 = vsel %vm2946, nan, %v2955
        %v2957 = vand.u32 2147483647, %v681
        %vm2958 = vcmp.le.f32.partialorder %v2957, 0.7853982
        %vm2959 = vcmp.lt.s32.totalorder %v681, 0
        %v2960 = vand.u32 %v681, 2139095040
        %v2961 = vshrl.u32 %v2960, 23
        %v2962 = vsub.s32 %v2961, 127
        %v2963 = vand.u32 2147483647, %v681
        %v2964 = vand.u32 %v2963, 8388607
        %v2965 = vor.u32 %v2964, 8388608
        %v2966 = vsub.s32 0, %v2965
        %v2967 = vadd.s32 %v2962, 1
        %vm2968 = vcmp.gt.s32.totalorder %v2967, 0
        %v2969 = vsel %vm2968, %v2967, 0
        %v2970 = vshrl.u32 %v2969, 5
        %v2971 = vand.u32 %v2969, 31
        %v2972 = vsub.s32 32, %v2971
        %v2973 = vshrl.u32 683565275, %v2972
        %v2974 = vshll.u32 683565275, %v2971
        %v2975 = vshrl.u32 2475754826, %v2972
        %v2976 = vor.u32 %v2974, %v2975
        %v2977 = vshll.u32 2475754826, %v2971
        %v2978 = vshrl.u32 2131351028, %v2972
        %v2979 = vor.u32 %v2977, %v2978
        %v2980 = vshll.u32 2131351028, %v2971
        %v2981 = vshrl.u32 2102212464, %v2972
        %v2982 = vor.u32 %v2980, %v2981
        %v2983 = vshll.u32 2102212464, %v2971
        %v2984 = vshrl.u32 920167782, %v2972
        %v2985 = vor.u32 %v2983, %v2984
        %v2986 = vshll.u32 920167782, %v2971
        %v2987 = vshrl.u32 1326507024, %v2972
        %v2988 = vor.u32 %v2986, %v2987
        %vm2989 = vcmp.lt.s32.totalorder %v2970, 1
        %vm2990 = vcmp.lt.s32.totalorder %v2970, 2
        %vm2991 = vcmp.lt.s32.totalorder %v2970, 3
        %vm2992 = vcmp.lt.s32.totalorder %v2970, 4
        %v2993 = vsel %vm2989, %v2973, %v2976
        %v2994 = vsel %vm2992, %v2982, 2102212464
        %v2995 = vsel %vm2991, %v2979, %v2994
        %v2996 = vsel %vm2990, %v2993, %v2995
        %v2997 = vsel %vm2989, %v2976, %v2979
        %v2998 = vsel %vm2992, %v2985, 920167782
        %v2999 = vsel %vm2991, %v2982, %v2998
        %v3000 = vsel %vm2990, %v2997, %v2999
        %v3001 = vsel %vm2989, %v2979, %v2982
        %v3002 = vsel %vm2992, %v2988, 1326507024
        %v3003 = vsel %vm2991, %v2985, %v3002
        %v3004 = vsel %vm2990, %v3001, %v3003
        %v3005 = vshll.u32 %v2965, 8
        %v3006 = vmul.u32.u64.compose %v3005, %v3004
        %v3007 = vextract.low.u32 %v3006
        %v3008 = vextract.high.u32 %v3006
        %v3009 = vmul.u32.u64.compose %v3005, %v3000
        %v3010 = vextract.low.u32 %v3009
        %v3011 = vextract.high.u32 %v3009
        %v3012 = vmul.u32 %v3005, %v2996
        %v3013 = vadd.s32 %v3008, %v3010
        %vm3014 = vc.u32 %v3008, %v3010
        %v3015 = vadd.s32 %v3011, 1
        %v3016 = vsel %vm3014, %v3015, %v3011
        %v3017 = vadd.s32 %v3012, %v3016
        %v3018 = vadd.s32 %v3017, 536870912
        %v3019 = vshrl.u32 %v3018, 30
        %v3020 = vshll.u32 %v3019, 30
        %v3021 = vsub.s32 %v3017, %v3020
        %vm3022 = vcmp.lt.s32.totalorder %v3021, 0
        %v3023 = vsub.s32 0, %v3021
        %v3024 = vsel %vm3022, %v3023, %v3021
        %v3025 = vclz %v3024
        %v3026 = vsub.s32 %v3025, 2
        %vm3027 = vcmp.gt.s32.totalorder 0, %v3026
        %v3028 = vsel %vm3027, 0, %v3026
        %v3029 = vsub.s32 32, %v3028
        %v3030 = vshll.u32 %v3021, %v3028
        %v3031 = vshrl.u32 %v3013, %v3029
        %v3032 = vor.u32 %v3030, %v3031
        %v3033 = vsub.s32 4294967266, %v3028
        %v3034 = vadd.s32 %v3033, 127
        %v3035 = vshll.u32 %v3034, 23
        %v3036 = vor.u32 4788187, %v3035
        %v3037 = vand.u32 2147483647, %v3036
        %v3039 = vcvt.s32.f32 %v3032
        %v3040 = vmul.f32 %v3039, %v3037
        %v3041 = vxor.u32 %v3040, 2147483648
        %v3042 = vsel %vm2959, %v3041, %v3040
        %v3043 = vsub.s32 4, %v3019
        %v3044 = vsel %vm2959, %v3043, %v3019
        %v3045 = vsel %vm2958, %v681, %v3042
        %v3046 = vsel %vm2958, 0, %v3044
        %v3047 = vcosq.f32.pop %v3045
        %v3048 = vsinq.f32.pop %v3045
        %vm3049 = vweird.f32 %v681
        %v3050 = vand.u32 %v3046, 3
        %vm3051 = vcmp.lt.s32.totalorder %v3050, 2
        %vm3052 = vcmp.eq.s32.totalorder %v3050, 0
        %v3053 = vxor.u32 %v3048, 2147483648
        %v3054 = vsel %vm3052, %v3047, %v3053
        %vm3055 = vcmp.eq.s32.totalorder %v3050, 2
        %v3056 = vxor.u32 %v3047, 2147483648
        %v3057 = vsel %vm3055, %v3056, %v3048
        %v3058 = vsel %vm3051, %v3054, %v3057
        %v3059 = vsel %vm3049, nan, %v3058
        %v3060 = vand.u32 2147483647, %v682
        %vm3061 = vcmp.le.f32.partialorder %v3060, 0.7853982
        %vm3062 = vcmp.lt.s32.totalorder %v682, 0
        %v3063 = vand.u32 %v682, 2139095040
        %v3064 = vshrl.u32 %v3063, 23
        %v3065 = vsub.s32 %v3064, 127
        %v3066 = vand.u32 2147483647, %v682
        %v3067 = vand.u32 %v3066, 8388607
        %v3068 = vor.u32 %v3067, 8388608
        %v3069 = vsub.s32 0, %v3068
        %v3070 = vadd.s32 %v3065, 1
        %vm3071 = vcmp.gt.s32.totalorder %v3070, 0
        %v3072 = vsel %vm3071, %v3070, 0
        %v3073 = vshrl.u32 %v3072, 5
        %v3074 = vand.u32 %v3072, 31
        %v3075 = vsub.s32 32, %v3074
        %v3076 = vshrl.u32 683565275, %v3075
        %v3077 = vshll.u32 683565275, %v3074
        %v3078 = vshrl.u32 2475754826, %v3075
        %v3079 = vor.u32 %v3077, %v3078
        %v3080 = vshll.u32 2475754826, %v3074
        %v3081 = vshrl.u32 2131351028, %v3075
        %v3082 = vor.u32 %v3080, %v3081
        %v3083 = vshll.u32 2131351028, %v3074
        %v3084 = vshrl.u32 2102212464, %v3075
        %v3085 = vor.u32 %v3083, %v3084
        %v3086 = vshll.u32 2102212464, %v3074
        %v3087 = vshrl.u32 920167782, %v3075
        %v3088 = vor.u32 %v3086, %v3087
        %v3089 = vshll.u32 920167782, %v3074
        %v3090 = vshrl.u32 1326507024, %v3075
        %v3091 = vor.u32 %v3089, %v3090
        %vm3092 = vcmp.lt.s32.totalorder %v3073, 1
        %vm3093 = vcmp.lt.s32.totalorder %v3073, 2
        %vm3094 = vcmp.lt.s32.totalorder %v3073, 3
        %vm3095 = vcmp.lt.s32.totalorder %v3073, 4
        %v3096 = vsel %vm3092, %v3076, %v3079
        %v3097 = vsel %vm3095, %v3085, 2102212464
        %v3098 = vsel %vm3094, %v3082, %v3097
        %v3099 = vsel %vm3093, %v3096, %v3098
        %v3100 = vsel %vm3092, %v3079, %v3082
        %v3101 = vsel %vm3095, %v3088, 920167782
        %v3102 = vsel %vm3094, %v3085, %v3101
        %v3103 = vsel %vm3093, %v3100, %v3102
        %v3104 = vsel %vm3092, %v3082, %v3085
        %v3105 = vsel %vm3095, %v3091, 1326507024
        %v3106 = vsel %vm3094, %v3088, %v3105
        %v3107 = vsel %vm3093, %v3104, %v3106
        %v3108 = vshll.u32 %v3068, 8
        %v3109 = vmul.u32.u64.compose %v3108, %v3107
        %v3110 = vextract.low.u32 %v3109
        %v3111 = vextract.high.u32 %v3109
        %v3112 = vmul.u32.u64.compose %v3108, %v3103
        %v3113 = vextract.low.u32 %v3112
        %v3114 = vextract.high.u32 %v3112
        %v3115 = vmul.u32 %v3108, %v3099
        %v3116 = vadd.s32 %v3111, %v3113
        %vm3117 = vc.u32 %v3111, %v3113
        %v3118 = vadd.s32 %v3114, 1
        %v3119 = vsel %vm3117, %v3118, %v3114
        %v3120 = vadd.s32 %v3115, %v3119
        %v3121 = vadd.s32 %v3120, 536870912
        %v3122 = vshrl.u32 %v3121, 30
        %v3123 = vshll.u32 %v3122, 30
        %v3124 = vsub.s32 %v3120, %v3123
        %vm3125 = vcmp.lt.s32.totalorder %v3124, 0
        %v3126 = vsub.s32 0, %v3124
        %v3127 = vsel %vm3125, %v3126, %v3124
        %v3128 = vclz %v3127
        %v3129 = vsub.s32 %v3128, 2
        %vm3130 = vcmp.gt.s32.totalorder 0, %v3129
        %v3131 = vsel %vm3130, 0, %v3129
        %v3132 = vsub.s32 32, %v3131
        %v3133 = vshll.u32 %v3124, %v3131
        %v3134 = vshrl.u32 %v3116, %v3132
        %v3135 = vor.u32 %v3133, %v3134
        %v3136 = vsub.s32 4294967266, %v3131
        %v3137 = vadd.s32 %v3136, 127
        %v3138 = vshll.u32 %v3137, 23
        %v3139 = vor.u32 4788187, %v3138
        %v3140 = vand.u32 2147483647, %v3139
        %v3142 = vcvt.s32.f32 %v3135
        %v3143 = vmul.f32 %v3142, %v3140
        %v3144 = vxor.u32 %v3143, 2147483648
        %v3145 = vsel %vm3062, %v3144, %v3143
        %v3146 = vsub.s32 4, %v3122
        %v3147 = vsel %vm3062, %v3146, %v3122
        %v3148 = vsel %vm3061, %v682, %v3145
        %v3149 = vsel %vm3061, 0, %v3147
        %v3150 = vcosq.f32.pop %v3148
        %v3151 = vsinq.f32.pop %v3148
        %vm3152 = vweird.f32 %v682
        %v3153 = vand.u32 %v3149, 3
        %vm3154 = vcmp.lt.s32.totalorder %v3153, 2
        %vm3155 = vcmp.eq.s32.totalorder %v3153, 0
        %v3156 = vxor.u32 %v3151, 2147483648
        %v3157 = vsel %vm3155, %v3150, %v3156
        %vm3158 = vcmp.eq.s32.totalorder %v3153, 2
        %v3159 = vxor.u32 %v3150, 2147483648
        %v3160 = vsel %vm3158, %v3159, %v3151
        %v3161 = vsel %vm3154, %v3157, %v3160
        %v3162 = vsel %vm3152, nan, %v3161
        %v3163 = vand.u32 2147483647, %v683
        %vm3164 = vcmp.le.f32.partialorder %v3163, 0.7853982
        %vm3165 = vcmp.lt.s32.totalorder %v683, 0
        %v3166 = vand.u32 %v683, 2139095040
        %v3167 = vshrl.u32 %v3166, 23
        %v3168 = vsub.s32 %v3167, 127
        %v3169 = vand.u32 2147483647, %v683
        %v3170 = vand.u32 %v3169, 8388607
        %v3171 = vor.u32 %v3170, 8388608
        %v3172 = vsub.s32 0, %v3171
        %v3173 = vadd.s32 %v3168, 1
        %vm3174 = vcmp.gt.s32.totalorder %v3173, 0
        %v3175 = vsel %vm3174, %v3173, 0
        %v3176 = vshrl.u32 %v3175, 5
        %v3177 = vand.u32 %v3175, 31
        %v3178 = vsub.s32 32, %v3177
        %v3179 = vshrl.u32 683565275, %v3178
        %v3180 = vshll.u32 683565275, %v3177
        %v3181 = vshrl.u32 2475754826, %v3178
        %v3182 = vor.u32 %v3180, %v3181
        %v3183 = vshll.u32 2475754826, %v3177
        %v3184 = vshrl.u32 2131351028, %v3178
        %v3185 = vor.u32 %v3183, %v3184
        %v3186 = vshll.u32 2131351028, %v3177
        %v3187 = vshrl.u32 2102212464, %v3178
        %v3188 = vor.u32 %v3186, %v3187
        %v3189 = vshll.u32 2102212464, %v3177
        %v3190 = vshrl.u32 920167782, %v3178
        %v3191 = vor.u32 %v3189, %v3190
        %v3192 = vshll.u32 920167782, %v3177
        %v3193 = vshrl.u32 1326507024, %v3178
        %v3194 = vor.u32 %v3192, %v3193
        %vm3195 = vcmp.lt.s32.totalorder %v3176, 1
        %vm3196 = vcmp.lt.s32.totalorder %v3176, 2
        %vm3197 = vcmp.lt.s32.totalorder %v3176, 3
        %vm3198 = vcmp.lt.s32.totalorder %v3176, 4
        %v3199 = vsel %vm3195, %v3179, %v3182
        %v3200 = vsel %vm3198, %v3188, 2102212464
        %v3201 = vsel %vm3197, %v3185, %v3200
        %v3202 = vsel %vm3196, %v3199, %v3201
        %v3203 = vsel %vm3195, %v3182, %v3185
        %v3204 = vsel %vm3198, %v3191, 920167782
        %v3205 = vsel %vm3197, %v3188, %v3204
        %v3206 = vsel %vm3196, %v3203, %v3205
        %v3207 = vsel %vm3195, %v3185, %v3188
        %v3208 = vsel %vm3198, %v3194, 1326507024
        %v3209 = vsel %vm3197, %v3191, %v3208
        %v3210 = vsel %vm3196, %v3207, %v3209
        %v3211 = vshll.u32 %v3171, 8
        %v3212 = vmul.u32.u64.compose %v3211, %v3210
        %v3213 = vextract.low.u32 %v3212
        %v3214 = vextract.high.u32 %v3212
        %v3215 = vmul.u32.u64.compose %v3211, %v3206
        %v3216 = vextract.low.u32 %v3215
        %v3217 = vextract.high.u32 %v3215
        %v3218 = vmul.u32 %v3211, %v3202
        %v3219 = vadd.s32 %v3214, %v3216
        %vm3220 = vc.u32 %v3214, %v3216
        %v3221 = vadd.s32 %v3217, 1
        %v3222 = vsel %vm3220, %v3221, %v3217
        %v3223 = vadd.s32 %v3218, %v3222
        %v3224 = vadd.s32 %v3223, 536870912
        %v3225 = vshrl.u32 %v3224, 30
        %v3226 = vshll.u32 %v3225, 30
        %v3227 = vsub.s32 %v3223, %v3226
        %vm3228 = vcmp.lt.s32.totalorder %v3227, 0
        %v3229 = vsub.s32 0, %v3227
        %v3230 = vsel %vm3228, %v3229, %v3227
        %v3231 = vclz %v3230
        %v3232 = vsub.s32 %v3231, 2
        %vm3233 = vcmp.gt.s32.totalorder 0, %v3232
        %v3234 = vsel %vm3233, 0, %v3232
        %v3235 = vsub.s32 32, %v3234
        %v3236 = vshll.u32 %v3227, %v3234
        %v3237 = vshrl.u32 %v3219, %v3235
        %v3238 = vor.u32 %v3236, %v3237
        %v3239 = vsub.s32 4294967266, %v3234
        %v3240 = vadd.s32 %v3239, 127
        %v3241 = vshll.u32 %v3240, 23
        %v3242 = vor.u32 4788187, %v3241
        %v3243 = vand.u32 2147483647, %v3242
        %v3245 = vcvt.s32.f32 %v3238
        %v3246 = vmul.f32 %v3245, %v3243
        %v3247 = vxor.u32 %v3246, 2147483648
        %v3248 = vsel %vm3165, %v3247, %v3246
        %v3249 = vsub.s32 4, %v3225
        %v3250 = vsel %vm3165, %v3249, %v3225
        %v3251 = vsel %vm3164, %v683, %v3248
        %v3252 = vsel %vm3164, 0, %v3250
        %v3253 = vcosq.f32.pop %v3251
        %v3254 = vsinq.f32.pop %v3251
        %vm3255 = vweird.f32 %v683
        %v3256 = vand.u32 %v3252, 3
        %vm3257 = vcmp.lt.s32.totalorder %v3256, 2
        %vm3258 = vcmp.eq.s32.totalorder %v3256, 0
        %v3259 = vxor.u32 %v3254, 2147483648
        %v3260 = vsel %vm3258, %v3253, %v3259
        %vm3261 = vcmp.eq.s32.totalorder %v3256, 2
        %v3262 = vxor.u32 %v3253, 2147483648
        %v3263 = vsel %vm3261, %v3262, %v3254
        %v3264 = vsel %vm3257, %v3260, %v3263
        %v3265 = vsel %vm3255, nan, %v3264
        %v3266 = vand.u32 2147483647, %v684
        %vm3267 = vcmp.le.f32.partialorder %v3266, 0.7853982
        %vm3268 = vcmp.lt.s32.totalorder %v684, 0
        %v3269 = vand.u32 %v684, 2139095040
        %v3270 = vshrl.u32 %v3269, 23
        %v3271 = vsub.s32 %v3270, 127
        %v3272 = vand.u32 2147483647, %v684
        %v3273 = vand.u32 %v3272, 8388607
        %v3274 = vor.u32 %v3273, 8388608
        %v3275 = vsub.s32 0, %v3274
        %v3276 = vadd.s32 %v3271, 1
        %vm3277 = vcmp.gt.s32.totalorder %v3276, 0
        %v3278 = vsel %vm3277, %v3276, 0
        %v3279 = vshrl.u32 %v3278, 5
        %v3280 = vand.u32 %v3278, 31
        %v3281 = vsub.s32 32, %v3280
        %v3282 = vshrl.u32 683565275, %v3281
        %v3283 = vshll.u32 683565275, %v3280
        %v3284 = vshrl.u32 2475754826, %v3281
        %v3285 = vor.u32 %v3283, %v3284
        %v3286 = vshll.u32 2475754826, %v3280
        %v3287 = vshrl.u32 2131351028, %v3281
        %v3288 = vor.u32 %v3286, %v3287
        %v3289 = vshll.u32 2131351028, %v3280
        %v3290 = vshrl.u32 2102212464, %v3281
        %v3291 = vor.u32 %v3289, %v3290
        %v3292 = vshll.u32 2102212464, %v3280
        %v3293 = vshrl.u32 920167782, %v3281
        %v3294 = vor.u32 %v3292, %v3293
        %v3295 = vshll.u32 920167782, %v3280
        %v3296 = vshrl.u32 1326507024, %v3281
        %v3297 = vor.u32 %v3295, %v3296
        %vm3298 = vcmp.lt.s32.totalorder %v3279, 1
        %vm3299 = vcmp.lt.s32.totalorder %v3279, 2
        %vm3300 = vcmp.lt.s32.totalorder %v3279, 3
        %vm3301 = vcmp.lt.s32.totalorder %v3279, 4
        %v3302 = vsel %vm3298, %v3282, %v3285
        %v3303 = vsel %vm3301, %v3291, 2102212464
        %v3304 = vsel %vm3300, %v3288, %v3303
        %v3305 = vsel %vm3299, %v3302, %v3304
        %v3306 = vsel %vm3298, %v3285, %v3288
        %v3307 = vsel %vm3301, %v3294, 920167782
        %v3308 = vsel %vm3300, %v3291, %v3307
        %v3309 = vsel %vm3299, %v3306, %v3308
        %v3310 = vsel %vm3298, %v3288, %v3291
        %v3311 = vsel %vm3301, %v3297, 1326507024
        %v3312 = vsel %vm3300, %v3294, %v3311
        %v3313 = vsel %vm3299, %v3310, %v3312
        %v3314 = vshll.u32 %v3274, 8
        %v3315 = vmul.u32.u64.compose %v3314, %v3313
        %v3316 = vextract.low.u32 %v3315
        %v3317 = vextract.high.u32 %v3315
        %v3318 = vmul.u32.u64.compose %v3314, %v3309
        %v3319 = vextract.low.u32 %v3318
        %v3320 = vextract.high.u32 %v3318
        %v3321 = vmul.u32 %v3314, %v3305
        %v3322 = vadd.s32 %v3317, %v3319
        %vm3323 = vc.u32 %v3317, %v3319
        %v3324 = vadd.s32 %v3320, 1
        %v3325 = vsel %vm3323, %v3324, %v3320
        %v3326 = vadd.s32 %v3321, %v3325
        %v3327 = vadd.s32 %v3326, 536870912
        %v3328 = vshrl.u32 %v3327, 30
        %v3329 = vshll.u32 %v3328, 30
        %v3330 = vsub.s32 %v3326, %v3329
        %vm3331 = vcmp.lt.s32.totalorder %v3330, 0
        %v3332 = vsub.s32 0, %v3330
        %v3333 = vsel %vm3331, %v3332, %v3330
        %v3334 = vclz %v3333
        %v3335 = vsub.s32 %v3334, 2
        %vm3336 = vcmp.gt.s32.totalorder 0, %v3335
        %v3337 = vsel %vm3336, 0, %v3335
        %v3338 = vsub.s32 32, %v3337
        %v3339 = vshll.u32 %v3330, %v3337
        %v3340 = vshrl.u32 %v3322, %v3338
        %v3341 = vor.u32 %v3339, %v3340
        %v3342 = vsub.s32 4294967266, %v3337
        %v3343 = vadd.s32 %v3342, 127
        %v3344 = vshll.u32 %v3343, 23
        %v3345 = vor.u32 4788187, %v3344
        %v3346 = vand.u32 2147483647, %v3345
        %v3348 = vcvt.s32.f32 %v3341
        %v3349 = vmul.f32 %v3348, %v3346
        %v3350 = vxor.u32 %v3349, 2147483648
        %v3351 = vsel %vm3268, %v3350, %v3349
        %v3352 = vsub.s32 4, %v3328
        %v3353 = vsel %vm3268, %v3352, %v3328
        %v3354 = vsel %vm3267, %v684, %v3351
        %v3355 = vsel %vm3267, 0, %v3353
        %v3356 = vcosq.f32.pop %v3354
        %v3357 = vsinq.f32.pop %v3354
        %vm3358 = vweird.f32 %v684
        %v3359 = vand.u32 %v3355, 3
        %vm3360 = vcmp.lt.s32.totalorder %v3359, 2
        %vm3361 = vcmp.eq.s32.totalorder %v3359, 0
        %v3362 = vxor.u32 %v3357, 2147483648
        %v3363 = vsel %vm3361, %v3356, %v3362
        %vm3364 = vcmp.eq.s32.totalorder %v3359, 2
        %v3365 = vxor.u32 %v3356, 2147483648
        %v3366 = vsel %vm3364, %v3365, %v3357
        %v3367 = vsel %vm3360, %v3363, %v3366
        %v3368 = vsel %vm3358, nan, %v3367
        %v3369 = vand.u32 2147483647, %v685
        %vm3370 = vcmp.le.f32.partialorder %v3369, 0.7853982
        %vm3371 = vcmp.lt.s32.totalorder %v685, 0
        %v3372 = vand.u32 %v685, 2139095040
        %v3373 = vshrl.u32 %v3372, 23
        %v3374 = vsub.s32 %v3373, 127
        %v3375 = vand.u32 2147483647, %v685
        %v3376 = vand.u32 %v3375, 8388607
        %v3377 = vor.u32 %v3376, 8388608
        %v3378 = vsub.s32 0, %v3377
        %v3379 = vadd.s32 %v3374, 1
        %vm3380 = vcmp.gt.s32.totalorder %v3379, 0
        %v3381 = vsel %vm3380, %v3379, 0
        %v3382 = vshrl.u32 %v3381, 5
        %v3383 = vand.u32 %v3381, 31
        %v3384 = vsub.s32 32, %v3383
        %v3385 = vshrl.u32 683565275, %v3384
        %v3386 = vshll.u32 683565275, %v3383
        %v3387 = vshrl.u32 2475754826, %v3384
        %v3388 = vor.u32 %v3386, %v3387
        %v3389 = vshll.u32 2475754826, %v3383
        %v3390 = vshrl.u32 2131351028, %v3384
        %v3391 = vor.u32 %v3389, %v3390
        %v3392 = vshll.u32 2131351028, %v3383
        %v3393 = vshrl.u32 2102212464, %v3384
        %v3394 = vor.u32 %v3392, %v3393
        %v3395 = vshll.u32 2102212464, %v3383
        %v3396 = vshrl.u32 920167782, %v3384
        %v3397 = vor.u32 %v3395, %v3396
        %v3398 = vshll.u32 920167782, %v3383
        %v3399 = vshrl.u32 1326507024, %v3384
        %v3400 = vor.u32 %v3398, %v3399
        %vm3401 = vcmp.lt.s32.totalorder %v3382, 1
        %vm3402 = vcmp.lt.s32.totalorder %v3382, 2
        %vm3403 = vcmp.lt.s32.totalorder %v3382, 3
        %vm3404 = vcmp.lt.s32.totalorder %v3382, 4
        %v3405 = vsel %vm3401, %v3385, %v3388
        %v3406 = vsel %vm3404, %v3394, 2102212464
        %v3407 = vsel %vm3403, %v3391, %v3406
        %v3408 = vsel %vm3402, %v3405, %v3407
        %v3409 = vsel %vm3401, %v3388, %v3391
        %v3410 = vsel %vm3404, %v3397, 920167782
        %v3411 = vsel %vm3403, %v3394, %v3410
        %v3412 = vsel %vm3402, %v3409, %v3411
        %v3413 = vsel %vm3401, %v3391, %v3394
        %v3414 = vsel %vm3404, %v3400, 1326507024
        %v3415 = vsel %vm3403, %v3397, %v3414
        %v3416 = vsel %vm3402, %v3413, %v3415
        %v3417 = vshll.u32 %v3377, 8
        %v3418 = vmul.u32.u64.compose %v3417, %v3416
        %v3419 = vextract.low.u32 %v3418
        %v3420 = vextract.high.u32 %v3418
        %v3421 = vmul.u32.u64.compose %v3417, %v3412
        %v3422 = vextract.low.u32 %v3421
        %v3423 = vextract.high.u32 %v3421
        %v3424 = vmul.u32 %v3417, %v3408
        %v3425 = vadd.s32 %v3420, %v3422
        %vm3426 = vc.u32 %v3420, %v3422
        %v3427 = vadd.s32 %v3423, 1
        %v3428 = vsel %vm3426, %v3427, %v3423
        %v3429 = vadd.s32 %v3424, %v3428
        %v3430 = vadd.s32 %v3429, 536870912
        %v3431 = vshrl.u32 %v3430, 30
        %v3432 = vshll.u32 %v3431, 30
        %v3433 = vsub.s32 %v3429, %v3432
        %vm3434 = vcmp.lt.s32.totalorder %v3433, 0
        %v3435 = vsub.s32 0, %v3433
        %v3436 = vsel %vm3434, %v3435, %v3433
        %v3437 = vclz %v3436
        %v3438 = vsub.s32 %v3437, 2
        %vm3439 = vcmp.gt.s32.totalorder 0, %v3438
        %v3440 = vsel %vm3439, 0, %v3438
        %v3441 = vsub.s32 32, %v3440
        %v3442 = vshll.u32 %v3433, %v3440
        %v3443 = vshrl.u32 %v3425, %v3441
        %v3444 = vor.u32 %v3442, %v3443
        %v3445 = vsub.s32 4294967266, %v3440
        %v3446 = vadd.s32 %v3445, 127
        %v3447 = vshll.u32 %v3446, 23
        %v3448 = vor.u32 4788187, %v3447
        %v3449 = vand.u32 2147483647, %v3448
        %v3451 = vcvt.s32.f32 %v3444
        %v3452 = vmul.f32 %v3451, %v3449
        %v3453 = vxor.u32 %v3452, 2147483648
        %v3454 = vsel %vm3371, %v3453, %v3452
        %v3455 = vsub.s32 4, %v3431
        %v3456 = vsel %vm3371, %v3455, %v3431
        %v3457 = vsel %vm3370, %v685, %v3454
        %v3458 = vsel %vm3370, 0, %v3456
        %v3459 = vcosq.f32.pop %v3457
        %v3460 = vsinq.f32.pop %v3457
        %vm3461 = vweird.f32 %v685
        %v3462 = vand.u32 %v3458, 3
        %vm3463 = vcmp.lt.s32.totalorder %v3462, 2
        %vm3464 = vcmp.eq.s32.totalorder %v3462, 0
        %v3465 = vxor.u32 %v3460, 2147483648
        %v3466 = vsel %vm3464, %v3459, %v3465
        %vm3467 = vcmp.eq.s32.totalorder %v3462, 2
        %v3468 = vxor.u32 %v3459, 2147483648
        %v3469 = vsel %vm3467, %v3468, %v3460
        %v3470 = vsel %vm3463, %v3466, %v3469
        %v3471 = vsel %vm3461, nan, %v3470
        %v3472 = vand.u32 2147483647, %v686
        %vm3473 = vcmp.le.f32.partialorder %v3472, 0.7853982
        %vm3474 = vcmp.lt.s32.totalorder %v686, 0
        %v3475 = vand.u32 %v686, 2139095040
        %v3476 = vshrl.u32 %v3475, 23
        %v3477 = vsub.s32 %v3476, 127
        %v3478 = vand.u32 2147483647, %v686
        %v3479 = vand.u32 %v3478, 8388607
        %v3480 = vor.u32 %v3479, 8388608
        %v3481 = vsub.s32 0, %v3480
        %v3482 = vadd.s32 %v3477, 1
        %vm3483 = vcmp.gt.s32.totalorder %v3482, 0
        %v3484 = vsel %vm3483, %v3482, 0
        %v3485 = vshrl.u32 %v3484, 5
        %v3486 = vand.u32 %v3484, 31
        %v3487 = vsub.s32 32, %v3486
        %v3488 = vshrl.u32 683565275, %v3487
        %v3489 = vshll.u32 683565275, %v3486
        %v3490 = vshrl.u32 2475754826, %v3487
        %v3491 = vor.u32 %v3489, %v3490
        %v3492 = vshll.u32 2475754826, %v3486
        %v3493 = vshrl.u32 2131351028, %v3487
        %v3494 = vor.u32 %v3492, %v3493
        %v3495 = vshll.u32 2131351028, %v3486
        %v3496 = vshrl.u32 2102212464, %v3487
        %v3497 = vor.u32 %v3495, %v3496
        %v3498 = vshll.u32 2102212464, %v3486
        %v3499 = vshrl.u32 920167782, %v3487
        %v3500 = vor.u32 %v3498, %v3499
        %v3501 = vshll.u32 920167782, %v3486
        %v3502 = vshrl.u32 1326507024, %v3487
        %v3503 = vor.u32 %v3501, %v3502
        %vm3504 = vcmp.lt.s32.totalorder %v3485, 1
        %vm3505 = vcmp.lt.s32.totalorder %v3485, 2
        %vm3506 = vcmp.lt.s32.totalorder %v3485, 3
        %vm3507 = vcmp.lt.s32.totalorder %v3485, 4
        %v3508 = vsel %vm3504, %v3488, %v3491
        %v3509 = vsel %vm3507, %v3497, 2102212464
        %v3510 = vsel %vm3506, %v3494, %v3509
        %v3511 = vsel %vm3505, %v3508, %v3510
        %v3512 = vsel %vm3504, %v3491, %v3494
        %v3513 = vsel %vm3507, %v3500, 920167782
        %v3514 = vsel %vm3506, %v3497, %v3513
        %v3515 = vsel %vm3505, %v3512, %v3514
        %v3516 = vsel %vm3504, %v3494, %v3497
        %v3517 = vsel %vm3507, %v3503, 1326507024
        %v3518 = vsel %vm3506, %v3500, %v3517
        %v3519 = vsel %vm3505, %v3516, %v3518
        %v3520 = vshll.u32 %v3480, 8
        %v3521 = vmul.u32.u64.compose %v3520, %v3519
        %v3522 = vextract.low.u32 %v3521
        %v3523 = vextract.high.u32 %v3521
        %v3524 = vmul.u32.u64.compose %v3520, %v3515
        %v3525 = vextract.low.u32 %v3524
        %v3526 = vextract.high.u32 %v3524
        %v3527 = vmul.u32 %v3520, %v3511
        %v3528 = vadd.s32 %v3523, %v3525
        %vm3529 = vc.u32 %v3523, %v3525
        %v3530 = vadd.s32 %v3526, 1
        %v3531 = vsel %vm3529, %v3530, %v3526
        %v3532 = vadd.s32 %v3527, %v3531
        %v3533 = vadd.s32 %v3532, 536870912
        %v3534 = vshrl.u32 %v3533, 30
        %v3535 = vshll.u32 %v3534, 30
        %v3536 = vsub.s32 %v3532, %v3535
        %vm3537 = vcmp.lt.s32.totalorder %v3536, 0
        %v3538 = vsub.s32 0, %v3536
        %v3539 = vsel %vm3537, %v3538, %v3536
        %v3540 = vclz %v3539
        %v3541 = vsub.s32 %v3540, 2
        %vm3542 = vcmp.gt.s32.totalorder 0, %v3541
        %v3543 = vsel %vm3542, 0, %v3541
        %v3544 = vsub.s32 32, %v3543
        %v3545 = vshll.u32 %v3536, %v3543
        %v3546 = vshrl.u32 %v3528, %v3544
        %v3547 = vor.u32 %v3545, %v3546
        %v3548 = vsub.s32 4294967266, %v3543
        %v3549 = vadd.s32 %v3548, 127
        %v3550 = vshll.u32 %v3549, 23
        %v3551 = vor.u32 4788187, %v3550
        %v3552 = vand.u32 2147483647, %v3551
        %v3554 = vcvt.s32.f32 %v3547
        %v3555 = vmul.f32 %v3554, %v3552
        %v3556 = vxor.u32 %v3555, 2147483648
        %v3557 = vsel %vm3474, %v3556, %v3555
        %v3558 = vsub.s32 4, %v3534
        %v3559 = vsel %vm3474, %v3558, %v3534
        %v3560 = vsel %vm3473, %v686, %v3557
        %v3561 = vsel %vm3473, 0, %v3559
        %v3562 = vcosq.f32.pop %v3560
        %v3563 = vsinq.f32.pop %v3560
        %vm3564 = vweird.f32 %v686
        %v3565 = vand.u32 %v3561, 3
        %vm3566 = vcmp.lt.s32.totalorder %v3565, 2
        %vm3567 = vcmp.eq.s32.totalorder %v3565, 0
        %v3568 = vxor.u32 %v3563, 2147483648
        %v3569 = vsel %vm3567, %v3562, %v3568
        %vm3570 = vcmp.eq.s32.totalorder %v3565, 2
        %v3571 = vxor.u32 %v3562, 2147483648
        %v3572 = vsel %vm3570, %v3571, %v3563
        %v3573 = vsel %vm3566, %v3569, %v3572
        %v3574 = vsel %vm3564, nan, %v3573
        %v3575 = vand.u32 2147483647, %v687
        %vm3576 = vcmp.le.f32.partialorder %v3575, 0.7853982
        %vm3577 = vcmp.lt.s32.totalorder %v687, 0
        %v3578 = vand.u32 %v687, 2139095040
        %v3579 = vshrl.u32 %v3578, 23
        %v3580 = vsub.s32 %v3579, 127
        %v3581 = vand.u32 2147483647, %v687
        %v3582 = vand.u32 %v3581, 8388607
        %v3583 = vor.u32 %v3582, 8388608
        %v3584 = vsub.s32 0, %v3583
        %v3585 = vadd.s32 %v3580, 1
        %vm3586 = vcmp.gt.s32.totalorder %v3585, 0
        %v3587 = vsel %vm3586, %v3585, 0
        %v3588 = vshrl.u32 %v3587, 5
        %v3589 = vand.u32 %v3587, 31
        %v3590 = vsub.s32 32, %v3589
        %v3591 = vshrl.u32 683565275, %v3590
        %v3592 = vshll.u32 683565275, %v3589
        %v3593 = vshrl.u32 2475754826, %v3590
        %v3594 = vor.u32 %v3592, %v3593
        %v3595 = vshll.u32 2475754826, %v3589
        %v3596 = vshrl.u32 2131351028, %v3590
        %v3597 = vor.u32 %v3595, %v3596
        %v3598 = vshll.u32 2131351028, %v3589
        %v3599 = vshrl.u32 2102212464, %v3590
        %v3600 = vor.u32 %v3598, %v3599
        %v3601 = vshll.u32 2102212464, %v3589
        %v3602 = vshrl.u32 920167782, %v3590
        %v3603 = vor.u32 %v3601, %v3602
        %v3604 = vshll.u32 920167782, %v3589
        %v3605 = vshrl.u32 1326507024, %v3590
        %v3606 = vor.u32 %v3604, %v3605
        %vm3607 = vcmp.lt.s32.totalorder %v3588, 1
        %vm3608 = vcmp.lt.s32.totalorder %v3588, 2
        %vm3609 = vcmp.lt.s32.totalorder %v3588, 3
        %vm3610 = vcmp.lt.s32.totalorder %v3588, 4
        %v3611 = vsel %vm3607, %v3591, %v3594
        %v3612 = vsel %vm3610, %v3600, 2102212464
        %v3613 = vsel %vm3609, %v3597, %v3612
        %v3614 = vsel %vm3608, %v3611, %v3613
        %v3615 = vsel %vm3607, %v3594, %v3597
        %v3616 = vsel %vm3610, %v3603, 920167782
        %v3617 = vsel %vm3609, %v3600, %v3616
        %v3618 = vsel %vm3608, %v3615, %v3617
        %v3619 = vsel %vm3607, %v3597, %v3600
        %v3620 = vsel %vm3610, %v3606, 1326507024
        %v3621 = vsel %vm3609, %v3603, %v3620
        %v3622 = vsel %vm3608, %v3619, %v3621
        %v3623 = vshll.u32 %v3583, 8
        %v3624 = vmul.u32.u64.compose %v3623, %v3622
        %v3625 = vextract.low.u32 %v3624
        %v3626 = vextract.high.u32 %v3624
        %v3627 = vmul.u32.u64.compose %v3623, %v3618
        %v3628 = vextract.low.u32 %v3627
        %v3629 = vextract.high.u32 %v3627
        %v3630 = vmul.u32 %v3623, %v3614
        %v3631 = vadd.s32 %v3626, %v3628
        %vm3632 = vc.u32 %v3626, %v3628
        %v3633 = vadd.s32 %v3629, 1
        %v3634 = vsel %vm3632, %v3633, %v3629
        %v3635 = vadd.s32 %v3630, %v3634
        %v3636 = vadd.s32 %v3635, 536870912
        %v3637 = vshrl.u32 %v3636, 30
        %v3638 = vshll.u32 %v3637, 30
        %v3639 = vsub.s32 %v3635, %v3638
        %vm3640 = vcmp.lt.s32.totalorder %v3639, 0
        %v3641 = vsub.s32 0, %v3639
        %v3642 = vsel %vm3640, %v3641, %v3639
        %v3643 = vclz %v3642
        %v3644 = vsub.s32 %v3643, 2
        %vm3645 = vcmp.gt.s32.totalorder 0, %v3644
        %v3646 = vsel %vm3645, 0, %v3644
        %v3647 = vsub.s32 32, %v3646
        %v3648 = vshll.u32 %v3639, %v3646
        %v3649 = vshrl.u32 %v3631, %v3647
        %v3650 = vor.u32 %v3648, %v3649
        %v3651 = vsub.s32 4294967266, %v3646
        %v3652 = vadd.s32 %v3651, 127
        %v3653 = vshll.u32 %v3652, 23
        %v3654 = vor.u32 4788187, %v3653
        %v3655 = vand.u32 2147483647, %v3654
        %v3657 = vcvt.s32.f32 %v3650
        %v3658 = vmul.f32 %v3657, %v3655
        %v3659 = vxor.u32 %v3658, 2147483648
        %v3660 = vsel %vm3577, %v3659, %v3658
        %v3661 = vsub.s32 4, %v3637
        %v3662 = vsel %vm3577, %v3661, %v3637
        %v3663 = vsel %vm3576, %v687, %v3660
        %v3664 = vsel %vm3576, 0, %v3662
        %v3665 = vcosq.f32.pop %v3663
        %v3666 = vsinq.f32.pop %v3663
        %vm3667 = vweird.f32 %v687
        %v3668 = vand.u32 %v3664, 3
        %vm3669 = vcmp.lt.s32.totalorder %v3668, 2
        %vm3670 = vcmp.eq.s32.totalorder %v3668, 0
        %v3671 = vxor.u32 %v3666, 2147483648
        %v3672 = vsel %vm3670, %v3665, %v3671
        %vm3673 = vcmp.eq.s32.totalorder %v3668, 2
        %v3674 = vxor.u32 %v3665, 2147483648
        %v3675 = vsel %vm3673, %v3674, %v3666
        %v3676 = vsel %vm3669, %v3672, %v3675
        %v3677 = vsel %vm3667, nan, %v3676
        %v3678 = vand.u32 2147483647, %v688
        %vm3679 = vcmp.le.f32.partialorder %v3678, 0.7853982
        %vm3680 = vcmp.lt.s32.totalorder %v688, 0
        %v3681 = vand.u32 %v688, 2139095040
        %v3682 = vshrl.u32 %v3681, 23
        %v3683 = vsub.s32 %v3682, 127
        %v3684 = vand.u32 2147483647, %v688
        %v3685 = vand.u32 %v3684, 8388607
        %v3686 = vor.u32 %v3685, 8388608
        %v3687 = vsub.s32 0, %v3686
        %v3688 = vadd.s32 %v3683, 1
        %vm3689 = vcmp.gt.s32.totalorder %v3688, 0
        %v3690 = vsel %vm3689, %v3688, 0
        %v3691 = vshrl.u32 %v3690, 5
        %v3692 = vand.u32 %v3690, 31
        %v3693 = vsub.s32 32, %v3692
        %v3694 = vshrl.u32 683565275, %v3693
        %v3695 = vshll.u32 683565275, %v3692
        %v3696 = vshrl.u32 2475754826, %v3693
        %v3697 = vor.u32 %v3695, %v3696
        %v3698 = vshll.u32 2475754826, %v3692
        %v3699 = vshrl.u32 2131351028, %v3693
        %v3700 = vor.u32 %v3698, %v3699
        %v3701 = vshll.u32 2131351028, %v3692
        %v3702 = vshrl.u32 2102212464, %v3693
        %v3703 = vor.u32 %v3701, %v3702
        %v3704 = vshll.u32 2102212464, %v3692
        %v3705 = vshrl.u32 920167782, %v3693
        %v3706 = vor.u32 %v3704, %v3705
        %v3707 = vshll.u32 920167782, %v3692
        %v3708 = vshrl.u32 1326507024, %v3693
        %v3709 = vor.u32 %v3707, %v3708
        %vm3710 = vcmp.lt.s32.totalorder %v3691, 1
        %vm3711 = vcmp.lt.s32.totalorder %v3691, 2
        %vm3712 = vcmp.lt.s32.totalorder %v3691, 3
        %vm3713 = vcmp.lt.s32.totalorder %v3691, 4
        %v3714 = vsel %vm3710, %v3694, %v3697
        %v3715 = vsel %vm3713, %v3703, 2102212464
        %v3716 = vsel %vm3712, %v3700, %v3715
        %v3717 = vsel %vm3711, %v3714, %v3716
        %v3718 = vsel %vm3710, %v3697, %v3700
        %v3719 = vsel %vm3713, %v3706, 920167782
        %v3720 = vsel %vm3712, %v3703, %v3719
        %v3721 = vsel %vm3711, %v3718, %v3720
        %v3722 = vsel %vm3710, %v3700, %v3703
        %v3723 = vsel %vm3713, %v3709, 1326507024
        %v3724 = vsel %vm3712, %v3706, %v3723
        %v3725 = vsel %vm3711, %v3722, %v3724
        %v3726 = vshll.u32 %v3686, 8
        %v3727 = vmul.u32.u64.compose %v3726, %v3725
        %v3728 = vextract.low.u32 %v3727
        %v3729 = vextract.high.u32 %v3727
        %v3730 = vmul.u32.u64.compose %v3726, %v3721
        %v3731 = vextract.low.u32 %v3730
        %v3732 = vextract.high.u32 %v3730
        %v3733 = vmul.u32 %v3726, %v3717
        %v3734 = vadd.s32 %v3729, %v3731
        %vm3735 = vc.u32 %v3729, %v3731
        %v3736 = vadd.s32 %v3732, 1
        %v3737 = vsel %vm3735, %v3736, %v3732
        %v3738 = vadd.s32 %v3733, %v3737
        %v3739 = vadd.s32 %v3738, 536870912
        %v3740 = vshrl.u32 %v3739, 30
        %v3741 = vshll.u32 %v3740, 30
        %v3742 = vsub.s32 %v3738, %v3741
        %vm3743 = vcmp.lt.s32.totalorder %v3742, 0
        %v3744 = vsub.s32 0, %v3742
        %v3745 = vsel %vm3743, %v3744, %v3742
        %v3746 = vclz %v3745
        %v3747 = vsub.s32 %v3746, 2
        %vm3748 = vcmp.gt.s32.totalorder 0, %v3747
        %v3749 = vsel %vm3748, 0, %v3747
        %v3750 = vsub.s32 32, %v3749
        %v3751 = vshll.u32 %v3742, %v3749
        %v3752 = vshrl.u32 %v3734, %v3750
        %v3753 = vor.u32 %v3751, %v3752
        %v3754 = vsub.s32 4294967266, %v3749
        %v3755 = vadd.s32 %v3754, 127
        %v3756 = vshll.u32 %v3755, 23
        %v3757 = vor.u32 4788187, %v3756
        %v3758 = vand.u32 2147483647, %v3757
        %v3760 = vcvt.s32.f32 %v3753
        %v3761 = vmul.f32 %v3760, %v3758
        %v3762 = vxor.u32 %v3761, 2147483648
        %v3763 = vsel %vm3680, %v3762, %v3761
        %v3764 = vsub.s32 4, %v3740
        %v3765 = vsel %vm3680, %v3764, %v3740
        %v3766 = vsel %vm3679, %v688, %v3763
        %v3767 = vsel %vm3679, 0, %v3765
        %v3768 = vcosq.f32.pop %v3766
        %v3769 = vsinq.f32.pop %v3766
        %vm3770 = vweird.f32 %v688
        %v3771 = vand.u32 %v3767, 3
        %vm3772 = vcmp.lt.s32.totalorder %v3771, 2
        %vm3773 = vcmp.eq.s32.totalorder %v3771, 0
        %v3774 = vxor.u32 %v3769, 2147483648
        %v3775 = vsel %vm3773, %v3768, %v3774
        %vm3776 = vcmp.eq.s32.totalorder %v3771, 2
        %v3777 = vxor.u32 %v3768, 2147483648
        %v3778 = vsel %vm3776, %v3777, %v3769
        %v3779 = vsel %vm3772, %v3775, %v3778
        %v3780 = vsel %vm3770, nan, %v3779
        %v3781 = vand.u32 2147483647, %v689
        %vm3782 = vcmp.le.f32.partialorder %v3781, 0.7853982
        %vm3783 = vcmp.lt.s32.totalorder %v689, 0
        %v3784 = vand.u32 %v689, 2139095040
        %v3785 = vshrl.u32 %v3784, 23
        %v3786 = vsub.s32 %v3785, 127
        %v3787 = vand.u32 2147483647, %v689
        %v3788 = vand.u32 %v3787, 8388607
        %v3789 = vor.u32 %v3788, 8388608
        %v3790 = vsub.s32 0, %v3789
        %v3791 = vadd.s32 %v3786, 1
        %vm3792 = vcmp.gt.s32.totalorder %v3791, 0
        %v3793 = vsel %vm3792, %v3791, 0
        %v3794 = vshrl.u32 %v3793, 5
        %v3795 = vand.u32 %v3793, 31
        %v3796 = vsub.s32 32, %v3795
        %v3797 = vshrl.u32 683565275, %v3796
        %v3798 = vshll.u32 683565275, %v3795
        %v3799 = vshrl.u32 2475754826, %v3796
        %v3800 = vor.u32 %v3798, %v3799
        %v3801 = vshll.u32 2475754826, %v3795
        %v3802 = vshrl.u32 2131351028, %v3796
        %v3803 = vor.u32 %v3801, %v3802
        %v3804 = vshll.u32 2131351028, %v3795
        %v3805 = vshrl.u32 2102212464, %v3796
        %v3806 = vor.u32 %v3804, %v3805
        %v3807 = vshll.u32 2102212464, %v3795
        %v3808 = vshrl.u32 920167782, %v3796
        %v3809 = vor.u32 %v3807, %v3808
        %v3810 = vshll.u32 920167782, %v3795
        %v3811 = vshrl.u32 1326507024, %v3796
        %v3812 = vor.u32 %v3810, %v3811
        %vm3813 = vcmp.lt.s32.totalorder %v3794, 1
        %vm3814 = vcmp.lt.s32.totalorder %v3794, 2
        %vm3815 = vcmp.lt.s32.totalorder %v3794, 3
        %vm3816 = vcmp.lt.s32.totalorder %v3794, 4
        %v3817 = vsel %vm3813, %v3797, %v3800
        %v3818 = vsel %vm3816, %v3806, 2102212464
        %v3819 = vsel %vm3815, %v3803, %v3818
        %v3820 = vsel %vm3814, %v3817, %v3819
        %v3821 = vsel %vm3813, %v3800, %v3803
        %v3822 = vsel %vm3816, %v3809, 920167782
        %v3823 = vsel %vm3815, %v3806, %v3822
        %v3824 = vsel %vm3814, %v3821, %v3823
        %v3825 = vsel %vm3813, %v3803, %v3806
        %v3826 = vsel %vm3816, %v3812, 1326507024
        %v3827 = vsel %vm3815, %v3809, %v3826
        %v3828 = vsel %vm3814, %v3825, %v3827
        %v3829 = vshll.u32 %v3789, 8
        %v3830 = vmul.u32.u64.compose %v3829, %v3828
        %v3831 = vextract.low.u32 %v3830
        %v3832 = vextract.high.u32 %v3830
        %v3833 = vmul.u32.u64.compose %v3829, %v3824
        %v3834 = vextract.low.u32 %v3833
        %v3835 = vextract.high.u32 %v3833
        %v3836 = vmul.u32 %v3829, %v3820
        %v3837 = vadd.s32 %v3832, %v3834
        %vm3838 = vc.u32 %v3832, %v3834
        %v3839 = vadd.s32 %v3835, 1
        %v3840 = vsel %vm3838, %v3839, %v3835
        %v3841 = vadd.s32 %v3836, %v3840
        %v3842 = vadd.s32 %v3841, 536870912
        %v3843 = vshrl.u32 %v3842, 30
        %v3844 = vshll.u32 %v3843, 30
        %v3845 = vsub.s32 %v3841, %v3844
        %vm3846 = vcmp.lt.s32.totalorder %v3845, 0
        %v3847 = vsub.s32 0, %v3845
        %v3848 = vsel %vm3846, %v3847, %v3845
        %v3849 = vclz %v3848
        %v3850 = vsub.s32 %v3849, 2
        %vm3851 = vcmp.gt.s32.totalorder 0, %v3850
        %v3852 = vsel %vm3851, 0, %v3850
        %v3853 = vsub.s32 32, %v3852
        %v3854 = vshll.u32 %v3845, %v3852
        %v3855 = vshrl.u32 %v3837, %v3853
        %v3856 = vor.u32 %v3854, %v3855
        %v3857 = vsub.s32 4294967266, %v3852
        %v3858 = vadd.s32 %v3857, 127
        %v3859 = vshll.u32 %v3858, 23
        %v3860 = vor.u32 4788187, %v3859
        %v3861 = vand.u32 2147483647, %v3860
        %v3863 = vcvt.s32.f32 %v3856
        %v3864 = vmul.f32 %v3863, %v3861
        %v3865 = vxor.u32 %v3864, 2147483648
        %v3866 = vsel %vm3783, %v3865, %v3864
        %v3867 = vsub.s32 4, %v3843
        %v3868 = vsel %vm3783, %v3867, %v3843
        %v3869 = vsel %vm3782, %v689, %v3866
        %v3870 = vsel %vm3782, 0, %v3868
        %v3871 = vcosq.f32.pop %v3869
        %v3872 = vsinq.f32.pop %v3869
        %vm3873 = vweird.f32 %v689
        %v3874 = vand.u32 %v3870, 3
        %vm3875 = vcmp.lt.s32.totalorder %v3874, 2
        %vm3876 = vcmp.eq.s32.totalorder %v3874, 0
        %v3877 = vxor.u32 %v3872, 2147483648
        %v3878 = vsel %vm3876, %v3871, %v3877
        %vm3879 = vcmp.eq.s32.totalorder %v3874, 2
        %v3880 = vxor.u32 %v3871, 2147483648
        %v3881 = vsel %vm3879, %v3880, %v3872
        %v3882 = vsel %vm3875, %v3878, %v3881
        %v3883 = vsel %vm3873, nan, %v3882
        %v3884 = vand.u32 2147483647, %v690
        %vm3885 = vcmp.le.f32.partialorder %v3884, 0.7853982
        %vm3886 = vcmp.lt.s32.totalorder %v690, 0
        %v3887 = vand.u32 %v690, 2139095040
        %v3888 = vshrl.u32 %v3887, 23
        %v3889 = vsub.s32 %v3888, 127
        %v3890 = vand.u32 2147483647, %v690
        %v3891 = vand.u32 %v3890, 8388607
        %v3892 = vor.u32 %v3891, 8388608
        %v3893 = vsub.s32 0, %v3892
        %v3894 = vadd.s32 %v3889, 1
        %vm3895 = vcmp.gt.s32.totalorder %v3894, 0
        %v3896 = vsel %vm3895, %v3894, 0
        %v3897 = vshrl.u32 %v3896, 5
        %v3898 = vand.u32 %v3896, 31
        %v3899 = vsub.s32 32, %v3898
        %v3900 = vshrl.u32 683565275, %v3899
        %v3901 = vshll.u32 683565275, %v3898
        %v3902 = vshrl.u32 2475754826, %v3899
        %v3903 = vor.u32 %v3901, %v3902
        %v3904 = vshll.u32 2475754826, %v3898
        %v3905 = vshrl.u32 2131351028, %v3899
        %v3906 = vor.u32 %v3904, %v3905
        %v3907 = vshll.u32 2131351028, %v3898
        %v3908 = vshrl.u32 2102212464, %v3899
        %v3909 = vor.u32 %v3907, %v3908
        %v3910 = vshll.u32 2102212464, %v3898
        %v3911 = vshrl.u32 920167782, %v3899
        %v3912 = vor.u32 %v3910, %v3911
        %v3913 = vshll.u32 920167782, %v3898
        %v3914 = vshrl.u32 1326507024, %v3899
        %v3915 = vor.u32 %v3913, %v3914
        %vm3916 = vcmp.lt.s32.totalorder %v3897, 1
        %vm3917 = vcmp.lt.s32.totalorder %v3897, 2
        %vm3918 = vcmp.lt.s32.totalorder %v3897, 3
        %vm3919 = vcmp.lt.s32.totalorder %v3897, 4
        %v3920 = vsel %vm3916, %v3900, %v3903
        %v3921 = vsel %vm3919, %v3909, 2102212464
        %v3922 = vsel %vm3918, %v3906, %v3921
        %v3923 = vsel %vm3917, %v3920, %v3922
        %v3924 = vsel %vm3916, %v3903, %v3906
        %v3925 = vsel %vm3919, %v3912, 920167782
        %v3926 = vsel %vm3918, %v3909, %v3925
        %v3927 = vsel %vm3917, %v3924, %v3926
        %v3928 = vsel %vm3916, %v3906, %v3909
        %v3929 = vsel %vm3919, %v3915, 1326507024
        %v3930 = vsel %vm3918, %v3912, %v3929
        %v3931 = vsel %vm3917, %v3928, %v3930
        %v3932 = vshll.u32 %v3892, 8
        %v3933 = vmul.u32.u64.compose %v3932, %v3931
        %v3934 = vextract.low.u32 %v3933
        %v3935 = vextract.high.u32 %v3933
        %v3936 = vmul.u32.u64.compose %v3932, %v3927
        %v3937 = vextract.low.u32 %v3936
        %v3938 = vextract.high.u32 %v3936
        %v3939 = vmul.u32 %v3932, %v3923
        %v3940 = vadd.s32 %v3935, %v3937
        %vm3941 = vc.u32 %v3935, %v3937
        %v3942 = vadd.s32 %v3938, 1
        %v3943 = vsel %vm3941, %v3942, %v3938
        %v3944 = vadd.s32 %v3939, %v3943
        %v3945 = vadd.s32 %v3944, 536870912
        %v3946 = vshrl.u32 %v3945, 30
        %v3947 = vshll.u32 %v3946, 30
        %v3948 = vsub.s32 %v3944, %v3947
        %vm3949 = vcmp.lt.s32.totalorder %v3948, 0
        %v3950 = vsub.s32 0, %v3948
        %v3951 = vsel %vm3949, %v3950, %v3948
        %v3952 = vclz %v3951
        %v3953 = vsub.s32 %v3952, 2
        %vm3954 = vcmp.gt.s32.totalorder 0, %v3953
        %v3955 = vsel %vm3954, 0, %v3953
        %v3956 = vsub.s32 32, %v3955
        %v3957 = vshll.u32 %v3948, %v3955
        %v3958 = vshrl.u32 %v3940, %v3956
        %v3959 = vor.u32 %v3957, %v3958
        %v3960 = vsub.s32 4294967266, %v3955
        %v3961 = vadd.s32 %v3960, 127
        %v3962 = vshll.u32 %v3961, 23
        %v3963 = vor.u32 4788187, %v3962
        %v3964 = vand.u32 2147483647, %v3963
        %v3966 = vcvt.s32.f32 %v3959
        %v3967 = vmul.f32 %v3966, %v3964
        %v3968 = vxor.u32 %v3967, 2147483648
        %v3969 = vsel %vm3886, %v3968, %v3967
        %v3970 = vsub.s32 4, %v3946
        %v3971 = vsel %vm3886, %v3970, %v3946
        %v3972 = vsel %vm3885, %v690, %v3969
        %v3973 = vsel %vm3885, 0, %v3971
        %v3974 = vcosq.f32.pop %v3972
        %v3975 = vsinq.f32.pop %v3972
        %vm3976 = vweird.f32 %v690
        %v3977 = vand.u32 %v3973, 3
        %vm3978 = vcmp.lt.s32.totalorder %v3977, 2
        %vm3979 = vcmp.eq.s32.totalorder %v3977, 0
        %v3980 = vxor.u32 %v3975, 2147483648
        %v3981 = vsel %vm3979, %v3974, %v3980
        %vm3982 = vcmp.eq.s32.totalorder %v3977, 2
        %v3983 = vxor.u32 %v3974, 2147483648
        %v3984 = vsel %vm3982, %v3983, %v3975
        %v3985 = vsel %vm3978, %v3981, %v3984
        %v3986 = vsel %vm3976, nan, %v3985
        %v3987 = vand.u32 2147483647, %v659
        %vm3988 = vcmp.le.f32.partialorder %v3987, 0.7853982
        %vm3989 = vcmp.lt.s32.totalorder %v659, 0
        %v3990 = vand.u32 %v659, 2139095040
        %v3991 = vshrl.u32 %v3990, 23
        %v3992 = vsub.s32 %v3991, 127
        %v3993 = vand.u32 2147483647, %v659
        %v3994 = vand.u32 %v3993, 8388607
        %v3995 = vor.u32 %v3994, 8388608
        %v3996 = vsub.s32 0, %v3995
        %v3997 = vadd.s32 %v3992, 1
        %vm3998 = vcmp.gt.s32.totalorder %v3997, 0
        %v3999 = vsel %vm3998, %v3997, 0
        %v4000 = vshrl.u32 %v3999, 5
        %v4001 = vand.u32 %v3999, 31
        %v4002 = vsub.s32 32, %v4001
        %v4003 = vshrl.u32 683565275, %v4002
        %v4004 = vshll.u32 683565275, %v4001
        %v4005 = vshrl.u32 2475754826, %v4002
        %v4006 = vor.u32 %v4004, %v4005
        %v4007 = vshll.u32 2475754826, %v4001
        %v4008 = vshrl.u32 2131351028, %v4002
        %v4009 = vor.u32 %v4007, %v4008
        %v4010 = vshll.u32 2131351028, %v4001
        %v4011 = vshrl.u32 2102212464, %v4002
        %v4012 = vor.u32 %v4010, %v4011
        %v4013 = vshll.u32 2102212464, %v4001
        %v4014 = vshrl.u32 920167782, %v4002
        %v4015 = vor.u32 %v4013, %v4014
        %v4016 = vshll.u32 920167782, %v4001
        %v4017 = vshrl.u32 1326507024, %v4002
        %v4018 = vor.u32 %v4016, %v4017
        %vm4019 = vcmp.lt.s32.totalorder %v4000, 1
        %vm4020 = vcmp.lt.s32.totalorder %v4000, 2
        %vm4021 = vcmp.lt.s32.totalorder %v4000, 3
        %vm4022 = vcmp.lt.s32.totalorder %v4000, 4
        %v4023 = vsel %vm4019, %v4003, %v4006
        %v4024 = vsel %vm4022, %v4012, 2102212464
        %v4025 = vsel %vm4021, %v4009, %v4024
        %v4026 = vsel %vm4020, %v4023, %v4025
        %v4027 = vsel %vm4019, %v4006, %v4009
        %v4028 = vsel %vm4022, %v4015, 920167782
        %v4029 = vsel %vm4021, %v4012, %v4028
        %v4030 = vsel %vm4020, %v4027, %v4029
        %v4031 = vsel %vm4019, %v4009, %v4012
        %v4032 = vsel %vm4022, %v4018, 1326507024
        %v4033 = vsel %vm4021, %v4015, %v4032
        %v4034 = vsel %vm4020, %v4031, %v4033
        %v4035 = vshll.u32 %v3995, 8
        %v4036 = vmul.u32.u64.compose %v4035, %v4034
        %v4037 = vextract.low.u32 %v4036
        %v4038 = vextract.high.u32 %v4036
        %v4039 = vmul.u32.u64.compose %v4035, %v4030
        %v4040 = vextract.low.u32 %v4039
        %v4041 = vextract.high.u32 %v4039
        %v4042 = vmul.u32 %v4035, %v4026
        %v4043 = vadd.s32 %v4038, %v4040
        %vm4044 = vc.u32 %v4038, %v4040
        %v4045 = vadd.s32 %v4041, 1
        %v4046 = vsel %vm4044, %v4045, %v4041
        %v4047 = vadd.s32 %v4042, %v4046
        %v4048 = vadd.s32 %v4047, 536870912
        %v4049 = vshrl.u32 %v4048, 30
        %v4050 = vshll.u32 %v4049, 30
        %v4051 = vsub.s32 %v4047, %v4050
        %vm4052 = vcmp.lt.s32.totalorder %v4051, 0
        %v4053 = vsub.s32 0, %v4051
        %v4054 = vsel %vm4052, %v4053, %v4051
        %v4055 = vclz %v4054
        %v4056 = vsub.s32 %v4055, 2
        %vm4057 = vcmp.gt.s32.totalorder 0, %v4056
        %v4058 = vsel %vm4057, 0, %v4056
        %v4059 = vsub.s32 32, %v4058
        %v4060 = vshll.u32 %v4051, %v4058
        %v4061 = vshrl.u32 %v4043, %v4059
        %v4062 = vor.u32 %v4060, %v4061
        %v4063 = vsub.s32 4294967266, %v4058
        %v4064 = vadd.s32 %v4063, 127
        %v4065 = vshll.u32 %v4064, 23
        %v4066 = vor.u32 4788187, %v4065
        %v4067 = vand.u32 2147483647, %v4066
        %v4069 = vcvt.s32.f32 %v4062
        %v4070 = vmul.f32 %v4069, %v4067
        %v4071 = vxor.u32 %v4070, 2147483648
        %v4072 = vsel %vm3989, %v4071, %v4070
        %v4073 = vsub.s32 4, %v4049
        %v4074 = vsel %vm3989, %v4073, %v4049
        %v4075 = vsel %vm3988, %v659, %v4072
        %v4076 = vsel %vm3988, 0, %v4074
        %v4077 = vcosq.f32.pop %v4075
        %v4078 = vsinq.f32.pop %v4075
        %vm4079 = vweird.f32 %v659
        %v4080 = vadd.s32 %v4076, 3
        %v4081 = vand.u32 %v4080, 3
        %vm4082 = vcmp.lt.s32.totalorder %v4081, 2
        %vm4083 = vcmp.eq.s32.totalorder %v4081, 0
        %v4084 = vxor.u32 %v4078, 2147483648
        %v4085 = vsel %vm4083, %v4077, %v4084
        %vm4086 = vcmp.eq.s32.totalorder %v4081, 2
        %v4087 = vxor.u32 %v4077, 2147483648
        %v4088 = vsel %vm4086, %v4087, %v4078
        %v4089 = vsel %vm4082, %v4085, %v4088
        %v4090 = vsel %vm4079, nan, %v4089
        %v4091 = vand.u32 2147483647, %v660
        %vm4092 = vcmp.le.f32.partialorder %v4091, 0.7853982
        %vm4093 = vcmp.lt.s32.totalorder %v660, 0
        %v4094 = vand.u32 %v660, 2139095040
        %v4095 = vshrl.u32 %v4094, 23
        %v4096 = vsub.s32 %v4095, 127
        %v4097 = vand.u32 2147483647, %v660
        %v4098 = vand.u32 %v4097, 8388607
        %v4099 = vor.u32 %v4098, 8388608
        %v4100 = vsub.s32 0, %v4099
        %v4101 = vadd.s32 %v4096, 1
        %vm4102 = vcmp.gt.s32.totalorder %v4101, 0
        %v4103 = vsel %vm4102, %v4101, 0
        %v4104 = vshrl.u32 %v4103, 5
        %v4105 = vand.u32 %v4103, 31
        %v4106 = vsub.s32 32, %v4105
        %v4107 = vshrl.u32 683565275, %v4106
        %v4108 = vshll.u32 683565275, %v4105
        %v4109 = vshrl.u32 2475754826, %v4106
        %v4110 = vor.u32 %v4108, %v4109
        %v4111 = vshll.u32 2475754826, %v4105
        %v4112 = vshrl.u32 2131351028, %v4106
        %v4113 = vor.u32 %v4111, %v4112
        %v4114 = vshll.u32 2131351028, %v4105
        %v4115 = vshrl.u32 2102212464, %v4106
        %v4116 = vor.u32 %v4114, %v4115
        %v4117 = vshll.u32 2102212464, %v4105
        %v4118 = vshrl.u32 920167782, %v4106
        %v4119 = vor.u32 %v4117, %v4118
        %v4120 = vshll.u32 920167782, %v4105
        %v4121 = vshrl.u32 1326507024, %v4106
        %v4122 = vor.u32 %v4120, %v4121
        %vm4123 = vcmp.lt.s32.totalorder %v4104, 1
        %vm4124 = vcmp.lt.s32.totalorder %v4104, 2
        %vm4125 = vcmp.lt.s32.totalorder %v4104, 3
        %vm4126 = vcmp.lt.s32.totalorder %v4104, 4
        %v4127 = vsel %vm4123, %v4107, %v4110
        %v4128 = vsel %vm4126, %v4116, 2102212464
        %v4129 = vsel %vm4125, %v4113, %v4128
        %v4130 = vsel %vm4124, %v4127, %v4129
        %v4131 = vsel %vm4123, %v4110, %v4113
        %v4132 = vsel %vm4126, %v4119, 920167782
        %v4133 = vsel %vm4125, %v4116, %v4132
        %v4134 = vsel %vm4124, %v4131, %v4133
        %v4135 = vsel %vm4123, %v4113, %v4116
        %v4136 = vsel %vm4126, %v4122, 1326507024
        %v4137 = vsel %vm4125, %v4119, %v4136
        %v4138 = vsel %vm4124, %v4135, %v4137
        %v4139 = vshll.u32 %v4099, 8
        %v4140 = vmul.u32.u64.compose %v4139, %v4138
        %v4141 = vextract.low.u32 %v4140
        %v4142 = vextract.high.u32 %v4140
        %v4143 = vmul.u32.u64.compose %v4139, %v4134
        %v4144 = vextract.low.u32 %v4143
        %v4145 = vextract.high.u32 %v4143
        %v4146 = vmul.u32 %v4139, %v4130
        %v4147 = vadd.s32 %v4142, %v4144
        %vm4148 = vc.u32 %v4142, %v4144
        %v4149 = vadd.s32 %v4145, 1
        %v4150 = vsel %vm4148, %v4149, %v4145
        %v4151 = vadd.s32 %v4146, %v4150
        %v4152 = vadd.s32 %v4151, 536870912
        %v4153 = vshrl.u32 %v4152, 30
        %v4154 = vshll.u32 %v4153, 30
        %v4155 = vsub.s32 %v4151, %v4154
        %vm4156 = vcmp.lt.s32.totalorder %v4155, 0
        %v4157 = vsub.s32 0, %v4155
        %v4158 = vsel %vm4156, %v4157, %v4155
        %v4159 = vclz %v4158
        %v4160 = vsub.s32 %v4159, 2
        %vm4161 = vcmp.gt.s32.totalorder 0, %v4160
        %v4162 = vsel %vm4161, 0, %v4160
        %v4163 = vsub.s32 32, %v4162
        %v4164 = vshll.u32 %v4155, %v4162
        %v4165 = vshrl.u32 %v4147, %v4163
        %v4166 = vor.u32 %v4164, %v4165
        %v4167 = vsub.s32 4294967266, %v4162
        %v4168 = vadd.s32 %v4167, 127
        %v4169 = vshll.u32 %v4168, 23
        %v4170 = vor.u32 4788187, %v4169
        %v4171 = vand.u32 2147483647, %v4170
        %v4173 = vcvt.s32.f32 %v4166
        %v4174 = vmul.f32 %v4173, %v4171
        %v4175 = vxor.u32 %v4174, 2147483648
        %v4176 = vsel %vm4093, %v4175, %v4174
        %v4177 = vsub.s32 4, %v4153
        %v4178 = vsel %vm4093, %v4177, %v4153
        %v4179 = vsel %vm4092, %v660, %v4176
        %v4180 = vsel %vm4092, 0, %v4178
        %v4181 = vcosq.f32.pop %v4179
        %v4182 = vsinq.f32.pop %v4179
        %vm4183 = vweird.f32 %v660
        %v4184 = vadd.s32 %v4180, 3
        %v4185 = vand.u32 %v4184, 3
        %vm4186 = vcmp.lt.s32.totalorder %v4185, 2
        %vm4187 = vcmp.eq.s32.totalorder %v4185, 0
        %v4188 = vxor.u32 %v4182, 2147483648
        %v4189 = vsel %vm4187, %v4181, %v4188
        %vm4190 = vcmp.eq.s32.totalorder %v4185, 2
        %v4191 = vxor.u32 %v4181, 2147483648
        %v4192 = vsel %vm4190, %v4191, %v4182
        %v4193 = vsel %vm4186, %v4189, %v4192
        %v4194 = vsel %vm4183, nan, %v4193
        %v4195 = vand.u32 2147483647, %v661
        %vm4196 = vcmp.le.f32.partialorder %v4195, 0.7853982
        %vm4197 = vcmp.lt.s32.totalorder %v661, 0
        %v4198 = vand.u32 %v661, 2139095040
        %v4199 = vshrl.u32 %v4198, 23
        %v4200 = vsub.s32 %v4199, 127
        %v4201 = vand.u32 2147483647, %v661
        %v4202 = vand.u32 %v4201, 8388607
        %v4203 = vor.u32 %v4202, 8388608
        %v4204 = vsub.s32 0, %v4203
        %v4205 = vadd.s32 %v4200, 1
        %vm4206 = vcmp.gt.s32.totalorder %v4205, 0
        %v4207 = vsel %vm4206, %v4205, 0
        %v4208 = vshrl.u32 %v4207, 5
        %v4209 = vand.u32 %v4207, 31
        %v4210 = vsub.s32 32, %v4209
        %v4211 = vshrl.u32 683565275, %v4210
        %v4212 = vshll.u32 683565275, %v4209
        %v4213 = vshrl.u32 2475754826, %v4210
        %v4214 = vor.u32 %v4212, %v4213
        %v4215 = vshll.u32 2475754826, %v4209
        %v4216 = vshrl.u32 2131351028, %v4210
        %v4217 = vor.u32 %v4215, %v4216
        %v4218 = vshll.u32 2131351028, %v4209
        %v4219 = vshrl.u32 2102212464, %v4210
        %v4220 = vor.u32 %v4218, %v4219
        %v4221 = vshll.u32 2102212464, %v4209
        %v4222 = vshrl.u32 920167782, %v4210
        %v4223 = vor.u32 %v4221, %v4222
        %v4224 = vshll.u32 920167782, %v4209
        %v4225 = vshrl.u32 1326507024, %v4210
        %v4226 = vor.u32 %v4224, %v4225
        %vm4227 = vcmp.lt.s32.totalorder %v4208, 1
        %vm4228 = vcmp.lt.s32.totalorder %v4208, 2
        %vm4229 = vcmp.lt.s32.totalorder %v4208, 3
        %vm4230 = vcmp.lt.s32.totalorder %v4208, 4
        %v4231 = vsel %vm4227, %v4211, %v4214
        %v4232 = vsel %vm4230, %v4220, 2102212464
        %v4233 = vsel %vm4229, %v4217, %v4232
        %v4234 = vsel %vm4228, %v4231, %v4233
        %v4235 = vsel %vm4227, %v4214, %v4217
        %v4236 = vsel %vm4230, %v4223, 920167782
        %v4237 = vsel %vm4229, %v4220, %v4236
        %v4238 = vsel %vm4228, %v4235, %v4237
        %v4239 = vsel %vm4227, %v4217, %v4220
        %v4240 = vsel %vm4230, %v4226, 1326507024
        %v4241 = vsel %vm4229, %v4223, %v4240
        %v4242 = vsel %vm4228, %v4239, %v4241
        %v4243 = vshll.u32 %v4203, 8
        %v4244 = vmul.u32.u64.compose %v4243, %v4242
        %v4245 = vextract.low.u32 %v4244
        %v4246 = vextract.high.u32 %v4244
        %v4247 = vmul.u32.u64.compose %v4243, %v4238
        %v4248 = vextract.low.u32 %v4247
        %v4249 = vextract.high.u32 %v4247
        %v4250 = vmul.u32 %v4243, %v4234
        %v4251 = vadd.s32 %v4246, %v4248
        %vm4252 = vc.u32 %v4246, %v4248
        %v4253 = vadd.s32 %v4249, 1
        %v4254 = vsel %vm4252, %v4253, %v4249
        %v4255 = vadd.s32 %v4250, %v4254
        %v4256 = vadd.s32 %v4255, 536870912
        %v4257 = vshrl.u32 %v4256, 30
        %v4258 = vshll.u32 %v4257, 30
        %v4259 = vsub.s32 %v4255, %v4258
        %vm4260 = vcmp.lt.s32.totalorder %v4259, 0
        %v4261 = vsub.s32 0, %v4259
        %v4262 = vsel %vm4260, %v4261, %v4259
        %v4263 = vclz %v4262
        %v4264 = vsub.s32 %v4263, 2
        %vm4265 = vcmp.gt.s32.totalorder 0, %v4264
        %v4266 = vsel %vm4265, 0, %v4264
        %v4267 = vsub.s32 32, %v4266
        %v4268 = vshll.u32 %v4259, %v4266
        %v4269 = vshrl.u32 %v4251, %v4267
        %v4270 = vor.u32 %v4268, %v4269
        %v4271 = vsub.s32 4294967266, %v4266
        %v4272 = vadd.s32 %v4271, 127
        %v4273 = vshll.u32 %v4272, 23
        %v4274 = vor.u32 4788187, %v4273
        %v4275 = vand.u32 2147483647, %v4274
        %v4277 = vcvt.s32.f32 %v4270
        %v4278 = vmul.f32 %v4277, %v4275
        %v4279 = vxor.u32 %v4278, 2147483648
        %v4280 = vsel %vm4197, %v4279, %v4278
        %v4281 = vsub.s32 4, %v4257
        %v4282 = vsel %vm4197, %v4281, %v4257
        %v4283 = vsel %vm4196, %v661, %v4280
        %v4284 = vsel %vm4196, 0, %v4282
        %v4285 = vcosq.f32.pop %v4283
        %v4286 = vsinq.f32.pop %v4283
        %vm4287 = vweird.f32 %v661
        %v4288 = vadd.s32 %v4284, 3
        %v4289 = vand.u32 %v4288, 3
        %vm4290 = vcmp.lt.s32.totalorder %v4289, 2
        %vm4291 = vcmp.eq.s32.totalorder %v4289, 0
        %v4292 = vxor.u32 %v4286, 2147483648
        %v4293 = vsel %vm4291, %v4285, %v4292
        %vm4294 = vcmp.eq.s32.totalorder %v4289, 2
        %v4295 = vxor.u32 %v4285, 2147483648
        %v4296 = vsel %vm4294, %v4295, %v4286
        %v4297 = vsel %vm4290, %v4293, %v4296
        %v4298 = vsel %vm4287, nan, %v4297
        %v4299 = vand.u32 2147483647, %v662
        %vm4300 = vcmp.le.f32.partialorder %v4299, 0.7853982
        %vm4301 = vcmp.lt.s32.totalorder %v662, 0
        %v4302 = vand.u32 %v662, 2139095040
        %v4303 = vshrl.u32 %v4302, 23
        %v4304 = vsub.s32 %v4303, 127
        %v4305 = vand.u32 2147483647, %v662
        %v4306 = vand.u32 %v4305, 8388607
        %v4307 = vor.u32 %v4306, 8388608
        %v4308 = vsub.s32 0, %v4307
        %v4309 = vadd.s32 %v4304, 1
        %vm4310 = vcmp.gt.s32.totalorder %v4309, 0
        %v4311 = vsel %vm4310, %v4309, 0
        %v4312 = vshrl.u32 %v4311, 5
        %v4313 = vand.u32 %v4311, 31
        %v4314 = vsub.s32 32, %v4313
        %v4315 = vshrl.u32 683565275, %v4314
        %v4316 = vshll.u32 683565275, %v4313
        %v4317 = vshrl.u32 2475754826, %v4314
        %v4318 = vor.u32 %v4316, %v4317
        %v4319 = vshll.u32 2475754826, %v4313
        %v4320 = vshrl.u32 2131351028, %v4314
        %v4321 = vor.u32 %v4319, %v4320
        %v4322 = vshll.u32 2131351028, %v4313
        %v4323 = vshrl.u32 2102212464, %v4314
        %v4324 = vor.u32 %v4322, %v4323
        %v4325 = vshll.u32 2102212464, %v4313
        %v4326 = vshrl.u32 920167782, %v4314
        %v4327 = vor.u32 %v4325, %v4326
        %v4328 = vshll.u32 920167782, %v4313
        %v4329 = vshrl.u32 1326507024, %v4314
        %v4330 = vor.u32 %v4328, %v4329
        %vm4331 = vcmp.lt.s32.totalorder %v4312, 1
        %vm4332 = vcmp.lt.s32.totalorder %v4312, 2
        %vm4333 = vcmp.lt.s32.totalorder %v4312, 3
        %vm4334 = vcmp.lt.s32.totalorder %v4312, 4
        %v4335 = vsel %vm4331, %v4315, %v4318
        %v4336 = vsel %vm4334, %v4324, 2102212464
        %v4337 = vsel %vm4333, %v4321, %v4336
        %v4338 = vsel %vm4332, %v4335, %v4337
        %v4339 = vsel %vm4331, %v4318, %v4321
        %v4340 = vsel %vm4334, %v4327, 920167782
        %v4341 = vsel %vm4333, %v4324, %v4340
        %v4342 = vsel %vm4332, %v4339, %v4341
        %v4343 = vsel %vm4331, %v4321, %v4324
        %v4344 = vsel %vm4334, %v4330, 1326507024
        %v4345 = vsel %vm4333, %v4327, %v4344
        %v4346 = vsel %vm4332, %v4343, %v4345
        %v4347 = vshll.u32 %v4307, 8
        %v4348 = vmul.u32.u64.compose %v4347, %v4346
        %v4349 = vextract.low.u32 %v4348
        %v4350 = vextract.high.u32 %v4348
        %v4351 = vmul.u32.u64.compose %v4347, %v4342
        %v4352 = vextract.low.u32 %v4351
        %v4353 = vextract.high.u32 %v4351
        %v4354 = vmul.u32 %v4347, %v4338
        %v4355 = vadd.s32 %v4350, %v4352
        %vm4356 = vc.u32 %v4350, %v4352
        %v4357 = vadd.s32 %v4353, 1
        %v4358 = vsel %vm4356, %v4357, %v4353
        %v4359 = vadd.s32 %v4354, %v4358
        %v4360 = vadd.s32 %v4359, 536870912
        %v4361 = vshrl.u32 %v4360, 30
        %v4362 = vshll.u32 %v4361, 30
        %v4363 = vsub.s32 %v4359, %v4362
        %vm4364 = vcmp.lt.s32.totalorder %v4363, 0
        %v4365 = vsub.s32 0, %v4363
        %v4366 = vsel %vm4364, %v4365, %v4363
        %v4367 = vclz %v4366
        %v4368 = vsub.s32 %v4367, 2
        %vm4369 = vcmp.gt.s32.totalorder 0, %v4368
        %v4370 = vsel %vm4369, 0, %v4368
        %v4371 = vsub.s32 32, %v4370
        %v4372 = vshll.u32 %v4363, %v4370
        %v4373 = vshrl.u32 %v4355, %v4371
        %v4374 = vor.u32 %v4372, %v4373
        %v4375 = vsub.s32 4294967266, %v4370
        %v4376 = vadd.s32 %v4375, 127
        %v4377 = vshll.u32 %v4376, 23
        %v4378 = vor.u32 4788187, %v4377
        %v4379 = vand.u32 2147483647, %v4378
        %v4381 = vcvt.s32.f32 %v4374
        %v4382 = vmul.f32 %v4381, %v4379
        %v4383 = vxor.u32 %v4382, 2147483648
        %v4384 = vsel %vm4301, %v4383, %v4382
        %v4385 = vsub.s32 4, %v4361
        %v4386 = vsel %vm4301, %v4385, %v4361
        %v4387 = vsel %vm4300, %v662, %v4384
        %v4388 = vsel %vm4300, 0, %v4386
        %v4389 = vcosq.f32.pop %v4387
        %v4390 = vsinq.f32.pop %v4387
        %vm4391 = vweird.f32 %v662
        %v4392 = vadd.s32 %v4388, 3
        %v4393 = vand.u32 %v4392, 3
        %vm4394 = vcmp.lt.s32.totalorder %v4393, 2
        %vm4395 = vcmp.eq.s32.totalorder %v4393, 0
        %v4396 = vxor.u32 %v4390, 2147483648
        %v4397 = vsel %vm4395, %v4389, %v4396
        %vm4398 = vcmp.eq.s32.totalorder %v4393, 2
        %v4399 = vxor.u32 %v4389, 2147483648
        %v4400 = vsel %vm4398, %v4399, %v4390
        %v4401 = vsel %vm4394, %v4397, %v4400
        %v4402 = vsel %vm4391, nan, %v4401
        %v4403 = vand.u32 2147483647, %v663
        %vm4404 = vcmp.le.f32.partialorder %v4403, 0.7853982
        %vm4405 = vcmp.lt.s32.totalorder %v663, 0
        %v4406 = vand.u32 %v663, 2139095040
        %v4407 = vshrl.u32 %v4406, 23
        %v4408 = vsub.s32 %v4407, 127
        %v4409 = vand.u32 2147483647, %v663
        %v4410 = vand.u32 %v4409, 8388607
        %v4411 = vor.u32 %v4410, 8388608
        %v4412 = vsub.s32 0, %v4411
        %v4413 = vadd.s32 %v4408, 1
        %vm4414 = vcmp.gt.s32.totalorder %v4413, 0
        %v4415 = vsel %vm4414, %v4413, 0
        %v4416 = vshrl.u32 %v4415, 5
        %v4417 = vand.u32 %v4415, 31
        %v4418 = vsub.s32 32, %v4417
        %v4419 = vshrl.u32 683565275, %v4418
        %v4420 = vshll.u32 683565275, %v4417
        %v4421 = vshrl.u32 2475754826, %v4418
        %v4422 = vor.u32 %v4420, %v4421
        %v4423 = vshll.u32 2475754826, %v4417
        %v4424 = vshrl.u32 2131351028, %v4418
        %v4425 = vor.u32 %v4423, %v4424
        %v4426 = vshll.u32 2131351028, %v4417
        %v4427 = vshrl.u32 2102212464, %v4418
        %v4428 = vor.u32 %v4426, %v4427
        %v4429 = vshll.u32 2102212464, %v4417
        %v4430 = vshrl.u32 920167782, %v4418
        %v4431 = vor.u32 %v4429, %v4430
        %v4432 = vshll.u32 920167782, %v4417
        %v4433 = vshrl.u32 1326507024, %v4418
        %v4434 = vor.u32 %v4432, %v4433
        %vm4435 = vcmp.lt.s32.totalorder %v4416, 1
        %vm4436 = vcmp.lt.s32.totalorder %v4416, 2
        %vm4437 = vcmp.lt.s32.totalorder %v4416, 3
        %vm4438 = vcmp.lt.s32.totalorder %v4416, 4
        %v4439 = vsel %vm4435, %v4419, %v4422
        %v4440 = vsel %vm4438, %v4428, 2102212464
        %v4441 = vsel %vm4437, %v4425, %v4440
        %v4442 = vsel %vm4436, %v4439, %v4441
        %v4443 = vsel %vm4435, %v4422, %v4425
        %v4444 = vsel %vm4438, %v4431, 920167782
        %v4445 = vsel %vm4437, %v4428, %v4444
        %v4446 = vsel %vm4436, %v4443, %v4445
        %v4447 = vsel %vm4435, %v4425, %v4428
        %v4448 = vsel %vm4438, %v4434, 1326507024
        %v4449 = vsel %vm4437, %v4431, %v4448
        %v4450 = vsel %vm4436, %v4447, %v4449
        %v4451 = vshll.u32 %v4411, 8
        %v4452 = vmul.u32.u64.compose %v4451, %v4450
        %v4453 = vextract.low.u32 %v4452
        %v4454 = vextract.high.u32 %v4452
        %v4455 = vmul.u32.u64.compose %v4451, %v4446
        %v4456 = vextract.low.u32 %v4455
        %v4457 = vextract.high.u32 %v4455
        %v4458 = vmul.u32 %v4451, %v4442
        %v4459 = vadd.s32 %v4454, %v4456
        %vm4460 = vc.u32 %v4454, %v4456
        %v4461 = vadd.s32 %v4457, 1
        %v4462 = vsel %vm4460, %v4461, %v4457
        %v4463 = vadd.s32 %v4458, %v4462
        %v4464 = vadd.s32 %v4463, 536870912
        %v4465 = vshrl.u32 %v4464, 30
        %v4466 = vshll.u32 %v4465, 30
        %v4467 = vsub.s32 %v4463, %v4466
        %vm4468 = vcmp.lt.s32.totalorder %v4467, 0
        %v4469 = vsub.s32 0, %v4467
        %v4470 = vsel %vm4468, %v4469, %v4467
        %v4471 = vclz %v4470
        %v4472 = vsub.s32 %v4471, 2
        %vm4473 = vcmp.gt.s32.totalorder 0, %v4472
        %v4474 = vsel %vm4473, 0, %v4472
        %v4475 = vsub.s32 32, %v4474
        %v4476 = vshll.u32 %v4467, %v4474
        %v4477 = vshrl.u32 %v4459, %v4475
        %v4478 = vor.u32 %v4476, %v4477
        %v4479 = vsub.s32 4294967266, %v4474
        %v4480 = vadd.s32 %v4479, 127
        %v4481 = vshll.u32 %v4480, 23
        %v4482 = vor.u32 4788187, %v4481
        %v4483 = vand.u32 2147483647, %v4482
        %v4485 = vcvt.s32.f32 %v4478
        %v4486 = vmul.f32 %v4485, %v4483
        %v4487 = vxor.u32 %v4486, 2147483648
        %v4488 = vsel %vm4405, %v4487, %v4486
        %v4489 = vsub.s32 4, %v4465
        %v4490 = vsel %vm4405, %v4489, %v4465
        %v4491 = vsel %vm4404, %v663, %v4488
        %v4492 = vsel %vm4404, 0, %v4490
        %v4493 = vcosq.f32.pop %v4491
        %v4494 = vsinq.f32.pop %v4491
        %vm4495 = vweird.f32 %v663
        %v4496 = vadd.s32 %v4492, 3
        %v4497 = vand.u32 %v4496, 3
        %vm4498 = vcmp.lt.s32.totalorder %v4497, 2
        %vm4499 = vcmp.eq.s32.totalorder %v4497, 0
        %v4500 = vxor.u32 %v4494, 2147483648
        %v4501 = vsel %vm4499, %v4493, %v4500
        %vm4502 = vcmp.eq.s32.totalorder %v4497, 2
        %v4503 = vxor.u32 %v4493, 2147483648
        %v4504 = vsel %vm4502, %v4503, %v4494
        %v4505 = vsel %vm4498, %v4501, %v4504
        %v4506 = vsel %vm4495, nan, %v4505
        %v4507 = vand.u32 2147483647, %v664
        %vm4508 = vcmp.le.f32.partialorder %v4507, 0.7853982
        %vm4509 = vcmp.lt.s32.totalorder %v664, 0
        %v4510 = vand.u32 %v664, 2139095040
        %v4511 = vshrl.u32 %v4510, 23
        %v4512 = vsub.s32 %v4511, 127
        %v4513 = vand.u32 2147483647, %v664
        %v4514 = vand.u32 %v4513, 8388607
        %v4515 = vor.u32 %v4514, 8388608
        %v4516 = vsub.s32 0, %v4515
        %v4517 = vadd.s32 %v4512, 1
        %vm4518 = vcmp.gt.s32.totalorder %v4517, 0
        %v4519 = vsel %vm4518, %v4517, 0
        %v4520 = vshrl.u32 %v4519, 5
        %v4521 = vand.u32 %v4519, 31
        %v4522 = vsub.s32 32, %v4521
        %v4523 = vshrl.u32 683565275, %v4522
        %v4524 = vshll.u32 683565275, %v4521
        %v4525 = vshrl.u32 2475754826, %v4522
        %v4526 = vor.u32 %v4524, %v4525
        %v4527 = vshll.u32 2475754826, %v4521
        %v4528 = vshrl.u32 2131351028, %v4522
        %v4529 = vor.u32 %v4527, %v4528
        %v4530 = vshll.u32 2131351028, %v4521
        %v4531 = vshrl.u32 2102212464, %v4522
        %v4532 = vor.u32 %v4530, %v4531
        %v4533 = vshll.u32 2102212464, %v4521
        %v4534 = vshrl.u32 920167782, %v4522
        %v4535 = vor.u32 %v4533, %v4534
        %v4536 = vshll.u32 920167782, %v4521
        %v4537 = vshrl.u32 1326507024, %v4522
        %v4538 = vor.u32 %v4536, %v4537
        %vm4539 = vcmp.lt.s32.totalorder %v4520, 1
        %vm4540 = vcmp.lt.s32.totalorder %v4520, 2
        %vm4541 = vcmp.lt.s32.totalorder %v4520, 3
        %vm4542 = vcmp.lt.s32.totalorder %v4520, 4
        %v4543 = vsel %vm4539, %v4523, %v4526
        %v4544 = vsel %vm4542, %v4532, 2102212464
        %v4545 = vsel %vm4541, %v4529, %v4544
        %v4546 = vsel %vm4540, %v4543, %v4545
        %v4547 = vsel %vm4539, %v4526, %v4529
        %v4548 = vsel %vm4542, %v4535, 920167782
        %v4549 = vsel %vm4541, %v4532, %v4548
        %v4550 = vsel %vm4540, %v4547, %v4549
        %v4551 = vsel %vm4539, %v4529, %v4532
        %v4552 = vsel %vm4542, %v4538, 1326507024
        %v4553 = vsel %vm4541, %v4535, %v4552
        %v4554 = vsel %vm4540, %v4551, %v4553
        %v4555 = vshll.u32 %v4515, 8
        %v4556 = vmul.u32.u64.compose %v4555, %v4554
        %v4557 = vextract.low.u32 %v4556
        %v4558 = vextract.high.u32 %v4556
        %v4559 = vmul.u32.u64.compose %v4555, %v4550
        %v4560 = vextract.low.u32 %v4559
        %v4561 = vextract.high.u32 %v4559
        %v4562 = vmul.u32 %v4555, %v4546
        %v4563 = vadd.s32 %v4558, %v4560
        %vm4564 = vc.u32 %v4558, %v4560
        %v4565 = vadd.s32 %v4561, 1
        %v4566 = vsel %vm4564, %v4565, %v4561
        %v4567 = vadd.s32 %v4562, %v4566
        %v4568 = vadd.s32 %v4567, 536870912
        %v4569 = vshrl.u32 %v4568, 30
        %v4570 = vshll.u32 %v4569, 30
        %v4571 = vsub.s32 %v4567, %v4570
        %vm4572 = vcmp.lt.s32.totalorder %v4571, 0
        %v4573 = vsub.s32 0, %v4571
        %v4574 = vsel %vm4572, %v4573, %v4571
        %v4575 = vclz %v4574
        %v4576 = vsub.s32 %v4575, 2
        %vm4577 = vcmp.gt.s32.totalorder 0, %v4576
        %v4578 = vsel %vm4577, 0, %v4576
        %v4579 = vsub.s32 32, %v4578
        %v4580 = vshll.u32 %v4571, %v4578
        %v4581 = vshrl.u32 %v4563, %v4579
        %v4582 = vor.u32 %v4580, %v4581
        %v4583 = vsub.s32 4294967266, %v4578
        %v4584 = vadd.s32 %v4583, 127
        %v4585 = vshll.u32 %v4584, 23
        %v4586 = vor.u32 4788187, %v4585
        %v4587 = vand.u32 2147483647, %v4586
        %v4589 = vcvt.s32.f32 %v4582
        %v4590 = vmul.f32 %v4589, %v4587
        %v4591 = vxor.u32 %v4590, 2147483648
        %v4592 = vsel %vm4509, %v4591, %v4590
        %v4593 = vsub.s32 4, %v4569
        %v4594 = vsel %vm4509, %v4593, %v4569
        %v4595 = vsel %vm4508, %v664, %v4592
        %v4596 = vsel %vm4508, 0, %v4594
        %v4597 = vcosq.f32.pop %v4595
        %v4598 = vsinq.f32.pop %v4595
        %vm4599 = vweird.f32 %v664
        %v4600 = vadd.s32 %v4596, 3
        %v4601 = vand.u32 %v4600, 3
        %vm4602 = vcmp.lt.s32.totalorder %v4601, 2
        %vm4603 = vcmp.eq.s32.totalorder %v4601, 0
        %v4604 = vxor.u32 %v4598, 2147483648
        %v4605 = vsel %vm4603, %v4597, %v4604
        %vm4606 = vcmp.eq.s32.totalorder %v4601, 2
        %v4607 = vxor.u32 %v4597, 2147483648
        %v4608 = vsel %vm4606, %v4607, %v4598
        %v4609 = vsel %vm4602, %v4605, %v4608
        %v4610 = vsel %vm4599, nan, %v4609
        %v4611 = vand.u32 2147483647, %v665
        %vm4612 = vcmp.le.f32.partialorder %v4611, 0.7853982
        %vm4613 = vcmp.lt.s32.totalorder %v665, 0
        %v4614 = vand.u32 %v665, 2139095040
        %v4615 = vshrl.u32 %v4614, 23
        %v4616 = vsub.s32 %v4615, 127
        %v4617 = vand.u32 2147483647, %v665
        %v4618 = vand.u32 %v4617, 8388607
        %v4619 = vor.u32 %v4618, 8388608
        %v4620 = vsub.s32 0, %v4619
        %v4621 = vadd.s32 %v4616, 1
        %vm4622 = vcmp.gt.s32.totalorder %v4621, 0
        %v4623 = vsel %vm4622, %v4621, 0
        %v4624 = vshrl.u32 %v4623, 5
        %v4625 = vand.u32 %v4623, 31
        %v4626 = vsub.s32 32, %v4625
        %v4627 = vshrl.u32 683565275, %v4626
        %v4628 = vshll.u32 683565275, %v4625
        %v4629 = vshrl.u32 2475754826, %v4626
        %v4630 = vor.u32 %v4628, %v4629
        %v4631 = vshll.u32 2475754826, %v4625
        %v4632 = vshrl.u32 2131351028, %v4626
        %v4633 = vor.u32 %v4631, %v4632
        %v4634 = vshll.u32 2131351028, %v4625
        %v4635 = vshrl.u32 2102212464, %v4626
        %v4636 = vor.u32 %v4634, %v4635
        %v4637 = vshll.u32 2102212464, %v4625
        %v4638 = vshrl.u32 920167782, %v4626
        %v4639 = vor.u32 %v4637, %v4638
        %v4640 = vshll.u32 920167782, %v4625
        %v4641 = vshrl.u32 1326507024, %v4626
        %v4642 = vor.u32 %v4640, %v4641
        %vm4643 = vcmp.lt.s32.totalorder %v4624, 1
        %vm4644 = vcmp.lt.s32.totalorder %v4624, 2
        %vm4645 = vcmp.lt.s32.totalorder %v4624, 3
        %vm4646 = vcmp.lt.s32.totalorder %v4624, 4
        %v4647 = vsel %vm4643, %v4627, %v4630
        %v4648 = vsel %vm4646, %v4636, 2102212464
        %v4649 = vsel %vm4645, %v4633, %v4648
        %v4650 = vsel %vm4644, %v4647, %v4649
        %v4651 = vsel %vm4643, %v4630, %v4633
        %v4652 = vsel %vm4646, %v4639, 920167782
        %v4653 = vsel %vm4645, %v4636, %v4652
        %v4654 = vsel %vm4644, %v4651, %v4653
        %v4655 = vsel %vm4643, %v4633, %v4636
        %v4656 = vsel %vm4646, %v4642, 1326507024
        %v4657 = vsel %vm4645, %v4639, %v4656
        %v4658 = vsel %vm4644, %v4655, %v4657
        %v4659 = vshll.u32 %v4619, 8
        %v4660 = vmul.u32.u64.compose %v4659, %v4658
        %v4661 = vextract.low.u32 %v4660
        %v4662 = vextract.high.u32 %v4660
        %v4663 = vmul.u32.u64.compose %v4659, %v4654
        %v4664 = vextract.low.u32 %v4663
        %v4665 = vextract.high.u32 %v4663
        %v4666 = vmul.u32 %v4659, %v4650
        %v4667 = vadd.s32 %v4662, %v4664
        %vm4668 = vc.u32 %v4662, %v4664
        %v4669 = vadd.s32 %v4665, 1
        %v4670 = vsel %vm4668, %v4669, %v4665
        %v4671 = vadd.s32 %v4666, %v4670
        %v4672 = vadd.s32 %v4671, 536870912
        %v4673 = vshrl.u32 %v4672, 30
        %v4674 = vshll.u32 %v4673, 30
        %v4675 = vsub.s32 %v4671, %v4674
        %vm4676 = vcmp.lt.s32.totalorder %v4675, 0
        %v4677 = vsub.s32 0, %v4675
        %v4678 = vsel %vm4676, %v4677, %v4675
        %v4679 = vclz %v4678
        %v4680 = vsub.s32 %v4679, 2
        %vm4681 = vcmp.gt.s32.totalorder 0, %v4680
        %v4682 = vsel %vm4681, 0, %v4680
        %v4683 = vsub.s32 32, %v4682
        %v4684 = vshll.u32 %v4675, %v4682
        %v4685 = vshrl.u32 %v4667, %v4683
        %v4686 = vor.u32 %v4684, %v4685
        %v4687 = vsub.s32 4294967266, %v4682
        %v4688 = vadd.s32 %v4687, 127
        %v4689 = vshll.u32 %v4688, 23
        %v4690 = vor.u32 4788187, %v4689
        %v4691 = vand.u32 2147483647, %v4690
        %v4693 = vcvt.s32.f32 %v4686
        %v4694 = vmul.f32 %v4693, %v4691
        %v4695 = vxor.u32 %v4694, 2147483648
        %v4696 = vsel %vm4613, %v4695, %v4694
        %v4697 = vsub.s32 4, %v4673
        %v4698 = vsel %vm4613, %v4697, %v4673
        %v4699 = vsel %vm4612, %v665, %v4696
        %v4700 = vsel %vm4612, 0, %v4698
        %v4701 = vcosq.f32.pop %v4699
        %v4702 = vsinq.f32.pop %v4699
        %vm4703 = vweird.f32 %v665
        %v4704 = vadd.s32 %v4700, 3
        %v4705 = vand.u32 %v4704, 3
        %vm4706 = vcmp.lt.s32.totalorder %v4705, 2
        %vm4707 = vcmp.eq.s32.totalorder %v4705, 0
        %v4708 = vxor.u32 %v4702, 2147483648
        %v4709 = vsel %vm4707, %v4701, %v4708
        %vm4710 = vcmp.eq.s32.totalorder %v4705, 2
        %v4711 = vxor.u32 %v4701, 2147483648
        %v4712 = vsel %vm4710, %v4711, %v4702
        %v4713 = vsel %vm4706, %v4709, %v4712
        %v4714 = vsel %vm4703, nan, %v4713
        %v4715 = vand.u32 2147483647, %v666
        %vm4716 = vcmp.le.f32.partialorder %v4715, 0.7853982
        %vm4717 = vcmp.lt.s32.totalorder %v666, 0
        %v4718 = vand.u32 %v666, 2139095040
        %v4719 = vshrl.u32 %v4718, 23
        %v4720 = vsub.s32 %v4719, 127
        %v4721 = vand.u32 2147483647, %v666
        %v4722 = vand.u32 %v4721, 8388607
        %v4723 = vor.u32 %v4722, 8388608
        %v4724 = vsub.s32 0, %v4723
        %v4725 = vadd.s32 %v4720, 1
        %vm4726 = vcmp.gt.s32.totalorder %v4725, 0
        %v4727 = vsel %vm4726, %v4725, 0
        %v4728 = vshrl.u32 %v4727, 5
        %v4729 = vand.u32 %v4727, 31
        %v4730 = vsub.s32 32, %v4729
        %v4731 = vshrl.u32 683565275, %v4730
        %v4732 = vshll.u32 683565275, %v4729
        %v4733 = vshrl.u32 2475754826, %v4730
        %v4734 = vor.u32 %v4732, %v4733
        %v4735 = vshll.u32 2475754826, %v4729
        %v4736 = vshrl.u32 2131351028, %v4730
        %v4737 = vor.u32 %v4735, %v4736
        %v4738 = vshll.u32 2131351028, %v4729
        %v4739 = vshrl.u32 2102212464, %v4730
        %v4740 = vor.u32 %v4738, %v4739
        %v4741 = vshll.u32 2102212464, %v4729
        %v4742 = vshrl.u32 920167782, %v4730
        %v4743 = vor.u32 %v4741, %v4742
        %v4744 = vshll.u32 920167782, %v4729
        %v4745 = vshrl.u32 1326507024, %v4730
        %v4746 = vor.u32 %v4744, %v4745
        %vm4747 = vcmp.lt.s32.totalorder %v4728, 1
        %vm4748 = vcmp.lt.s32.totalorder %v4728, 2
        %vm4749 = vcmp.lt.s32.totalorder %v4728, 3
        %vm4750 = vcmp.lt.s32.totalorder %v4728, 4
        %v4751 = vsel %vm4747, %v4731, %v4734
        %v4752 = vsel %vm4750, %v4740, 2102212464
        %v4753 = vsel %vm4749, %v4737, %v4752
        %v4754 = vsel %vm4748, %v4751, %v4753
        %v4755 = vsel %vm4747, %v4734, %v4737
        %v4756 = vsel %vm4750, %v4743, 920167782
        %v4757 = vsel %vm4749, %v4740, %v4756
        %v4758 = vsel %vm4748, %v4755, %v4757
        %v4759 = vsel %vm4747, %v4737, %v4740
        %v4760 = vsel %vm4750, %v4746, 1326507024
        %v4761 = vsel %vm4749, %v4743, %v4760
        %v4762 = vsel %vm4748, %v4759, %v4761
        %v4763 = vshll.u32 %v4723, 8
        %v4764 = vmul.u32.u64.compose %v4763, %v4762
        %v4765 = vextract.low.u32 %v4764
        %v4766 = vextract.high.u32 %v4764
        %v4767 = vmul.u32.u64.compose %v4763, %v4758
        %v4768 = vextract.low.u32 %v4767
        %v4769 = vextract.high.u32 %v4767
        %v4770 = vmul.u32 %v4763, %v4754
        %v4771 = vadd.s32 %v4766, %v4768
        %vm4772 = vc.u32 %v4766, %v4768
        %v4773 = vadd.s32 %v4769, 1
        %v4774 = vsel %vm4772, %v4773, %v4769
        %v4775 = vadd.s32 %v4770, %v4774
        %v4776 = vadd.s32 %v4775, 536870912
        %v4777 = vshrl.u32 %v4776, 30
        %v4778 = vshll.u32 %v4777, 30
        %v4779 = vsub.s32 %v4775, %v4778
        %vm4780 = vcmp.lt.s32.totalorder %v4779, 0
        %v4781 = vsub.s32 0, %v4779
        %v4782 = vsel %vm4780, %v4781, %v4779
        %v4783 = vclz %v4782
        %v4784 = vsub.s32 %v4783, 2
        %vm4785 = vcmp.gt.s32.totalorder 0, %v4784
        %v4786 = vsel %vm4785, 0, %v4784
        %v4787 = vsub.s32 32, %v4786
        %v4788 = vshll.u32 %v4779, %v4786
        %v4789 = vshrl.u32 %v4771, %v4787
        %v4790 = vor.u32 %v4788, %v4789
        %v4791 = vsub.s32 4294967266, %v4786
        %v4792 = vadd.s32 %v4791, 127
        %v4793 = vshll.u32 %v4792, 23
        %v4794 = vor.u32 4788187, %v4793
        %v4795 = vand.u32 2147483647, %v4794
        %v4797 = vcvt.s32.f32 %v4790
        %v4798 = vmul.f32 %v4797, %v4795
        %v4799 = vxor.u32 %v4798, 2147483648
        %v4800 = vsel %vm4717, %v4799, %v4798
        %v4801 = vsub.s32 4, %v4777
        %v4802 = vsel %vm4717, %v4801, %v4777
        %v4803 = vsel %vm4716, %v666, %v4800
        %v4804 = vsel %vm4716, 0, %v4802
        %v4805 = vcosq.f32.pop %v4803
        %v4806 = vsinq.f32.pop %v4803
        %vm4807 = vweird.f32 %v666
        %v4808 = vadd.s32 %v4804, 3
        %v4809 = vand.u32 %v4808, 3
        %vm4810 = vcmp.lt.s32.totalorder %v4809, 2
        %vm4811 = vcmp.eq.s32.totalorder %v4809, 0
        %v4812 = vxor.u32 %v4806, 2147483648
        %v4813 = vsel %vm4811, %v4805, %v4812
        %vm4814 = vcmp.eq.s32.totalorder %v4809, 2
        %v4815 = vxor.u32 %v4805, 2147483648
        %v4816 = vsel %vm4814, %v4815, %v4806
        %v4817 = vsel %vm4810, %v4813, %v4816
        %v4818 = vsel %vm4807, nan, %v4817
        %v4819 = vand.u32 2147483647, %v667
        %vm4820 = vcmp.le.f32.partialorder %v4819, 0.7853982
        %vm4821 = vcmp.lt.s32.totalorder %v667, 0
        %v4822 = vand.u32 %v667, 2139095040
        %v4823 = vshrl.u32 %v4822, 23
        %v4824 = vsub.s32 %v4823, 127
        %v4825 = vand.u32 2147483647, %v667
        %v4826 = vand.u32 %v4825, 8388607
        %v4827 = vor.u32 %v4826, 8388608
        %v4828 = vsub.s32 0, %v4827
        %v4829 = vadd.s32 %v4824, 1
        %vm4830 = vcmp.gt.s32.totalorder %v4829, 0
        %v4831 = vsel %vm4830, %v4829, 0
        %v4832 = vshrl.u32 %v4831, 5
        %v4833 = vand.u32 %v4831, 31
        %v4834 = vsub.s32 32, %v4833
        %v4835 = vshrl.u32 683565275, %v4834
        %v4836 = vshll.u32 683565275, %v4833
        %v4837 = vshrl.u32 2475754826, %v4834
        %v4838 = vor.u32 %v4836, %v4837
        %v4839 = vshll.u32 2475754826, %v4833
        %v4840 = vshrl.u32 2131351028, %v4834
        %v4841 = vor.u32 %v4839, %v4840
        %v4842 = vshll.u32 2131351028, %v4833
        %v4843 = vshrl.u32 2102212464, %v4834
        %v4844 = vor.u32 %v4842, %v4843
        %v4845 = vshll.u32 2102212464, %v4833
        %v4846 = vshrl.u32 920167782, %v4834
        %v4847 = vor.u32 %v4845, %v4846
        %v4848 = vshll.u32 920167782, %v4833
        %v4849 = vshrl.u32 1326507024, %v4834
        %v4850 = vor.u32 %v4848, %v4849
        %vm4851 = vcmp.lt.s32.totalorder %v4832, 1
        %vm4852 = vcmp.lt.s32.totalorder %v4832, 2
        %vm4853 = vcmp.lt.s32.totalorder %v4832, 3
        %vm4854 = vcmp.lt.s32.totalorder %v4832, 4
        %v4855 = vsel %vm4851, %v4835, %v4838
        %v4856 = vsel %vm4854, %v4844, 2102212464
        %v4857 = vsel %vm4853, %v4841, %v4856
        %v4858 = vsel %vm4852, %v4855, %v4857
        %v4859 = vsel %vm4851, %v4838, %v4841
        %v4860 = vsel %vm4854, %v4847, 920167782
        %v4861 = vsel %vm4853, %v4844, %v4860
        %v4862 = vsel %vm4852, %v4859, %v4861
        %v4863 = vsel %vm4851, %v4841, %v4844
        %v4864 = vsel %vm4854, %v4850, 1326507024
        %v4865 = vsel %vm4853, %v4847, %v4864
        %v4866 = vsel %vm4852, %v4863, %v4865
        %v4867 = vshll.u32 %v4827, 8
        %v4868 = vmul.u32.u64.compose %v4867, %v4866
        %v4869 = vextract.low.u32 %v4868
        %v4870 = vextract.high.u32 %v4868
        %v4871 = vmul.u32.u64.compose %v4867, %v4862
        %v4872 = vextract.low.u32 %v4871
        %v4873 = vextract.high.u32 %v4871
        %v4874 = vmul.u32 %v4867, %v4858
        %v4875 = vadd.s32 %v4870, %v4872
        %vm4876 = vc.u32 %v4870, %v4872
        %v4877 = vadd.s32 %v4873, 1
        %v4878 = vsel %vm4876, %v4877, %v4873
        %v4879 = vadd.s32 %v4874, %v4878
        %v4880 = vadd.s32 %v4879, 536870912
        %v4881 = vshrl.u32 %v4880, 30
        %v4882 = vshll.u32 %v4881, 30
        %v4883 = vsub.s32 %v4879, %v4882
        %vm4884 = vcmp.lt.s32.totalorder %v4883, 0
        %v4885 = vsub.s32 0, %v4883
        %v4886 = vsel %vm4884, %v4885, %v4883
        %v4887 = vclz %v4886
        %v4888 = vsub.s32 %v4887, 2
        %vm4889 = vcmp.gt.s32.totalorder 0, %v4888
        %v4890 = vsel %vm4889, 0, %v4888
        %v4891 = vsub.s32 32, %v4890
        %v4892 = vshll.u32 %v4883, %v4890
        %v4893 = vshrl.u32 %v4875, %v4891
        %v4894 = vor.u32 %v4892, %v4893
        %v4895 = vsub.s32 4294967266, %v4890
        %v4896 = vadd.s32 %v4895, 127
        %v4897 = vshll.u32 %v4896, 23
        %v4898 = vor.u32 4788187, %v4897
        %v4899 = vand.u32 2147483647, %v4898
        %v4901 = vcvt.s32.f32 %v4894
        %v4902 = vmul.f32 %v4901, %v4899
        %v4903 = vxor.u32 %v4902, 2147483648
        %v4904 = vsel %vm4821, %v4903, %v4902
        %v4905 = vsub.s32 4, %v4881
        %v4906 = vsel %vm4821, %v4905, %v4881
        %v4907 = vsel %vm4820, %v667, %v4904
        %v4908 = vsel %vm4820, 0, %v4906
        %v4909 = vcosq.f32.pop %v4907
        %v4910 = vsinq.f32.pop %v4907
        %vm4911 = vweird.f32 %v667
        %v4912 = vadd.s32 %v4908, 3
        %v4913 = vand.u32 %v4912, 3
        %vm4914 = vcmp.lt.s32.totalorder %v4913, 2
        %vm4915 = vcmp.eq.s32.totalorder %v4913, 0
        %v4916 = vxor.u32 %v4910, 2147483648
        %v4917 = vsel %vm4915, %v4909, %v4916
        %vm4918 = vcmp.eq.s32.totalorder %v4913, 2
        %v4919 = vxor.u32 %v4909, 2147483648
        %v4920 = vsel %vm4918, %v4919, %v4910
        %v4921 = vsel %vm4914, %v4917, %v4920
        %v4922 = vsel %vm4911, nan, %v4921
        %v4923 = vand.u32 2147483647, %v668
        %vm4924 = vcmp.le.f32.partialorder %v4923, 0.7853982
        %vm4925 = vcmp.lt.s32.totalorder %v668, 0
        %v4926 = vand.u32 %v668, 2139095040
        %v4927 = vshrl.u32 %v4926, 23
        %v4928 = vsub.s32 %v4927, 127
        %v4929 = vand.u32 2147483647, %v668
        %v4930 = vand.u32 %v4929, 8388607
        %v4931 = vor.u32 %v4930, 8388608
        %v4932 = vsub.s32 0, %v4931
        %v4933 = vadd.s32 %v4928, 1
        %vm4934 = vcmp.gt.s32.totalorder %v4933, 0
        %v4935 = vsel %vm4934, %v4933, 0
        %v4936 = vshrl.u32 %v4935, 5
        %v4937 = vand.u32 %v4935, 31
        %v4938 = vsub.s32 32, %v4937
        %v4939 = vshrl.u32 683565275, %v4938
        %v4940 = vshll.u32 683565275, %v4937
        %v4941 = vshrl.u32 2475754826, %v4938
        %v4942 = vor.u32 %v4940, %v4941
        %v4943 = vshll.u32 2475754826, %v4937
        %v4944 = vshrl.u32 2131351028, %v4938
        %v4945 = vor.u32 %v4943, %v4944
        %v4946 = vshll.u32 2131351028, %v4937
        %v4947 = vshrl.u32 2102212464, %v4938
        %v4948 = vor.u32 %v4946, %v4947
        %v4949 = vshll.u32 2102212464, %v4937
        %v4950 = vshrl.u32 920167782, %v4938
        %v4951 = vor.u32 %v4949, %v4950
        %v4952 = vshll.u32 920167782, %v4937
        %v4953 = vshrl.u32 1326507024, %v4938
        %v4954 = vor.u32 %v4952, %v4953
        %vm4955 = vcmp.lt.s32.totalorder %v4936, 1
        %vm4956 = vcmp.lt.s32.totalorder %v4936, 2
        %vm4957 = vcmp.lt.s32.totalorder %v4936, 3
        %vm4958 = vcmp.lt.s32.totalorder %v4936, 4
        %v4959 = vsel %vm4955, %v4939, %v4942
        %v4960 = vsel %vm4958, %v4948, 2102212464
        %v4961 = vsel %vm4957, %v4945, %v4960
        %v4962 = vsel %vm4956, %v4959, %v4961
        %v4963 = vsel %vm4955, %v4942, %v4945
        %v4964 = vsel %vm4958, %v4951, 920167782
        %v4965 = vsel %vm4957, %v4948, %v4964
        %v4966 = vsel %vm4956, %v4963, %v4965
        %v4967 = vsel %vm4955, %v4945, %v4948
        %v4968 = vsel %vm4958, %v4954, 1326507024
        %v4969 = vsel %vm4957, %v4951, %v4968
        %v4970 = vsel %vm4956, %v4967, %v4969
        %v4971 = vshll.u32 %v4931, 8
        %v4972 = vmul.u32.u64.compose %v4971, %v4970
        %v4973 = vextract.low.u32 %v4972
        %v4974 = vextract.high.u32 %v4972
        %v4975 = vmul.u32.u64.compose %v4971, %v4966
        %v4976 = vextract.low.u32 %v4975
        %v4977 = vextract.high.u32 %v4975
        %v4978 = vmul.u32 %v4971, %v4962
        %v4979 = vadd.s32 %v4974, %v4976
        %vm4980 = vc.u32 %v4974, %v4976
        %v4981 = vadd.s32 %v4977, 1
        %v4982 = vsel %vm4980, %v4981, %v4977
        %v4983 = vadd.s32 %v4978, %v4982
        %v4984 = vadd.s32 %v4983, 536870912
        %v4985 = vshrl.u32 %v4984, 30
        %v4986 = vshll.u32 %v4985, 30
        %v4987 = vsub.s32 %v4983, %v4986
        %vm4988 = vcmp.lt.s32.totalorder %v4987, 0
        %v4989 = vsub.s32 0, %v4987
        %v4990 = vsel %vm4988, %v4989, %v4987
        %v4991 = vclz %v4990
        %v4992 = vsub.s32 %v4991, 2
        %vm4993 = vcmp.gt.s32.totalorder 0, %v4992
        %v4994 = vsel %vm4993, 0, %v4992
        %v4995 = vsub.s32 32, %v4994
        %v4996 = vshll.u32 %v4987, %v4994
        %v4997 = vshrl.u32 %v4979, %v4995
        %v4998 = vor.u32 %v4996, %v4997
        %v4999 = vsub.s32 4294967266, %v4994
        %v5000 = vadd.s32 %v4999, 127
        %v5001 = vshll.u32 %v5000, 23
        %v5002 = vor.u32 4788187, %v5001
        %v5003 = vand.u32 2147483647, %v5002
        %v5005 = vcvt.s32.f32 %v4998
        %v5006 = vmul.f32 %v5005, %v5003
        %v5007 = vxor.u32 %v5006, 2147483648
        %v5008 = vsel %vm4925, %v5007, %v5006
        %v5009 = vsub.s32 4, %v4985
        %v5010 = vsel %vm4925, %v5009, %v4985
        %v5011 = vsel %vm4924, %v668, %v5008
        %v5012 = vsel %vm4924, 0, %v5010
        %v5013 = vcosq.f32.pop %v5011
        %v5014 = vsinq.f32.pop %v5011
        %vm5015 = vweird.f32 %v668
        %v5016 = vadd.s32 %v5012, 3
        %v5017 = vand.u32 %v5016, 3
        %vm5018 = vcmp.lt.s32.totalorder %v5017, 2
        %vm5019 = vcmp.eq.s32.totalorder %v5017, 0
        %v5020 = vxor.u32 %v5014, 2147483648
        %v5021 = vsel %vm5019, %v5013, %v5020
        %vm5022 = vcmp.eq.s32.totalorder %v5017, 2
        %v5023 = vxor.u32 %v5013, 2147483648
        %v5024 = vsel %vm5022, %v5023, %v5014
        %v5025 = vsel %vm5018, %v5021, %v5024
        %v5026 = vsel %vm5015, nan, %v5025
        %v5027 = vand.u32 2147483647, %v669
        %vm5028 = vcmp.le.f32.partialorder %v5027, 0.7853982
        %vm5029 = vcmp.lt.s32.totalorder %v669, 0
        %v5030 = vand.u32 %v669, 2139095040
        %v5031 = vshrl.u32 %v5030, 23
        %v5032 = vsub.s32 %v5031, 127
        %v5033 = vand.u32 2147483647, %v669
        %v5034 = vand.u32 %v5033, 8388607
        %v5035 = vor.u32 %v5034, 8388608
        %v5036 = vsub.s32 0, %v5035
        %v5037 = vadd.s32 %v5032, 1
        %vm5038 = vcmp.gt.s32.totalorder %v5037, 0
        %v5039 = vsel %vm5038, %v5037, 0
        %v5040 = vshrl.u32 %v5039, 5
        %v5041 = vand.u32 %v5039, 31
        %v5042 = vsub.s32 32, %v5041
        %v5043 = vshrl.u32 683565275, %v5042
        %v5044 = vshll.u32 683565275, %v5041
        %v5045 = vshrl.u32 2475754826, %v5042
        %v5046 = vor.u32 %v5044, %v5045
        %v5047 = vshll.u32 2475754826, %v5041
        %v5048 = vshrl.u32 2131351028, %v5042
        %v5049 = vor.u32 %v5047, %v5048
        %v5050 = vshll.u32 2131351028, %v5041
        %v5051 = vshrl.u32 2102212464, %v5042
        %v5052 = vor.u32 %v5050, %v5051
        %v5053 = vshll.u32 2102212464, %v5041
        %v5054 = vshrl.u32 920167782, %v5042
        %v5055 = vor.u32 %v5053, %v5054
        %v5056 = vshll.u32 920167782, %v5041
        %v5057 = vshrl.u32 1326507024, %v5042
        %v5058 = vor.u32 %v5056, %v5057
        %vm5059 = vcmp.lt.s32.totalorder %v5040, 1
        %vm5060 = vcmp.lt.s32.totalorder %v5040, 2
        %vm5061 = vcmp.lt.s32.totalorder %v5040, 3
        %vm5062 = vcmp.lt.s32.totalorder %v5040, 4
        %v5063 = vsel %vm5059, %v5043, %v5046
        %v5064 = vsel %vm5062, %v5052, 2102212464
        %v5065 = vsel %vm5061, %v5049, %v5064
        %v5066 = vsel %vm5060, %v5063, %v5065
        %v5067 = vsel %vm5059, %v5046, %v5049
        %v5068 = vsel %vm5062, %v5055, 920167782
        %v5069 = vsel %vm5061, %v5052, %v5068
        %v5070 = vsel %vm5060, %v5067, %v5069
        %v5071 = vsel %vm5059, %v5049, %v5052
        %v5072 = vsel %vm5062, %v5058, 1326507024
        %v5073 = vsel %vm5061, %v5055, %v5072
        %v5074 = vsel %vm5060, %v5071, %v5073
        %v5075 = vshll.u32 %v5035, 8
        %v5076 = vmul.u32.u64.compose %v5075, %v5074
        %v5077 = vextract.low.u32 %v5076
        %v5078 = vextract.high.u32 %v5076
        %v5079 = vmul.u32.u64.compose %v5075, %v5070
        %v5080 = vextract.low.u32 %v5079
        %v5081 = vextract.high.u32 %v5079
        %v5082 = vmul.u32 %v5075, %v5066
        %v5083 = vadd.s32 %v5078, %v5080
        %vm5084 = vc.u32 %v5078, %v5080
        %v5085 = vadd.s32 %v5081, 1
        %v5086 = vsel %vm5084, %v5085, %v5081
        %v5087 = vadd.s32 %v5082, %v5086
        %v5088 = vadd.s32 %v5087, 536870912
        %v5089 = vshrl.u32 %v5088, 30
        %v5090 = vshll.u32 %v5089, 30
        %v5091 = vsub.s32 %v5087, %v5090
        %vm5092 = vcmp.lt.s32.totalorder %v5091, 0
        %v5093 = vsub.s32 0, %v5091
        %v5094 = vsel %vm5092, %v5093, %v5091
        %v5095 = vclz %v5094
        %v5096 = vsub.s32 %v5095, 2
        %vm5097 = vcmp.gt.s32.totalorder 0, %v5096
        %v5098 = vsel %vm5097, 0, %v5096
        %v5099 = vsub.s32 32, %v5098
        %v5100 = vshll.u32 %v5091, %v5098
        %v5101 = vshrl.u32 %v5083, %v5099
        %v5102 = vor.u32 %v5100, %v5101
        %v5103 = vsub.s32 4294967266, %v5098
        %v5104 = vadd.s32 %v5103, 127
        %v5105 = vshll.u32 %v5104, 23
        %v5106 = vor.u32 4788187, %v5105
        %v5107 = vand.u32 2147483647, %v5106
        %v5109 = vcvt.s32.f32 %v5102
        %v5110 = vmul.f32 %v5109, %v5107
        %v5111 = vxor.u32 %v5110, 2147483648
        %v5112 = vsel %vm5029, %v5111, %v5110
        %v5113 = vsub.s32 4, %v5089
        %v5114 = vsel %vm5029, %v5113, %v5089
        %v5115 = vsel %vm5028, %v669, %v5112
        %v5116 = vsel %vm5028, 0, %v5114
        %v5117 = vcosq.f32.pop %v5115
        %v5118 = vsinq.f32.pop %v5115
        %vm5119 = vweird.f32 %v669
        %v5120 = vadd.s32 %v5116, 3
        %v5121 = vand.u32 %v5120, 3
        %vm5122 = vcmp.lt.s32.totalorder %v5121, 2
        %vm5123 = vcmp.eq.s32.totalorder %v5121, 0
        %v5124 = vxor.u32 %v5118, 2147483648
        %v5125 = vsel %vm5123, %v5117, %v5124
        %vm5126 = vcmp.eq.s32.totalorder %v5121, 2
        %v5127 = vxor.u32 %v5117, 2147483648
        %v5128 = vsel %vm5126, %v5127, %v5118
        %v5129 = vsel %vm5122, %v5125, %v5128
        %v5130 = vsel %vm5119, nan, %v5129
        %v5131 = vand.u32 2147483647, %v670
        %vm5132 = vcmp.le.f32.partialorder %v5131, 0.7853982
        %vm5133 = vcmp.lt.s32.totalorder %v670, 0
        %v5134 = vand.u32 %v670, 2139095040
        %v5135 = vshrl.u32 %v5134, 23
        %v5136 = vsub.s32 %v5135, 127
        %v5137 = vand.u32 2147483647, %v670
        %v5138 = vand.u32 %v5137, 8388607
        %v5139 = vor.u32 %v5138, 8388608
        %v5140 = vsub.s32 0, %v5139
        %v5141 = vadd.s32 %v5136, 1
        %vm5142 = vcmp.gt.s32.totalorder %v5141, 0
        %v5143 = vsel %vm5142, %v5141, 0
        %v5144 = vshrl.u32 %v5143, 5
        %v5145 = vand.u32 %v5143, 31
        %v5146 = vsub.s32 32, %v5145
        %v5147 = vshrl.u32 683565275, %v5146
        %v5148 = vshll.u32 683565275, %v5145
        %v5149 = vshrl.u32 2475754826, %v5146
        %v5150 = vor.u32 %v5148, %v5149
        %v5151 = vshll.u32 2475754826, %v5145
        %v5152 = vshrl.u32 2131351028, %v5146
        %v5153 = vor.u32 %v5151, %v5152
        %v5154 = vshll.u32 2131351028, %v5145
        %v5155 = vshrl.u32 2102212464, %v5146
        %v5156 = vor.u32 %v5154, %v5155
        %v5157 = vshll.u32 2102212464, %v5145
        %v5158 = vshrl.u32 920167782, %v5146
        %v5159 = vor.u32 %v5157, %v5158
        %v5160 = vshll.u32 920167782, %v5145
        %v5161 = vshrl.u32 1326507024, %v5146
        %v5162 = vor.u32 %v5160, %v5161
        %vm5163 = vcmp.lt.s32.totalorder %v5144, 1
        %vm5164 = vcmp.lt.s32.totalorder %v5144, 2
        %vm5165 = vcmp.lt.s32.totalorder %v5144, 3
        %vm5166 = vcmp.lt.s32.totalorder %v5144, 4
        %v5167 = vsel %vm5163, %v5147, %v5150
        %v5168 = vsel %vm5166, %v5156, 2102212464
        %v5169 = vsel %vm5165, %v5153, %v5168
        %v5170 = vsel %vm5164, %v5167, %v5169
        %v5171 = vsel %vm5163, %v5150, %v5153
        %v5172 = vsel %vm5166, %v5159, 920167782
        %v5173 = vsel %vm5165, %v5156, %v5172
        %v5174 = vsel %vm5164, %v5171, %v5173
        %v5175 = vsel %vm5163, %v5153, %v5156
        %v5176 = vsel %vm5166, %v5162, 1326507024
        %v5177 = vsel %vm5165, %v5159, %v5176
        %v5178 = vsel %vm5164, %v5175, %v5177
        %v5179 = vshll.u32 %v5139, 8
        %v5180 = vmul.u32.u64.compose %v5179, %v5178
        %v5181 = vextract.low.u32 %v5180
        %v5182 = vextract.high.u32 %v5180
        %v5183 = vmul.u32.u64.compose %v5179, %v5174
        %v5184 = vextract.low.u32 %v5183
        %v5185 = vextract.high.u32 %v5183
        %v5186 = vmul.u32 %v5179, %v5170
        %v5187 = vadd.s32 %v5182, %v5184
        %vm5188 = vc.u32 %v5182, %v5184
        %v5189 = vadd.s32 %v5185, 1
        %v5190 = vsel %vm5188, %v5189, %v5185
        %v5191 = vadd.s32 %v5186, %v5190
        %v5192 = vadd.s32 %v5191, 536870912
        %v5193 = vshrl.u32 %v5192, 30
        %v5194 = vshll.u32 %v5193, 30
        %v5195 = vsub.s32 %v5191, %v5194
        %vm5196 = vcmp.lt.s32.totalorder %v5195, 0
        %v5197 = vsub.s32 0, %v5195
        %v5198 = vsel %vm5196, %v5197, %v5195
        %v5199 = vclz %v5198
        %v5200 = vsub.s32 %v5199, 2
        %vm5201 = vcmp.gt.s32.totalorder 0, %v5200
        %v5202 = vsel %vm5201, 0, %v5200
        %v5203 = vsub.s32 32, %v5202
        %v5204 = vshll.u32 %v5195, %v5202
        %v5205 = vshrl.u32 %v5187, %v5203
        %v5206 = vor.u32 %v5204, %v5205
        %v5207 = vsub.s32 4294967266, %v5202
        %v5208 = vadd.s32 %v5207, 127
        %v5209 = vshll.u32 %v5208, 23
        %v5210 = vor.u32 4788187, %v5209
        %v5211 = vand.u32 2147483647, %v5210
        %v5213 = vcvt.s32.f32 %v5206
        %v5214 = vmul.f32 %v5213, %v5211
        %v5215 = vxor.u32 %v5214, 2147483648
        %v5216 = vsel %vm5133, %v5215, %v5214
        %v5217 = vsub.s32 4, %v5193
        %v5218 = vsel %vm5133, %v5217, %v5193
        %v5219 = vsel %vm5132, %v670, %v5216
        %v5220 = vsel %vm5132, 0, %v5218
        %v5221 = vcosq.f32.pop %v5219
        %v5222 = vsinq.f32.pop %v5219
        %vm5223 = vweird.f32 %v670
        %v5224 = vadd.s32 %v5220, 3
        %v5225 = vand.u32 %v5224, 3
        %vm5226 = vcmp.lt.s32.totalorder %v5225, 2
        %vm5227 = vcmp.eq.s32.totalorder %v5225, 0
        %v5228 = vxor.u32 %v5222, 2147483648
        %v5229 = vsel %vm5227, %v5221, %v5228
        %vm5230 = vcmp.eq.s32.totalorder %v5225, 2
        %v5231 = vxor.u32 %v5221, 2147483648
        %v5232 = vsel %vm5230, %v5231, %v5222
        %v5233 = vsel %vm5226, %v5229, %v5232
        %v5234 = vsel %vm5223, nan, %v5233
        %v5235 = vand.u32 2147483647, %v671
        %vm5236 = vcmp.le.f32.partialorder %v5235, 0.7853982
        %vm5237 = vcmp.lt.s32.totalorder %v671, 0
        %v5238 = vand.u32 %v671, 2139095040
        %v5239 = vshrl.u32 %v5238, 23
        %v5240 = vsub.s32 %v5239, 127
        %v5241 = vand.u32 2147483647, %v671
        %v5242 = vand.u32 %v5241, 8388607
        %v5243 = vor.u32 %v5242, 8388608
        %v5244 = vsub.s32 0, %v5243
        %v5245 = vadd.s32 %v5240, 1
        %vm5246 = vcmp.gt.s32.totalorder %v5245, 0
        %v5247 = vsel %vm5246, %v5245, 0
        %v5248 = vshrl.u32 %v5247, 5
        %v5249 = vand.u32 %v5247, 31
        %v5250 = vsub.s32 32, %v5249
        %v5251 = vshrl.u32 683565275, %v5250
        %v5252 = vshll.u32 683565275, %v5249
        %v5253 = vshrl.u32 2475754826, %v5250
        %v5254 = vor.u32 %v5252, %v5253
        %v5255 = vshll.u32 2475754826, %v5249
        %v5256 = vshrl.u32 2131351028, %v5250
        %v5257 = vor.u32 %v5255, %v5256
        %v5258 = vshll.u32 2131351028, %v5249
        %v5259 = vshrl.u32 2102212464, %v5250
        %v5260 = vor.u32 %v5258, %v5259
        %v5261 = vshll.u32 2102212464, %v5249
        %v5262 = vshrl.u32 920167782, %v5250
        %v5263 = vor.u32 %v5261, %v5262
        %v5264 = vshll.u32 920167782, %v5249
        %v5265 = vshrl.u32 1326507024, %v5250
        %v5266 = vor.u32 %v5264, %v5265
        %vm5267 = vcmp.lt.s32.totalorder %v5248, 1
        %vm5268 = vcmp.lt.s32.totalorder %v5248, 2
        %vm5269 = vcmp.lt.s32.totalorder %v5248, 3
        %vm5270 = vcmp.lt.s32.totalorder %v5248, 4
        %v5271 = vsel %vm5267, %v5251, %v5254
        %v5272 = vsel %vm5270, %v5260, 2102212464
        %v5273 = vsel %vm5269, %v5257, %v5272
        %v5274 = vsel %vm5268, %v5271, %v5273
        %v5275 = vsel %vm5267, %v5254, %v5257
        %v5276 = vsel %vm5270, %v5263, 920167782
        %v5277 = vsel %vm5269, %v5260, %v5276
        %v5278 = vsel %vm5268, %v5275, %v5277
        %v5279 = vsel %vm5267, %v5257, %v5260
        %v5280 = vsel %vm5270, %v5266, 1326507024
        %v5281 = vsel %vm5269, %v5263, %v5280
        %v5282 = vsel %vm5268, %v5279, %v5281
        %v5283 = vshll.u32 %v5243, 8
        %v5284 = vmul.u32.u64.compose %v5283, %v5282
        %v5285 = vextract.low.u32 %v5284
        %v5286 = vextract.high.u32 %v5284
        %v5287 = vmul.u32.u64.compose %v5283, %v5278
        %v5288 = vextract.low.u32 %v5287
        %v5289 = vextract.high.u32 %v5287
        %v5290 = vmul.u32 %v5283, %v5274
        %v5291 = vadd.s32 %v5286, %v5288
        %vm5292 = vc.u32 %v5286, %v5288
        %v5293 = vadd.s32 %v5289, 1
        %v5294 = vsel %vm5292, %v5293, %v5289
        %v5295 = vadd.s32 %v5290, %v5294
        %v5296 = vadd.s32 %v5295, 536870912
        %v5297 = vshrl.u32 %v5296, 30
        %v5298 = vshll.u32 %v5297, 30
        %v5299 = vsub.s32 %v5295, %v5298
        %vm5300 = vcmp.lt.s32.totalorder %v5299, 0
        %v5301 = vsub.s32 0, %v5299
        %v5302 = vsel %vm5300, %v5301, %v5299
        %v5303 = vclz %v5302
        %v5304 = vsub.s32 %v5303, 2
        %vm5305 = vcmp.gt.s32.totalorder 0, %v5304
        %v5306 = vsel %vm5305, 0, %v5304
        %v5307 = vsub.s32 32, %v5306
        %v5308 = vshll.u32 %v5299, %v5306
        %v5309 = vshrl.u32 %v5291, %v5307
        %v5310 = vor.u32 %v5308, %v5309
        %v5311 = vsub.s32 4294967266, %v5306
        %v5312 = vadd.s32 %v5311, 127
        %v5313 = vshll.u32 %v5312, 23
        %v5314 = vor.u32 4788187, %v5313
        %v5315 = vand.u32 2147483647, %v5314
        %v5317 = vcvt.s32.f32 %v5310
        %v5318 = vmul.f32 %v5317, %v5315
        %v5319 = vxor.u32 %v5318, 2147483648
        %v5320 = vsel %vm5237, %v5319, %v5318
        %v5321 = vsub.s32 4, %v5297
        %v5322 = vsel %vm5237, %v5321, %v5297
        %v5323 = vsel %vm5236, %v671, %v5320
        %v5324 = vsel %vm5236, 0, %v5322
        %v5325 = vcosq.f32.pop %v5323
        %v5326 = vsinq.f32.pop %v5323
        %vm5327 = vweird.f32 %v671
        %v5328 = vadd.s32 %v5324, 3
        %v5329 = vand.u32 %v5328, 3
        %vm5330 = vcmp.lt.s32.totalorder %v5329, 2
        %vm5331 = vcmp.eq.s32.totalorder %v5329, 0
        %v5332 = vxor.u32 %v5326, 2147483648
        %v5333 = vsel %vm5331, %v5325, %v5332
        %vm5334 = vcmp.eq.s32.totalorder %v5329, 2
        %v5335 = vxor.u32 %v5325, 2147483648
        %v5336 = vsel %vm5334, %v5335, %v5326
        %v5337 = vsel %vm5330, %v5333, %v5336
        %v5338 = vsel %vm5327, nan, %v5337
        %v5339 = vand.u32 2147483647, %v672
        %vm5340 = vcmp.le.f32.partialorder %v5339, 0.7853982
        %vm5341 = vcmp.lt.s32.totalorder %v672, 0
        %v5342 = vand.u32 %v672, 2139095040
        %v5343 = vshrl.u32 %v5342, 23
        %v5344 = vsub.s32 %v5343, 127
        %v5345 = vand.u32 2147483647, %v672
        %v5346 = vand.u32 %v5345, 8388607
        %v5347 = vor.u32 %v5346, 8388608
        %v5348 = vsub.s32 0, %v5347
        %v5349 = vadd.s32 %v5344, 1
        %vm5350 = vcmp.gt.s32.totalorder %v5349, 0
        %v5351 = vsel %vm5350, %v5349, 0
        %v5352 = vshrl.u32 %v5351, 5
        %v5353 = vand.u32 %v5351, 31
        %v5354 = vsub.s32 32, %v5353
        %v5355 = vshrl.u32 683565275, %v5354
        %v5356 = vshll.u32 683565275, %v5353
        %v5357 = vshrl.u32 2475754826, %v5354
        %v5358 = vor.u32 %v5356, %v5357
        %v5359 = vshll.u32 2475754826, %v5353
        %v5360 = vshrl.u32 2131351028, %v5354
        %v5361 = vor.u32 %v5359, %v5360
        %v5362 = vshll.u32 2131351028, %v5353
        %v5363 = vshrl.u32 2102212464, %v5354
        %v5364 = vor.u32 %v5362, %v5363
        %v5365 = vshll.u32 2102212464, %v5353
        %v5366 = vshrl.u32 920167782, %v5354
        %v5367 = vor.u32 %v5365, %v5366
        %v5368 = vshll.u32 920167782, %v5353
        %v5369 = vshrl.u32 1326507024, %v5354
        %v5370 = vor.u32 %v5368, %v5369
        %vm5371 = vcmp.lt.s32.totalorder %v5352, 1
        %vm5372 = vcmp.lt.s32.totalorder %v5352, 2
        %vm5373 = vcmp.lt.s32.totalorder %v5352, 3
        %vm5374 = vcmp.lt.s32.totalorder %v5352, 4
        %v5375 = vsel %vm5371, %v5355, %v5358
        %v5376 = vsel %vm5374, %v5364, 2102212464
        %v5377 = vsel %vm5373, %v5361, %v5376
        %v5378 = vsel %vm5372, %v5375, %v5377
        %v5379 = vsel %vm5371, %v5358, %v5361
        %v5380 = vsel %vm5374, %v5367, 920167782
        %v5381 = vsel %vm5373, %v5364, %v5380
        %v5382 = vsel %vm5372, %v5379, %v5381
        %v5383 = vsel %vm5371, %v5361, %v5364
        %v5384 = vsel %vm5374, %v5370, 1326507024
        %v5385 = vsel %vm5373, %v5367, %v5384
        %v5386 = vsel %vm5372, %v5383, %v5385
        %v5387 = vshll.u32 %v5347, 8
        %v5388 = vmul.u32.u64.compose %v5387, %v5386
        %v5389 = vextract.low.u32 %v5388
        %v5390 = vextract.high.u32 %v5388
        %v5391 = vmul.u32.u64.compose %v5387, %v5382
        %v5392 = vextract.low.u32 %v5391
        %v5393 = vextract.high.u32 %v5391
        %v5394 = vmul.u32 %v5387, %v5378
        %v5395 = vadd.s32 %v5390, %v5392
        %vm5396 = vc.u32 %v5390, %v5392
        %v5397 = vadd.s32 %v5393, 1
        %v5398 = vsel %vm5396, %v5397, %v5393
        %v5399 = vadd.s32 %v5394, %v5398
        %v5400 = vadd.s32 %v5399, 536870912
        %v5401 = vshrl.u32 %v5400, 30
        %v5402 = vshll.u32 %v5401, 30
        %v5403 = vsub.s32 %v5399, %v5402
        %vm5404 = vcmp.lt.s32.totalorder %v5403, 0
        %v5405 = vsub.s32 0, %v5403
        %v5406 = vsel %vm5404, %v5405, %v5403
        %v5407 = vclz %v5406
        %v5408 = vsub.s32 %v5407, 2
        %vm5409 = vcmp.gt.s32.totalorder 0, %v5408
        %v5410 = vsel %vm5409, 0, %v5408
        %v5411 = vsub.s32 32, %v5410
        %v5412 = vshll.u32 %v5403, %v5410
        %v5413 = vshrl.u32 %v5395, %v5411
        %v5414 = vor.u32 %v5412, %v5413
        %v5415 = vsub.s32 4294967266, %v5410
        %v5416 = vadd.s32 %v5415, 127
        %v5417 = vshll.u32 %v5416, 23
        %v5418 = vor.u32 4788187, %v5417
        %v5419 = vand.u32 2147483647, %v5418
        %v5421 = vcvt.s32.f32 %v5414
        %v5422 = vmul.f32 %v5421, %v5419
        %v5423 = vxor.u32 %v5422, 2147483648
        %v5424 = vsel %vm5341, %v5423, %v5422
        %v5425 = vsub.s32 4, %v5401
        %v5426 = vsel %vm5341, %v5425, %v5401
        %v5427 = vsel %vm5340, %v672, %v5424
        %v5428 = vsel %vm5340, 0, %v5426
        %v5429 = vcosq.f32.pop %v5427
        %v5430 = vsinq.f32.pop %v5427
        %vm5431 = vweird.f32 %v672
        %v5432 = vadd.s32 %v5428, 3
        %v5433 = vand.u32 %v5432, 3
        %vm5434 = vcmp.lt.s32.totalorder %v5433, 2
        %vm5435 = vcmp.eq.s32.totalorder %v5433, 0
        %v5436 = vxor.u32 %v5430, 2147483648
        %v5437 = vsel %vm5435, %v5429, %v5436
        %vm5438 = vcmp.eq.s32.totalorder %v5433, 2
        %v5439 = vxor.u32 %v5429, 2147483648
        %v5440 = vsel %vm5438, %v5439, %v5430
        %v5441 = vsel %vm5434, %v5437, %v5440
        %v5442 = vsel %vm5431, nan, %v5441
        %v5443 = vand.u32 2147483647, %v673
        %vm5444 = vcmp.le.f32.partialorder %v5443, 0.7853982
        %vm5445 = vcmp.lt.s32.totalorder %v673, 0
        %v5446 = vand.u32 %v673, 2139095040
        %v5447 = vshrl.u32 %v5446, 23
        %v5448 = vsub.s32 %v5447, 127
        %v5449 = vand.u32 2147483647, %v673
        %v5450 = vand.u32 %v5449, 8388607
        %v5451 = vor.u32 %v5450, 8388608
        %v5452 = vsub.s32 0, %v5451
        %v5453 = vadd.s32 %v5448, 1
        %vm5454 = vcmp.gt.s32.totalorder %v5453, 0
        %v5455 = vsel %vm5454, %v5453, 0
        %v5456 = vshrl.u32 %v5455, 5
        %v5457 = vand.u32 %v5455, 31
        %v5458 = vsub.s32 32, %v5457
        %v5459 = vshrl.u32 683565275, %v5458
        %v5460 = vshll.u32 683565275, %v5457
        %v5461 = vshrl.u32 2475754826, %v5458
        %v5462 = vor.u32 %v5460, %v5461
        %v5463 = vshll.u32 2475754826, %v5457
        %v5464 = vshrl.u32 2131351028, %v5458
        %v5465 = vor.u32 %v5463, %v5464
        %v5466 = vshll.u32 2131351028, %v5457
        %v5467 = vshrl.u32 2102212464, %v5458
        %v5468 = vor.u32 %v5466, %v5467
        %v5469 = vshll.u32 2102212464, %v5457
        %v5470 = vshrl.u32 920167782, %v5458
        %v5471 = vor.u32 %v5469, %v5470
        %v5472 = vshll.u32 920167782, %v5457
        %v5473 = vshrl.u32 1326507024, %v5458
        %v5474 = vor.u32 %v5472, %v5473
        %vm5475 = vcmp.lt.s32.totalorder %v5456, 1
        %vm5476 = vcmp.lt.s32.totalorder %v5456, 2
        %vm5477 = vcmp.lt.s32.totalorder %v5456, 3
        %vm5478 = vcmp.lt.s32.totalorder %v5456, 4
        %v5479 = vsel %vm5475, %v5459, %v5462
        %v5480 = vsel %vm5478, %v5468, 2102212464
        %v5481 = vsel %vm5477, %v5465, %v5480
        %v5482 = vsel %vm5476, %v5479, %v5481
        %v5483 = vsel %vm5475, %v5462, %v5465
        %v5484 = vsel %vm5478, %v5471, 920167782
        %v5485 = vsel %vm5477, %v5468, %v5484
        %v5486 = vsel %vm5476, %v5483, %v5485
        %v5487 = vsel %vm5475, %v5465, %v5468
        %v5488 = vsel %vm5478, %v5474, 1326507024
        %v5489 = vsel %vm5477, %v5471, %v5488
        %v5490 = vsel %vm5476, %v5487, %v5489
        %v5491 = vshll.u32 %v5451, 8
        %v5492 = vmul.u32.u64.compose %v5491, %v5490
        %v5493 = vextract.low.u32 %v5492
        %v5494 = vextract.high.u32 %v5492
        %v5495 = vmul.u32.u64.compose %v5491, %v5486
        %v5496 = vextract.low.u32 %v5495
        %v5497 = vextract.high.u32 %v5495
        %v5498 = vmul.u32 %v5491, %v5482
        %v5499 = vadd.s32 %v5494, %v5496
        %vm5500 = vc.u32 %v5494, %v5496
        %v5501 = vadd.s32 %v5497, 1
        %v5502 = vsel %vm5500, %v5501, %v5497
        %v5503 = vadd.s32 %v5498, %v5502
        %v5504 = vadd.s32 %v5503, 536870912
        %v5505 = vshrl.u32 %v5504, 30
        %v5506 = vshll.u32 %v5505, 30
        %v5507 = vsub.s32 %v5503, %v5506
        %vm5508 = vcmp.lt.s32.totalorder %v5507, 0
        %v5509 = vsub.s32 0, %v5507
        %v5510 = vsel %vm5508, %v5509, %v5507
        %v5511 = vclz %v5510
        %v5512 = vsub.s32 %v5511, 2
        %vm5513 = vcmp.gt.s32.totalorder 0, %v5512
        %v5514 = vsel %vm5513, 0, %v5512
        %v5515 = vsub.s32 32, %v5514
        %v5516 = vshll.u32 %v5507, %v5514
        %v5517 = vshrl.u32 %v5499, %v5515
        %v5518 = vor.u32 %v5516, %v5517
        %v5519 = vsub.s32 4294967266, %v5514
        %v5520 = vadd.s32 %v5519, 127
        %v5521 = vshll.u32 %v5520, 23
        %v5522 = vor.u32 4788187, %v5521
        %v5523 = vand.u32 2147483647, %v5522
        %v5525 = vcvt.s32.f32 %v5518
        %v5526 = vmul.f32 %v5525, %v5523
        %v5527 = vxor.u32 %v5526, 2147483648
        %v5528 = vsel %vm5445, %v5527, %v5526
        %v5529 = vsub.s32 4, %v5505
        %v5530 = vsel %vm5445, %v5529, %v5505
        %v5531 = vsel %vm5444, %v673, %v5528
        %v5532 = vsel %vm5444, 0, %v5530
        %v5533 = vcosq.f32.pop %v5531
        %v5534 = vsinq.f32.pop %v5531
        %vm5535 = vweird.f32 %v673
        %v5536 = vadd.s32 %v5532, 3
        %v5537 = vand.u32 %v5536, 3
        %vm5538 = vcmp.lt.s32.totalorder %v5537, 2
        %vm5539 = vcmp.eq.s32.totalorder %v5537, 0
        %v5540 = vxor.u32 %v5534, 2147483648
        %v5541 = vsel %vm5539, %v5533, %v5540
        %vm5542 = vcmp.eq.s32.totalorder %v5537, 2
        %v5543 = vxor.u32 %v5533, 2147483648
        %v5544 = vsel %vm5542, %v5543, %v5534
        %v5545 = vsel %vm5538, %v5541, %v5544
        %v5546 = vsel %vm5535, nan, %v5545
        %v5547 = vand.u32 2147483647, %v674
        %vm5548 = vcmp.le.f32.partialorder %v5547, 0.7853982
        %vm5549 = vcmp.lt.s32.totalorder %v674, 0
        %v5550 = vand.u32 %v674, 2139095040
        %v5551 = vshrl.u32 %v5550, 23
        %v5552 = vsub.s32 %v5551, 127
        %v5553 = vand.u32 2147483647, %v674
        %v5554 = vand.u32 %v5553, 8388607
        %v5555 = vor.u32 %v5554, 8388608
        %v5556 = vsub.s32 0, %v5555
        %v5557 = vadd.s32 %v5552, 1
        %vm5558 = vcmp.gt.s32.totalorder %v5557, 0
        %v5559 = vsel %vm5558, %v5557, 0
        %v5560 = vshrl.u32 %v5559, 5
        %v5561 = vand.u32 %v5559, 31
        %v5562 = vsub.s32 32, %v5561
        %v5563 = vshrl.u32 683565275, %v5562
        %v5564 = vshll.u32 683565275, %v5561
        %v5565 = vshrl.u32 2475754826, %v5562
        %v5566 = vor.u32 %v5564, %v5565
        %v5567 = vshll.u32 2475754826, %v5561
        %v5568 = vshrl.u32 2131351028, %v5562
        %v5569 = vor.u32 %v5567, %v5568
        %v5570 = vshll.u32 2131351028, %v5561
        %v5571 = vshrl.u32 2102212464, %v5562
        %v5572 = vor.u32 %v5570, %v5571
        %v5573 = vshll.u32 2102212464, %v5561
        %v5574 = vshrl.u32 920167782, %v5562
        %v5575 = vor.u32 %v5573, %v5574
        %v5576 = vshll.u32 920167782, %v5561
        %v5577 = vshrl.u32 1326507024, %v5562
        %v5578 = vor.u32 %v5576, %v5577
        %vm5579 = vcmp.lt.s32.totalorder %v5560, 1
        %vm5580 = vcmp.lt.s32.totalorder %v5560, 2
        %vm5581 = vcmp.lt.s32.totalorder %v5560, 3
        %vm5582 = vcmp.lt.s32.totalorder %v5560, 4
        %v5583 = vsel %vm5579, %v5563, %v5566
        %v5584 = vsel %vm5582, %v5572, 2102212464
        %v5585 = vsel %vm5581, %v5569, %v5584
        %v5586 = vsel %vm5580, %v5583, %v5585
        %v5587 = vsel %vm5579, %v5566, %v5569
        %v5588 = vsel %vm5582, %v5575, 920167782
        %v5589 = vsel %vm5581, %v5572, %v5588
        %v5590 = vsel %vm5580, %v5587, %v5589
        %v5591 = vsel %vm5579, %v5569, %v5572
        %v5592 = vsel %vm5582, %v5578, 1326507024
        %v5593 = vsel %vm5581, %v5575, %v5592
        %v5594 = vsel %vm5580, %v5591, %v5593
        %v5595 = vshll.u32 %v5555, 8
        %v5596 = vmul.u32.u64.compose %v5595, %v5594
        %v5597 = vextract.low.u32 %v5596
        %v5598 = vextract.high.u32 %v5596
        %v5599 = vmul.u32.u64.compose %v5595, %v5590
        %v5600 = vextract.low.u32 %v5599
        %v5601 = vextract.high.u32 %v5599
        %v5602 = vmul.u32 %v5595, %v5586
        %v5603 = vadd.s32 %v5598, %v5600
        %vm5604 = vc.u32 %v5598, %v5600
        %v5605 = vadd.s32 %v5601, 1
        %v5606 = vsel %vm5604, %v5605, %v5601
        %v5607 = vadd.s32 %v5602, %v5606
        %v5608 = vadd.s32 %v5607, 536870912
        %v5609 = vshrl.u32 %v5608, 30
        %v5610 = vshll.u32 %v5609, 30
        %v5611 = vsub.s32 %v5607, %v5610
        %vm5612 = vcmp.lt.s32.totalorder %v5611, 0
        %v5613 = vsub.s32 0, %v5611
        %v5614 = vsel %vm5612, %v5613, %v5611
        %v5615 = vclz %v5614
        %v5616 = vsub.s32 %v5615, 2
        %vm5617 = vcmp.gt.s32.totalorder 0, %v5616
        %v5618 = vsel %vm5617, 0, %v5616
        %v5619 = vsub.s32 32, %v5618
        %v5620 = vshll.u32 %v5611, %v5618
        %v5621 = vshrl.u32 %v5603, %v5619
        %v5622 = vor.u32 %v5620, %v5621
        %v5623 = vsub.s32 4294967266, %v5618
        %v5624 = vadd.s32 %v5623, 127
        %v5625 = vshll.u32 %v5624, 23
        %v5626 = vor.u32 4788187, %v5625
        %v5627 = vand.u32 2147483647, %v5626
        %v5629 = vcvt.s32.f32 %v5622
        %v5630 = vmul.f32 %v5629, %v5627
        %v5631 = vxor.u32 %v5630, 2147483648
        %v5632 = vsel %vm5549, %v5631, %v5630
        %v5633 = vsub.s32 4, %v5609
        %v5634 = vsel %vm5549, %v5633, %v5609
        %v5635 = vsel %vm5548, %v674, %v5632
        %v5636 = vsel %vm5548, 0, %v5634
        %v5637 = vcosq.f32.pop %v5635
        %v5638 = vsinq.f32.pop %v5635
        %vm5639 = vweird.f32 %v674
        %v5640 = vadd.s32 %v5636, 3
        %v5641 = vand.u32 %v5640, 3
        %vm5642 = vcmp.lt.s32.totalorder %v5641, 2
        %vm5643 = vcmp.eq.s32.totalorder %v5641, 0
        %v5644 = vxor.u32 %v5638, 2147483648
        %v5645 = vsel %vm5643, %v5637, %v5644
        %vm5646 = vcmp.eq.s32.totalorder %v5641, 2
        %v5647 = vxor.u32 %v5637, 2147483648
        %v5648 = vsel %vm5646, %v5647, %v5638
        %v5649 = vsel %vm5642, %v5645, %v5648
        %v5650 = vsel %vm5639, nan, %v5649
        %v5651 = vand.u32 2147483647, %v675
        %vm5652 = vcmp.le.f32.partialorder %v5651, 0.7853982
        %vm5653 = vcmp.lt.s32.totalorder %v675, 0
        %v5654 = vand.u32 %v675, 2139095040
        %v5655 = vshrl.u32 %v5654, 23
        %v5656 = vsub.s32 %v5655, 127
        %v5657 = vand.u32 2147483647, %v675
        %v5658 = vand.u32 %v5657, 8388607
        %v5659 = vor.u32 %v5658, 8388608
        %v5660 = vsub.s32 0, %v5659
        %v5661 = vadd.s32 %v5656, 1
        %vm5662 = vcmp.gt.s32.totalorder %v5661, 0
        %v5663 = vsel %vm5662, %v5661, 0
        %v5664 = vshrl.u32 %v5663, 5
        %v5665 = vand.u32 %v5663, 31
        %v5666 = vsub.s32 32, %v5665
        %v5667 = vshrl.u32 683565275, %v5666
        %v5668 = vshll.u32 683565275, %v5665
        %v5669 = vshrl.u32 2475754826, %v5666
        %v5670 = vor.u32 %v5668, %v5669
        %v5671 = vshll.u32 2475754826, %v5665
        %v5672 = vshrl.u32 2131351028, %v5666
        %v5673 = vor.u32 %v5671, %v5672
        %v5674 = vshll.u32 2131351028, %v5665
        %v5675 = vshrl.u32 2102212464, %v5666
        %v5676 = vor.u32 %v5674, %v5675
        %v5677 = vshll.u32 2102212464, %v5665
        %v5678 = vshrl.u32 920167782, %v5666
        %v5679 = vor.u32 %v5677, %v5678
        %v5680 = vshll.u32 920167782, %v5665
        %v5681 = vshrl.u32 1326507024, %v5666
        %v5682 = vor.u32 %v5680, %v5681
        %vm5683 = vcmp.lt.s32.totalorder %v5664, 1
        %vm5684 = vcmp.lt.s32.totalorder %v5664, 2
        %vm5685 = vcmp.lt.s32.totalorder %v5664, 3
        %vm5686 = vcmp.lt.s32.totalorder %v5664, 4
        %v5687 = vsel %vm5683, %v5667, %v5670
        %v5688 = vsel %vm5686, %v5676, 2102212464
        %v5689 = vsel %vm5685, %v5673, %v5688
        %v5690 = vsel %vm5684, %v5687, %v5689
        %v5691 = vsel %vm5683, %v5670, %v5673
        %v5692 = vsel %vm5686, %v5679, 920167782
        %v5693 = vsel %vm5685, %v5676, %v5692
        %v5694 = vsel %vm5684, %v5691, %v5693
        %v5695 = vsel %vm5683, %v5673, %v5676
        %v5696 = vsel %vm5686, %v5682, 1326507024
        %v5697 = vsel %vm5685, %v5679, %v5696
        %v5698 = vsel %vm5684, %v5695, %v5697
        %v5699 = vshll.u32 %v5659, 8
        %v5700 = vmul.u32.u64.compose %v5699, %v5698
        %v5701 = vextract.low.u32 %v5700
        %v5702 = vextract.high.u32 %v5700
        %v5703 = vmul.u32.u64.compose %v5699, %v5694
        %v5704 = vextract.low.u32 %v5703
        %v5705 = vextract.high.u32 %v5703
        %v5706 = vmul.u32 %v5699, %v5690
        %v5707 = vadd.s32 %v5702, %v5704
        %vm5708 = vc.u32 %v5702, %v5704
        %v5709 = vadd.s32 %v5705, 1
        %v5710 = vsel %vm5708, %v5709, %v5705
        %v5711 = vadd.s32 %v5706, %v5710
        %v5712 = vadd.s32 %v5711, 536870912
        %v5713 = vshrl.u32 %v5712, 30
        %v5714 = vshll.u32 %v5713, 30
        %v5715 = vsub.s32 %v5711, %v5714
        %vm5716 = vcmp.lt.s32.totalorder %v5715, 0
        %v5717 = vsub.s32 0, %v5715
        %v5718 = vsel %vm5716, %v5717, %v5715
        %v5719 = vclz %v5718
        %v5720 = vsub.s32 %v5719, 2
        %vm5721 = vcmp.gt.s32.totalorder 0, %v5720
        %v5722 = vsel %vm5721, 0, %v5720
        %v5723 = vsub.s32 32, %v5722
        %v5724 = vshll.u32 %v5715, %v5722
        %v5725 = vshrl.u32 %v5707, %v5723
        %v5726 = vor.u32 %v5724, %v5725
        %v5727 = vsub.s32 4294967266, %v5722
        %v5728 = vadd.s32 %v5727, 127
        %v5729 = vshll.u32 %v5728, 23
        %v5730 = vor.u32 4788187, %v5729
        %v5731 = vand.u32 2147483647, %v5730
        %v5733 = vcvt.s32.f32 %v5726
        %v5734 = vmul.f32 %v5733, %v5731
        %v5735 = vxor.u32 %v5734, 2147483648
        %v5736 = vsel %vm5653, %v5735, %v5734
        %v5737 = vsub.s32 4, %v5713
        %v5738 = vsel %vm5653, %v5737, %v5713
        %v5739 = vsel %vm5652, %v675, %v5736
        %v5740 = vsel %vm5652, 0, %v5738
        %v5741 = vcosq.f32.pop %v5739
        %v5742 = vsinq.f32.pop %v5739
        %vm5743 = vweird.f32 %v675
        %v5744 = vadd.s32 %v5740, 3
        %v5745 = vand.u32 %v5744, 3
        %vm5746 = vcmp.lt.s32.totalorder %v5745, 2
        %vm5747 = vcmp.eq.s32.totalorder %v5745, 0
        %v5748 = vxor.u32 %v5742, 2147483648
        %v5749 = vsel %vm5747, %v5741, %v5748
        %vm5750 = vcmp.eq.s32.totalorder %v5745, 2
        %v5751 = vxor.u32 %v5741, 2147483648
        %v5752 = vsel %vm5750, %v5751, %v5742
        %v5753 = vsel %vm5746, %v5749, %v5752
        %v5754 = vsel %vm5743, nan, %v5753
        %v5755 = vand.u32 2147483647, %v676
        %vm5756 = vcmp.le.f32.partialorder %v5755, 0.7853982
        %vm5757 = vcmp.lt.s32.totalorder %v676, 0
        %v5758 = vand.u32 %v676, 2139095040
        %v5759 = vshrl.u32 %v5758, 23
        %v5760 = vsub.s32 %v5759, 127
        %v5761 = vand.u32 2147483647, %v676
        %v5762 = vand.u32 %v5761, 8388607
        %v5763 = vor.u32 %v5762, 8388608
        %v5764 = vsub.s32 0, %v5763
        %v5765 = vadd.s32 %v5760, 1
        %vm5766 = vcmp.gt.s32.totalorder %v5765, 0
        %v5767 = vsel %vm5766, %v5765, 0
        %v5768 = vshrl.u32 %v5767, 5
        %v5769 = vand.u32 %v5767, 31
        %v5770 = vsub.s32 32, %v5769
        %v5771 = vshrl.u32 683565275, %v5770
        %v5772 = vshll.u32 683565275, %v5769
        %v5773 = vshrl.u32 2475754826, %v5770
        %v5774 = vor.u32 %v5772, %v5773
        %v5775 = vshll.u32 2475754826, %v5769
        %v5776 = vshrl.u32 2131351028, %v5770
        %v5777 = vor.u32 %v5775, %v5776
        %v5778 = vshll.u32 2131351028, %v5769
        %v5779 = vshrl.u32 2102212464, %v5770
        %v5780 = vor.u32 %v5778, %v5779
        %v5781 = vshll.u32 2102212464, %v5769
        %v5782 = vshrl.u32 920167782, %v5770
        %v5783 = vor.u32 %v5781, %v5782
        %v5784 = vshll.u32 920167782, %v5769
        %v5785 = vshrl.u32 1326507024, %v5770
        %v5786 = vor.u32 %v5784, %v5785
        %vm5787 = vcmp.lt.s32.totalorder %v5768, 1
        %vm5788 = vcmp.lt.s32.totalorder %v5768, 2
        %vm5789 = vcmp.lt.s32.totalorder %v5768, 3
        %vm5790 = vcmp.lt.s32.totalorder %v5768, 4
        %v5791 = vsel %vm5787, %v5771, %v5774
        %v5792 = vsel %vm5790, %v5780, 2102212464
        %v5793 = vsel %vm5789, %v5777, %v5792
        %v5794 = vsel %vm5788, %v5791, %v5793
        %v5795 = vsel %vm5787, %v5774, %v5777
        %v5796 = vsel %vm5790, %v5783, 920167782
        %v5797 = vsel %vm5789, %v5780, %v5796
        %v5798 = vsel %vm5788, %v5795, %v5797
        %v5799 = vsel %vm5787, %v5777, %v5780
        %v5800 = vsel %vm5790, %v5786, 1326507024
        %v5801 = vsel %vm5789, %v5783, %v5800
        %v5802 = vsel %vm5788, %v5799, %v5801
        %v5803 = vshll.u32 %v5763, 8
        %v5804 = vmul.u32.u64.compose %v5803, %v5802
        %v5805 = vextract.low.u32 %v5804
        %v5806 = vextract.high.u32 %v5804
        %v5807 = vmul.u32.u64.compose %v5803, %v5798
        %v5808 = vextract.low.u32 %v5807
        %v5809 = vextract.high.u32 %v5807
        %v5810 = vmul.u32 %v5803, %v5794
        %v5811 = vadd.s32 %v5806, %v5808
        %vm5812 = vc.u32 %v5806, %v5808
        %v5813 = vadd.s32 %v5809, 1
        %v5814 = vsel %vm5812, %v5813, %v5809
        %v5815 = vadd.s32 %v5810, %v5814
        %v5816 = vadd.s32 %v5815, 536870912
        %v5817 = vshrl.u32 %v5816, 30
        %v5818 = vshll.u32 %v5817, 30
        %v5819 = vsub.s32 %v5815, %v5818
        %vm5820 = vcmp.lt.s32.totalorder %v5819, 0
        %v5821 = vsub.s32 0, %v5819
        %v5822 = vsel %vm5820, %v5821, %v5819
        %v5823 = vclz %v5822
        %v5824 = vsub.s32 %v5823, 2
        %vm5825 = vcmp.gt.s32.totalorder 0, %v5824
        %v5826 = vsel %vm5825, 0, %v5824
        %v5827 = vsub.s32 32, %v5826
        %v5828 = vshll.u32 %v5819, %v5826
        %v5829 = vshrl.u32 %v5811, %v5827
        %v5830 = vor.u32 %v5828, %v5829
        %v5831 = vsub.s32 4294967266, %v5826
        %v5832 = vadd.s32 %v5831, 127
        %v5833 = vshll.u32 %v5832, 23
        %v5834 = vor.u32 4788187, %v5833
        %v5835 = vand.u32 2147483647, %v5834
        %v5837 = vcvt.s32.f32 %v5830
        %v5838 = vmul.f32 %v5837, %v5835
        %v5839 = vxor.u32 %v5838, 2147483648
        %v5840 = vsel %vm5757, %v5839, %v5838
        %v5841 = vsub.s32 4, %v5817
        %v5842 = vsel %vm5757, %v5841, %v5817
        %v5843 = vsel %vm5756, %v676, %v5840
        %v5844 = vsel %vm5756, 0, %v5842
        %v5845 = vcosq.f32.pop %v5843
        %v5846 = vsinq.f32.pop %v5843
        %vm5847 = vweird.f32 %v676
        %v5848 = vadd.s32 %v5844, 3
        %v5849 = vand.u32 %v5848, 3
        %vm5850 = vcmp.lt.s32.totalorder %v5849, 2
        %vm5851 = vcmp.eq.s32.totalorder %v5849, 0
        %v5852 = vxor.u32 %v5846, 2147483648
        %v5853 = vsel %vm5851, %v5845, %v5852
        %vm5854 = vcmp.eq.s32.totalorder %v5849, 2
        %v5855 = vxor.u32 %v5845, 2147483648
        %v5856 = vsel %vm5854, %v5855, %v5846
        %v5857 = vsel %vm5850, %v5853, %v5856
        %v5858 = vsel %vm5847, nan, %v5857
        %v5859 = vand.u32 2147483647, %v677
        %vm5860 = vcmp.le.f32.partialorder %v5859, 0.7853982
        %vm5861 = vcmp.lt.s32.totalorder %v677, 0
        %v5862 = vand.u32 %v677, 2139095040
        %v5863 = vshrl.u32 %v5862, 23
        %v5864 = vsub.s32 %v5863, 127
        %v5865 = vand.u32 2147483647, %v677
        %v5866 = vand.u32 %v5865, 8388607
        %v5867 = vor.u32 %v5866, 8388608
        %v5868 = vsub.s32 0, %v5867
        %v5869 = vadd.s32 %v5864, 1
        %vm5870 = vcmp.gt.s32.totalorder %v5869, 0
        %v5871 = vsel %vm5870, %v5869, 0
        %v5872 = vshrl.u32 %v5871, 5
        %v5873 = vand.u32 %v5871, 31
        %v5874 = vsub.s32 32, %v5873
        %v5875 = vshrl.u32 683565275, %v5874
        %v5876 = vshll.u32 683565275, %v5873
        %v5877 = vshrl.u32 2475754826, %v5874
        %v5878 = vor.u32 %v5876, %v5877
        %v5879 = vshll.u32 2475754826, %v5873
        %v5880 = vshrl.u32 2131351028, %v5874
        %v5881 = vor.u32 %v5879, %v5880
        %v5882 = vshll.u32 2131351028, %v5873
        %v5883 = vshrl.u32 2102212464, %v5874
        %v5884 = vor.u32 %v5882, %v5883
        %v5885 = vshll.u32 2102212464, %v5873
        %v5886 = vshrl.u32 920167782, %v5874
        %v5887 = vor.u32 %v5885, %v5886
        %v5888 = vshll.u32 920167782, %v5873
        %v5889 = vshrl.u32 1326507024, %v5874
        %v5890 = vor.u32 %v5888, %v5889
        %vm5891 = vcmp.lt.s32.totalorder %v5872, 1
        %vm5892 = vcmp.lt.s32.totalorder %v5872, 2
        %vm5893 = vcmp.lt.s32.totalorder %v5872, 3
        %vm5894 = vcmp.lt.s32.totalorder %v5872, 4
        %v5895 = vsel %vm5891, %v5875, %v5878
        %v5896 = vsel %vm5894, %v5884, 2102212464
        %v5897 = vsel %vm5893, %v5881, %v5896
        %v5898 = vsel %vm5892, %v5895, %v5897
        %v5899 = vsel %vm5891, %v5878, %v5881
        %v5900 = vsel %vm5894, %v5887, 920167782
        %v5901 = vsel %vm5893, %v5884, %v5900
        %v5902 = vsel %vm5892, %v5899, %v5901
        %v5903 = vsel %vm5891, %v5881, %v5884
        %v5904 = vsel %vm5894, %v5890, 1326507024
        %v5905 = vsel %vm5893, %v5887, %v5904
        %v5906 = vsel %vm5892, %v5903, %v5905
        %v5907 = vshll.u32 %v5867, 8
        %v5908 = vmul.u32.u64.compose %v5907, %v5906
        %v5909 = vextract.low.u32 %v5908
        %v5910 = vextract.high.u32 %v5908
        %v5911 = vmul.u32.u64.compose %v5907, %v5902
        %v5912 = vextract.low.u32 %v5911
        %v5913 = vextract.high.u32 %v5911
        %v5914 = vmul.u32 %v5907, %v5898
        %v5915 = vadd.s32 %v5910, %v5912
        %vm5916 = vc.u32 %v5910, %v5912
        %v5917 = vadd.s32 %v5913, 1
        %v5918 = vsel %vm5916, %v5917, %v5913
        %v5919 = vadd.s32 %v5914, %v5918
        %v5920 = vadd.s32 %v5919, 536870912
        %v5921 = vshrl.u32 %v5920, 30
        %v5922 = vshll.u32 %v5921, 30
        %v5923 = vsub.s32 %v5919, %v5922
        %vm5924 = vcmp.lt.s32.totalorder %v5923, 0
        %v5925 = vsub.s32 0, %v5923
        %v5926 = vsel %vm5924, %v5925, %v5923
        %v5927 = vclz %v5926
        %v5928 = vsub.s32 %v5927, 2
        %vm5929 = vcmp.gt.s32.totalorder 0, %v5928
        %v5930 = vsel %vm5929, 0, %v5928
        %v5931 = vsub.s32 32, %v5930
        %v5932 = vshll.u32 %v5923, %v5930
        %v5933 = vshrl.u32 %v5915, %v5931
        %v5934 = vor.u32 %v5932, %v5933
        %v5935 = vsub.s32 4294967266, %v5930
        %v5936 = vadd.s32 %v5935, 127
        %v5937 = vshll.u32 %v5936, 23
        %v5938 = vor.u32 4788187, %v5937
        %v5939 = vand.u32 2147483647, %v5938
        %v5941 = vcvt.s32.f32 %v5934
        %v5942 = vmul.f32 %v5941, %v5939
        %v5943 = vxor.u32 %v5942, 2147483648
        %v5944 = vsel %vm5861, %v5943, %v5942
        %v5945 = vsub.s32 4, %v5921
        %v5946 = vsel %vm5861, %v5945, %v5921
        %v5947 = vsel %vm5860, %v677, %v5944
        %v5948 = vsel %vm5860, 0, %v5946
        %v5949 = vcosq.f32.pop %v5947
        %v5950 = vsinq.f32.pop %v5947
        %vm5951 = vweird.f32 %v677
        %v5952 = vadd.s32 %v5948, 3
        %v5953 = vand.u32 %v5952, 3
        %vm5954 = vcmp.lt.s32.totalorder %v5953, 2
        %vm5955 = vcmp.eq.s32.totalorder %v5953, 0
        %v5956 = vxor.u32 %v5950, 2147483648
        %v5957 = vsel %vm5955, %v5949, %v5956
        %vm5958 = vcmp.eq.s32.totalorder %v5953, 2
        %v5959 = vxor.u32 %v5949, 2147483648
        %v5960 = vsel %vm5958, %v5959, %v5950
        %v5961 = vsel %vm5954, %v5957, %v5960
        %v5962 = vsel %vm5951, nan, %v5961
        %v5963 = vand.u32 2147483647, %v678
        %vm5964 = vcmp.le.f32.partialorder %v5963, 0.7853982
        %vm5965 = vcmp.lt.s32.totalorder %v678, 0
        %v5966 = vand.u32 %v678, 2139095040
        %v5967 = vshrl.u32 %v5966, 23
        %v5968 = vsub.s32 %v5967, 127
        %v5969 = vand.u32 2147483647, %v678
        %v5970 = vand.u32 %v5969, 8388607
        %v5971 = vor.u32 %v5970, 8388608
        %v5972 = vsub.s32 0, %v5971
        %v5973 = vadd.s32 %v5968, 1
        %vm5974 = vcmp.gt.s32.totalorder %v5973, 0
        %v5975 = vsel %vm5974, %v5973, 0
        %v5976 = vshrl.u32 %v5975, 5
        %v5977 = vand.u32 %v5975, 31
        %v5978 = vsub.s32 32, %v5977
        %v5979 = vshrl.u32 683565275, %v5978
        %v5980 = vshll.u32 683565275, %v5977
        %v5981 = vshrl.u32 2475754826, %v5978
        %v5982 = vor.u32 %v5980, %v5981
        %v5983 = vshll.u32 2475754826, %v5977
        %v5984 = vshrl.u32 2131351028, %v5978
        %v5985 = vor.u32 %v5983, %v5984
        %v5986 = vshll.u32 2131351028, %v5977
        %v5987 = vshrl.u32 2102212464, %v5978
        %v5988 = vor.u32 %v5986, %v5987
        %v5989 = vshll.u32 2102212464, %v5977
        %v5990 = vshrl.u32 920167782, %v5978
        %v5991 = vor.u32 %v5989, %v5990
        %v5992 = vshll.u32 920167782, %v5977
        %v5993 = vshrl.u32 1326507024, %v5978
        %v5994 = vor.u32 %v5992, %v5993
        %vm5995 = vcmp.lt.s32.totalorder %v5976, 1
        %vm5996 = vcmp.lt.s32.totalorder %v5976, 2
        %vm5997 = vcmp.lt.s32.totalorder %v5976, 3
        %vm5998 = vcmp.lt.s32.totalorder %v5976, 4
        %v5999 = vsel %vm5995, %v5979, %v5982
        %v6000 = vsel %vm5998, %v5988, 2102212464
        %v6001 = vsel %vm5997, %v5985, %v6000
        %v6002 = vsel %vm5996, %v5999, %v6001
        %v6003 = vsel %vm5995, %v5982, %v5985
        %v6004 = vsel %vm5998, %v5991, 920167782
        %v6005 = vsel %vm5997, %v5988, %v6004
        %v6006 = vsel %vm5996, %v6003, %v6005
        %v6007 = vsel %vm5995, %v5985, %v5988
        %v6008 = vsel %vm5998, %v5994, 1326507024
        %v6009 = vsel %vm5997, %v5991, %v6008
        %v6010 = vsel %vm5996, %v6007, %v6009
        %v6011 = vshll.u32 %v5971, 8
        %v6012 = vmul.u32.u64.compose %v6011, %v6010
        %v6013 = vextract.low.u32 %v6012
        %v6014 = vextract.high.u32 %v6012
        %v6015 = vmul.u32.u64.compose %v6011, %v6006
        %v6016 = vextract.low.u32 %v6015
        %v6017 = vextract.high.u32 %v6015
        %v6018 = vmul.u32 %v6011, %v6002
        %v6019 = vadd.s32 %v6014, %v6016
        %vm6020 = vc.u32 %v6014, %v6016
        %v6021 = vadd.s32 %v6017, 1
        %v6022 = vsel %vm6020, %v6021, %v6017
        %v6023 = vadd.s32 %v6018, %v6022
        %v6024 = vadd.s32 %v6023, 536870912
        %v6025 = vshrl.u32 %v6024, 30
        %v6026 = vshll.u32 %v6025, 30
        %v6027 = vsub.s32 %v6023, %v6026
        %vm6028 = vcmp.lt.s32.totalorder %v6027, 0
        %v6029 = vsub.s32 0, %v6027
        %v6030 = vsel %vm6028, %v6029, %v6027
        %v6031 = vclz %v6030
        %v6032 = vsub.s32 %v6031, 2
        %vm6033 = vcmp.gt.s32.totalorder 0, %v6032
        %v6034 = vsel %vm6033, 0, %v6032
        %v6035 = vsub.s32 32, %v6034
        %v6036 = vshll.u32 %v6027, %v6034
        %v6037 = vshrl.u32 %v6019, %v6035
        %v6038 = vor.u32 %v6036, %v6037
        %v6039 = vsub.s32 4294967266, %v6034
        %v6040 = vadd.s32 %v6039, 127
        %v6041 = vshll.u32 %v6040, 23
        %v6042 = vor.u32 4788187, %v6041
        %v6043 = vand.u32 2147483647, %v6042
        %v6045 = vcvt.s32.f32 %v6038
        %v6046 = vmul.f32 %v6045, %v6043
        %v6047 = vxor.u32 %v6046, 2147483648
        %v6048 = vsel %vm5965, %v6047, %v6046
        %v6049 = vsub.s32 4, %v6025
        %v6050 = vsel %vm5965, %v6049, %v6025
        %v6051 = vsel %vm5964, %v678, %v6048
        %v6052 = vsel %vm5964, 0, %v6050
        %v6053 = vcosq.f32.pop %v6051
        %v6054 = vsinq.f32.pop %v6051
        %vm6055 = vweird.f32 %v678
        %v6056 = vadd.s32 %v6052, 3
        %v6057 = vand.u32 %v6056, 3
        %vm6058 = vcmp.lt.s32.totalorder %v6057, 2
        %vm6059 = vcmp.eq.s32.totalorder %v6057, 0
        %v6060 = vxor.u32 %v6054, 2147483648
        %v6061 = vsel %vm6059, %v6053, %v6060
        %vm6062 = vcmp.eq.s32.totalorder %v6057, 2
        %v6063 = vxor.u32 %v6053, 2147483648
        %v6064 = vsel %vm6062, %v6063, %v6054
        %v6065 = vsel %vm6058, %v6061, %v6064
        %v6066 = vsel %vm6055, nan, %v6065
        %v6067 = vand.u32 2147483647, %v679
        %vm6068 = vcmp.le.f32.partialorder %v6067, 0.7853982
        %vm6069 = vcmp.lt.s32.totalorder %v679, 0
        %v6070 = vand.u32 %v679, 2139095040
        %v6071 = vshrl.u32 %v6070, 23
        %v6072 = vsub.s32 %v6071, 127
        %v6073 = vand.u32 2147483647, %v679
        %v6074 = vand.u32 %v6073, 8388607
        %v6075 = vor.u32 %v6074, 8388608
        %v6076 = vsub.s32 0, %v6075
        %v6077 = vadd.s32 %v6072, 1
        %vm6078 = vcmp.gt.s32.totalorder %v6077, 0
        %v6079 = vsel %vm6078, %v6077, 0
        %v6080 = vshrl.u32 %v6079, 5
        %v6081 = vand.u32 %v6079, 31
        %v6082 = vsub.s32 32, %v6081
        %v6083 = vshrl.u32 683565275, %v6082
        %v6084 = vshll.u32 683565275, %v6081
        %v6085 = vshrl.u32 2475754826, %v6082
        %v6086 = vor.u32 %v6084, %v6085
        %v6087 = vshll.u32 2475754826, %v6081
        %v6088 = vshrl.u32 2131351028, %v6082
        %v6089 = vor.u32 %v6087, %v6088
        %v6090 = vshll.u32 2131351028, %v6081
        %v6091 = vshrl.u32 2102212464, %v6082
        %v6092 = vor.u32 %v6090, %v6091
        %v6093 = vshll.u32 2102212464, %v6081
        %v6094 = vshrl.u32 920167782, %v6082
        %v6095 = vor.u32 %v6093, %v6094
        %v6096 = vshll.u32 920167782, %v6081
        %v6097 = vshrl.u32 1326507024, %v6082
        %v6098 = vor.u32 %v6096, %v6097
        %vm6099 = vcmp.lt.s32.totalorder %v6080, 1
        %vm6100 = vcmp.lt.s32.totalorder %v6080, 2
        %vm6101 = vcmp.lt.s32.totalorder %v6080, 3
        %vm6102 = vcmp.lt.s32.totalorder %v6080, 4
        %v6103 = vsel %vm6099, %v6083, %v6086
        %v6104 = vsel %vm6102, %v6092, 2102212464
        %v6105 = vsel %vm6101, %v6089, %v6104
        %v6106 = vsel %vm6100, %v6103, %v6105
        %v6107 = vsel %vm6099, %v6086, %v6089
        %v6108 = vsel %vm6102, %v6095, 920167782
        %v6109 = vsel %vm6101, %v6092, %v6108
        %v6110 = vsel %vm6100, %v6107, %v6109
        %v6111 = vsel %vm6099, %v6089, %v6092
        %v6112 = vsel %vm6102, %v6098, 1326507024
        %v6113 = vsel %vm6101, %v6095, %v6112
        %v6114 = vsel %vm6100, %v6111, %v6113
        %v6115 = vshll.u32 %v6075, 8
        %v6116 = vmul.u32.u64.compose %v6115, %v6114
        %v6117 = vextract.low.u32 %v6116
        %v6118 = vextract.high.u32 %v6116
        %v6119 = vmul.u32.u64.compose %v6115, %v6110
        %v6120 = vextract.low.u32 %v6119
        %v6121 = vextract.high.u32 %v6119
        %v6122 = vmul.u32 %v6115, %v6106
        %v6123 = vadd.s32 %v6118, %v6120
        %vm6124 = vc.u32 %v6118, %v6120
        %v6125 = vadd.s32 %v6121, 1
        %v6126 = vsel %vm6124, %v6125, %v6121
        %v6127 = vadd.s32 %v6122, %v6126
        %v6128 = vadd.s32 %v6127, 536870912
        %v6129 = vshrl.u32 %v6128, 30
        %v6130 = vshll.u32 %v6129, 30
        %v6131 = vsub.s32 %v6127, %v6130
        %vm6132 = vcmp.lt.s32.totalorder %v6131, 0
        %v6133 = vsub.s32 0, %v6131
        %v6134 = vsel %vm6132, %v6133, %v6131
        %v6135 = vclz %v6134
        %v6136 = vsub.s32 %v6135, 2
        %vm6137 = vcmp.gt.s32.totalorder 0, %v6136
        %v6138 = vsel %vm6137, 0, %v6136
        %v6139 = vsub.s32 32, %v6138
        %v6140 = vshll.u32 %v6131, %v6138
        %v6141 = vshrl.u32 %v6123, %v6139
        %v6142 = vor.u32 %v6140, %v6141
        %v6143 = vsub.s32 4294967266, %v6138
        %v6144 = vadd.s32 %v6143, 127
        %v6145 = vshll.u32 %v6144, 23
        %v6146 = vor.u32 4788187, %v6145
        %v6147 = vand.u32 2147483647, %v6146
        %v6149 = vcvt.s32.f32 %v6142
        %v6150 = vmul.f32 %v6149, %v6147
        %v6151 = vxor.u32 %v6150, 2147483648
        %v6152 = vsel %vm6069, %v6151, %v6150
        %v6153 = vsub.s32 4, %v6129
        %v6154 = vsel %vm6069, %v6153, %v6129
        %v6155 = vsel %vm6068, %v679, %v6152
        %v6156 = vsel %vm6068, 0, %v6154
        %v6157 = vcosq.f32.pop %v6155
        %v6158 = vsinq.f32.pop %v6155
        %vm6159 = vweird.f32 %v679
        %v6160 = vadd.s32 %v6156, 3
        %v6161 = vand.u32 %v6160, 3
        %vm6162 = vcmp.lt.s32.totalorder %v6161, 2
        %vm6163 = vcmp.eq.s32.totalorder %v6161, 0
        %v6164 = vxor.u32 %v6158, 2147483648
        %v6165 = vsel %vm6163, %v6157, %v6164
        %vm6166 = vcmp.eq.s32.totalorder %v6161, 2
        %v6167 = vxor.u32 %v6157, 2147483648
        %v6168 = vsel %vm6166, %v6167, %v6158
        %v6169 = vsel %vm6162, %v6165, %v6168
        %v6170 = vsel %vm6159, nan, %v6169
        %v6171 = vand.u32 2147483647, %v680
        %vm6172 = vcmp.le.f32.partialorder %v6171, 0.7853982
        %vm6173 = vcmp.lt.s32.totalorder %v680, 0
        %v6174 = vand.u32 %v680, 2139095040
        %v6175 = vshrl.u32 %v6174, 23
        %v6176 = vsub.s32 %v6175, 127
        %v6177 = vand.u32 2147483647, %v680
        %v6178 = vand.u32 %v6177, 8388607
        %v6179 = vor.u32 %v6178, 8388608
        %v6180 = vsub.s32 0, %v6179
        %v6181 = vadd.s32 %v6176, 1
        %vm6182 = vcmp.gt.s32.totalorder %v6181, 0
        %v6183 = vsel %vm6182, %v6181, 0
        %v6184 = vshrl.u32 %v6183, 5
        %v6185 = vand.u32 %v6183, 31
        %v6186 = vsub.s32 32, %v6185
        %v6187 = vshrl.u32 683565275, %v6186
        %v6188 = vshll.u32 683565275, %v6185
        %v6189 = vshrl.u32 2475754826, %v6186
        %v6190 = vor.u32 %v6188, %v6189
        %v6191 = vshll.u32 2475754826, %v6185
        %v6192 = vshrl.u32 2131351028, %v6186
        %v6193 = vor.u32 %v6191, %v6192
        %v6194 = vshll.u32 2131351028, %v6185
        %v6195 = vshrl.u32 2102212464, %v6186
        %v6196 = vor.u32 %v6194, %v6195
        %v6197 = vshll.u32 2102212464, %v6185
        %v6198 = vshrl.u32 920167782, %v6186
        %v6199 = vor.u32 %v6197, %v6198
        %v6200 = vshll.u32 920167782, %v6185
        %v6201 = vshrl.u32 1326507024, %v6186
        %v6202 = vor.u32 %v6200, %v6201
        %vm6203 = vcmp.lt.s32.totalorder %v6184, 1
        %vm6204 = vcmp.lt.s32.totalorder %v6184, 2
        %vm6205 = vcmp.lt.s32.totalorder %v6184, 3
        %vm6206 = vcmp.lt.s32.totalorder %v6184, 4
        %v6207 = vsel %vm6203, %v6187, %v6190
        %v6208 = vsel %vm6206, %v6196, 2102212464
        %v6209 = vsel %vm6205, %v6193, %v6208
        %v6210 = vsel %vm6204, %v6207, %v6209
        %v6211 = vsel %vm6203, %v6190, %v6193
        %v6212 = vsel %vm6206, %v6199, 920167782
        %v6213 = vsel %vm6205, %v6196, %v6212
        %v6214 = vsel %vm6204, %v6211, %v6213
        %v6215 = vsel %vm6203, %v6193, %v6196
        %v6216 = vsel %vm6206, %v6202, 1326507024
        %v6217 = vsel %vm6205, %v6199, %v6216
        %v6218 = vsel %vm6204, %v6215, %v6217
        %v6219 = vshll.u32 %v6179, 8
        %v6220 = vmul.u32.u64.compose %v6219, %v6218
        %v6221 = vextract.low.u32 %v6220
        %v6222 = vextract.high.u32 %v6220
        %v6223 = vmul.u32.u64.compose %v6219, %v6214
        %v6224 = vextract.low.u32 %v6223
        %v6225 = vextract.high.u32 %v6223
        %v6226 = vmul.u32 %v6219, %v6210
        %v6227 = vadd.s32 %v6222, %v6224
        %vm6228 = vc.u32 %v6222, %v6224
        %v6229 = vadd.s32 %v6225, 1
        %v6230 = vsel %vm6228, %v6229, %v6225
        %v6231 = vadd.s32 %v6226, %v6230
        %v6232 = vadd.s32 %v6231, 536870912
        %v6233 = vshrl.u32 %v6232, 30
        %v6234 = vshll.u32 %v6233, 30
        %v6235 = vsub.s32 %v6231, %v6234
        %vm6236 = vcmp.lt.s32.totalorder %v6235, 0
        %v6237 = vsub.s32 0, %v6235
        %v6238 = vsel %vm6236, %v6237, %v6235
        %v6239 = vclz %v6238
        %v6240 = vsub.s32 %v6239, 2
        %vm6241 = vcmp.gt.s32.totalorder 0, %v6240
        %v6242 = vsel %vm6241, 0, %v6240
        %v6243 = vsub.s32 32, %v6242
        %v6244 = vshll.u32 %v6235, %v6242
        %v6245 = vshrl.u32 %v6227, %v6243
        %v6246 = vor.u32 %v6244, %v6245
        %v6247 = vsub.s32 4294967266, %v6242
        %v6248 = vadd.s32 %v6247, 127
        %v6249 = vshll.u32 %v6248, 23
        %v6250 = vor.u32 4788187, %v6249
        %v6251 = vand.u32 2147483647, %v6250
        %v6253 = vcvt.s32.f32 %v6246
        %v6254 = vmul.f32 %v6253, %v6251
        %v6255 = vxor.u32 %v6254, 2147483648
        %v6256 = vsel %vm6173, %v6255, %v6254
        %v6257 = vsub.s32 4, %v6233
        %v6258 = vsel %vm6173, %v6257, %v6233
        %v6259 = vsel %vm6172, %v680, %v6256
        %v6260 = vsel %vm6172, 0, %v6258
        %v6261 = vcosq.f32.pop %v6259
        %v6262 = vsinq.f32.pop %v6259
        %vm6263 = vweird.f32 %v680
        %v6264 = vadd.s32 %v6260, 3
        %v6265 = vand.u32 %v6264, 3
        %vm6266 = vcmp.lt.s32.totalorder %v6265, 2
        %vm6267 = vcmp.eq.s32.totalorder %v6265, 0
        %v6268 = vxor.u32 %v6262, 2147483648
        %v6269 = vsel %vm6267, %v6261, %v6268
        %vm6270 = vcmp.eq.s32.totalorder %v6265, 2
        %v6271 = vxor.u32 %v6261, 2147483648
        %v6272 = vsel %vm6270, %v6271, %v6262
        %v6273 = vsel %vm6266, %v6269, %v6272
        %v6274 = vsel %vm6263, nan, %v6273
        %v6275 = vand.u32 2147483647, %v681
        %vm6276 = vcmp.le.f32.partialorder %v6275, 0.7853982
        %vm6277 = vcmp.lt.s32.totalorder %v681, 0
        %v6278 = vand.u32 %v681, 2139095040
        %v6279 = vshrl.u32 %v6278, 23
        %v6280 = vsub.s32 %v6279, 127
        %v6281 = vand.u32 2147483647, %v681
        %v6282 = vand.u32 %v6281, 8388607
        %v6283 = vor.u32 %v6282, 8388608
        %v6284 = vsub.s32 0, %v6283
        %v6285 = vadd.s32 %v6280, 1
        %vm6286 = vcmp.gt.s32.totalorder %v6285, 0
        %v6287 = vsel %vm6286, %v6285, 0
        %v6288 = vshrl.u32 %v6287, 5
        %v6289 = vand.u32 %v6287, 31
        %v6290 = vsub.s32 32, %v6289
        %v6291 = vshrl.u32 683565275, %v6290
        %v6292 = vshll.u32 683565275, %v6289
        %v6293 = vshrl.u32 2475754826, %v6290
        %v6294 = vor.u32 %v6292, %v6293
        %v6295 = vshll.u32 2475754826, %v6289
        %v6296 = vshrl.u32 2131351028, %v6290
        %v6297 = vor.u32 %v6295, %v6296
        %v6298 = vshll.u32 2131351028, %v6289
        %v6299 = vshrl.u32 2102212464, %v6290
        %v6300 = vor.u32 %v6298, %v6299
        %v6301 = vshll.u32 2102212464, %v6289
        %v6302 = vshrl.u32 920167782, %v6290
        %v6303 = vor.u32 %v6301, %v6302
        %v6304 = vshll.u32 920167782, %v6289
        %v6305 = vshrl.u32 1326507024, %v6290
        %v6306 = vor.u32 %v6304, %v6305
        %vm6307 = vcmp.lt.s32.totalorder %v6288, 1
        %vm6308 = vcmp.lt.s32.totalorder %v6288, 2
        %vm6309 = vcmp.lt.s32.totalorder %v6288, 3
        %vm6310 = vcmp.lt.s32.totalorder %v6288, 4
        %v6311 = vsel %vm6307, %v6291, %v6294
        %v6312 = vsel %vm6310, %v6300, 2102212464
        %v6313 = vsel %vm6309, %v6297, %v6312
        %v6314 = vsel %vm6308, %v6311, %v6313
        %v6315 = vsel %vm6307, %v6294, %v6297
        %v6316 = vsel %vm6310, %v6303, 920167782
        %v6317 = vsel %vm6309, %v6300, %v6316
        %v6318 = vsel %vm6308, %v6315, %v6317
        %v6319 = vsel %vm6307, %v6297, %v6300
        %v6320 = vsel %vm6310, %v6306, 1326507024
        %v6321 = vsel %vm6309, %v6303, %v6320
        %v6322 = vsel %vm6308, %v6319, %v6321
        %v6323 = vshll.u32 %v6283, 8
        %v6324 = vmul.u32.u64.compose %v6323, %v6322
        %v6325 = vextract.low.u32 %v6324
        %v6326 = vextract.high.u32 %v6324
        %v6327 = vmul.u32.u64.compose %v6323, %v6318
        %v6328 = vextract.low.u32 %v6327
        %v6329 = vextract.high.u32 %v6327
        %v6330 = vmul.u32 %v6323, %v6314
        %v6331 = vadd.s32 %v6326, %v6328
        %vm6332 = vc.u32 %v6326, %v6328
        %v6333 = vadd.s32 %v6329, 1
        %v6334 = vsel %vm6332, %v6333, %v6329
        %v6335 = vadd.s32 %v6330, %v6334
        %v6336 = vadd.s32 %v6335, 536870912
        %v6337 = vshrl.u32 %v6336, 30
        %v6338 = vshll.u32 %v6337, 30
        %v6339 = vsub.s32 %v6335, %v6338
        %vm6340 = vcmp.lt.s32.totalorder %v6339, 0
        %v6341 = vsub.s32 0, %v6339
        %v6342 = vsel %vm6340, %v6341, %v6339
        %v6343 = vclz %v6342
        %v6344 = vsub.s32 %v6343, 2
        %vm6345 = vcmp.gt.s32.totalorder 0, %v6344
        %v6346 = vsel %vm6345, 0, %v6344
        %v6347 = vsub.s32 32, %v6346
        %v6348 = vshll.u32 %v6339, %v6346
        %v6349 = vshrl.u32 %v6331, %v6347
        %v6350 = vor.u32 %v6348, %v6349
        %v6351 = vsub.s32 4294967266, %v6346
        %v6352 = vadd.s32 %v6351, 127
        %v6353 = vshll.u32 %v6352, 23
        %v6354 = vor.u32 4788187, %v6353
        %v6355 = vand.u32 2147483647, %v6354
        %v6357 = vcvt.s32.f32 %v6350
        %v6358 = vmul.f32 %v6357, %v6355
        %v6359 = vxor.u32 %v6358, 2147483648
        %v6360 = vsel %vm6277, %v6359, %v6358
        %v6361 = vsub.s32 4, %v6337
        %v6362 = vsel %vm6277, %v6361, %v6337
        %v6363 = vsel %vm6276, %v681, %v6360
        %v6364 = vsel %vm6276, 0, %v6362
        %v6365 = vcosq.f32.pop %v6363
        %v6366 = vsinq.f32.pop %v6363
        %vm6367 = vweird.f32 %v681
        %v6368 = vadd.s32 %v6364, 3
        %v6369 = vand.u32 %v6368, 3
        %vm6370 = vcmp.lt.s32.totalorder %v6369, 2
        %vm6371 = vcmp.eq.s32.totalorder %v6369, 0
        %v6372 = vxor.u32 %v6366, 2147483648
        %v6373 = vsel %vm6371, %v6365, %v6372
        %vm6374 = vcmp.eq.s32.totalorder %v6369, 2
        %v6375 = vxor.u32 %v6365, 2147483648
        %v6376 = vsel %vm6374, %v6375, %v6366
        %v6377 = vsel %vm6370, %v6373, %v6376
        %v6378 = vsel %vm6367, nan, %v6377
        %v6379 = vand.u32 2147483647, %v682
        %vm6380 = vcmp.le.f32.partialorder %v6379, 0.7853982
        %vm6381 = vcmp.lt.s32.totalorder %v682, 0
        %v6382 = vand.u32 %v682, 2139095040
        %v6383 = vshrl.u32 %v6382, 23
        %v6384 = vsub.s32 %v6383, 127
        %v6385 = vand.u32 2147483647, %v682
        %v6386 = vand.u32 %v6385, 8388607
        %v6387 = vor.u32 %v6386, 8388608
        %v6388 = vsub.s32 0, %v6387
        %v6389 = vadd.s32 %v6384, 1
        %vm6390 = vcmp.gt.s32.totalorder %v6389, 0
        %v6391 = vsel %vm6390, %v6389, 0
        %v6392 = vshrl.u32 %v6391, 5
        %v6393 = vand.u32 %v6391, 31
        %v6394 = vsub.s32 32, %v6393
        %v6395 = vshrl.u32 683565275, %v6394
        %v6396 = vshll.u32 683565275, %v6393
        %v6397 = vshrl.u32 2475754826, %v6394
        %v6398 = vor.u32 %v6396, %v6397
        %v6399 = vshll.u32 2475754826, %v6393
        %v6400 = vshrl.u32 2131351028, %v6394
        %v6401 = vor.u32 %v6399, %v6400
        %v6402 = vshll.u32 2131351028, %v6393
        %v6403 = vshrl.u32 2102212464, %v6394
        %v6404 = vor.u32 %v6402, %v6403
        %v6405 = vshll.u32 2102212464, %v6393
        %v6406 = vshrl.u32 920167782, %v6394
        %v6407 = vor.u32 %v6405, %v6406
        %v6408 = vshll.u32 920167782, %v6393
        %v6409 = vshrl.u32 1326507024, %v6394
        %v6410 = vor.u32 %v6408, %v6409
        %vm6411 = vcmp.lt.s32.totalorder %v6392, 1
        %vm6412 = vcmp.lt.s32.totalorder %v6392, 2
        %vm6413 = vcmp.lt.s32.totalorder %v6392, 3
        %vm6414 = vcmp.lt.s32.totalorder %v6392, 4
        %v6415 = vsel %vm6411, %v6395, %v6398
        %v6416 = vsel %vm6414, %v6404, 2102212464
        %v6417 = vsel %vm6413, %v6401, %v6416
        %v6418 = vsel %vm6412, %v6415, %v6417
        %v6419 = vsel %vm6411, %v6398, %v6401
        %v6420 = vsel %vm6414, %v6407, 920167782
        %v6421 = vsel %vm6413, %v6404, %v6420
        %v6422 = vsel %vm6412, %v6419, %v6421
        %v6423 = vsel %vm6411, %v6401, %v6404
        %v6424 = vsel %vm6414, %v6410, 1326507024
        %v6425 = vsel %vm6413, %v6407, %v6424
        %v6426 = vsel %vm6412, %v6423, %v6425
        %v6427 = vshll.u32 %v6387, 8
        %v6428 = vmul.u32.u64.compose %v6427, %v6426
        %v6429 = vextract.low.u32 %v6428
        %v6430 = vextract.high.u32 %v6428
        %v6431 = vmul.u32.u64.compose %v6427, %v6422
        %v6432 = vextract.low.u32 %v6431
        %v6433 = vextract.high.u32 %v6431
        %v6434 = vmul.u32 %v6427, %v6418
        %v6435 = vadd.s32 %v6430, %v6432
        %vm6436 = vc.u32 %v6430, %v6432
        %v6437 = vadd.s32 %v6433, 1
        %v6438 = vsel %vm6436, %v6437, %v6433
        %v6439 = vadd.s32 %v6434, %v6438
        %v6440 = vadd.s32 %v6439, 536870912
        %v6441 = vshrl.u32 %v6440, 30
        %v6442 = vshll.u32 %v6441, 30
        %v6443 = vsub.s32 %v6439, %v6442
        %vm6444 = vcmp.lt.s32.totalorder %v6443, 0
        %v6445 = vsub.s32 0, %v6443
        %v6446 = vsel %vm6444, %v6445, %v6443
        %v6447 = vclz %v6446
        %v6448 = vsub.s32 %v6447, 2
        %vm6449 = vcmp.gt.s32.totalorder 0, %v6448
        %v6450 = vsel %vm6449, 0, %v6448
        %v6451 = vsub.s32 32, %v6450
        %v6452 = vshll.u32 %v6443, %v6450
        %v6453 = vshrl.u32 %v6435, %v6451
        %v6454 = vor.u32 %v6452, %v6453
        %v6455 = vsub.s32 4294967266, %v6450
        %v6456 = vadd.s32 %v6455, 127
        %v6457 = vshll.u32 %v6456, 23
        %v6458 = vor.u32 4788187, %v6457
        %v6459 = vand.u32 2147483647, %v6458
        %v6461 = vcvt.s32.f32 %v6454
        %v6462 = vmul.f32 %v6461, %v6459
        %v6463 = vxor.u32 %v6462, 2147483648
        %v6464 = vsel %vm6381, %v6463, %v6462
        %v6465 = vsub.s32 4, %v6441
        %v6466 = vsel %vm6381, %v6465, %v6441
        %v6467 = vsel %vm6380, %v682, %v6464
        %v6468 = vsel %vm6380, 0, %v6466
        %v6469 = vcosq.f32.pop %v6467
        %v6470 = vsinq.f32.pop %v6467
        %vm6471 = vweird.f32 %v682
        %v6472 = vadd.s32 %v6468, 3
        %v6473 = vand.u32 %v6472, 3
        %vm6474 = vcmp.lt.s32.totalorder %v6473, 2
        %vm6475 = vcmp.eq.s32.totalorder %v6473, 0
        %v6476 = vxor.u32 %v6470, 2147483648
        %v6477 = vsel %vm6475, %v6469, %v6476
        %vm6478 = vcmp.eq.s32.totalorder %v6473, 2
        %v6479 = vxor.u32 %v6469, 2147483648
        %v6480 = vsel %vm6478, %v6479, %v6470
        %v6481 = vsel %vm6474, %v6477, %v6480
        %v6482 = vsel %vm6471, nan, %v6481
        %v6483 = vand.u32 2147483647, %v683
        %vm6484 = vcmp.le.f32.partialorder %v6483, 0.7853982
        %vm6485 = vcmp.lt.s32.totalorder %v683, 0
        %v6486 = vand.u32 %v683, 2139095040
        %v6487 = vshrl.u32 %v6486, 23
        %v6488 = vsub.s32 %v6487, 127
        %v6489 = vand.u32 2147483647, %v683
        %v6490 = vand.u32 %v6489, 8388607
        %v6491 = vor.u32 %v6490, 8388608
        %v6492 = vsub.s32 0, %v6491
        %v6493 = vadd.s32 %v6488, 1
        %vm6494 = vcmp.gt.s32.totalorder %v6493, 0
        %v6495 = vsel %vm6494, %v6493, 0
        %v6496 = vshrl.u32 %v6495, 5
        %v6497 = vand.u32 %v6495, 31
        %v6498 = vsub.s32 32, %v6497
        %v6499 = vshrl.u32 683565275, %v6498
        %v6500 = vshll.u32 683565275, %v6497
        %v6501 = vshrl.u32 2475754826, %v6498
        %v6502 = vor.u32 %v6500, %v6501
        %v6503 = vshll.u32 2475754826, %v6497
        %v6504 = vshrl.u32 2131351028, %v6498
        %v6505 = vor.u32 %v6503, %v6504
        %v6506 = vshll.u32 2131351028, %v6497
        %v6507 = vshrl.u32 2102212464, %v6498
        %v6508 = vor.u32 %v6506, %v6507
        %v6509 = vshll.u32 2102212464, %v6497
        %v6510 = vshrl.u32 920167782, %v6498
        %v6511 = vor.u32 %v6509, %v6510
        %v6512 = vshll.u32 920167782, %v6497
        %v6513 = vshrl.u32 1326507024, %v6498
        %v6514 = vor.u32 %v6512, %v6513
        %vm6515 = vcmp.lt.s32.totalorder %v6496, 1
        %vm6516 = vcmp.lt.s32.totalorder %v6496, 2
        %vm6517 = vcmp.lt.s32.totalorder %v6496, 3
        %vm6518 = vcmp.lt.s32.totalorder %v6496, 4
        %v6519 = vsel %vm6515, %v6499, %v6502
        %v6520 = vsel %vm6518, %v6508, 2102212464
        %v6521 = vsel %vm6517, %v6505, %v6520
        %v6522 = vsel %vm6516, %v6519, %v6521
        %v6523 = vsel %vm6515, %v6502, %v6505
        %v6524 = vsel %vm6518, %v6511, 920167782
        %v6525 = vsel %vm6517, %v6508, %v6524
        %v6526 = vsel %vm6516, %v6523, %v6525
        %v6527 = vsel %vm6515, %v6505, %v6508
        %v6528 = vsel %vm6518, %v6514, 1326507024
        %v6529 = vsel %vm6517, %v6511, %v6528
        %v6530 = vsel %vm6516, %v6527, %v6529
        %v6531 = vshll.u32 %v6491, 8
        %v6532 = vmul.u32.u64.compose %v6531, %v6530
        %v6533 = vextract.low.u32 %v6532
        %v6534 = vextract.high.u32 %v6532
        %v6535 = vmul.u32.u64.compose %v6531, %v6526
        %v6536 = vextract.low.u32 %v6535
        %v6537 = vextract.high.u32 %v6535
        %v6538 = vmul.u32 %v6531, %v6522
        %v6539 = vadd.s32 %v6534, %v6536
        %vm6540 = vc.u32 %v6534, %v6536
        %v6541 = vadd.s32 %v6537, 1
        %v6542 = vsel %vm6540, %v6541, %v6537
        %v6543 = vadd.s32 %v6538, %v6542
        %v6544 = vadd.s32 %v6543, 536870912
        %v6545 = vshrl.u32 %v6544, 30
        %v6546 = vshll.u32 %v6545, 30
        %v6547 = vsub.s32 %v6543, %v6546
        %vm6548 = vcmp.lt.s32.totalorder %v6547, 0
        %v6549 = vsub.s32 0, %v6547
        %v6550 = vsel %vm6548, %v6549, %v6547
        %v6551 = vclz %v6550
        %v6552 = vsub.s32 %v6551, 2
        %vm6553 = vcmp.gt.s32.totalorder 0, %v6552
        %v6554 = vsel %vm6553, 0, %v6552
        %v6555 = vsub.s32 32, %v6554
        %v6556 = vshll.u32 %v6547, %v6554
        %v6557 = vshrl.u32 %v6539, %v6555
        %v6558 = vor.u32 %v6556, %v6557
        %v6559 = vsub.s32 4294967266, %v6554
        %v6560 = vadd.s32 %v6559, 127
        %v6561 = vshll.u32 %v6560, 23
        %v6562 = vor.u32 4788187, %v6561
        %v6563 = vand.u32 2147483647, %v6562
        %v6565 = vcvt.s32.f32 %v6558
        %v6566 = vmul.f32 %v6565, %v6563
        %v6567 = vxor.u32 %v6566, 2147483648
        %v6568 = vsel %vm6485, %v6567, %v6566
        %v6569 = vsub.s32 4, %v6545
        %v6570 = vsel %vm6485, %v6569, %v6545
        %v6571 = vsel %vm6484, %v683, %v6568
        %v6572 = vsel %vm6484, 0, %v6570
        %v6573 = vcosq.f32.pop %v6571
        %v6574 = vsinq.f32.pop %v6571
        %vm6575 = vweird.f32 %v683
        %v6576 = vadd.s32 %v6572, 3
        %v6577 = vand.u32 %v6576, 3
        %vm6578 = vcmp.lt.s32.totalorder %v6577, 2
        %vm6579 = vcmp.eq.s32.totalorder %v6577, 0
        %v6580 = vxor.u32 %v6574, 2147483648
        %v6581 = vsel %vm6579, %v6573, %v6580
        %vm6582 = vcmp.eq.s32.totalorder %v6577, 2
        %v6583 = vxor.u32 %v6573, 2147483648
        %v6584 = vsel %vm6582, %v6583, %v6574
        %v6585 = vsel %vm6578, %v6581, %v6584
        %v6586 = vsel %vm6575, nan, %v6585
        %v6587 = vand.u32 2147483647, %v684
        %vm6588 = vcmp.le.f32.partialorder %v6587, 0.7853982
        %vm6589 = vcmp.lt.s32.totalorder %v684, 0
        %v6590 = vand.u32 %v684, 2139095040
        %v6591 = vshrl.u32 %v6590, 23
        %v6592 = vsub.s32 %v6591, 127
        %v6593 = vand.u32 2147483647, %v684
        %v6594 = vand.u32 %v6593, 8388607
        %v6595 = vor.u32 %v6594, 8388608
        %v6596 = vsub.s32 0, %v6595
        %v6597 = vadd.s32 %v6592, 1
        %vm6598 = vcmp.gt.s32.totalorder %v6597, 0
        %v6599 = vsel %vm6598, %v6597, 0
        %v6600 = vshrl.u32 %v6599, 5
        %v6601 = vand.u32 %v6599, 31
        %v6602 = vsub.s32 32, %v6601
        %v6603 = vshrl.u32 683565275, %v6602
        %v6604 = vshll.u32 683565275, %v6601
        %v6605 = vshrl.u32 2475754826, %v6602
        %v6606 = vor.u32 %v6604, %v6605
        %v6607 = vshll.u32 2475754826, %v6601
        %v6608 = vshrl.u32 2131351028, %v6602
        %v6609 = vor.u32 %v6607, %v6608
        %v6610 = vshll.u32 2131351028, %v6601
        %v6611 = vshrl.u32 2102212464, %v6602
        %v6612 = vor.u32 %v6610, %v6611
        %v6613 = vshll.u32 2102212464, %v6601
        %v6614 = vshrl.u32 920167782, %v6602
        %v6615 = vor.u32 %v6613, %v6614
        %v6616 = vshll.u32 920167782, %v6601
        %v6617 = vshrl.u32 1326507024, %v6602
        %v6618 = vor.u32 %v6616, %v6617
        %vm6619 = vcmp.lt.s32.totalorder %v6600, 1
        %vm6620 = vcmp.lt.s32.totalorder %v6600, 2
        %vm6621 = vcmp.lt.s32.totalorder %v6600, 3
        %vm6622 = vcmp.lt.s32.totalorder %v6600, 4
        %v6623 = vsel %vm6619, %v6603, %v6606
        %v6624 = vsel %vm6622, %v6612, 2102212464
        %v6625 = vsel %vm6621, %v6609, %v6624
        %v6626 = vsel %vm6620, %v6623, %v6625
        %v6627 = vsel %vm6619, %v6606, %v6609
        %v6628 = vsel %vm6622, %v6615, 920167782
        %v6629 = vsel %vm6621, %v6612, %v6628
        %v6630 = vsel %vm6620, %v6627, %v6629
        %v6631 = vsel %vm6619, %v6609, %v6612
        %v6632 = vsel %vm6622, %v6618, 1326507024
        %v6633 = vsel %vm6621, %v6615, %v6632
        %v6634 = vsel %vm6620, %v6631, %v6633
        %v6635 = vshll.u32 %v6595, 8
        %v6636 = vmul.u32.u64.compose %v6635, %v6634
        %v6637 = vextract.low.u32 %v6636
        %v6638 = vextract.high.u32 %v6636
        %v6639 = vmul.u32.u64.compose %v6635, %v6630
        %v6640 = vextract.low.u32 %v6639
        %v6641 = vextract.high.u32 %v6639
        %v6642 = vmul.u32 %v6635, %v6626
        %v6643 = vadd.s32 %v6638, %v6640
        %vm6644 = vc.u32 %v6638, %v6640
        %v6645 = vadd.s32 %v6641, 1
        %v6646 = vsel %vm6644, %v6645, %v6641
        %v6647 = vadd.s32 %v6642, %v6646
        %v6648 = vadd.s32 %v6647, 536870912
        %v6649 = vshrl.u32 %v6648, 30
        %v6650 = vshll.u32 %v6649, 30
        %v6651 = vsub.s32 %v6647, %v6650
        %vm6652 = vcmp.lt.s32.totalorder %v6651, 0
        %v6653 = vsub.s32 0, %v6651
        %v6654 = vsel %vm6652, %v6653, %v6651
        %v6655 = vclz %v6654
        %v6656 = vsub.s32 %v6655, 2
        %vm6657 = vcmp.gt.s32.totalorder 0, %v6656
        %v6658 = vsel %vm6657, 0, %v6656
        %v6659 = vsub.s32 32, %v6658
        %v6660 = vshll.u32 %v6651, %v6658
        %v6661 = vshrl.u32 %v6643, %v6659
        %v6662 = vor.u32 %v6660, %v6661
        %v6663 = vsub.s32 4294967266, %v6658
        %v6664 = vadd.s32 %v6663, 127
        %v6665 = vshll.u32 %v6664, 23
        %v6666 = vor.u32 4788187, %v6665
        %v6667 = vand.u32 2147483647, %v6666
        %v6669 = vcvt.s32.f32 %v6662
        %v6670 = vmul.f32 %v6669, %v6667
        %v6671 = vxor.u32 %v6670, 2147483648
        %v6672 = vsel %vm6589, %v6671, %v6670
        %v6673 = vsub.s32 4, %v6649
        %v6674 = vsel %vm6589, %v6673, %v6649
        %v6675 = vsel %vm6588, %v684, %v6672
        %v6676 = vsel %vm6588, 0, %v6674
        %v6677 = vcosq.f32.pop %v6675
        %v6678 = vsinq.f32.pop %v6675
        %vm6679 = vweird.f32 %v684
        %v6680 = vadd.s32 %v6676, 3
        %v6681 = vand.u32 %v6680, 3
        %vm6682 = vcmp.lt.s32.totalorder %v6681, 2
        %vm6683 = vcmp.eq.s32.totalorder %v6681, 0
        %v6684 = vxor.u32 %v6678, 2147483648
        %v6685 = vsel %vm6683, %v6677, %v6684
        %vm6686 = vcmp.eq.s32.totalorder %v6681, 2
        %v6687 = vxor.u32 %v6677, 2147483648
        %v6688 = vsel %vm6686, %v6687, %v6678
        %v6689 = vsel %vm6682, %v6685, %v6688
        %v6690 = vsel %vm6679, nan, %v6689
        %v6691 = vand.u32 2147483647, %v685
        %vm6692 = vcmp.le.f32.partialorder %v6691, 0.7853982
        %vm6693 = vcmp.lt.s32.totalorder %v685, 0
        %v6694 = vand.u32 %v685, 2139095040
        %v6695 = vshrl.u32 %v6694, 23
        %v6696 = vsub.s32 %v6695, 127
        %v6697 = vand.u32 2147483647, %v685
        %v6698 = vand.u32 %v6697, 8388607
        %v6699 = vor.u32 %v6698, 8388608
        %v6700 = vsub.s32 0, %v6699
        %v6701 = vadd.s32 %v6696, 1
        %vm6702 = vcmp.gt.s32.totalorder %v6701, 0
        %v6703 = vsel %vm6702, %v6701, 0
        %v6704 = vshrl.u32 %v6703, 5
        %v6705 = vand.u32 %v6703, 31
        %v6706 = vsub.s32 32, %v6705
        %v6707 = vshrl.u32 683565275, %v6706
        %v6708 = vshll.u32 683565275, %v6705
        %v6709 = vshrl.u32 2475754826, %v6706
        %v6710 = vor.u32 %v6708, %v6709
        %v6711 = vshll.u32 2475754826, %v6705
        %v6712 = vshrl.u32 2131351028, %v6706
        %v6713 = vor.u32 %v6711, %v6712
        %v6714 = vshll.u32 2131351028, %v6705
        %v6715 = vshrl.u32 2102212464, %v6706
        %v6716 = vor.u32 %v6714, %v6715
        %v6717 = vshll.u32 2102212464, %v6705
        %v6718 = vshrl.u32 920167782, %v6706
        %v6719 = vor.u32 %v6717, %v6718
        %v6720 = vshll.u32 920167782, %v6705
        %v6721 = vshrl.u32 1326507024, %v6706
        %v6722 = vor.u32 %v6720, %v6721
        %vm6723 = vcmp.lt.s32.totalorder %v6704, 1
        %vm6724 = vcmp.lt.s32.totalorder %v6704, 2
        %vm6725 = vcmp.lt.s32.totalorder %v6704, 3
        %vm6726 = vcmp.lt.s32.totalorder %v6704, 4
        %v6727 = vsel %vm6723, %v6707, %v6710
        %v6728 = vsel %vm6726, %v6716, 2102212464
        %v6729 = vsel %vm6725, %v6713, %v6728
        %v6730 = vsel %vm6724, %v6727, %v6729
        %v6731 = vsel %vm6723, %v6710, %v6713
        %v6732 = vsel %vm6726, %v6719, 920167782
        %v6733 = vsel %vm6725, %v6716, %v6732
        %v6734 = vsel %vm6724, %v6731, %v6733
        %v6735 = vsel %vm6723, %v6713, %v6716
        %v6736 = vsel %vm6726, %v6722, 1326507024
        %v6737 = vsel %vm6725, %v6719, %v6736
        %v6738 = vsel %vm6724, %v6735, %v6737
        %v6739 = vshll.u32 %v6699, 8
        %v6740 = vmul.u32.u64.compose %v6739, %v6738
        %v6741 = vextract.low.u32 %v6740
        %v6742 = vextract.high.u32 %v6740
        %v6743 = vmul.u32.u64.compose %v6739, %v6734
        %v6744 = vextract.low.u32 %v6743
        %v6745 = vextract.high.u32 %v6743
        %v6746 = vmul.u32 %v6739, %v6730
        %v6747 = vadd.s32 %v6742, %v6744
        %vm6748 = vc.u32 %v6742, %v6744
        %v6749 = vadd.s32 %v6745, 1
        %v6750 = vsel %vm6748, %v6749, %v6745
        %v6751 = vadd.s32 %v6746, %v6750
        %v6752 = vadd.s32 %v6751, 536870912
        %v6753 = vshrl.u32 %v6752, 30
        %v6754 = vshll.u32 %v6753, 30
        %v6755 = vsub.s32 %v6751, %v6754
        %vm6756 = vcmp.lt.s32.totalorder %v6755, 0
        %v6757 = vsub.s32 0, %v6755
        %v6758 = vsel %vm6756, %v6757, %v6755
        %v6759 = vclz %v6758
        %v6760 = vsub.s32 %v6759, 2
        %vm6761 = vcmp.gt.s32.totalorder 0, %v6760
        %v6762 = vsel %vm6761, 0, %v6760
        %v6763 = vsub.s32 32, %v6762
        %v6764 = vshll.u32 %v6755, %v6762
        %v6765 = vshrl.u32 %v6747, %v6763
        %v6766 = vor.u32 %v6764, %v6765
        %v6767 = vsub.s32 4294967266, %v6762
        %v6768 = vadd.s32 %v6767, 127
        %v6769 = vshll.u32 %v6768, 23
        %v6770 = vor.u32 4788187, %v6769
        %v6771 = vand.u32 2147483647, %v6770
        %v6773 = vcvt.s32.f32 %v6766
        %v6774 = vmul.f32 %v6773, %v6771
        %v6775 = vxor.u32 %v6774, 2147483648
        %v6776 = vsel %vm6693, %v6775, %v6774
        %v6777 = vsub.s32 4, %v6753
        %v6778 = vsel %vm6693, %v6777, %v6753
        %v6779 = vsel %vm6692, %v685, %v6776
        %v6780 = vsel %vm6692, 0, %v6778
        %v6781 = vcosq.f32.pop %v6779
        %v6782 = vsinq.f32.pop %v6779
        %vm6783 = vweird.f32 %v685
        %v6784 = vadd.s32 %v6780, 3
        %v6785 = vand.u32 %v6784, 3
        %vm6786 = vcmp.lt.s32.totalorder %v6785, 2
        %vm6787 = vcmp.eq.s32.totalorder %v6785, 0
        %v6788 = vxor.u32 %v6782, 2147483648
        %v6789 = vsel %vm6787, %v6781, %v6788
        %vm6790 = vcmp.eq.s32.totalorder %v6785, 2
        %v6791 = vxor.u32 %v6781, 2147483648
        %v6792 = vsel %vm6790, %v6791, %v6782
        %v6793 = vsel %vm6786, %v6789, %v6792
        %v6794 = vsel %vm6783, nan, %v6793
        %v6795 = vand.u32 2147483647, %v686
        %vm6796 = vcmp.le.f32.partialorder %v6795, 0.7853982
        %vm6797 = vcmp.lt.s32.totalorder %v686, 0
        %v6798 = vand.u32 %v686, 2139095040
        %v6799 = vshrl.u32 %v6798, 23
        %v6800 = vsub.s32 %v6799, 127
        %v6801 = vand.u32 2147483647, %v686
        %v6802 = vand.u32 %v6801, 8388607
        %v6803 = vor.u32 %v6802, 8388608
        %v6804 = vsub.s32 0, %v6803
        %v6805 = vadd.s32 %v6800, 1
        %vm6806 = vcmp.gt.s32.totalorder %v6805, 0
        %v6807 = vsel %vm6806, %v6805, 0
        %v6808 = vshrl.u32 %v6807, 5
        %v6809 = vand.u32 %v6807, 31
        %v6810 = vsub.s32 32, %v6809
        %v6811 = vshrl.u32 683565275, %v6810
        %v6812 = vshll.u32 683565275, %v6809
        %v6813 = vshrl.u32 2475754826, %v6810
        %v6814 = vor.u32 %v6812, %v6813
        %v6815 = vshll.u32 2475754826, %v6809
        %v6816 = vshrl.u32 2131351028, %v6810
        %v6817 = vor.u32 %v6815, %v6816
        %v6818 = vshll.u32 2131351028, %v6809
        %v6819 = vshrl.u32 2102212464, %v6810
        %v6820 = vor.u32 %v6818, %v6819
        %v6821 = vshll.u32 2102212464, %v6809
        %v6822 = vshrl.u32 920167782, %v6810
        %v6823 = vor.u32 %v6821, %v6822
        %v6824 = vshll.u32 920167782, %v6809
        %v6825 = vshrl.u32 1326507024, %v6810
        %v6826 = vor.u32 %v6824, %v6825
        %vm6827 = vcmp.lt.s32.totalorder %v6808, 1
        %vm6828 = vcmp.lt.s32.totalorder %v6808, 2
        %vm6829 = vcmp.lt.s32.totalorder %v6808, 3
        %vm6830 = vcmp.lt.s32.totalorder %v6808, 4
        %v6831 = vsel %vm6827, %v6811, %v6814
        %v6832 = vsel %vm6830, %v6820, 2102212464
        %v6833 = vsel %vm6829, %v6817, %v6832
        %v6834 = vsel %vm6828, %v6831, %v6833
        %v6835 = vsel %vm6827, %v6814, %v6817
        %v6836 = vsel %vm6830, %v6823, 920167782
        %v6837 = vsel %vm6829, %v6820, %v6836
        %v6838 = vsel %vm6828, %v6835, %v6837
        %v6839 = vsel %vm6827, %v6817, %v6820
        %v6840 = vsel %vm6830, %v6826, 1326507024
        %v6841 = vsel %vm6829, %v6823, %v6840
        %v6842 = vsel %vm6828, %v6839, %v6841
        %v6843 = vshll.u32 %v6803, 8
        %v6844 = vmul.u32.u64.compose %v6843, %v6842
        %v6845 = vextract.low.u32 %v6844
        %v6846 = vextract.high.u32 %v6844
        %v6847 = vmul.u32.u64.compose %v6843, %v6838
        %v6848 = vextract.low.u32 %v6847
        %v6849 = vextract.high.u32 %v6847
        %v6850 = vmul.u32 %v6843, %v6834
        %v6851 = vadd.s32 %v6846, %v6848
        %vm6852 = vc.u32 %v6846, %v6848
        %v6853 = vadd.s32 %v6849, 1
        %v6854 = vsel %vm6852, %v6853, %v6849
        %v6855 = vadd.s32 %v6850, %v6854
        %v6856 = vadd.s32 %v6855, 536870912
        %v6857 = vshrl.u32 %v6856, 30
        %v6858 = vshll.u32 %v6857, 30
        %v6859 = vsub.s32 %v6855, %v6858
        %vm6860 = vcmp.lt.s32.totalorder %v6859, 0
        %v6861 = vsub.s32 0, %v6859
        %v6862 = vsel %vm6860, %v6861, %v6859
        %v6863 = vclz %v6862
        %v6864 = vsub.s32 %v6863, 2
        %vm6865 = vcmp.gt.s32.totalorder 0, %v6864
        %v6866 = vsel %vm6865, 0, %v6864
        %v6867 = vsub.s32 32, %v6866
        %v6868 = vshll.u32 %v6859, %v6866
        %v6869 = vshrl.u32 %v6851, %v6867
        %v6870 = vor.u32 %v6868, %v6869
        %v6871 = vsub.s32 4294967266, %v6866
        %v6872 = vadd.s32 %v6871, 127
        %v6873 = vshll.u32 %v6872, 23
        %v6874 = vor.u32 4788187, %v6873
        %v6875 = vand.u32 2147483647, %v6874
        %v6877 = vcvt.s32.f32 %v6870
        %v6878 = vmul.f32 %v6877, %v6875
        %v6879 = vxor.u32 %v6878, 2147483648
        %v6880 = vsel %vm6797, %v6879, %v6878
        %v6881 = vsub.s32 4, %v6857
        %v6882 = vsel %vm6797, %v6881, %v6857
        %v6883 = vsel %vm6796, %v686, %v6880
        %v6884 = vsel %vm6796, 0, %v6882
        %v6885 = vcosq.f32.pop %v6883
        %v6886 = vsinq.f32.pop %v6883
        %vm6887 = vweird.f32 %v686
        %v6888 = vadd.s32 %v6884, 3
        %v6889 = vand.u32 %v6888, 3
        %vm6890 = vcmp.lt.s32.totalorder %v6889, 2
        %vm6891 = vcmp.eq.s32.totalorder %v6889, 0
        %v6892 = vxor.u32 %v6886, 2147483648
        %v6893 = vsel %vm6891, %v6885, %v6892
        %vm6894 = vcmp.eq.s32.totalorder %v6889, 2
        %v6895 = vxor.u32 %v6885, 2147483648
        %v6896 = vsel %vm6894, %v6895, %v6886
        %v6897 = vsel %vm6890, %v6893, %v6896
        %v6898 = vsel %vm6887, nan, %v6897
        %v6899 = vand.u32 2147483647, %v687
        %vm6900 = vcmp.le.f32.partialorder %v6899, 0.7853982
        %vm6901 = vcmp.lt.s32.totalorder %v687, 0
        %v6902 = vand.u32 %v687, 2139095040
        %v6903 = vshrl.u32 %v6902, 23
        %v6904 = vsub.s32 %v6903, 127
        %v6905 = vand.u32 2147483647, %v687
        %v6906 = vand.u32 %v6905, 8388607
        %v6907 = vor.u32 %v6906, 8388608
        %v6908 = vsub.s32 0, %v6907
        %v6909 = vadd.s32 %v6904, 1
        %vm6910 = vcmp.gt.s32.totalorder %v6909, 0
        %v6911 = vsel %vm6910, %v6909, 0
        %v6912 = vshrl.u32 %v6911, 5
        %v6913 = vand.u32 %v6911, 31
        %v6914 = vsub.s32 32, %v6913
        %v6915 = vshrl.u32 683565275, %v6914
        %v6916 = vshll.u32 683565275, %v6913
        %v6917 = vshrl.u32 2475754826, %v6914
        %v6918 = vor.u32 %v6916, %v6917
        %v6919 = vshll.u32 2475754826, %v6913
        %v6920 = vshrl.u32 2131351028, %v6914
        %v6921 = vor.u32 %v6919, %v6920
        %v6922 = vshll.u32 2131351028, %v6913
        %v6923 = vshrl.u32 2102212464, %v6914
        %v6924 = vor.u32 %v6922, %v6923
        %v6925 = vshll.u32 2102212464, %v6913
        %v6926 = vshrl.u32 920167782, %v6914
        %v6927 = vor.u32 %v6925, %v6926
        %v6928 = vshll.u32 920167782, %v6913
        %v6929 = vshrl.u32 1326507024, %v6914
        %v6930 = vor.u32 %v6928, %v6929
        %vm6931 = vcmp.lt.s32.totalorder %v6912, 1
        %vm6932 = vcmp.lt.s32.totalorder %v6912, 2
        %vm6933 = vcmp.lt.s32.totalorder %v6912, 3
        %vm6934 = vcmp.lt.s32.totalorder %v6912, 4
        %v6935 = vsel %vm6931, %v6915, %v6918
        %v6936 = vsel %vm6934, %v6924, 2102212464
        %v6937 = vsel %vm6933, %v6921, %v6936
        %v6938 = vsel %vm6932, %v6935, %v6937
        %v6939 = vsel %vm6931, %v6918, %v6921
        %v6940 = vsel %vm6934, %v6927, 920167782
        %v6941 = vsel %vm6933, %v6924, %v6940
        %v6942 = vsel %vm6932, %v6939, %v6941
        %v6943 = vsel %vm6931, %v6921, %v6924
        %v6944 = vsel %vm6934, %v6930, 1326507024
        %v6945 = vsel %vm6933, %v6927, %v6944
        %v6946 = vsel %vm6932, %v6943, %v6945
        %v6947 = vshll.u32 %v6907, 8
        %v6948 = vmul.u32.u64.compose %v6947, %v6946
        %v6949 = vextract.low.u32 %v6948
        %v6950 = vextract.high.u32 %v6948
        %v6951 = vmul.u32.u64.compose %v6947, %v6942
        %v6952 = vextract.low.u32 %v6951
        %v6953 = vextract.high.u32 %v6951
        %v6954 = vmul.u32 %v6947, %v6938
        %v6955 = vadd.s32 %v6950, %v6952
        %vm6956 = vc.u32 %v6950, %v6952
        %v6957 = vadd.s32 %v6953, 1
        %v6958 = vsel %vm6956, %v6957, %v6953
        %v6959 = vadd.s32 %v6954, %v6958
        %v6960 = vadd.s32 %v6959, 536870912
        %v6961 = vshrl.u32 %v6960, 30
        %v6962 = vshll.u32 %v6961, 30
        %v6963 = vsub.s32 %v6959, %v6962
        %vm6964 = vcmp.lt.s32.totalorder %v6963, 0
        %v6965 = vsub.s32 0, %v6963
        %v6966 = vsel %vm6964, %v6965, %v6963
        %v6967 = vclz %v6966
        %v6968 = vsub.s32 %v6967, 2
        %vm6969 = vcmp.gt.s32.totalorder 0, %v6968
        %v6970 = vsel %vm6969, 0, %v6968
        %v6971 = vsub.s32 32, %v6970
        %v6972 = vshll.u32 %v6963, %v6970
        %v6973 = vshrl.u32 %v6955, %v6971
        %v6974 = vor.u32 %v6972, %v6973
        %v6975 = vsub.s32 4294967266, %v6970
        %v6976 = vadd.s32 %v6975, 127
        %v6977 = vshll.u32 %v6976, 23
        %v6978 = vor.u32 4788187, %v6977
        %v6979 = vand.u32 2147483647, %v6978
        %v6981 = vcvt.s32.f32 %v6974
        %v6982 = vmul.f32 %v6981, %v6979
        %v6983 = vxor.u32 %v6982, 2147483648
        %v6984 = vsel %vm6901, %v6983, %v6982
        %v6985 = vsub.s32 4, %v6961
        %v6986 = vsel %vm6901, %v6985, %v6961
        %v6987 = vsel %vm6900, %v687, %v6984
        %v6988 = vsel %vm6900, 0, %v6986
        %v6989 = vcosq.f32.pop %v6987
        %v6990 = vsinq.f32.pop %v6987
        %vm6991 = vweird.f32 %v687
        %v6992 = vadd.s32 %v6988, 3
        %v6993 = vand.u32 %v6992, 3
        %vm6994 = vcmp.lt.s32.totalorder %v6993, 2
        %vm6995 = vcmp.eq.s32.totalorder %v6993, 0
        %v6996 = vxor.u32 %v6990, 2147483648
        %v6997 = vsel %vm6995, %v6989, %v6996
        %vm6998 = vcmp.eq.s32.totalorder %v6993, 2
        %v6999 = vxor.u32 %v6989, 2147483648
        %v7000 = vsel %vm6998, %v6999, %v6990
        %v7001 = vsel %vm6994, %v6997, %v7000
        %v7002 = vsel %vm6991, nan, %v7001
        %v7003 = vand.u32 2147483647, %v688
        %vm7004 = vcmp.le.f32.partialorder %v7003, 0.7853982
        %vm7005 = vcmp.lt.s32.totalorder %v688, 0
        %v7006 = vand.u32 %v688, 2139095040
        %v7007 = vshrl.u32 %v7006, 23
        %v7008 = vsub.s32 %v7007, 127
        %v7009 = vand.u32 2147483647, %v688
        %v7010 = vand.u32 %v7009, 8388607
        %v7011 = vor.u32 %v7010, 8388608
        %v7012 = vsub.s32 0, %v7011
        %v7013 = vadd.s32 %v7008, 1
        %vm7014 = vcmp.gt.s32.totalorder %v7013, 0
        %v7015 = vsel %vm7014, %v7013, 0
        %v7016 = vshrl.u32 %v7015, 5
        %v7017 = vand.u32 %v7015, 31
        %v7018 = vsub.s32 32, %v7017
        %v7019 = vshrl.u32 683565275, %v7018
        %v7020 = vshll.u32 683565275, %v7017
        %v7021 = vshrl.u32 2475754826, %v7018
        %v7022 = vor.u32 %v7020, %v7021
        %v7023 = vshll.u32 2475754826, %v7017
        %v7024 = vshrl.u32 2131351028, %v7018
        %v7025 = vor.u32 %v7023, %v7024
        %v7026 = vshll.u32 2131351028, %v7017
        %v7027 = vshrl.u32 2102212464, %v7018
        %v7028 = vor.u32 %v7026, %v7027
        %v7029 = vshll.u32 2102212464, %v7017
        %v7030 = vshrl.u32 920167782, %v7018
        %v7031 = vor.u32 %v7029, %v7030
        %v7032 = vshll.u32 920167782, %v7017
        %v7033 = vshrl.u32 1326507024, %v7018
        %v7034 = vor.u32 %v7032, %v7033
        %vm7035 = vcmp.lt.s32.totalorder %v7016, 1
        %vm7036 = vcmp.lt.s32.totalorder %v7016, 2
        %vm7037 = vcmp.lt.s32.totalorder %v7016, 3
        %vm7038 = vcmp.lt.s32.totalorder %v7016, 4
        %v7039 = vsel %vm7035, %v7019, %v7022
        %v7040 = vsel %vm7038, %v7028, 2102212464
        %v7041 = vsel %vm7037, %v7025, %v7040
        %v7042 = vsel %vm7036, %v7039, %v7041
        %v7043 = vsel %vm7035, %v7022, %v7025
        %v7044 = vsel %vm7038, %v7031, 920167782
        %v7045 = vsel %vm7037, %v7028, %v7044
        %v7046 = vsel %vm7036, %v7043, %v7045
        %v7047 = vsel %vm7035, %v7025, %v7028
        %v7048 = vsel %vm7038, %v7034, 1326507024
        %v7049 = vsel %vm7037, %v7031, %v7048
        %v7050 = vsel %vm7036, %v7047, %v7049
        %v7051 = vshll.u32 %v7011, 8
        %v7052 = vmul.u32.u64.compose %v7051, %v7050
        %v7053 = vextract.low.u32 %v7052
        %v7054 = vextract.high.u32 %v7052
        %v7055 = vmul.u32.u64.compose %v7051, %v7046
        %v7056 = vextract.low.u32 %v7055
        %v7057 = vextract.high.u32 %v7055
        %v7058 = vmul.u32 %v7051, %v7042
        %v7059 = vadd.s32 %v7054, %v7056
        %vm7060 = vc.u32 %v7054, %v7056
        %v7061 = vadd.s32 %v7057, 1
        %v7062 = vsel %vm7060, %v7061, %v7057
        %v7063 = vadd.s32 %v7058, %v7062
        %v7064 = vadd.s32 %v7063, 536870912
        %v7065 = vshrl.u32 %v7064, 30
        %v7066 = vshll.u32 %v7065, 30
        %v7067 = vsub.s32 %v7063, %v7066
        %vm7068 = vcmp.lt.s32.totalorder %v7067, 0
        %v7069 = vsub.s32 0, %v7067
        %v7070 = vsel %vm7068, %v7069, %v7067
        %v7071 = vclz %v7070
        %v7072 = vsub.s32 %v7071, 2
        %vm7073 = vcmp.gt.s32.totalorder 0, %v7072
        %v7074 = vsel %vm7073, 0, %v7072
        %v7075 = vsub.s32 32, %v7074
        %v7076 = vshll.u32 %v7067, %v7074
        %v7077 = vshrl.u32 %v7059, %v7075
        %v7078 = vor.u32 %v7076, %v7077
        %v7079 = vsub.s32 4294967266, %v7074
        %v7080 = vadd.s32 %v7079, 127
        %v7081 = vshll.u32 %v7080, 23
        %v7082 = vor.u32 4788187, %v7081
        %v7083 = vand.u32 2147483647, %v7082
        %v7085 = vcvt.s32.f32 %v7078
        %v7086 = vmul.f32 %v7085, %v7083
        %v7087 = vxor.u32 %v7086, 2147483648
        %v7088 = vsel %vm7005, %v7087, %v7086
        %v7089 = vsub.s32 4, %v7065
        %v7090 = vsel %vm7005, %v7089, %v7065
        %v7091 = vsel %vm7004, %v688, %v7088
        %v7092 = vsel %vm7004, 0, %v7090
        %v7093 = vcosq.f32.pop %v7091
        %v7094 = vsinq.f32.pop %v7091
        %vm7095 = vweird.f32 %v688
        %v7096 = vadd.s32 %v7092, 3
        %v7097 = vand.u32 %v7096, 3
        %vm7098 = vcmp.lt.s32.totalorder %v7097, 2
        %vm7099 = vcmp.eq.s32.totalorder %v7097, 0
        %v7100 = vxor.u32 %v7094, 2147483648
        %v7101 = vsel %vm7099, %v7093, %v7100
        %vm7102 = vcmp.eq.s32.totalorder %v7097, 2
        %v7103 = vxor.u32 %v7093, 2147483648
        %v7104 = vsel %vm7102, %v7103, %v7094
        %v7105 = vsel %vm7098, %v7101, %v7104
        %v7106 = vsel %vm7095, nan, %v7105
        %v7107 = vand.u32 2147483647, %v689
        %vm7108 = vcmp.le.f32.partialorder %v7107, 0.7853982
        %vm7109 = vcmp.lt.s32.totalorder %v689, 0
        %v7110 = vand.u32 %v689, 2139095040
        %v7111 = vshrl.u32 %v7110, 23
        %v7112 = vsub.s32 %v7111, 127
        %v7113 = vand.u32 2147483647, %v689
        %v7114 = vand.u32 %v7113, 8388607
        %v7115 = vor.u32 %v7114, 8388608
        %v7116 = vsub.s32 0, %v7115
        %v7117 = vadd.s32 %v7112, 1
        %vm7118 = vcmp.gt.s32.totalorder %v7117, 0
        %v7119 = vsel %vm7118, %v7117, 0
        %v7120 = vshrl.u32 %v7119, 5
        %v7121 = vand.u32 %v7119, 31
        %v7122 = vsub.s32 32, %v7121
        %v7123 = vshrl.u32 683565275, %v7122
        %v7124 = vshll.u32 683565275, %v7121
        %v7125 = vshrl.u32 2475754826, %v7122
        %v7126 = vor.u32 %v7124, %v7125
        %v7127 = vshll.u32 2475754826, %v7121
        %v7128 = vshrl.u32 2131351028, %v7122
        %v7129 = vor.u32 %v7127, %v7128
        %v7130 = vshll.u32 2131351028, %v7121
        %v7131 = vshrl.u32 2102212464, %v7122
        %v7132 = vor.u32 %v7130, %v7131
        %v7133 = vshll.u32 2102212464, %v7121
        %v7134 = vshrl.u32 920167782, %v7122
        %v7135 = vor.u32 %v7133, %v7134
        %v7136 = vshll.u32 920167782, %v7121
        %v7137 = vshrl.u32 1326507024, %v7122
        %v7138 = vor.u32 %v7136, %v7137
        %vm7139 = vcmp.lt.s32.totalorder %v7120, 1
        %vm7140 = vcmp.lt.s32.totalorder %v7120, 2
        %vm7141 = vcmp.lt.s32.totalorder %v7120, 3
        %vm7142 = vcmp.lt.s32.totalorder %v7120, 4
        %v7143 = vsel %vm7139, %v7123, %v7126
        %v7144 = vsel %vm7142, %v7132, 2102212464
        %v7145 = vsel %vm7141, %v7129, %v7144
        %v7146 = vsel %vm7140, %v7143, %v7145
        %v7147 = vsel %vm7139, %v7126, %v7129
        %v7148 = vsel %vm7142, %v7135, 920167782
        %v7149 = vsel %vm7141, %v7132, %v7148
        %v7150 = vsel %vm7140, %v7147, %v7149
        %v7151 = vsel %vm7139, %v7129, %v7132
        %v7152 = vsel %vm7142, %v7138, 1326507024
        %v7153 = vsel %vm7141, %v7135, %v7152
        %v7154 = vsel %vm7140, %v7151, %v7153
        %v7155 = vshll.u32 %v7115, 8
        %v7156 = vmul.u32.u64.compose %v7155, %v7154
        %v7157 = vextract.low.u32 %v7156
        %v7158 = vextract.high.u32 %v7156
        %v7159 = vmul.u32.u64.compose %v7155, %v7150
        %v7160 = vextract.low.u32 %v7159
        %v7161 = vextract.high.u32 %v7159
        %v7162 = vmul.u32 %v7155, %v7146
        %v7163 = vadd.s32 %v7158, %v7160
        %vm7164 = vc.u32 %v7158, %v7160
        %v7165 = vadd.s32 %v7161, 1
        %v7166 = vsel %vm7164, %v7165, %v7161
        %v7167 = vadd.s32 %v7162, %v7166
        %v7168 = vadd.s32 %v7167, 536870912
        %v7169 = vshrl.u32 %v7168, 30
        %v7170 = vshll.u32 %v7169, 30
        %v7171 = vsub.s32 %v7167, %v7170
        %vm7172 = vcmp.lt.s32.totalorder %v7171, 0
        %v7173 = vsub.s32 0, %v7171
        %v7174 = vsel %vm7172, %v7173, %v7171
        %v7175 = vclz %v7174
        %v7176 = vsub.s32 %v7175, 2
        %vm7177 = vcmp.gt.s32.totalorder 0, %v7176
        %v7178 = vsel %vm7177, 0, %v7176
        %v7179 = vsub.s32 32, %v7178
        %v7180 = vshll.u32 %v7171, %v7178
        %v7181 = vshrl.u32 %v7163, %v7179
        %v7182 = vor.u32 %v7180, %v7181
        %v7183 = vsub.s32 4294967266, %v7178
        %v7184 = vadd.s32 %v7183, 127
        %v7185 = vshll.u32 %v7184, 23
        %v7186 = vor.u32 4788187, %v7185
        %v7187 = vand.u32 2147483647, %v7186
        %v7189 = vcvt.s32.f32 %v7182
        %v7190 = vmul.f32 %v7189, %v7187
        %v7191 = vxor.u32 %v7190, 2147483648
        %v7192 = vsel %vm7109, %v7191, %v7190
        %v7193 = vsub.s32 4, %v7169
        %v7194 = vsel %vm7109, %v7193, %v7169
        %v7195 = vsel %vm7108, %v689, %v7192
        %v7196 = vsel %vm7108, 0, %v7194
        %v7197 = vcosq.f32.pop %v7195
        %v7198 = vsinq.f32.pop %v7195
        %vm7199 = vweird.f32 %v689
        %v7200 = vadd.s32 %v7196, 3
        %v7201 = vand.u32 %v7200, 3
        %vm7202 = vcmp.lt.s32.totalorder %v7201, 2
        %vm7203 = vcmp.eq.s32.totalorder %v7201, 0
        %v7204 = vxor.u32 %v7198, 2147483648
        %v7205 = vsel %vm7203, %v7197, %v7204
        %vm7206 = vcmp.eq.s32.totalorder %v7201, 2
        %v7207 = vxor.u32 %v7197, 2147483648
        %v7208 = vsel %vm7206, %v7207, %v7198
        %v7209 = vsel %vm7202, %v7205, %v7208
        %v7210 = vsel %vm7199, nan, %v7209
        %v7211 = vand.u32 2147483647, %v690
        %vm7212 = vcmp.le.f32.partialorder %v7211, 0.7853982
        %vm7213 = vcmp.lt.s32.totalorder %v690, 0
        %v7214 = vand.u32 %v690, 2139095040
        %v7215 = vshrl.u32 %v7214, 23
        %v7216 = vsub.s32 %v7215, 127
        %v7217 = vand.u32 2147483647, %v690
        %v7218 = vand.u32 %v7217, 8388607
        %v7219 = vor.u32 %v7218, 8388608
        %v7220 = vsub.s32 0, %v7219
        %v7221 = vadd.s32 %v7216, 1
        %vm7222 = vcmp.gt.s32.totalorder %v7221, 0
        %v7223 = vsel %vm7222, %v7221, 0
        %v7224 = vshrl.u32 %v7223, 5
        %v7225 = vand.u32 %v7223, 31
        %v7226 = vsub.s32 32, %v7225
        %v7227 = vshrl.u32 683565275, %v7226
        %v7228 = vshll.u32 683565275, %v7225
        %v7229 = vshrl.u32 2475754826, %v7226
        %v7230 = vor.u32 %v7228, %v7229
        %v7231 = vshll.u32 2475754826, %v7225
        %v7232 = vshrl.u32 2131351028, %v7226
        %v7233 = vor.u32 %v7231, %v7232
        %v7234 = vshll.u32 2131351028, %v7225
        %v7235 = vshrl.u32 2102212464, %v7226
        %v7236 = vor.u32 %v7234, %v7235
        %v7237 = vshll.u32 2102212464, %v7225
        %v7238 = vshrl.u32 920167782, %v7226
        %v7239 = vor.u32 %v7237, %v7238
        %v7240 = vshll.u32 920167782, %v7225
        %v7241 = vshrl.u32 1326507024, %v7226
        %v7242 = vor.u32 %v7240, %v7241
        %vm7243 = vcmp.lt.s32.totalorder %v7224, 1
        %vm7244 = vcmp.lt.s32.totalorder %v7224, 2
        %vm7245 = vcmp.lt.s32.totalorder %v7224, 3
        %vm7246 = vcmp.lt.s32.totalorder %v7224, 4
        %v7247 = vsel %vm7243, %v7227, %v7230
        %v7248 = vsel %vm7246, %v7236, 2102212464
        %v7249 = vsel %vm7245, %v7233, %v7248
        %v7250 = vsel %vm7244, %v7247, %v7249
        %v7251 = vsel %vm7243, %v7230, %v7233
        %v7252 = vsel %vm7246, %v7239, 920167782
        %v7253 = vsel %vm7245, %v7236, %v7252
        %v7254 = vsel %vm7244, %v7251, %v7253
        %v7255 = vsel %vm7243, %v7233, %v7236
        %v7256 = vsel %vm7246, %v7242, 1326507024
        %v7257 = vsel %vm7245, %v7239, %v7256
        %v7258 = vsel %vm7244, %v7255, %v7257
        %v7259 = vshll.u32 %v7219, 8
        %v7260 = vmul.u32.u64.compose %v7259, %v7258
        %v7261 = vextract.low.u32 %v7260
        %v7262 = vextract.high.u32 %v7260
        %v7263 = vmul.u32.u64.compose %v7259, %v7254
        %v7264 = vextract.low.u32 %v7263
        %v7265 = vextract.high.u32 %v7263
        %v7266 = vmul.u32 %v7259, %v7250
        %v7267 = vadd.s32 %v7262, %v7264
        %vm7268 = vc.u32 %v7262, %v7264
        %v7269 = vadd.s32 %v7265, 1
        %v7270 = vsel %vm7268, %v7269, %v7265
        %v7271 = vadd.s32 %v7266, %v7270
        %v7272 = vadd.s32 %v7271, 536870912
        %v7273 = vshrl.u32 %v7272, 30
        %v7274 = vshll.u32 %v7273, 30
        %v7275 = vsub.s32 %v7271, %v7274
        %vm7276 = vcmp.lt.s32.totalorder %v7275, 0
        %v7277 = vsub.s32 0, %v7275
        %v7278 = vsel %vm7276, %v7277, %v7275
        %v7279 = vclz %v7278
        %v7280 = vsub.s32 %v7279, 2
        %vm7281 = vcmp.gt.s32.totalorder 0, %v7280
        %v7282 = vsel %vm7281, 0, %v7280
        %v7283 = vsub.s32 32, %v7282
        %v7284 = vshll.u32 %v7275, %v7282
        %v7285 = vshrl.u32 %v7267, %v7283
        %v7286 = vor.u32 %v7284, %v7285
        %v7287 = vsub.s32 4294967266, %v7282
        %v7288 = vadd.s32 %v7287, 127
        %v7289 = vshll.u32 %v7288, 23
        %v7290 = vor.u32 4788187, %v7289
        %v7291 = vand.u32 2147483647, %v7290
        %v7293 = vcvt.s32.f32 %v7286
        %v7294 = vmul.f32 %v7293, %v7291
        %v7295 = vxor.u32 %v7294, 2147483648
        %v7296 = vsel %vm7213, %v7295, %v7294
        %v7297 = vsub.s32 4, %v7273
        %v7298 = vsel %vm7213, %v7297, %v7273
        %v7299 = vsel %vm7212, %v690, %v7296
        %v7300 = vsel %vm7212, 0, %v7298
        %v7301 = vcosq.f32.pop %v7299
        %v7302 = vsinq.f32.pop %v7299
        %vm7303 = vweird.f32 %v690
        %v7304 = vadd.s32 %v7300, 3
        %v7305 = vand.u32 %v7304, 3
        %vm7306 = vcmp.lt.s32.totalorder %v7305, 2
        %vm7307 = vcmp.eq.s32.totalorder %v7305, 0
        %v7308 = vxor.u32 %v7302, 2147483648
        %v7309 = vsel %vm7307, %v7301, %v7308
        %vm7310 = vcmp.eq.s32.totalorder %v7305, 2
        %v7311 = vxor.u32 %v7301, 2147483648
        %v7312 = vsel %vm7310, %v7311, %v7302
        %v7313 = vsel %vm7306, %v7309, %v7312
        %v7314 = vsel %vm7303, nan, %v7313
        %v7315 = vmul.f32 %v499, %v793
        %v7316 = vmul.f32 %v500, %v896
        %v7317 = vmul.f32 %v501, %v999
        %v7318 = vmul.f32 %v502, %v1102
        %v7319 = vmul.f32 %v503, %v1205
        %v7320 = vmul.f32 %v504, %v1308
        %v7321 = vmul.f32 %v505, %v1411
        %v7322 = vmul.f32 %v506, %v1514
        %v7323 = vmul.f32 %v507, %v1617
        %v7324 = vmul.f32 %v508, %v1720
        %v7325 = vmul.f32 %v509, %v1823
        %v7326 = vmul.f32 %v510, %v1926
        %v7327 = vmul.f32 %v511, %v2029
        %v7328 = vmul.f32 %v512, %v2132
        %v7329 = vmul.f32 %v513, %v2235
        %v7330 = vmul.f32 %v514, %v2338
        %v7331 = vmul.f32 %v515, %v2441
        %v7332 = vmul.f32 %v516, %v2544
        %v7333 = vmul.f32 %v517, %v2647
        %v7334 = vmul.f32 %v518, %v2750
        %v7335 = vmul.f32 %v519, %v2853
        %v7336 = vmul.f32 %v520, %v2956
        %v7337 = vmul.f32 %v521, %v3059
        %v7338 = vmul.f32 %v522, %v3162
        %v7339 = vmul.f32 %v523, %v3265
        %v7340 = vmul.f32 %v524, %v3368
        %v7341 = vmul.f32 %v525, %v3471
        %v7342 = vmul.f32 %v526, %v3574
        %v7343 = vmul.f32 %v527, %v3677
        %v7344 = vmul.f32 %v528, %v3780
        %v7345 = vmul.f32 %v529, %v3883
        %v7346 = vmul.f32 %v530, %v3986
        %v7347 = vmul.f32 %v531, %v4090
        %v7348 = vmul.f32 %v532, %v4194
        %v7349 = vmul.f32 %v533, %v4298
        %v7350 = vmul.f32 %v534, %v4402
        %v7351 = vmul.f32 %v535, %v4506
        %v7352 = vmul.f32 %v536, %v4610
        %v7353 = vmul.f32 %v537, %v4714
        %v7354 = vmul.f32 %v538, %v4818
        %v7355 = vmul.f32 %v539, %v4922
        %v7356 = vmul.f32 %v540, %v5026
        %v7357 = vmul.f32 %v541, %v5130
        %v7358 = vmul.f32 %v542, %v5234
        %v7359 = vmul.f32 %v543, %v5338
        %v7360 = vmul.f32 %v544, %v5442
        %v7361 = vmul.f32 %v545, %v5546
        %v7362 = vmul.f32 %v546, %v5650
        %v7363 = vmul.f32 %v547, %v5754
        %v7364 = vmul.f32 %v548, %v5858
        %v7365 = vmul.f32 %v549, %v5962
        %v7366 = vmul.f32 %v550, %v6066
        %v7367 = vmul.f32 %v551, %v6170
        %v7368 = vmul.f32 %v552, %v6274
        %v7369 = vmul.f32 %v553, %v6378
        %v7370 = vmul.f32 %v554, %v6482
        %v7371 = vmul.f32 %v555, %v6586
        %v7372 = vmul.f32 %v556, %v6690
        %v7373 = vmul.f32 %v557, %v6794
        %v7374 = vmul.f32 %v558, %v6898
        %v7375 = vmul.f32 %v559, %v7002
        %v7376 = vmul.f32 %v560, %v7106
        %v7377 = vmul.f32 %v561, %v7210
        %v7378 = vmul.f32 %v562, %v7314
        %v7379 = vsub.f32 %v7315, %v7347
        %v7380 = vsub.f32 %v7316, %v7348
        %v7381 = vsub.f32 %v7317, %v7349
        %v7382 = vsub.f32 %v7318, %v7350
        %v7383 = vsub.f32 %v7319, %v7351
        %v7384 = vsub.f32 %v7320, %v7352
        %v7385 = vsub.f32 %v7321, %v7353
        %v7386 = vsub.f32 %v7322, %v7354
        %v7387 = vsub.f32 %v7323, %v7355
        %v7388 = vsub.f32 %v7324, %v7356
        %v7389 = vsub.f32 %v7325, %v7357
        %v7390 = vsub.f32 %v7326, %v7358
        %v7391 = vsub.f32 %v7327, %v7359
        %v7392 = vsub.f32 %v7328, %v7360
        %v7393 = vsub.f32 %v7329, %v7361
        %v7394 = vsub.f32 %v7330, %v7362
        %v7395 = vsub.f32 %v7331, %v7363
        %v7396 = vsub.f32 %v7332, %v7364
        %v7397 = vsub.f32 %v7333, %v7365
        %v7398 = vsub.f32 %v7334, %v7366
        %v7399 = vsub.f32 %v7335, %v7367
        %v7400 = vsub.f32 %v7336, %v7368
        %v7401 = vsub.f32 %v7337, %v7369
        %v7402 = vsub.f32 %v7338, %v7370
        %v7403 = vsub.f32 %v7339, %v7371
        %v7404 = vsub.f32 %v7340, %v7372
        %v7405 = vsub.f32 %v7341, %v7373
        %v7406 = vsub.f32 %v7342, %v7374
        %v7407 = vsub.f32 %v7343, %v7375
        %v7408 = vsub.f32 %v7344, %v7376
        %v7409 = vsub.f32 %v7345, %v7377
        %v7410 = vsub.f32 %v7346, %v7378
        %v7411 = vsub.f32 %v7379, %v563
        %v7412 = vsub.f32 %v7380, %v564
        %v7413 = vsub.f32 %v7381, %v565
        %v7414 = vsub.f32 %v7382, %v566
        %v7415 = vsub.f32 %v7383, %v567
        %v7416 = vsub.f32 %v7384, %v568
        %v7417 = vsub.f32 %v7385, %v569
        %v7418 = vsub.f32 %v7386, %v570
        %v7419 = vsub.f32 %v7387, %v571
        %v7420 = vsub.f32 %v7388, %v572
        %v7421 = vsub.f32 %v7389, %v573
        %v7422 = vsub.f32 %v7390, %v574
        %v7423 = vsub.f32 %v7391, %v575
        %v7424 = vsub.f32 %v7392, %v576
        %v7425 = vsub.f32 %v7393, %v577
        %v7426 = vsub.f32 %v7394, %v578
        %v7427 = vsub.f32 %v7395, %v579
        %v7428 = vsub.f32 %v7396, %v580
        %v7429 = vsub.f32 %v7397, %v581
        %v7430 = vsub.f32 %v7398, %v582
        %v7431 = vsub.f32 %v7399, %v583
        %v7432 = vsub.f32 %v7400, %v584
        %v7433 = vsub.f32 %v7401, %v585
        %v7434 = vsub.f32 %v7402, %v586
        %v7435 = vsub.f32 %v7403, %v587
        %v7436 = vsub.f32 %v7404, %v588
        %v7437 = vsub.f32 %v7405, %v589
        %v7438 = vsub.f32 %v7406, %v590
        %v7439 = vsub.f32 %v7407, %v591
        %v7440 = vsub.f32 %v7408, %v592
        %v7441 = vsub.f32 %v7409, %v593
        %v7442 = vsub.f32 %v7410, %v594
        %v7443 = vmul.f32 %v499, %v4090
        %v7444 = vmul.f32 %v500, %v4194
        %v7445 = vmul.f32 %v501, %v4298
        %v7446 = vmul.f32 %v502, %v4402
        %v7447 = vmul.f32 %v503, %v4506
        %v7448 = vmul.f32 %v504, %v4610
        %v7449 = vmul.f32 %v505, %v4714
        %v7450 = vmul.f32 %v506, %v4818
        %v7451 = vmul.f32 %v507, %v4922
        %v7452 = vmul.f32 %v508, %v5026
        %v7453 = vmul.f32 %v509, %v5130
        %v7454 = vmul.f32 %v510, %v5234
        %v7455 = vmul.f32 %v511, %v5338
        %v7456 = vmul.f32 %v512, %v5442
        %v7457 = vmul.f32 %v513, %v5546
        %v7458 = vmul.f32 %v514, %v5650
        %v7459 = vmul.f32 %v515, %v5754
        %v7460 = vmul.f32 %v516, %v5858
        %v7461 = vmul.f32 %v517, %v5962
        %v7462 = vmul.f32 %v518, %v6066
        %v7463 = vmul.f32 %v519, %v6170
        %v7464 = vmul.f32 %v520, %v6274
        %v7465 = vmul.f32 %v521, %v6378
        %v7466 = vmul.f32 %v522, %v6482
        %v7467 = vmul.f32 %v523, %v6586
        %v7468 = vmul.f32 %v524, %v6690
        %v7469 = vmul.f32 %v525, %v6794
        %v7470 = vmul.f32 %v526, %v6898
        %v7471 = vmul.f32 %v527, %v7002
        %v7472 = vmul.f32 %v528, %v7106
        %v7473 = vmul.f32 %v529, %v7210
        %v7474 = vmul.f32 %v530, %v7314
        %v7475 = vmul.f32 %v531, %v793
        %v7476 = vmul.f32 %v532, %v896
        %v7477 = vmul.f32 %v533, %v999
        %v7478 = vmul.f32 %v534, %v1102
        %v7479 = vmul.f32 %v535, %v1205
        %v7480 = vmul.f32 %v536, %v1308
        %v7481 = vmul.f32 %v537, %v1411
        %v7482 = vmul.f32 %v538, %v1514
        %v7483 = vmul.f32 %v539, %v1617
        %v7484 = vmul.f32 %v540, %v1720
        %v7485 = vmul.f32 %v541, %v1823
        %v7486 = vmul.f32 %v542, %v1926
        %v7487 = vmul.f32 %v543, %v2029
        %v7488 = vmul.f32 %v544, %v2132
        %v7489 = vmul.f32 %v545, %v2235
        %v7490 = vmul.f32 %v546, %v2338
        %v7491 = vmul.f32 %v547, %v2441
        %v7492 = vmul.f32 %v548, %v2544
        %v7493 = vmul.f32 %v549, %v2647
        %v7494 = vmul.f32 %v550, %v2750
        %v7495 = vmul.f32 %v551, %v2853
        %v7496 = vmul.f32 %v552, %v2956
        %v7497 = vmul.f32 %v553, %v3059
        %v7498 = vmul.f32 %v554, %v3162
        %v7499 = vmul.f32 %v555, %v3265
        %v7500 = vmul.f32 %v556, %v3368
        %v7501 = vmul.f32 %v557, %v3471
        %v7502 = vmul.f32 %v558, %v3574
        %v7503 = vmul.f32 %v559, %v3677
        %v7504 = vmul.f32 %v560, %v3780
        %v7505 = vmul.f32 %v561, %v3883
        %v7506 = vmul.f32 %v562, %v3986
        %v7507 = vadd.f32 %v7443, %v7475
        %v7508 = vadd.f32 %v7444, %v7476
        %v7509 = vadd.f32 %v7445, %v7477
        %v7510 = vadd.f32 %v7446, %v7478
        %v7511 = vadd.f32 %v7447, %v7479
        %v7512 = vadd.f32 %v7448, %v7480
        %v7513 = vadd.f32 %v7449, %v7481
        %v7514 = vadd.f32 %v7450, %v7482
        %v7515 = vadd.f32 %v7451, %v7483
        %v7516 = vadd.f32 %v7452, %v7484
        %v7517 = vadd.f32 %v7453, %v7485
        %v7518 = vadd.f32 %v7454, %v7486
        %v7519 = vadd.f32 %v7455, %v7487
        %v7520 = vadd.f32 %v7456, %v7488
        %v7521 = vadd.f32 %v7457, %v7489
        %v7522 = vadd.f32 %v7458, %v7490
        %v7523 = vadd.f32 %v7459, %v7491
        %v7524 = vadd.f32 %v7460, %v7492
        %v7525 = vadd.f32 %v7461, %v7493
        %v7526 = vadd.f32 %v7462, %v7494
        %v7527 = vadd.f32 %v7463, %v7495
        %v7528 = vadd.f32 %v7464, %v7496
        %v7529 = vadd.f32 %v7465, %v7497
        %v7530 = vadd.f32 %v7466, %v7498
        %v7531 = vadd.f32 %v7467, %v7499
        %v7532 = vadd.f32 %v7468, %v7500
        %v7533 = vadd.f32 %v7469, %v7501
        %v7534 = vadd.f32 %v7470, %v7502
        %v7535 = vadd.f32 %v7471, %v7503
        %v7536 = vadd.f32 %v7472, %v7504
        %v7537 = vadd.f32 %v7473, %v7505
        %v7538 = vadd.f32 %v7474, %v7506
        %v7539 = vsub.f32 %v7507, %v595
        %v7540 = vsub.f32 %v7508, %v596
        %v7541 = vsub.f32 %v7509, %v597
        %v7542 = vsub.f32 %v7510, %v598
        %v7543 = vsub.f32 %v7511, %v599
        %v7544 = vsub.f32 %v7512, %v600
        %v7545 = vsub.f32 %v7513, %v601
        %v7546 = vsub.f32 %v7514, %v602
        %v7547 = vsub.f32 %v7515, %v603
        %v7548 = vsub.f32 %v7516, %v604
        %v7549 = vsub.f32 %v7517, %v605
        %v7550 = vsub.f32 %v7518, %v606
        %v7551 = vsub.f32 %v7519, %v607
        %v7552 = vsub.f32 %v7520, %v608
        %v7553 = vsub.f32 %v7521, %v609
        %v7554 = vsub.f32 %v7522, %v610
        %v7555 = vsub.f32 %v7523, %v611
        %v7556 = vsub.f32 %v7524, %v612
        %v7557 = vsub.f32 %v7525, %v613
        %v7558 = vsub.f32 %v7526, %v614
        %v7559 = vsub.f32 %v7527, %v615
        %v7560 = vsub.f32 %v7528, %v616
        %v7561 = vsub.f32 %v7529, %v617
        %v7562 = vsub.f32 %v7530, %v618
        %v7563 = vsub.f32 %v7531, %v619
        %v7564 = vsub.f32 %v7532, %v620
        %v7565 = vsub.f32 %v7533, %v621
        %v7566 = vsub.f32 %v7534, %v622
        %v7567 = vsub.f32 %v7535, %v623
        %v7568 = vsub.f32 %v7536, %v624
        %v7569 = vsub.f32 %v7537, %v625
        %v7570 = vsub.f32 %v7538, %v626
        %v7571 = vmul.f32 %v7411, %v7411
        %v7572 = vmul.f32 %v7412, %v7412
        %v7573 = vmul.f32 %v7413, %v7413
        %v7574 = vmul.f32 %v7414, %v7414
        %v7575 = vmul.f32 %v7415, %v7415
        %v7576 = vmul.f32 %v7416, %v7416
        %v7577 = vmul.f32 %v7417, %v7417
        %v7578 = vmul.f32 %v7418, %v7418
        %v7579 = vmul.f32 %v7419, %v7419
        %v7580 = vmul.f32 %v7420, %v7420
        %v7581 = vmul.f32 %v7421, %v7421
        %v7582 = vmul.f32 %v7422, %v7422
        %v7583 = vmul.f32 %v7423, %v7423
        %v7584 = vmul.f32 %v7424, %v7424
        %v7585 = vmul.f32 %v7425, %v7425
        %v7586 = vmul.f32 %v7426, %v7426
        %v7587 = vmul.f32 %v7427, %v7427
        %v7588 = vmul.f32 %v7428, %v7428
        %v7589 = vmul.f32 %v7429, %v7429
        %v7590 = vmul.f32 %v7430, %v7430
        %v7591 = vmul.f32 %v7431, %v7431
        %v7592 = vmul.f32 %v7432, %v7432
        %v7593 = vmul.f32 %v7433, %v7433
        %v7594 = vmul.f32 %v7434, %v7434
        %v7595 = vmul.f32 %v7435, %v7435
        %v7596 = vmul.f32 %v7436, %v7436
        %v7597 = vmul.f32 %v7437, %v7437
        %v7598 = vmul.f32 %v7438, %v7438
        %v7599 = vmul.f32 %v7439, %v7439
        %v7600 = vmul.f32 %v7440, %v7440
        %v7601 = vmul.f32 %v7441, %v7441
        %v7602 = vmul.f32 %v7442, %v7442
        %v7603 = vmul.f32 %v7539, %v7539
        %v7604 = vmul.f32 %v7540, %v7540
        %v7605 = vmul.f32 %v7541, %v7541
        %v7606 = vmul.f32 %v7542, %v7542
        %v7607 = vmul.f32 %v7543, %v7543
        %v7608 = vmul.f32 %v7544, %v7544
        %v7609 = vmul.f32 %v7545, %v7545
        %v7610 = vmul.f32 %v7546, %v7546
        %v7611 = vmul.f32 %v7547, %v7547
        %v7612 = vmul.f32 %v7548, %v7548
        %v7613 = vmul.f32 %v7549, %v7549
        %v7614 = vmul.f32 %v7550, %v7550
        %v7615 = vmul.f32 %v7551, %v7551
        %v7616 = vmul.f32 %v7552, %v7552
        %v7617 = vmul.f32 %v7553, %v7553
        %v7618 = vmul.f32 %v7554, %v7554
        %v7619 = vmul.f32 %v7555, %v7555
        %v7620 = vmul.f32 %v7556, %v7556
        %v7621 = vmul.f32 %v7557, %v7557
        %v7622 = vmul.f32 %v7558, %v7558
        %v7623 = vmul.f32 %v7559, %v7559
        %v7624 = vmul.f32 %v7560, %v7560
        %v7625 = vmul.f32 %v7561, %v7561
        %v7626 = vmul.f32 %v7562, %v7562
        %v7627 = vmul.f32 %v7563, %v7563
        %v7628 = vmul.f32 %v7564, %v7564
        %v7629 = vmul.f32 %v7565, %v7565
        %v7630 = vmul.f32 %v7566, %v7566
        %v7631 = vmul.f32 %v7567, %v7567
        %v7632 = vmul.f32 %v7568, %v7568
        %v7633 = vmul.f32 %v7569, %v7569
        %v7634 = vmul.f32 %v7570, %v7570
        %v7635 = vadd.f32 %v7571, %v7603
        %v7636 = vadd.f32 %v7572, %v7604
        %v7637 = vadd.f32 %v7573, %v7605
        %v7638 = vadd.f32 %v7574, %v7606
        %v7639 = vadd.f32 %v7575, %v7607
        %v7640 = vadd.f32 %v7576, %v7608
        %v7641 = vadd.f32 %v7577, %v7609
        %v7642 = vadd.f32 %v7578, %v7610
        %v7643 = vadd.f32 %v7579, %v7611
        %v7644 = vadd.f32 %v7580, %v7612
        %v7645 = vadd.f32 %v7581, %v7613
        %v7646 = vadd.f32 %v7582, %v7614
        %v7647 = vadd.f32 %v7583, %v7615
        %v7648 = vadd.f32 %v7584, %v7616
        %v7649 = vadd.f32 %v7585, %v7617
        %v7650 = vadd.f32 %v7586, %v7618
        %v7651 = vadd.f32 %v7587, %v7619
        %v7652 = vadd.f32 %v7588, %v7620
        %v7653 = vadd.f32 %v7589, %v7621
        %v7654 = vadd.f32 %v7590, %v7622
        %v7655 = vadd.f32 %v7591, %v7623
        %v7656 = vadd.f32 %v7592, %v7624
        %v7657 = vadd.f32 %v7593, %v7625
        %v7658 = vadd.f32 %v7594, %v7626
        %v7659 = vadd.f32 %v7595, %v7627
        %v7660 = vadd.f32 %v7596, %v7628
        %v7661 = vadd.f32 %v7597, %v7629
        %v7662 = vadd.f32 %v7598, %v7630
        %v7663 = vadd.f32 %v7599, %v7631
        %v7664 = vadd.f32 %v7600, %v7632
        %v7665 = vadd.f32 %v7601, %v7633
        %v7666 = vadd.f32 %v7602, %v7634
        %v7667 = vrsqrt.pop %v7635
        %v7668 = vmul.f32 %v7635, %v7667
        %vm7669 = vcmp.eq.f32.partialorder %v7635, inf
        %v7670 = vsel %vm7669, %v7635, %v7668
        %vm7671 = vcmp.eq.f32.partialorder %v7635, 0.0
        %v7672 = vand.u32 %v7635, 2147483648
        %v7673 = vsel %vm7671, %v7672, %v7670
        %v7674 = vrsqrt.pop %v7636
        %v7675 = vmul.f32 %v7636, %v7674
        %vm7676 = vcmp.eq.f32.partialorder %v7636, inf
        %v7677 = vsel %vm7676, %v7636, %v7675
        %vm7678 = vcmp.eq.f32.partialorder %v7636, 0.0
        %v7679 = vand.u32 %v7636, 2147483648
        %v7680 = vsel %vm7678, %v7679, %v7677
        %v7681 = vrsqrt.pop %v7637
        %v7682 = vmul.f32 %v7637, %v7681
        %vm7683 = vcmp.eq.f32.partialorder %v7637, inf
        %v7684 = vsel %vm7683, %v7637, %v7682
        %vm7685 = vcmp.eq.f32.partialorder %v7637, 0.0
        %v7686 = vand.u32 %v7637, 2147483648
        %v7687 = vsel %vm7685, %v7686, %v7684
        %v7688 = vrsqrt.pop %v7638
        %v7689 = vmul.f32 %v7638, %v7688
        %vm7690 = vcmp.eq.f32.partialorder %v7638, inf
        %v7691 = vsel %vm7690, %v7638, %v7689
        %vm7692 = vcmp.eq.f32.partialorder %v7638, 0.0
        %v7693 = vand.u32 %v7638, 2147483648
        %v7694 = vsel %vm7692, %v7693, %v7691
        %v7695 = vrsqrt.pop %v7639
        %v7696 = vmul.f32 %v7639, %v7695
        %vm7697 = vcmp.eq.f32.partialorder %v7639, inf
        %v7698 = vsel %vm7697, %v7639, %v7696
        %vm7699 = vcmp.eq.f32.partialorder %v7639, 0.0
        %v7700 = vand.u32 %v7639, 2147483648
        %v7701 = vsel %vm7699, %v7700, %v7698
        %v7702 = vrsqrt.pop %v7640
        %v7703 = vmul.f32 %v7640, %v7702
        %vm7704 = vcmp.eq.f32.partialorder %v7640, inf
        %v7705 = vsel %vm7704, %v7640, %v7703
        %vm7706 = vcmp.eq.f32.partialorder %v7640, 0.0
        %v7707 = vand.u32 %v7640, 2147483648
        %v7708 = vsel %vm7706, %v7707, %v7705
        %v7709 = vrsqrt.pop %v7641
        %v7710 = vmul.f32 %v7641, %v7709
        %vm7711 = vcmp.eq.f32.partialorder %v7641, inf
        %v7712 = vsel %vm7711, %v7641, %v7710
        %vm7713 = vcmp.eq.f32.partialorder %v7641, 0.0
        %v7714 = vand.u32 %v7641, 2147483648
        %v7715 = vsel %vm7713, %v7714, %v7712
        %v7716 = vrsqrt.pop %v7642
        %v7717 = vmul.f32 %v7642, %v7716
        %vm7718 = vcmp.eq.f32.partialorder %v7642, inf
        %v7719 = vsel %vm7718, %v7642, %v7717
        %vm7720 = vcmp.eq.f32.partialorder %v7642, 0.0
        %v7721 = vand.u32 %v7642, 2147483648
        %v7722 = vsel %vm7720, %v7721, %v7719
        %v7723 = vrsqrt.pop %v7643
        %v7724 = vmul.f32 %v7643, %v7723
        %vm7725 = vcmp.eq.f32.partialorder %v7643, inf
        %v7726 = vsel %vm7725, %v7643, %v7724
        %vm7727 = vcmp.eq.f32.partialorder %v7643, 0.0
        %v7728 = vand.u32 %v7643, 2147483648
        %v7729 = vsel %vm7727, %v7728, %v7726
        %v7730 = vrsqrt.pop %v7644
        %v7731 = vmul.f32 %v7644, %v7730
        %vm7732 = vcmp.eq.f32.partialorder %v7644, inf
        %v7733 = vsel %vm7732, %v7644, %v7731
        %vm7734 = vcmp.eq.f32.partialorder %v7644, 0.0
        %v7735 = vand.u32 %v7644, 2147483648
        %v7736 = vsel %vm7734, %v7735, %v7733
        %v7737 = vrsqrt.pop %v7645
        %v7738 = vmul.f32 %v7645, %v7737
        %vm7739 = vcmp.eq.f32.partialorder %v7645, inf
        %v7740 = vsel %vm7739, %v7645, %v7738
        %vm7741 = vcmp.eq.f32.partialorder %v7645, 0.0
        %v7742 = vand.u32 %v7645, 2147483648
        %v7743 = vsel %vm7741, %v7742, %v7740
        %v7744 = vrsqrt.pop %v7646
        %v7745 = vmul.f32 %v7646, %v7744
        %vm7746 = vcmp.eq.f32.partialorder %v7646, inf
        %v7747 = vsel %vm7746, %v7646, %v7745
        %vm7748 = vcmp.eq.f32.partialorder %v7646, 0.0
        %v7749 = vand.u32 %v7646, 2147483648
        %v7750 = vsel %vm7748, %v7749, %v7747
        %v7751 = vrsqrt.pop %v7647
        %v7752 = vmul.f32 %v7647, %v7751
        %vm7753 = vcmp.eq.f32.partialorder %v7647, inf
        %v7754 = vsel %vm7753, %v7647, %v7752
        %vm7755 = vcmp.eq.f32.partialorder %v7647, 0.0
        %v7756 = vand.u32 %v7647, 2147483648
        %v7757 = vsel %vm7755, %v7756, %v7754
        %v7758 = vrsqrt.pop %v7648
        %v7759 = vmul.f32 %v7648, %v7758
        %vm7760 = vcmp.eq.f32.partialorder %v7648, inf
        %v7761 = vsel %vm7760, %v7648, %v7759
        %vm7762 = vcmp.eq.f32.partialorder %v7648, 0.0
        %v7763 = vand.u32 %v7648, 2147483648
        %v7764 = vsel %vm7762, %v7763, %v7761
        %v7765 = vrsqrt.pop %v7649
        %v7766 = vmul.f32 %v7649, %v7765
        %vm7767 = vcmp.eq.f32.partialorder %v7649, inf
        %v7768 = vsel %vm7767, %v7649, %v7766
        %vm7769 = vcmp.eq.f32.partialorder %v7649, 0.0
        %v7770 = vand.u32 %v7649, 2147483648
        %v7771 = vsel %vm7769, %v7770, %v7768
        %v7772 = vrsqrt.pop %v7650
        %v7773 = vmul.f32 %v7650, %v7772
        %vm7774 = vcmp.eq.f32.partialorder %v7650, inf
        %v7775 = vsel %vm7774, %v7650, %v7773
        %vm7776 = vcmp.eq.f32.partialorder %v7650, 0.0
        %v7777 = vand.u32 %v7650, 2147483648
        %v7778 = vsel %vm7776, %v7777, %v7775
        %v7779 = vrsqrt.pop %v7651
        %v7780 = vmul.f32 %v7651, %v7779
        %vm7781 = vcmp.eq.f32.partialorder %v7651, inf
        %v7782 = vsel %vm7781, %v7651, %v7780
        %vm7783 = vcmp.eq.f32.partialorder %v7651, 0.0
        %v7784 = vand.u32 %v7651, 2147483648
        %v7785 = vsel %vm7783, %v7784, %v7782
        %v7786 = vrsqrt.pop %v7652
        %v7787 = vmul.f32 %v7652, %v7786
        %vm7788 = vcmp.eq.f32.partialorder %v7652, inf
        %v7789 = vsel %vm7788, %v7652, %v7787
        %vm7790 = vcmp.eq.f32.partialorder %v7652, 0.0
        %v7791 = vand.u32 %v7652, 2147483648
        %v7792 = vsel %vm7790, %v7791, %v7789
        %v7793 = vrsqrt.pop %v7653
        %v7794 = vmul.f32 %v7653, %v7793
        %vm7795 = vcmp.eq.f32.partialorder %v7653, inf
        %v7796 = vsel %vm7795, %v7653, %v7794
        %vm7797 = vcmp.eq.f32.partialorder %v7653, 0.0
        %v7798 = vand.u32 %v7653, 2147483648
        %v7799 = vsel %vm7797, %v7798, %v7796
        %v7800 = vrsqrt.pop %v7654
        %v7801 = vmul.f32 %v7654, %v7800
        %vm7802 = vcmp.eq.f32.partialorder %v7654, inf
        %v7803 = vsel %vm7802, %v7654, %v7801
        %vm7804 = vcmp.eq.f32.partialorder %v7654, 0.0
        %v7805 = vand.u32 %v7654, 2147483648
        %v7806 = vsel %vm7804, %v7805, %v7803
        %v7807 = vrsqrt.pop %v7655
        %v7808 = vmul.f32 %v7655, %v7807
        %vm7809 = vcmp.eq.f32.partialorder %v7655, inf
        %v7810 = vsel %vm7809, %v7655, %v7808
        %vm7811 = vcmp.eq.f32.partialorder %v7655, 0.0
        %v7812 = vand.u32 %v7655, 2147483648
        %v7813 = vsel %vm7811, %v7812, %v7810
        %v7814 = vrsqrt.pop %v7656
        %v7815 = vmul.f32 %v7656, %v7814
        %vm7816 = vcmp.eq.f32.partialorder %v7656, inf
        %v7817 = vsel %vm7816, %v7656, %v7815
        %vm7818 = vcmp.eq.f32.partialorder %v7656, 0.0
        %v7819 = vand.u32 %v7656, 2147483648
        %v7820 = vsel %vm7818, %v7819, %v7817
        %v7821 = vrsqrt.pop %v7657
        %v7822 = vmul.f32 %v7657, %v7821
        %vm7823 = vcmp.eq.f32.partialorder %v7657, inf
        %v7824 = vsel %vm7823, %v7657, %v7822
        %vm7825 = vcmp.eq.f32.partialorder %v7657, 0.0
        %v7826 = vand.u32 %v7657, 2147483648
        %v7827 = vsel %vm7825, %v7826, %v7824
        %v7828 = vrsqrt.pop %v7658
        %v7829 = vmul.f32 %v7658, %v7828
        %vm7830 = vcmp.eq.f32.partialorder %v7658, inf
        %v7831 = vsel %vm7830, %v7658, %v7829
        %vm7832 = vcmp.eq.f32.partialorder %v7658, 0.0
        %v7833 = vand.u32 %v7658, 2147483648
        %v7834 = vsel %vm7832, %v7833, %v7831
        %v7835 = vrsqrt.pop %v7659
        %v7836 = vmul.f32 %v7659, %v7835
        %vm7837 = vcmp.eq.f32.partialorder %v7659, inf
        %v7838 = vsel %vm7837, %v7659, %v7836
        %vm7839 = vcmp.eq.f32.partialorder %v7659, 0.0
        %v7840 = vand.u32 %v7659, 2147483648
        %v7841 = vsel %vm7839, %v7840, %v7838
        %v7842 = vrsqrt.pop %v7660
        %v7843 = vmul.f32 %v7660, %v7842
        %vm7844 = vcmp.eq.f32.partialorder %v7660, inf
        %v7845 = vsel %vm7844, %v7660, %v7843
        %vm7846 = vcmp.eq.f32.partialorder %v7660, 0.0
        %v7847 = vand.u32 %v7660, 2147483648
        %v7848 = vsel %vm7846, %v7847, %v7845
        %v7849 = vrsqrt.pop %v7661
        %v7850 = vmul.f32 %v7661, %v7849
        %vm7851 = vcmp.eq.f32.partialorder %v7661, inf
        %v7852 = vsel %vm7851, %v7661, %v7850
        %vm7853 = vcmp.eq.f32.partialorder %v7661, 0.0
        %v7854 = vand.u32 %v7661, 2147483648
        %v7855 = vsel %vm7853, %v7854, %v7852
        %v7856 = vrsqrt.pop %v7662
        %v7857 = vmul.f32 %v7662, %v7856
        %vm7858 = vcmp.eq.f32.partialorder %v7662, inf
        %v7859 = vsel %vm7858, %v7662, %v7857
        %vm7860 = vcmp.eq.f32.partialorder %v7662, 0.0
        %v7861 = vand.u32 %v7662, 2147483648
        %v7862 = vsel %vm7860, %v7861, %v7859
        %v7863 = vrsqrt.pop %v7663
        %v7864 = vmul.f32 %v7663, %v7863
        %vm7865 = vcmp.eq.f32.partialorder %v7663, inf
        %v7866 = vsel %vm7865, %v7663, %v7864
        %vm7867 = vcmp.eq.f32.partialorder %v7663, 0.0
        %v7868 = vand.u32 %v7663, 2147483648
        %v7869 = vsel %vm7867, %v7868, %v7866
        %v7870 = vrsqrt.pop %v7664
        %v7871 = vmul.f32 %v7664, %v7870
        %vm7872 = vcmp.eq.f32.partialorder %v7664, inf
        %v7873 = vsel %vm7872, %v7664, %v7871
        %vm7874 = vcmp.eq.f32.partialorder %v7664, 0.0
        %v7875 = vand.u32 %v7664, 2147483648
        %v7876 = vsel %vm7874, %v7875, %v7873
        %v7877 = vrsqrt.pop %v7665
        %v7878 = vmul.f32 %v7665, %v7877
        %vm7879 = vcmp.eq.f32.partialorder %v7665, inf
        %v7880 = vsel %vm7879, %v7665, %v7878
        %vm7881 = vcmp.eq.f32.partialorder %v7665, 0.0
        %v7882 = vand.u32 %v7665, 2147483648
        %v7883 = vsel %vm7881, %v7882, %v7880
        %v7884 = vrsqrt.pop %v7666
        %v7885 = vmul.f32 %v7666, %v7884
        %vm7886 = vcmp.eq.f32.partialorder %v7666, inf
        %v7887 = vsel %vm7886, %v7666, %v7885
        %vm7888 = vcmp.eq.f32.partialorder %v7666, 0.0
        %v7889 = vand.u32 %v7666, 2147483648
        %v7890 = vsel %vm7888, %v7889, %v7887
        %v7891 = vld [vmem:[#allocation2] sm:$0xff]
        %7892 = vmatprep.subr.mxu0 0.0
        %7893 = vmatpush1.xpose.msra.mxu0 %v7778
        %7894 = vmatprep.subr.mxu0 0.0
        %7895 = vmatpush1.xpose.msra.mxu0 %v7771
        %7896 = vmatprep.subr.mxu0 0.0
        %7897 = vmatpush1.xpose.msra.mxu0 %v7764
        %7898 = vmatprep.subr.mxu0 0.0
        %7899 = vmatpush1.xpose.msra.mxu0 %v7757
        %7900 = vmatprep.subr.mxu0 0.0
        %7901 = vmatpush1.xpose.msra.mxu0 %v7750
        %7902 = vmatprep.subr.mxu0 0.0
        %7903 = vmatpush1.xpose.msra.mxu0 %v7743
        %7904 = vmatprep.subr.mxu0 0.0
        %7905 = vmatpush1.xpose.msra.mxu0 %v7736
        %7906 = vmatprep.subr.mxu0 0.0
        %7907 = vmatpush1.xpose.msra.mxu0 %v7729
        %7908 = vmatprep.subr.mxu0 0.0
        %7909 = vmatpush1.xpose.msra.mxu0 %v7722
        %7910 = vmatprep.subr.mxu0 0.0
        %7911 = vmatpush1.xpose.msra.mxu0 %v7715
        %7912 = vmatprep.subr.mxu0 0.0
        %7913 = vmatpush1.xpose.msra.mxu0 %v7708
        %7914 = vmatprep.subr.mxu0 0.0
        %7915 = vmatpush1.xpose.msra.mxu0 %v7701
        %7916 = vmatprep.subr.mxu0 0.0
        %7917 = vmatpush1.xpose.msra.mxu0 %v7694
        %7918 = vmatprep.subr.mxu0 0.0
        %7919 = vmatpush1.xpose.msra.mxu0 %v7687
        %7920 = vmatprep.subr.mxu0 0.0
        %7921 = vmatpush1.xpose.msra.mxu0 %v7680
        %7922 = vmatprep.subr.mxu0 0.0
        %7923 = vmatpush1.xpose.msra.mxu0 %v7673
        %7924 = vmatprep.subr.mxu0 0.0
        %7925 = vmatpush2.xpose.msra.mxu0 %v7890
        %7926 = vmatprep.subr.mxu0 0.0
        %7927 = vmatpush2.xpose.msra.mxu0 %v7883
        %7928 = vmatprep.subr.mxu0 0.0
        %7929 = vmatpush2.xpose.msra.mxu0 %v7876
        %7930 = vmatprep.subr.mxu0 0.0
        %7931 = vmatpush2.xpose.msra.mxu0 %v7869
        %7932 = vmatprep.subr.mxu0 0.0
        %7933 = vmatpush2.xpose.msra.mxu0 %v7862
        %7934 = vmatprep.subr.mxu0 0.0
        %7935 = vmatpush2.xpose.msra.mxu0 %v7855
        %7936 = vmatprep.subr.mxu0 0.0
        %7937 = vmatpush2.xpose.msra.mxu0 %v7848
        %7938 = vmatprep.subr.mxu0 0.0
        %7939 = vmatpush2.xpose.msra.mxu0 %v7841
        %7940 = vmatprep.subr.mxu0 0.0
        %7941 = vmatpush2.xpose.msra.mxu0 %v7834
        %7942 = vmatprep.subr.mxu0 0.0
        %7943 = vmatpush2.xpose.msra.mxu0 %v7827
        %7944 = vmatprep.subr.mxu0 0.0
        %7945 = vmatpush2.xpose.msra.mxu0 %v7820
        %7946 = vmatprep.subr.mxu0 0.0
        %7947 = vmatpush2.xpose.msra.mxu0 %v7813
        %7948 = vmatprep.subr.mxu0 0.0
        %7949 = vmatpush2.xpose.msra.mxu0 %v7806
        %7950 = vmatprep.subr.mxu0 0.0
        %7951 = vmatpush2.xpose.msra.mxu0 %v7799
        %7952 = vmatprep.subr.mxu0 0.0
        %7953 = vmatpush2.xpose.msra.mxu0 %v7792
        %7954 = vmatprep.subr.mxu0 0.0
        %7955 = vmatpush2.xpose.msra.mxu0 %v7785
        %7956 = vmatprep.mubr.f32.mxu0 0.0
        %7957 = vmatmul.mubr.f32.gmra.mxu0 %v7891
        %v7958 = vpop.f32.mrf.mxu0
        %v7959 = vadd.f32 0.0, %v7958
        %v7960 = vpop.f32.mrf.mxu0
        %v7961 = vadd.f32 0.0, %v7960
        %7962 = vdwg.mxu0
        %v7963 = vsub.f32 12.0, %v7959
        %v7964 = vsub.f32 12.0, %v7961
        %v7967 = vcombine.low %v7963, %v7964
        %v7969 = vunpack.c.l.s4 1966171168
        %v7970 = vunpack.c.0.s8 %v7969
        %v7971 = vlaneseq
        %v7972 = vshrl.u32 %v7971, 7
        %v7973 = vsub.s32 %v7970, %v7972
        %v7974 = vrot.slane %v7967, %v7973
        %v7976 = vunpack.c.l.s4 1966171168
        %v7977 = vunpack.c.0.s8 %v7976
        %v7978 = vlaneseq
        %v7979 = vshrl.u32 %v7978, 7
        %v7980 = vsub.s32 %v7977, %v7979
        %v7981 = vrot.slane %v7974, %v7980
        %v7983 = vlaneseq
        %vm7984 = vcmp.ge.s32.totalorder %v7983, 0
        %vm7985 = vcmp.lt.s32.totalorder %v7983, 256
        %vm7986 = vmand %vm7984, %vm7985
        %7987 = vst.msk [vmem:[%s472] sm:$0x3] %vm7986, %v7981
        %s7988 = sand.u32 %s189, 1
        %s7989 = scalar_lea.sflag [#allocation4], %s7988
        %s7990 = sand.u32 %s189, 1
        %s7991 = smul.addr %s7990, 2
        %s7992 = scalar_lea.vmem [#allocation13], %s7991
        // Predicated region
        $region69: #{tpu_custom_call.1} parent=43 // pred_check
          %p7993 = pneg %p199
        $region70: #{tpu_custom_call.1} parent=43 // pred_check_branch
          %7995 = sbr.rel (%p7993) target = $region72
        $region71: #{tpu_custom_call.1} parent=43 // pred_region
          %s7996 = smul.u32 2, %s30
          %s7998 = ssub.s32 32, 32
          %7999 = vsyncadd %s7989, %s7998
          %s8000 = smul.addr %s7996, 16
          %s8001 = scalar_lea.hbm %s6, %s8000
          %s8003 = sshll.u32 %s7992, 4
          %s8004 = int_to_ptr.vmem [resolvable:$true] %s8003
          %8006 = dma.vmem_to_hbm [thread:$0]  %s8004, 32, %s8001, %s7989
        $region72: #{tpu_custom_call.1} parent=43 // pred_fallthru
          _
      $region44: #{tpu_custom_call.1} parent=5 // pred_fallthru
        _
      %p8007 = scmp.le.s32.totalorder 2, %s25
      // Predicated region
      $region73: #{tpu_custom_call.1} parent=5 // pred_check
        %p8008 = pneg %p8007
      $region74: #{tpu_custom_call.1} parent=5 // pred_check_branch
        %8010 = sbr.rel (%p8008) target = $region76
      $region75: #{tpu_custom_call.1} parent=5 // pred_region
        %s8011 = ssub.s32 %s25, 2
        // Predicated region
        $region77: #{tpu_custom_call.1} parent=75 // pred_check
          %p8012 = pneg %p205
        $region78: #{tpu_custom_call.1} parent=75 // pred_check_branch
          %8014 = sbr.rel (%p8012) target = $region80
        $region79: #{tpu_custom_call.1} parent=75 // pred_region
          %s8015 = sand.u32 %s190, 1
          %s8016 = scalar_lea.sflag [#allocation4], %s8015
          %s8017 = sand.u32 %s190, 1
          %s8018 = smul.addr %s8017, 2
          %s8019 = scalar_lea.vmem [#allocation13], %s8018
          %8020 = dma.done %s8016, 32
        $region80: #{tpu_custom_call.1} parent=75 // pred_fallthru
          _
      $region76: #{tpu_custom_call.1} parent=5 // pred_fallthru
        _
    $region6: #{tpu_custom_call.1} parent=1 // loop_footer
      %s29 = sadd.s32 1, %s25
    $region7: #{tpu_custom_call.1} parent=1 // loop_footer_branch
      %24 = sbr.rel target = $region3
    $region8: #{tpu_custom_call.1} parent=1 // loop_exit
      _
    %8021 = vsyncpa [#allocation3], 1
    %s8022 = scalar_lea.sflag [#allocation3], 1
    %8023 = vsyncpa %s8022, 1
    %8024 = vsyncpa [#allocation6], 1
    %s8025 = scalar_lea.sflag [#allocation6], 1
    %8026 = vsyncpa %s8025, 1
    %8027 = vsyncpa [#allocation9], 1
    %s8028 = scalar_lea.sflag [#allocation9], 1
    %8029 = vsyncpa %s8028, 1
    %8030 = vsyncpa [#allocation12], 1
    %s8031 = scalar_lea.sflag [#allocation12], 1
    %8032 = vsyncpa %s8031, 1
    %8033 = vsyncpa [#allocation4], 1
    %s8034 = scalar_lea.sflag [#allocation4], 1
    %8035 = vsyncpa %s8034, 1

</llo_original>
